<compile_context>
chip_gen: v7x
topology: tpu7x:2x2x1
jax: 0.10.0
libtpu: 0.0.40
codegen_flags: <defaults>
</compile_context>

<pallas_src>
import functools

import jax
import jax.numpy as jnp
from jax.experimental import pallas as pl
from jax.experimental.pallas import tpu as pltpu

LATENT = 128
NODE_TYPE_SIZE = 9          # NodeType.SIZE in the reference code
OUTPUT_SIZE = 3             # params.get('size') for cloth (acceleration)
LN_EPS = 1e-5


# ----------------------------------------------------------------------------
# Small helpers
# ----------------------------------------------------------------------------
def _round_up(x, m):
    return ((x + m - 1) // m) * m


def _pad_rows(x, rows):
    r = x.shape[0]
    if rows == r:
        return x
    return jnp.pad(x, [(0, rows - r)] + [(0, 0)] * (x.ndim - 1))


def _pad_cols(x, cols):
    c = x.shape[1]
    if cols == c:
        return x
    return jnp.pad(x, ((0, 0), (0, cols - c)))


# ----------------------------------------------------------------------------
# Fused 3-layer MLP: concat -> Linear/ReLU -> Linear/ReLU -> Linear
#                    [-> LayerNorm] [+ residual]
# ----------------------------------------------------------------------------
def _fused_mlp_kernel(*refs, n_inputs, layer_norm, residual_idx):
    xs = refs[:n_inputs]
    i = n_inputs
    w1_ref, b1_ref, w2_ref, b2_ref, w3_ref, b3_ref = refs[i:i + 6]
    i += 6
    if layer_norm:
        g_ref, beta_ref = refs[i:i + 2]
        i += 2
    o_ref = refs[i]

    if n_inputs == 1:
        x = xs[0][...].astype(jnp.bfloat16)
    else:
        # In-VMEM lane concat (every operand width is a multiple of 128):
        # a single wide-K MXU matmul instead of K=128 partial matmuls.
        x = jnp.concatenate([r[...].astype(jnp.bfloat16) for r in xs], axis=-1)
    h = jnp.dot(x, w1_ref[...], preferred_element_type=jnp.float32) + b1_ref[...]
    h = jnp.maximum(h, 0.0)
    h = jnp.dot(h.astype(jnp.bfloat16), w2_ref[...],
                preferred_element_type=jnp.float32) + b2_ref[...]
    h = jnp.maximum(h, 0.0)
    y = jnp.dot(h.astype(jnp.bfloat16), w3_ref[...],
                preferred_element_type=jnp.float32) + b3_ref[...]
    if layer_norm:
        mu = jnp.mean(y, axis=-1, keepdims=True)
        var = jnp.mean(jnp.square(y - mu), axis=-1, keepdims=True)
        y = (y - mu) * jax.lax.rsqrt(var + LN_EPS)
        y = y * g_ref[...] + beta_ref[...]
    if residual_idx is not None:
        y = y + xs[residual_idx][...].astype(jnp.float32)
    o_ref[...] = y.astype(o_ref.dtype)


def _pick_row_tile(rows, row_tile):
    full = _round_up(rows, 16)
    if full <= row_tile:
        if full > 512:
            # split single-block cases so both v7x TensorCores get work
            return _round_up((full + 1) // 2, 16)
        return full
    return row_tile


def fused_mlp(inputs, p, *, layer_norm, residual_idx=None,
              out_dtype=jnp.bfloat16, row_tile=1024):
    """inputs: list of (R, Din_j) arrays (the 'concat' operands).
       p['w1'] is a single stacked (sum_j round_up(Din_j,128), LATENT) bf16."""
    R = inputs[0].shape[0]
    Dout = p["w3"].shape[1]
    tile = _pick_row_tile(R, row_tile)
    Rp = _round_up(R, tile)

    xs = [_pad_rows(_pad_cols(x, _round_up(x.shape[1], 128)), Rp) for x in inputs]

    row_spec = lambda d: pl.BlockSpec((tile, d), lambda i: (i, 0))
    # Constants: block index never changes -> DMA'd once regardless of buffering.
    const = lambda a: pl.BlockSpec(a.shape, lambda i: (0, 0))

    args = list(xs) + [p["w1"], p["b1"], p["w2"], p["b2"], p["w3"], p["b3"]]
    in_specs = [row_spec(x.shape[1]) for x in xs]
    in_specs += [const(p["w1"]), const(p["b1"]), const(p["w2"]), const(p["b2"]),
                 const(p["w3"]), const(p["b3"])]
    if layer_norm:
        args += [p["g"], p["beta"]]
        in_specs += [const(p["g"]), const(p["beta"])]

    out = pl.pallas_call(
        functools.partial(_fused_mlp_kernel, n_inputs=len(xs),
                          layer_norm=layer_norm, residual_idx=residual_idx),
        out_shape=jax.ShapeDtypeStruct((Rp, Dout), out_dtype),
        grid_spec=pltpu.PrefetchScalarGridSpec(
            num_scalar_prefetch=0,
            grid=(Rp // tile,),
            in_specs=in_specs,
            out_specs=pl.BlockSpec((tile, Dout), lambda i: (i, 0)),
        ),
        compiler_params=pltpu.CompilerParams(dimension_semantics=("parallel",)),
    )(*args)
    return out[:R]


# ----------------------------------------------------------------------------
# Segment sum (sum aggregation over receivers), merged-walk formulation.
# ----------------------------------------------------------------------------
def _segsum_tiles(num_nodes, num_edges, *, node_tile=256, edge_tile=256):
    nt = min(node_tile, _round_up(num_nodes, 8))
    et = min(edge_tile, _round_up(num_edges, 128))
    np_ = _round_up(num_nodes, nt)
    ep_ = _round_up(num_edges, et)
    nb = np_ // nt
    ntiles = ep_ // et
    steps = nb + ntiles          # static upper bound on the merged-walk length
    return nt, et, np_, ep_, nb, ntiles, steps


def build_segsum_plan(receivers_sorted, num_nodes):
    """Walk plan for the segment sum.  Depends only on connectivity, so it is
       built once (outside the per-forward path) and reused every step."""
    E = receivers_sorted.shape[0]
    nt, et, np_, ep_, nb, ntiles, steps = _segsum_tiles(num_nodes, E)

    big = jnp.int32(2 ** 30)     # padded edges never match any node id
    recv_pad = jnp.full((ep_,), big, jnp.int32).at[:E].set(
        receivers_sorted.astype(jnp.int32))

    bounds = (jnp.arange(nb + 1, dtype=jnp.int32) * nt).astype(jnp.int32)
    cuts = jnp.searchsorted(recv_pad, bounds, side="left").astype(jnp.int32)
    lo, hi = cuts[:-1], cuts[1:]                    # edge range per node block
    nonempty = hi > lo
    tile_lo = jnp.clip(lo // et, 0, ntiles - 1)
    tile_hi = jnp.where(nonempty, jnp.clip((hi - 1) // et, 0, ntiles - 1), tile_lo)
    count = jnp.where(nonempty, tile_hi - tile_lo + 1, 1).astype(jnp.int32)
    off = jnp.concatenate(
        [jnp.zeros((1,), jnp.int32), jnp.cumsum(count, dtype=jnp.int32)])
    walk_len = off[nb]                              # <= steps by construction

    s_idx = jnp.arange(steps, dtype=jnp.int32)
    nblk = jnp.clip(jnp.searchsorted(off, s_idx, side="right").astype(jnp.int32) - 1,
                    0, nb - 1)
    local = s_idx - off[nblk]
    # clamp so padded / trailing steps keep the same edge-tile index (no DMA churn)
    etile = jnp.minimum(tile_lo[nblk] + local, tile_hi[nblk]).astype(jnp.int32)
    valid = s_idx < walk_len
    first = jnp.logical_and(local == 0, valid).astype(jnp.int32)
    comp = jnp.logical_and(valid, nonempty[nblk]).astype(jnp.int32)
    return dict(recv_pad=recv_pad, nblk=nblk, etile=etile, first=first, comp=comp)


def _segsum_kernel(nblk_ref, etile_ref, first_ref, comp_ref,
                   recv_ref, msg_ref, o_ref, acc_ref, *, node_tile):
    s = pl.program_id(0)

    @pl.when(first_ref[s] == 1)
    def _():
        acc_ref[...] = jnp.zeros_like(acc_ref)

    @pl.when(comp_ref[s] == 1)
    def _():
        node_start = nblk_ref[s] * node_tile
        recv = recv_ref[...] - node_start                      # (1, edge_tile)
        te = recv.shape[1]
        local = jax.lax.broadcasted_iota(jnp.int32, (node_tile, te), 0)
        mask = (local == recv).astype(jnp.bfloat16)            # one-hot tile
        acc_ref[...] += jnp.dot(mask, msg_ref[...],
                                preferred_element_type=jnp.float32)

    # f32 accumulation in scratch, bf16 store to HBM (halves writeback bytes).
    o_ref[...] = acc_ref[...].astype(o_ref.dtype)


def segment_sum_pallas(messages, conn, num_nodes):
    """messages: (E, D) bf16 in receiver-sorted order.  Returns (num_nodes, D) bf16."""
    E, D = messages.shape
    nt, et, np_, ep_, nb, ntiles, steps = _segsum_tiles(num_nodes, E)

    msg = _pad_rows(messages.astype(jnp.bfloat16), ep_)
    recv2d = conn["recv_pad"].reshape(1, ep_)

    out = pl.pallas_call(
        functools.partial(_segsum_kernel, node_tile=nt),
        out_shape=jax.ShapeDtypeStruct((np_, D), jnp.bfloat16),
        grid_spec=pltpu.PrefetchScalarGridSpec(
            num_scalar_prefetch=4,
            grid=(steps,),
            in_specs=[
                pl.BlockSpec((1, et), lambda s, nbk, etl, fr, cp: (0, etl[s])),
                pl.BlockSpec((et, D), lambda s, nbk, etl, fr, cp: (etl[s], 0)),
            ],
            out_specs=pl.BlockSpec((nt, D), lambda s, nbk, etl, fr, cp: (nbk[s], 0)),
            scratch_shapes=[pltpu.VMEM((nt, D), jnp.float32)],
        ),
        compiler_params=pltpu.CompilerParams(dimension_semantics=("arbitrary",)),
    )(conn["nblk"], conn["etile"], conn["first"], conn["comp"], recv2d, msg)
    return out[:num_nodes]


# ----------------------------------------------------------------------------
# Parameters
# ----------------------------------------------------------------------------
def init_mlp_params(key, din_splits, dout, *, latent=LATENT, layer_norm=True,
                    pad_dout_to=None):
    n = len(din_splits)
    keys = jax.random.split(key, n + 2)

    blocks = []
    for i, d in enumerate(din_splits):
        dp = _round_up(d, 128)
        # scale by the TRUE fan-in; padded rows are zero (matching zero-padded inputs)
        w = jax.random.normal(keys[i], (d, latent), jnp.float32) / jnp.sqrt(jnp.float32(d))
        blocks.append(jnp.pad(w, ((0, dp - d), (0, 0))))
    w1 = jnp.concatenate(blocks, axis=0).astype(jnp.bfloat16)

    w2 = (jax.random.normal(keys[n], (latent, latent), jnp.float32)
          / jnp.sqrt(jnp.float32(latent))).astype(jnp.bfloat16)

    dout_p = pad_dout_to if pad_dout_to is not None else dout
    w3 = jax.random.normal(keys[n + 1], (latent, dout), jnp.float32) / \
        jnp.sqrt(jnp.float32(latent))
    if dout_p != dout:
        w3 = jnp.pad(w3, ((0, 0), (0, dout_p - dout)))   # lane-dense decoder out

    p = dict(
        w1=w1,
        b1=jnp.zeros((1, latent), jnp.float32),
        w2=w2,
        b2=jnp.zeros((1, latent), jnp.float32),
        w3=w3.astype(jnp.bfloat16),
        b3=jnp.zeros((1, dout_p), jnp.float32),
    )
    if layer_norm:
        p["g"] = jnp.ones((1, dout_p), jnp.float32)
        p["beta"] = jnp.zeros((1, dout_p), jnp.float32)
    return p


def init_flag_model_params(key, node_feat_dim, edge_feat_dim,
                           message_passing_steps, output_size=OUTPUT_SIZE):
    keys = jax.random.split(key, 3 + 2 * message_passing_steps)
    params = dict(
        node_encoder=init_mlp_params(keys[0], [node_feat_dim], LATENT),
        edge_encoder=init_mlp_params(keys[1], [edge_feat_dim], LATENT),
        decoder=init_mlp_params(keys[2], [LATENT], output_size,
                                layer_norm=False, pad_dout_to=LATENT),
        processor=[],
    )
    for s in range(message_passing_steps):
        params["processor"].append(dict(
            edge_mlp=init_mlp_params(keys[3 + 2 * s], [LATENT, LATENT, LATENT], LATENT),
            node_mlp=init_mlp_params(keys[4 + 2 * s], [LATENT, LATENT], LATENT),
        ))
    return params


# ----------------------------------------------------------------------------
# Connectivity preprocessing (hoisted out of the per-forward path)
# ----------------------------------------------------------------------------
def prepare_connectivity(senders, receivers, num_nodes):
    """Receiver sort + segment-sum walk plan.  Depends only on mesh connectivity
       (fixed across rollout steps), so it is computed once and reused."""
    senders = senders.astype(jnp.int32)
    receivers = receivers.astype(jnp.int32)
    order = jnp.argsort(receivers)
    s_sorted = jnp.take(senders, order)
    r_sorted = jnp.take(receivers, order)
    plan = build_segsum_plan(r_sorted, num_nodes)
    return dict(order=order, senders=s_sorted, receivers=r_sorted, **plan)


# ----------------------------------------------------------------------------
# MeshGraphNet (= FlagModel.forward) assembly
# ----------------------------------------------------------------------------
def flag_model_forward(params, node_features, edge_features, conn):
    """node_features: (N, Fn) f32, edge_features: (E, Fe) f32 (unsorted order),
       conn: output of prepare_connectivity."""
    num_nodes = node_features.shape[0]
    senders = conn["senders"]
    receivers = conn["receivers"]

    # Permute edge features into the (fixed) receiver-sorted order.  Sum
    # aggregation is permutation-invariant and per-edge updates are
    # permutation-equivariant, so the per-node output is unchanged.
    edge_features = jnp.take(edge_features, conn["order"], axis=0)

    # Encoder (latents stored bf16 between kernels; LayerNorm/ReLU fused).
    # NOTE: bf16 residual stream is a deliberate perf/precision trade-off.
    node_lat = fused_mlp([node_features], params["node_encoder"], layer_norm=True)
    edge_lat = fused_mlp([edge_features], params["edge_encoder"], layer_norm=True)

    # Processor (message passing, sum aggregation)
    for pstep in params["processor"]:
        # TODO(synk): fuse these row gathers into the edge-MLP kernel (in-kernel
        # DMA gather from HBM-resident node_lat); general vector-indexed gather
        # has no robust Mosaic lowering today, so they stay as XLA gathers.
        sfeat = jnp.take(node_lat, senders, axis=0)
        rfeat = jnp.take(node_lat, receivers, axis=0)
        # concat + MLP + LN + residual fused; single K=384 first-layer matmul.
        edge_lat = fused_mlp([sfeat, rfeat, edge_lat], pstep["edge_mlp"],
                             layer_norm=True, residual_idx=2)

        agg = segment_sum_pallas(edge_lat, conn, num_nodes)        # bf16 (N,128)
        # concat + MLP + LN + residual fused; single K=256 first-layer matmul.
        node_lat = fused_mlp([node_lat, agg], pstep["node_mlp"],
                             layer_norm=True, residual_idx=0)

    # Decoder (no LayerNorm); lane-dense (128-wide) output, slice to size 3.
    y = fused_mlp([node_lat], params["decoder"], layer_norm=False,
                  out_dtype=jnp.float32)
    return y[:, :OUTPUT_SIZE]


# ----------------------------------------------------------------------------
if __name__ == "__main__":
    key = jax.random.PRNGKey(0)
    k_nodes, k_edges, k_send, k_recv, k_params = jax.random.split(key, 5)

    num_nodes = 64
    num_edges = 256
    message_passing_steps = 2
    node_feat_dim = 3 + NODE_TYPE_SIZE   # velocity (3) + one-hot node type (9)
    edge_feat_dim = 7                    # rel world pos (3) + |.| + rel mesh pos + |.|

    node_features = jax.random.normal(k_nodes, (num_nodes, node_feat_dim), jnp.float32)
    edge_features = jax.random.normal(k_edges, (num_edges, edge_feat_dim), jnp.float32)
    senders = jax.random.randint(k_send, (num_edges,), 0, num_nodes, jnp.int32)
    receivers = jax.random.randint(k_recv, (num_edges,), 0, num_nodes, jnp.int32)

    params = init_flag_model_params(k_params, node_feat_dim, edge_feat_dim,
                                    message_passing_steps)

    # Hoisted once per mesh: receiver sort + segment-sum walk plan.
    conn = prepare_connectivity(senders, receivers, num_nodes)

    fwd = jax.jit(flag_model_forward)
    out = fwd(params, node_features, edge_features, conn)
    jax.block_until_ready(out)
    assert out.shape == (num_nodes, OUTPUT_SIZE)
    print("KERNEL_OK")
</pallas_src>

<mosaic_0001>
module attributes {stable_mosaic.version = 11 : i64} {
  func.func @_fused_mlp_kernel(%arg0: i32, %arg1: memref<64x128xf32, #tpu.memory_space<vmem>>, %arg2: memref<128x128xbf16, #tpu.memory_space<vmem>>, %arg3: memref<1x128xf32, #tpu.memory_space<vmem>>, %arg4: memref<128x128xbf16, #tpu.memory_space<vmem>>, %arg5: memref<1x128xf32, #tpu.memory_space<vmem>>, %arg6: memref<128x128xbf16, #tpu.memory_space<vmem>>, %arg7: memref<1x128xf32, #tpu.memory_space<vmem>>, %arg8: memref<1x128xf32, #tpu.memory_space<vmem>>, %arg9: memref<1x128xf32, #tpu.memory_space<vmem>>, %arg10: memref<64x128xbf16, #tpu.memory_space<vmem>>) attributes {dimension_semantics = [#tpu.dimension_semantics<parallel>], iteration_bounds = array<i64: 1>, scalar_prefetch = 0 : i64, scratch_operands = 0 : i64, tpu.core_type = #tpu.core_type<tc>, window_params = [{transform_indices = @transform_0, window_bounds = array<i64: 64, 128>}, {pipeline_mode = #tpu.pipeline_mode<synchronous>, transform_indices = @transform_1, window_bounds = array<i64: 128, 128>}, {pipeline_mode = #tpu.pipeline_mode<synchronous>, transform_indices = @transform_2, window_bounds = array<i64: 1, 128>}, {pipeline_mode = #tpu.pipeline_mode<synchronous>, transform_indices = @transform_3, window_bounds = array<i64: 128, 128>}, {pipeline_mode = #tpu.pipeline_mode<synchronous>, transform_indices = @transform_4, window_bounds = array<i64: 1, 128>}, {pipeline_mode = #tpu.pipeline_mode<synchronous>, transform_indices = @transform_5, window_bounds = array<i64: 128, 128>}, {pipeline_mode = #tpu.pipeline_mode<synchronous>, transform_indices = @transform_6, window_bounds = array<i64: 1, 128>}, {pipeline_mode = #tpu.pipeline_mode<synchronous>, transform_indices = @transform_7, window_bounds = array<i64: 1, 128>}, {pipeline_mode = #tpu.pipeline_mode<synchronous>, transform_indices = @transform_8, window_bounds = array<i64: 1, 128>}, {transform_indices = @transform_9, window_bounds = array<i64: 64, 128>}]} {
    %c0 = arith.constant 0 : index
    %c0_0 = arith.constant 0 : index
    %0 = vector.load %arg1[%c0, %c0_0] : memref<64x128xf32, #tpu.memory_space<vmem>>, vector<64x128xf32>
    %1 = arith.truncf %0 : vector<64x128xf32> to vector<64x128xbf16>
    %c0_1 = arith.constant 0 : index
    %c0_2 = arith.constant 0 : index
    %2 = vector.load %arg2[%c0_1, %c0_2] : memref<128x128xbf16, #tpu.memory_space<vmem>>, vector<128x128xbf16>
    %cst = arith.constant dense<0.000000e+00> : vector<64x128xf32>
    %3 = tpu.matmul %1, %2, %cst {dimension_numbers = #tpu.dot_dimension_numbers<[1], [0], [0], [1], [0, 0, 1, 1], [], []>} : vector<64x128xbf16>, vector<128x128xbf16>, vector<64x128xf32> -> vector<64x128xf32>
    %c0_3 = arith.constant 0 : index
    %c0_4 = arith.constant 0 : index
    %4 = vector.load %arg3[%c0_3, %c0_4] : memref<1x128xf32, #tpu.memory_space<vmem>>, vector<1x128xf32>
    %5 = vector.broadcast %4 : vector<1x128xf32> to vector<64x128xf32>
    %6 = arith.addf %3, %5 : vector<64x128xf32>
    %cst_5 = arith.constant 0.000000e+00 : f32
    %7 = vector.broadcast %cst_5 : f32 to vector<64x128xf32>
    %8 = arith.maximumf %6, %7 : vector<64x128xf32>
    %9 = arith.truncf %8 : vector<64x128xf32> to vector<64x128xbf16>
    %c0_6 = arith.constant 0 : index
    %c0_7 = arith.constant 0 : index
    %10 = vector.load %arg4[%c0_6, %c0_7] : memref<128x128xbf16, #tpu.memory_space<vmem>>, vector<128x128xbf16>
    %cst_8 = arith.constant dense<0.000000e+00> : vector<64x128xf32>
    %11 = tpu.matmul %9, %10, %cst_8 {dimension_numbers = #tpu.dot_dimension_numbers<[1], [0], [0], [1], [0, 0, 1, 1], [], []>} : vector<64x128xbf16>, vector<128x128xbf16>, vector<64x128xf32> -> vector<64x128xf32>
    %c0_9 = arith.constant 0 : index
    %c0_10 = arith.constant 0 : index
    %12 = vector.load %arg5[%c0_9, %c0_10] : memref<1x128xf32, #tpu.memory_space<vmem>>, vector<1x128xf32>
    %13 = vector.broadcast %12 : vector<1x128xf32> to vector<64x128xf32>
    %14 = arith.addf %11, %13 : vector<64x128xf32>
    %cst_11 = arith.constant 0.000000e+00 : f32
    %15 = vector.broadcast %cst_11 : f32 to vector<64x128xf32>
    %16 = arith.maximumf %14, %15 : vector<64x128xf32>
    %17 = arith.truncf %16 : vector<64x128xf32> to vector<64x128xbf16>
    %c0_12 = arith.constant 0 : index
    %c0_13 = arith.constant 0 : index
    %18 = vector.load %arg6[%c0_12, %c0_13] : memref<128x128xbf16, #tpu.memory_space<vmem>>, vector<128x128xbf16>
    %cst_14 = arith.constant dense<0.000000e+00> : vector<64x128xf32>
    %19 = tpu.matmul %17, %18, %cst_14 {dimension_numbers = #tpu.dot_dimension_numbers<[1], [0], [0], [1], [0, 0, 1, 1], [], []>} : vector<64x128xbf16>, vector<128x128xbf16>, vector<64x128xf32> -> vector<64x128xf32>
    %c0_15 = arith.constant 0 : index
    %c0_16 = arith.constant 0 : index
    %20 = vector.load %arg7[%c0_15, %c0_16] : memref<1x128xf32, #tpu.memory_space<vmem>>, vector<1x128xf32>
    %21 = vector.broadcast %20 : vector<1x128xf32> to vector<64x128xf32>
    %22 = arith.addf %19, %21 : vector<64x128xf32>
    %cst_17 = arith.constant dense<0.000000e+00> : vector<64xf32>
    %23 = vector.multi_reduction <add>, %22, %cst_17 [1] : vector<64x128xf32> to vector<64xf32>
    %24 = vector.shape_cast %23 : vector<64xf32> to vector<64x1xf32>
    %cst_18 = arith.constant 1.280000e+02 : f32
    %25 = vector.broadcast %cst_18 : f32 to vector<64x1xf32>
    %26 = arith.divf %24, %25 : vector<64x1xf32>
    %27 = vector.broadcast %26 : vector<64x1xf32> to vector<64x128xf32>
    %28 = arith.subf %22, %27 : vector<64x128xf32>
    %29 = arith.mulf %28, %28 : vector<64x128xf32>
    %cst_19 = arith.constant dense<0.000000e+00> : vector<64xf32>
    %30 = vector.multi_reduction <add>, %29, %cst_19 [1] : vector<64x128xf32> to vector<64xf32>
    %31 = vector.shape_cast %30 : vector<64xf32> to vector<64x1xf32>
    %cst_20 = arith.constant 1.280000e+02 : f32
    %32 = vector.broadcast %cst_20 : f32 to vector<64x1xf32>
    %33 = arith.divf %31, %32 : vector<64x1xf32>
    %34 = vector.broadcast %26 : vector<64x1xf32> to vector<64x128xf32>
    %35 = arith.subf %22, %34 : vector<64x128xf32>
    %cst_21 = arith.constant 9.99999974E-6 : f32
    %36 = vector.broadcast %cst_21 : f32 to vector<64x1xf32>
    %37 = arith.addf %33, %36 : vector<64x1xf32>
    %38 = math.rsqrt %37 : vector<64x1xf32>
    %39 = vector.broadcast %38 : vector<64x1xf32> to vector<64x128xf32>
    %40 = arith.mulf %35, %39 : vector<64x128xf32>
    %c0_22 = arith.constant 0 : index
    %c0_23 = arith.constant 0 : index
    %41 = vector.load %arg8[%c0_22, %c0_23] : memref<1x128xf32, #tpu.memory_space<vmem>>, vector<1x128xf32>
    %42 = vector.broadcast %41 : vector<1x128xf32> to vector<64x128xf32>
    %43 = arith.mulf %40, %42 : vector<64x128xf32>
    %c0_24 = arith.constant 0 : index
    %c0_25 = arith.constant 0 : index
    %44 = vector.load %arg9[%c0_24, %c0_25] : memref<1x128xf32, #tpu.memory_space<vmem>>, vector<1x128xf32>
    %45 = vector.broadcast %44 : vector<1x128xf32> to vector<64x128xf32>
    %46 = arith.addf %43, %45 : vector<64x128xf32>
    %47 = arith.truncf %46 : vector<64x128xf32> to vector<64x128xbf16>
    %c0_26 = arith.constant 0 : index
    %c0_27 = arith.constant 0 : index
    %48 = vector.load %arg10[%c0_26, %c0_27] : memref<64x128xbf16, #tpu.memory_space<vmem>>, vector<64x128xbf16>
    tpu.vector_store %arg10[%c0_26, %c0_27], %47 {strides = array<i32>} : memref<64x128xbf16, #tpu.memory_space<vmem>>, vector<64x128xbf16>,
    return
  }
  func.func @transform_0(%arg0: i32) -> (i32, i32) {
    %c0_i32 = arith.constant 0 : i32
    %c0_i32_0 = arith.constant 0 : i32
    return %arg0, %c0_i32 : i32, i32
  }
  func.func @transform_1(%arg0: i32) -> (i32, i32) {
    %c0_i32 = arith.constant 0 : i32
    %c0_i32_0 = arith.constant 0 : i32
    %c0_i32_1 = arith.constant 0 : i32
    return %c0_i32, %c0_i32_0 : i32, i32
  }
  func.func @transform_2(%arg0: i32) -> (i32, i32) {
    %c0_i32 = arith.constant 0 : i32
    %c0_i32_0 = arith.constant 0 : i32
    %c0_i32_1 = arith.constant 0 : i32
    return %c0_i32, %c0_i32_0 : i32, i32
  }
  func.func @transform_3(%arg0: i32) -> (i32, i32) {
    %c0_i32 = arith.constant 0 : i32
    %c0_i32_0 = arith.constant 0 : i32
    %c0_i32_1 = arith.constant 0 : i32
    return %c0_i32, %c0_i32_0 : i32, i32
  }
  func.func @transform_4(%arg0: i32) -> (i32, i32) {
    %c0_i32 = arith.constant 0 : i32
    %c0_i32_0 = arith.constant 0 : i32
    %c0_i32_1 = arith.constant 0 : i32
    return %c0_i32, %c0_i32_0 : i32, i32
  }
  func.func @transform_5(%arg0: i32) -> (i32, i32) {
    %c0_i32 = arith.constant 0 : i32
    %c0_i32_0 = arith.constant 0 : i32
    %c0_i32_1 = arith.constant 0 : i32
    return %c0_i32, %c0_i32_0 : i32, i32
  }
  func.func @transform_6(%arg0: i32) -> (i32, i32) {
    %c0_i32 = arith.constant 0 : i32
    %c0_i32_0 = arith.constant 0 : i32
    %c0_i32_1 = arith.constant 0 : i32
    return %c0_i32, %c0_i32_0 : i32, i32
  }
  func.func @transform_7(%arg0: i32) -> (i32, i32) {
    %c0_i32 = arith.constant 0 : i32
    %c0_i32_0 = arith.constant 0 : i32
    %c0_i32_1 = arith.constant 0 : i32
    return %c0_i32, %c0_i32_0 : i32, i32
  }
  func.func @transform_8(%arg0: i32) -> (i32, i32) {
    %c0_i32 = arith.constant 0 : i32
    %c0_i32_0 = arith.constant 0 : i32
    %c0_i32_1 = arith.constant 0 : i32
    return %c0_i32, %c0_i32_0 : i32, i32
  }
  func.func @transform_9(%arg0: i32) -> (i32, i32) {
    %c0_i32 = arith.constant 0 : i32
    %c0_i32_0 = arith.constant 0 : i32
    return %arg0, %c0_i32 : i32, i32
  }
}

module attributes {stable_mosaic.version = 11 : i64} {
  func.func @_fused_mlp_kernel(%arg0: i32, %arg1: memref<256x128xf32, #tpu.memory_space<vmem>>, %arg2: memref<128x128xbf16, #tpu.memory_space<vmem>>, %arg3: memref<1x128xf32, #tpu.memory_space<vmem>>, %arg4: memref<128x128xbf16, #tpu.memory_space<vmem>>, %arg5: memref<1x128xf32, #tpu.memory_space<vmem>>, %arg6: memref<128x128xbf16, #tpu.memory_space<vmem>>, %arg7: memref<1x128xf32, #tpu.memory_space<vmem>>, %arg8: memref<1x128xf32, #tpu.memory_space<vmem>>, %arg9: memref<1x128xf32, #tpu.memory_space<vmem>>, %arg10: memref<256x128xbf16, #tpu.memory_space<vmem>>) attributes {dimension_semantics = [#tpu.dimension_semantics<parallel>], iteration_bounds = array<i64: 1>, scalar_prefetch = 0 : i64, scratch_operands = 0 : i64, tpu.core_type = #tpu.core_type<tc>, window_params = [{transform_indices = @transform_0, window_bounds = array<i64: 256, 128>}, {pipeline_mode = #tpu.pipeline_mode<synchronous>, transform_indices = @transform_1, window_bounds = array<i64: 128, 128>}, {pipeline_mode = #tpu.pipeline_mode<synchronous>, transform_indices = @transform_2, window_bounds = array<i64: 1, 128>}, {pipeline_mode = #tpu.pipeline_mode<synchronous>, transform_indices = @transform_3, window_bounds = array<i64: 128, 128>}, {pipeline_mode = #tpu.pipeline_mode<synchronous>, transform_indices = @transform_4, window_bounds = array<i64: 1, 128>}, {pipeline_mode = #tpu.pipeline_mode<synchronous>, transform_indices = @transform_5, window_bounds = array<i64: 128, 128>}, {pipeline_mode = #tpu.pipeline_mode<synchronous>, transform_indices = @transform_6, window_bounds = array<i64: 1, 128>}, {pipeline_mode = #tpu.pipeline_mode<synchronous>, transform_indices = @transform_7, window_bounds = array<i64: 1, 128>}, {pipeline_mode = #tpu.pipeline_mode<synchronous>, transform_indices = @transform_8, window_bounds = array<i64: 1, 128>}, {transform_indices = @transform_9, window_bounds = array<i64: 256, 128>}]} {
    %c0 = arith.constant 0 : index
    %c0_0 = arith.constant 0 : index
    %0 = vector.load %arg1[%c0, %c0_0] : memref<256x128xf32, #tpu.memory_space<vmem>>, vector<256x128xf32>
    %1 = arith.truncf %0 : vector<256x128xf32> to vector<256x128xbf16>
    %c0_1 = arith.constant 0 : index
    %c0_2 = arith.constant 0 : index
    %2 = vector.load %arg2[%c0_1, %c0_2] : memref<128x128xbf16, #tpu.memory_space<vmem>>, vector<128x128xbf16>
    %cst = arith.constant dense<0.000000e+00> : vector<256x128xf32>
    %3 = tpu.matmul %1, %2, %cst {dimension_numbers = #tpu.dot_dimension_numbers<[1], [0], [0], [1], [0, 0, 1, 1], [], []>} : vector<256x128xbf16>, vector<128x128xbf16>, vector<256x128xf32> -> vector<256x128xf32>
    %c0_3 = arith.constant 0 : index
    %c0_4 = arith.constant 0 : index
    %4 = vector.load %arg3[%c0_3, %c0_4] : memref<1x128xf32, #tpu.memory_space<vmem>>, vector<1x128xf32>
    %5 = vector.broadcast %4 : vector<1x128xf32> to vector<256x128xf32>
    %6 = arith.addf %3, %5 : vector<256x128xf32>
    %cst_5 = arith.constant 0.000000e+00 : f32
    %7 = vector.broadcast %cst_5 : f32 to vector<256x128xf32>
    %8 = arith.maximumf %6, %7 : vector<256x128xf32>
    %9 = arith.truncf %8 : vector<256x128xf32> to vector<256x128xbf16>
    %c0_6 = arith.constant 0 : index
    %c0_7 = arith.constant 0 : index
    %10 = vector.load %arg4[%c0_6, %c0_7] : memref<128x128xbf16, #tpu.memory_space<vmem>>, vector<128x128xbf16>
    %cst_8 = arith.constant dense<0.000000e+00> : vector<256x128xf32>
    %11 = tpu.matmul %9, %10, %cst_8 {dimension_numbers = #tpu.dot_dimension_numbers<[1], [0], [0], [1], [0, 0, 1, 1], [], []>} : vector<256x128xbf16>, vector<128x128xbf16>, vector<256x128xf32> -> vector<256x128xf32>
    %c0_9 = arith.constant 0 : index
    %c0_10 = arith.constant 0 : index
    %12 = vector.load %arg5[%c0_9, %c0_10] : memref<1x128xf32, #tpu.memory_space<vmem>>, vector<1x128xf32>
    %13 = vector.broadcast %12 : vector<1x128xf32> to vector<256x128xf32>
    %14 = arith.addf %11, %13 : vector<256x128xf32>
    %cst_11 = arith.constant 0.000000e+00 : f32
    %15 = vector.broadcast %cst_11 : f32 to vector<256x128xf32>
    %16 = arith.maximumf %14, %15 : vector<256x128xf32>
    %17 = arith.truncf %16 : vector<256x128xf32> to vector<256x128xbf16>
    %c0_12 = arith.constant 0 : index
    %c0_13 = arith.constant 0 : index
    %18 = vector.load %arg6[%c0_12, %c0_13] : memref<128x128xbf16, #tpu.memory_space<vmem>>, vector<128x128xbf16>
    %cst_14 = arith.constant dense<0.000000e+00> : vector<256x128xf32>
    %19 = tpu.matmul %17, %18, %cst_14 {dimension_numbers = #tpu.dot_dimension_numbers<[1], [0], [0], [1], [0, 0, 1, 1], [], []>} : vector<256x128xbf16>, vector<128x128xbf16>, vector<256x128xf32> -> vector<256x128xf32>
    %c0_15 = arith.constant 0 : index
    %c0_16 = arith.constant 0 : index
    %20 = vector.load %arg7[%c0_15, %c0_16] : memref<1x128xf32, #tpu.memory_space<vmem>>, vector<1x128xf32>
    %21 = vector.broadcast %20 : vector<1x128xf32> to vector<256x128xf32>
    %22 = arith.addf %19, %21 : vector<256x128xf32>
    %cst_17 = arith.constant dense<0.000000e+00> : vector<256xf32>
    %23 = vector.multi_reduction <add>, %22, %cst_17 [1] : vector<256x128xf32> to vector<256xf32>
    %24 = vector.shape_cast %23 : vector<256xf32> to vector<256x1xf32>
    %cst_18 = arith.constant 1.280000e+02 : f32
    %25 = vector.broadcast %cst_18 : f32 to vector<256x1xf32>
    %26 = arith.divf %24, %25 : vector<256x1xf32>
    %27 = vector.broadcast %26 : vector<256x1xf32> to vector<256x128xf32>
    %28 = arith.subf %22, %27 : vector<256x128xf32>
    %29 = arith.mulf %28, %28 : vector<256x128xf32>
    %cst_19 = arith.constant dense<0.000000e+00> : vector<256xf32>
    %30 = vector.multi_reduction <add>, %29, %cst_19 [1] : vector<256x128xf32> to vector<256xf32>
    %31 = vector.shape_cast %30 : vector<256xf32> to vector<256x1xf32>
    %cst_20 = arith.constant 1.280000e+02 : f32
    %32 = vector.broadcast %cst_20 : f32 to vector<256x1xf32>
    %33 = arith.divf %31, %32 : vector<256x1xf32>
    %34 = vector.broadcast %26 : vector<256x1xf32> to vector<256x128xf32>
    %35 = arith.subf %22, %34 : vector<256x128xf32>
    %cst_21 = arith.constant 9.99999974E-6 : f32
    %36 = vector.broadcast %cst_21 : f32 to vector<256x1xf32>
    %37 = arith.addf %33, %36 : vector<256x1xf32>
    %38 = math.rsqrt %37 : vector<256x1xf32>
    %39 = vector.broadcast %38 : vector<256x1xf32> to vector<256x128xf32>
    %40 = arith.mulf %35, %39 : vector<256x128xf32>
    %c0_22 = arith.constant 0 : index
    %c0_23 = arith.constant 0 : index
    %41 = vector.load %arg8[%c0_22, %c0_23] : memref<1x128xf32, #tpu.memory_space<vmem>>, vector<1x128xf32>
    %42 = vector.broadcast %41 : vector<1x128xf32> to vector<256x128xf32>
    %43 = arith.mulf %40, %42 : vector<256x128xf32>
    %c0_24 = arith.constant 0 : index
    %c0_25 = arith.constant 0 : index
    %44 = vector.load %arg9[%c0_24, %c0_25] : memref<1x128xf32, #tpu.memory_space<vmem>>, vector<1x128xf32>
    %45 = vector.broadcast %44 : vector<1x128xf32> to vector<256x128xf32>
    %46 = arith.addf %43, %45 : vector<256x128xf32>
    %47 = arith.truncf %46 : vector<256x128xf32> to vector<256x128xbf16>
    %c0_26 = arith.constant 0 : index
    %c0_27 = arith.constant 0 : index
    %48 = vector.load %arg10[%c0_26, %c0_27] : memref<256x128xbf16, #tpu.memory_space<vmem>>, vector<256x128xbf16>
    tpu.vector_store %arg10[%c0_26, %c0_27], %47 {strides = array<i32>} : memref<256x128xbf16, #tpu.memory_space<vmem>>, vector<256x128xbf16>,
    return
  }
  func.func @transform_0(%arg0: i32) -> (i32, i32) {
    %c0_i32 = arith.constant 0 : i32
    %c0_i32_0 = arith.constant 0 : i32
    return %arg0, %c0_i32 : i32, i32
  }
  func.func @transform_1(%arg0: i32) -> (i32, i32) {
    %c0_i32 = arith.constant 0 : i32
    %c0_i32_0 = arith.constant 0 : i32
    %c0_i32_1 = arith.constant 0 : i32
    return %c0_i32, %c0_i32_0 : i32, i32
  }
  func.func @transform_2(%arg0: i32) -> (i32, i32) {
    %c0_i32 = arith.constant 0 : i32
    %c0_i32_0 = arith.constant 0 : i32
    %c0_i32_1 = arith.constant 0 : i32
    return %c0_i32, %c0_i32_0 : i32, i32
  }
  func.func @transform_3(%arg0: i32) -> (i32, i32) {
    %c0_i32 = arith.constant 0 : i32
    %c0_i32_0 = arith.constant 0 : i32
    %c0_i32_1 = arith.constant 0 : i32
    return %c0_i32, %c0_i32_0 : i32, i32
  }
  func.func @transform_4(%arg0: i32) -> (i32, i32) {
    %c0_i32 = arith.constant 0 : i32
    %c0_i32_0 = arith.constant 0 : i32
    %c0_i32_1 = arith.constant 0 : i32
    return %c0_i32, %c0_i32_0 : i32, i32
  }
  func.func @transform_5(%arg0: i32) -> (i32, i32) {
    %c0_i32 = arith.constant 0 : i32
    %c0_i32_0 = arith.constant 0 : i32
    %c0_i32_1 = arith.constant 0 : i32
    return %c0_i32, %c0_i32_0 : i32, i32
  }
  func.func @transform_6(%arg0: i32) -> (i32, i32) {
    %c0_i32 = arith.constant 0 : i32
    %c0_i32_0 = arith.constant 0 : i32
    %c0_i32_1 = arith.constant 0 : i32
    return %c0_i32, %c0_i32_0 : i32, i32
  }
  func.func @transform_7(%arg0: i32) -> (i32, i32) {
    %c0_i32 = arith.constant 0 : i32
    %c0_i32_0 = arith.constant 0 : i32
    %c0_i32_1 = arith.constant 0 : i32
    return %c0_i32, %c0_i32_0 : i32, i32
  }
  func.func @transform_8(%arg0: i32) -> (i32, i32) {
    %c0_i32 = arith.constant 0 : i32
    %c0_i32_0 = arith.constant 0 : i32
    %c0_i32_1 = arith.constant 0 : i32
    return %c0_i32, %c0_i32_0 : i32, i32
  }
  func.func @transform_9(%arg0: i32) -> (i32, i32) {
    %c0_i32 = arith.constant 0 : i32
    %c0_i32_0 = arith.constant 0 : i32
    return %arg0, %c0_i32 : i32, i32
  }
}

module attributes {stable_mosaic.version = 11 : i64} {
  func.func @_fused_mlp_kernel(%arg0: i32, %arg1: memref<256x128xbf16, #tpu.memory_space<vmem>>, %arg2: memref<256x128xbf16, #tpu.memory_space<vmem>>, %arg3: memref<256x128xbf16, #tpu.memory_space<vmem>>, %arg4: memref<384x128xbf16, #tpu.memory_space<vmem>>, %arg5: memref<1x128xf32, #tpu.memory_space<vmem>>, %arg6: memref<128x128xbf16, #tpu.memory_space<vmem>>, %arg7: memref<1x128xf32, #tpu.memory_space<vmem>>, %arg8: memref<128x128xbf16, #tpu.memory_space<vmem>>, %arg9: memref<1x128xf32, #tpu.memory_space<vmem>>, %arg10: memref<1x128xf32, #tpu.memory_space<vmem>>, %arg11: memref<1x128xf32, #tpu.memory_space<vmem>>, %arg12: memref<256x128xbf16, #tpu.memory_space<vmem>>) attributes {dimension_semantics = [#tpu.dimension_semantics<parallel>], iteration_bounds = array<i64: 1>, scalar_prefetch = 0 : i64, scratch_operands = 0 : i64, tpu.core_type = #tpu.core_type<tc>, window_params = [{transform_indices = @transform_0, window_bounds = array<i64: 256, 128>}, {transform_indices = @transform_1, window_bounds = array<i64: 256, 128>}, {transform_indices = @transform_2, window_bounds = array<i64: 256, 128>}, {pipeline_mode = #tpu.pipeline_mode<synchronous>, transform_indices = @transform_3, window_bounds = array<i64: 384, 128>}, {pipeline_mode = #tpu.pipeline_mode<synchronous>, transform_indices = @transform_4, window_bounds = array<i64: 1, 128>}, {pipeline_mode = #tpu.pipeline_mode<synchronous>, transform_indices = @transform_5, window_bounds = array<i64: 128, 128>}, {pipeline_mode = #tpu.pipeline_mode<synchronous>, transform_indices = @transform_6, window_bounds = array<i64: 1, 128>}, {pipeline_mode = #tpu.pipeline_mode<synchronous>, transform_indices = @transform_7, window_bounds = array<i64: 128, 128>}, {pipeline_mode = #tpu.pipeline_mode<synchronous>, transform_indices = @transform_8, window_bounds = array<i64: 1, 128>}, {pipeline_mode = #tpu.pipeline_mode<synchronous>, transform_indices = @transform_9, window_bounds = array<i64: 1, 128>}, {pipeline_mode = #tpu.pipeline_mode<synchronous>, transform_indices = @transform_10, window_bounds = array<i64: 1, 128>}, {transform_indices = @transform_11, window_bounds = array<i64: 256, 128>}]} {
    %c0 = arith.constant 0 : index
    %c0_0 = arith.constant 0 : index
    %0 = vector.load %arg1[%c0, %c0_0] : memref<256x128xbf16, #tpu.memory_space<vmem>>, vector<256x128xbf16>
    %c0_1 = arith.constant 0 : index
    %c0_2 = arith.constant 0 : index
    %1 = vector.load %arg2[%c0_1, %c0_2] : memref<256x128xbf16, #tpu.memory_space<vmem>>, vector<256x128xbf16>
    %c0_3 = arith.constant 0 : index
    %c0_4 = arith.constant 0 : index
    %2 = vector.load %arg3[%c0_3, %c0_4] : memref<256x128xbf16, #tpu.memory_space<vmem>>, vector<256x128xbf16>
    %3 = tpu.concatenate %0, %1, %2 in 1 : vector<256x128xbf16>, vector<256x128xbf16>, vector<256x128xbf16> -> vector<256x384xbf16>
    %c0_5 = arith.constant 0 : index
    %c0_6 = arith.constant 0 : index
    %4 = vector.load %arg4[%c0_5, %c0_6] : memref<384x128xbf16, #tpu.memory_space<vmem>>, vector<384x128xbf16>
    %cst = arith.constant dense<0.000000e+00> : vector<256x128xf32>
    %5 = tpu.matmul %3, %4, %cst {dimension_numbers = #tpu.dot_dimension_numbers<[1], [0], [0], [1], [0, 0, 1, 1], [], []>} : vector<256x384xbf16>, vector<384x128xbf16>, vector<256x128xf32> -> vector<256x128xf32>
    %c0_7 = arith.constant 0 : index
    %c0_8 = arith.constant 0 : index
    %6 = vector.load %arg5[%c0_7, %c0_8] : memref<1x128xf32, #tpu.memory_space<vmem>>, vector<1x128xf32>
    %7 = vector.broadcast %6 : vector<1x128xf32> to vector<256x128xf32>
    %8 = arith.addf %5, %7 : vector<256x128xf32>
    %cst_9 = arith.constant 0.000000e+00 : f32
    %9 = vector.broadcast %cst_9 : f32 to vector<256x128xf32>
    %10 = arith.maximumf %8, %9 : vector<256x128xf32>
    %11 = arith.truncf %10 : vector<256x128xf32> to vector<256x128xbf16>
    %c0_10 = arith.constant 0 : index
    %c0_11 = arith.constant 0 : index
    %12 = vector.load %arg6[%c0_10, %c0_11] : memref<128x128xbf16, #tpu.memory_space<vmem>>, vector<128x128xbf16>
    %cst_12 = arith.constant dense<0.000000e+00> : vector<256x128xf32>
    %13 = tpu.matmul %11, %12, %cst_12 {dimension_numbers = #tpu.dot_dimension_numbers<[1], [0], [0], [1], [0, 0, 1, 1], [], []>} : vector<256x128xbf16>, vector<128x128xbf16>, vector<256x128xf32> -> vector<256x128xf32>
    %c0_13 = arith.constant 0 : index
    %c0_14 = arith.constant 0 : index
    %14 = vector.load %arg7[%c0_13, %c0_14] : memref<1x128xf32, #tpu.memory_space<vmem>>, vector<1x128xf32>
    %15 = vector.broadcast %14 : vector<1x128xf32> to vector<256x128xf32>
    %16 = arith.addf %13, %15 : vector<256x128xf32>
    %cst_15 = arith.constant 0.000000e+00 : f32
    %17 = vector.broadcast %cst_15 : f32 to vector<256x128xf32>
    %18 = arith.maximumf %16, %17 : vector<256x128xf32>
    %19 = arith.truncf %18 : vector<256x128xf32> to vector<256x128xbf16>
    %c0_16 = arith.constant 0 : index
    %c0_17 = arith.constant 0 : index
    %20 = vector.load %arg8[%c0_16, %c0_17] : memref<128x128xbf16, #tpu.memory_space<vmem>>, vector<128x128xbf16>
    %cst_18 = arith.constant dense<0.000000e+00> : vector<256x128xf32>
    %21 = tpu.matmul %19, %20, %cst_18 {dimension_numbers = #tpu.dot_dimension_numbers<[1], [0], [0], [1], [0, 0, 1, 1], [], []>} : vector<256x128xbf16>, vector<128x128xbf16>, vector<256x128xf32> -> vector<256x128xf32>
    %c0_19 = arith.constant 0 : index
    %c0_20 = arith.constant 0 : index
    %22 = vector.load %arg9[%c0_19, %c0_20] : memref<1x128xf32, #tpu.memory_space<vmem>>, vector<1x128xf32>
    %23 = vector.broadcast %22 : vector<1x128xf32> to vector<256x128xf32>
    %24 = arith.addf %21, %23 : vector<256x128xf32>
    %cst_21 = arith.constant dense<0.000000e+00> : vector<256xf32>
    %25 = vector.multi_reduction <add>, %24, %cst_21 [1] : vector<256x128xf32> to vector<256xf32>
    %26 = vector.shape_cast %25 : vector<256xf32> to vector<256x1xf32>
    %cst_22 = arith.constant 1.280000e+02 : f32
    %27 = vector.broadcast %cst_22 : f32 to vector<256x1xf32>
    %28 = arith.divf %26, %27 : vector<256x1xf32>
    %29 = vector.broadcast %28 : vector<256x1xf32> to vector<256x128xf32>
    %30 = arith.subf %24, %29 : vector<256x128xf32>
    %31 = arith.mulf %30, %30 : vector<256x128xf32>
    %cst_23 = arith.constant dense<0.000000e+00> : vector<256xf32>
    %32 = vector.multi_reduction <add>, %31, %cst_23 [1] : vector<256x128xf32> to vector<256xf32>
    %33 = vector.shape_cast %32 : vector<256xf32> to vector<256x1xf32>
    %cst_24 = arith.constant 1.280000e+02 : f32
    %34 = vector.broadcast %cst_24 : f32 to vector<256x1xf32>
    %35 = arith.divf %33, %34 : vector<256x1xf32>
    %36 = vector.broadcast %28 : vector<256x1xf32> to vector<256x128xf32>
    %37 = arith.subf %24, %36 : vector<256x128xf32>
    %cst_25 = arith.constant 9.99999974E-6 : f32
    %38 = vector.broadcast %cst_25 : f32 to vector<256x1xf32>
    %39 = arith.addf %35, %38 : vector<256x1xf32>
    %40 = math.rsqrt %39 : vector<256x1xf32>
    %41 = vector.broadcast %40 : vector<256x1xf32> to vector<256x128xf32>
    %42 = arith.mulf %37, %41 : vector<256x128xf32>
    %c0_26 = arith.constant 0 : index
    %c0_27 = arith.constant 0 : index
    %43 = vector.load %arg10[%c0_26, %c0_27] : memref<1x128xf32, #tpu.memory_space<vmem>>, vector<1x128xf32>
    %44 = vector.broadcast %43 : vector<1x128xf32> to vector<256x128xf32>
    %45 = arith.mulf %42, %44 : vector<256x128xf32>
    %c0_28 = arith.constant 0 : index
    %c0_29 = arith.constant 0 : index
    %46 = vector.load %arg11[%c0_28, %c0_29] : memref<1x128xf32, #tpu.memory_space<vmem>>, vector<1x128xf32>
    %47 = vector.broadcast %46 : vector<1x128xf32> to vector<256x128xf32>
    %48 = arith.addf %45, %47 : vector<256x128xf32>
    %c0_30 = arith.constant 0 : index
    %c0_31 = arith.constant 0 : index
    %49 = vector.load %arg3[%c0_30, %c0_31] : memref<256x128xbf16, #tpu.memory_space<vmem>>, vector<256x128xbf16>
    %50 = arith.extf %49 : vector<256x128xbf16> to vector<256x128xf32>
    %51 = arith.addf %48, %50 : vector<256x128xf32>
    %52 = arith.truncf %51 : vector<256x128xf32> to vector<256x128xbf16>
    %c0_32 = arith.constant 0 : index
    %c0_33 = arith.constant 0 : index
    %53 = vector.load %arg12[%c0_32, %c0_33] : memref<256x128xbf16, #tpu.memory_space<vmem>>, vector<256x128xbf16>
    tpu.vector_store %arg12[%c0_32, %c0_33], %52 {strides = array<i32>} : memref<256x128xbf16, #tpu.memory_space<vmem>>, vector<256x128xbf16>,
    return
  }
  func.func @transform_0(%arg0: i32) -> (i32, i32) {
    %c0_i32 = arith.constant 0 : i32
    %c0_i32_0 = arith.constant 0 : i32
    return %arg0, %c0_i32 : i32, i32
  }
  func.func @transform_1(%arg0: i32) -> (i32, i32) {
    %c0_i32 = arith.constant 0 : i32
    %c0_i32_0 = arith.constant 0 : i32
    return %arg0, %c0_i32 : i32, i32
  }
  func.func @transform_2(%arg0: i32) -> (i32, i32) {
    %c0_i32 = arith.constant 0 : i32
    %c0_i32_0 = arith.constant 0 : i32
    return %arg0, %c0_i32 : i32, i32
  }
  func.func @transform_3(%arg0: i32) -> (i32, i32) {
    %c0_i32 = arith.constant 0 : i32
    %c0_i32_0 = arith.constant 0 : i32
    %c0_i32_1 = arith.constant 0 : i32
    return %c0_i32, %c0_i32_0 : i32, i32
  }
  func.func @transform_4(%arg0: i32) -> (i32, i32) {
    %c0_i32 = arith.constant 0 : i32
    %c0_i32_0 = arith.constant 0 : i32
    %c0_i32_1 = arith.constant 0 : i32
    return %c0_i32, %c0_i32_0 : i32, i32
  }
  func.func @transform_5(%arg0: i32) -> (i32, i32) {
    %c0_i32 = arith.constant 0 : i32
    %c0_i32_0 = arith.constant 0 : i32
    %c0_i32_1 = arith.constant 0 : i32
    return %c0_i32, %c0_i32_0 : i32, i32
  }
  func.func @transform_6(%arg0: i32) -> (i32, i32) {
    %c0_i32 = arith.constant 0 : i32
    %c0_i32_0 = arith.constant 0 : i32
    %c0_i32_1 = arith.constant 0 : i32
    return %c0_i32, %c0_i32_0 : i32, i32
  }
  func.func @transform_7(%arg0: i32) -> (i32, i32) {
    %c0_i32 = arith.constant 0 : i32
    %c0_i32_0 = arith.constant 0 : i32
    %c0_i32_1 = arith.constant 0 : i32
    return %c0_i32, %c0_i32_0 : i32, i32
  }
  func.func @transform_8(%arg0: i32) -> (i32, i32) {
    %c0_i32 = arith.constant 0 : i32
    %c0_i32_0 = arith.constant 0 : i32
    %c0_i32_1 = arith.constant 0 : i32
    return %c0_i32, %c0_i32_0 : i32, i32
  }
  func.func @transform_9(%arg0: i32) -> (i32, i32) {
    %c0_i32 = arith.constant 0 : i32
    %c0_i32_0 = arith.constant 0 : i32
    %c0_i32_1 = arith.constant 0 : i32
    return %c0_i32, %c0_i32_0 : i32, i32
  }
  func.func @transform_10(%arg0: i32) -> (i32, i32) {
    %c0_i32 = arith.constant 0 : i32
    %c0_i32_0 = arith.constant 0 : i32
    %c0_i32_1 = arith.constant 0 : i32
    return %c0_i32, %c0_i32_0 : i32, i32
  }
  func.func @transform_11(%arg0: i32) -> (i32, i32) {
    %c0_i32 = arith.constant 0 : i32
    %c0_i32_0 = arith.constant 0 : i32
    return %arg0, %c0_i32 : i32, i32
  }
}

module attributes {stable_mosaic.version = 11 : i64} {
  func.func @_segsum_kernel(%arg0: i32, %arg1: memref<2xi32, #tpu.memory_space<smem>>, %arg2: memref<2xi32, #tpu.memory_space<smem>>, %arg3: memref<2xi32, #tpu.memory_space<smem>>, %arg4: memref<2xi32, #tpu.memory_space<smem>>, %arg5: memref<1x256xi32, #tpu.memory_space<vmem>>, %arg6: memref<256x128xbf16, #tpu.memory_space<vmem>>, %arg7: memref<64x128xbf16, #tpu.memory_space<vmem>>, %arg8: memref<64x128xf32, #tpu.memory_space<vmem>>) attributes {dimension_semantics = [#tpu.dimension_semantics<arbitrary>], iteration_bounds = array<i64: 2>, scalar_prefetch = 4 : i64, scratch_operands = 1 : i64, tpu.core_type = #tpu.core_type<tc>, window_params = [{transform_indices = @transform_0, window_bounds = array<i64: 1, 256>}, {transform_indices = @transform_1, window_bounds = array<i64: 256, 128>}, {transform_indices = @transform_2, window_bounds = array<i64: 64, 128>}]} {
    %0 = arith.index_cast %arg0 : i32 to index
    %1 = memref.load %arg3[%0] : memref<2xi32, #tpu.memory_space<smem>>
    %c1_i32 = arith.constant 1 : i32
    %2 = arith.cmpi eq, %1, %c1_i32 : i32
    %3 = arith.extui %2 : i1 to i32
    %c0_i32 = arith.constant 0 : i32
    %4 = arith.cmpi ne, %3, %c0_i32 : i32
    scf.if %4 {
      %cst = arith.constant 0.000000e+00 : f32
      %13 = vector.broadcast %cst : f32 to vector<64x128xf32>
      %c0_5 = arith.constant 0 : index
      %c0_6 = arith.constant 0 : index
      %14 = vector.load %arg8[%c0_5, %c0_6] : memref<64x128xf32, #tpu.memory_space<vmem>>, vector<64x128xf32>
      tpu.vector_store %arg8[%c0_5, %c0_6], %13 {strides = array<i32>} : memref<64x128xf32, #tpu.memory_space<vmem>>, vector<64x128xf32>,
    } else {
    }
    %5 = arith.index_cast %arg0 : i32 to index
    %6 = memref.load %arg4[%5] : memref<2xi32, #tpu.memory_space<smem>>
    %c1_i32_0 = arith.constant 1 : i32
    %7 = arith.cmpi eq, %6, %c1_i32_0 : i32
    %8 = arith.extui %7 : i1 to i32
    %c0_i32_1 = arith.constant 0 : i32
    %9 = arith.cmpi ne, %8, %c0_i32_1 : i32
    scf.if %9 {
      %13 = arith.index_cast %arg0 : i32 to index
      %14 = memref.load %arg1[%13] : memref<2xi32, #tpu.memory_space<smem>>
      %c64_i32 = arith.constant 64 : i32
      %15 = arith.muli %14, %c64_i32 : i32
      %c0_5 = arith.constant 0 : index
      %c0_6 = arith.constant 0 : index
      %16 = vector.load %arg5[%c0_5, %c0_6] : memref<1x256xi32, #tpu.memory_space<vmem>>, vector<1x256xi32>
      %17 = vector.broadcast %15 : i32 to vector<1x256xi32>
      %18 = arith.subi %16, %17 : vector<1x256xi32>
      %19 = tpu.iota {dimensions = array<i32: 0>} : vector<64x256xi32>
      %20 = vector.broadcast %18 : vector<1x256xi32> to vector<64x256xi32>
      %21 = arith.cmpi eq, %19, %20 : vector<64x256xi32>
      %22 = arith.extui %21 : vector<64x256xi1> to vector<64x256xi32>
      %23 = arith.sitofp %22 : vector<64x256xi32> to vector<64x256xf32>
      %24 = arith.truncf %23 : vector<64x256xf32> to vector<64x256xbf16>
      %c0_7 = arith.constant 0 : index
      %c0_8 = arith.constant 0 : index
      %25 = vector.load %arg8[%c0_7, %c0_8] : memref<64x128xf32, #tpu.memory_space<vmem>>, vector<64x128xf32>
      %c0_9 = arith.constant 0 : index
      %c0_10 = arith.constant 0 : index
      %26 = vector.load %arg6[%c0_9, %c0_10] : memref<256x128xbf16, #tpu.memory_space<vmem>>, vector<256x128xbf16>
      %cst = arith.constant dense<0.000000e+00> : vector<64x128xf32>
      %27 = tpu.matmul %24, %26, %cst {dimension_numbers = #tpu.dot_dimension_numbers<[1], [0], [0], [1], [0, 0, 1, 1], [], []>} : vector<64x256xbf16>, vector<256x128xbf16>, vector<64x128xf32> -> vector<64x128xf32>
      %28 = arith.addf %25, %27 : vector<64x128xf32>
      %c0_11 = arith.constant 0 : index
      %c0_12 = arith.constant 0 : index
      %29 = vector.load %arg8[%c0_11, %c0_12] : memref<64x128xf32, #tpu.memory_space<vmem>>, vector<64x128xf32>
      tpu.vector_store %arg8[%c0_11, %c0_12], %28 {strides = array<i32>} : memref<64x128xf32, #tpu.memory_space<vmem>>, vector<64x128xf32>,
    } else {
    }
    %c0 = arith.constant 0 : index
    %c0_2 = arith.constant 0 : index
    %10 = vector.load %arg8[%c0, %c0_2] : memref<64x128xf32, #tpu.memory_space<vmem>>, vector<64x128xf32>
    %11 = arith.truncf %10 : vector<64x128xf32> to vector<64x128xbf16>
    %c0_3 = arith.constant 0 : index
    %c0_4 = arith.constant 0 : index
    %12 = vector.load %arg7[%c0_3, %c0_4] : memref<64x128xbf16, #tpu.memory_space<vmem>>, vector<64x128xbf16>
    tpu.vector_store %arg7[%c0_3, %c0_4], %11 {strides = array<i32>} : memref<64x128xbf16, #tpu.memory_space<vmem>>, vector<64x128xbf16>,
    return
  }
  func.func @transform_0(%arg0: i32, %arg1: memref<2xi32, #tpu.memory_space<smem>>, %arg2: memref<2xi32, #tpu.memory_space<smem>>, %arg3: memref<2xi32, #tpu.memory_space<smem>>, %arg4: memref<2xi32, #tpu.memory_space<smem>>) -> (i32, i32) {
    %0 = arith.index_cast %arg0 : i32 to index
    %1 = memref.load %arg2[%0] : memref<2xi32, #tpu.memory_space<smem>>
    %c0_i32 = arith.constant 0 : i32
    %c0_i32_0 = arith.constant 0 : i32
    return %c0_i32, %1 : i32, i32
  }
  func.func @transform_1(%arg0: i32, %arg1: memref<2xi32, #tpu.memory_space<smem>>, %arg2: memref<2xi32, #tpu.memory_space<smem>>, %arg3: memref<2xi32, #tpu.memory_space<smem>>, %arg4: memref<2xi32, #tpu.memory_space<smem>>) -> (i32, i32) {
    %0 = arith.index_cast %arg0 : i32 to index
    %1 = memref.load %arg2[%0] : memref<2xi32, #tpu.memory_space<smem>>
    %c0_i32 = arith.constant 0 : i32
    %c0_i32_0 = arith.constant 0 : i32
    return %1, %c0_i32 : i32, i32
  }
  func.func @transform_2(%arg0: i32, %arg1: memref<2xi32, #tpu.memory_space<smem>>, %arg2: memref<2xi32, #tpu.memory_space<smem>>, %arg3: memref<2xi32, #tpu.memory_space<smem>>, %arg4: memref<2xi32, #tpu.memory_space<smem>>) -> (i32, i32) {
    %0 = arith.index_cast %arg0 : i32 to index
    %1 = memref.load %arg1[%0] : memref<2xi32, #tpu.memory_space<smem>>
    %c0_i32 = arith.constant 0 : i32
    %c0_i32_0 = arith.constant 0 : i32
    return %1, %c0_i32 : i32, i32
  }
}

module attributes {stable_mosaic.version = 11 : i64} {
  func.func @_fused_mlp_kernel(%arg0: i32, %arg1: memref<64x128xbf16, #tpu.memory_space<vmem>>, %arg2: memref<64x128xbf16, #tpu.memory_space<vmem>>, %arg3: memref<256x128xbf16, #tpu.memory_space<vmem>>, %arg4: memref<1x128xf32, #tpu.memory_space<vmem>>, %arg5: memref<128x128xbf16, #tpu.memory_space<vmem>>, %arg6: memref<1x128xf32, #tpu.memory_space<vmem>>, %arg7: memref<128x128xbf16, #tpu.memory_space<vmem>>, %arg8: memref<1x128xf32, #tpu.memory_space<vmem>>, %arg9: memref<1x128xf32, #tpu.memory_space<vmem>>, %arg10: memref<1x128xf32, #tpu.memory_space<vmem>>, %arg11: memref<64x128xbf16, #tpu.memory_space<vmem>>) attributes {dimension_semantics = [#tpu.dimension_semantics<parallel>], iteration_bounds = array<i64: 1>, scalar_prefetch = 0 : i64, scratch_operands = 0 : i64, tpu.core_type = #tpu.core_type<tc>, window_params = [{transform_indices = @transform_0, window_bounds = array<i64: 64, 128>}, {transform_indices = @transform_1, window_bounds = array<i64: 64, 128>}, {pipeline_mode = #tpu.pipeline_mode<synchronous>, transform_indices = @transform_2, window_bounds = array<i64: 256, 128>}, {pipeline_mode = #tpu.pipeline_mode<synchronous>, transform_indices = @transform_3, window_bounds = array<i64: 1, 128>}, {pipeline_mode = #tpu.pipeline_mode<synchronous>, transform_indices = @transform_4, window_bounds = array<i64: 128, 128>}, {pipeline_mode = #tpu.pipeline_mode<synchronous>, transform_indices = @transform_5, window_bounds = array<i64: 1, 128>}, {pipeline_mode = #tpu.pipeline_mode<synchronous>, transform_indices = @transform_6, window_bounds = array<i64: 128, 128>}, {pipeline_mode = #tpu.pipeline_mode<synchronous>, transform_indices = @transform_7, window_bounds = array<i64: 1, 128>}, {pipeline_mode = #tpu.pipeline_mode<synchronous>, transform_indices = @transform_8, window_bounds = array<i64: 1, 128>}, {pipeline_mode = #tpu.pipeline_mode<synchronous>, transform_indices = @transform_9, window_bounds = array<i64: 1, 128>}, {transform_indices = @transform_10, window_bounds = array<i64: 64, 128>}]} {
    %c0 = arith.constant 0 : index
    %c0_0 = arith.constant 0 : index
    %0 = vector.load %arg1[%c0, %c0_0] : memref<64x128xbf16, #tpu.memory_space<vmem>>, vector<64x128xbf16>
    %c0_1 = arith.constant 0 : index
    %c0_2 = arith.constant 0 : index
    %1 = vector.load %arg2[%c0_1, %c0_2] : memref<64x128xbf16, #tpu.memory_space<vmem>>, vector<64x128xbf16>
    %2 = tpu.concatenate %0, %1 in 1 : vector<64x128xbf16>, vector<64x128xbf16> -> vector<64x256xbf16>
    %c0_3 = arith.constant 0 : index
    %c0_4 = arith.constant 0 : index
    %3 = vector.load %arg3[%c0_3, %c0_4] : memref<256x128xbf16, #tpu.memory_space<vmem>>, vector<256x128xbf16>
    %cst = arith.constant dense<0.000000e+00> : vector<64x128xf32>
    %4 = tpu.matmul %2, %3, %cst {dimension_numbers = #tpu.dot_dimension_numbers<[1], [0], [0], [1], [0, 0, 1, 1], [], []>} : vector<64x256xbf16>, vector<256x128xbf16>, vector<64x128xf32> -> vector<64x128xf32>
    %c0_5 = arith.constant 0 : index
    %c0_6 = arith.constant 0 : index
    %5 = vector.load %arg4[%c0_5, %c0_6] : memref<1x128xf32, #tpu.memory_space<vmem>>, vector<1x128xf32>
    %6 = vector.broadcast %5 : vector<1x128xf32> to vector<64x128xf32>
    %7 = arith.addf %4, %6 : vector<64x128xf32>
    %cst_7 = arith.constant 0.000000e+00 : f32
    %8 = vector.broadcast %cst_7 : f32 to vector<64x128xf32>
    %9 = arith.maximumf %7, %8 : vector<64x128xf32>
    %10 = arith.truncf %9 : vector<64x128xf32> to vector<64x128xbf16>
    %c0_8 = arith.constant 0 : index
    %c0_9 = arith.constant 0 : index
    %11 = vector.load %arg5[%c0_8, %c0_9] : memref<128x128xbf16, #tpu.memory_space<vmem>>, vector<128x128xbf16>
    %cst_10 = arith.constant dense<0.000000e+00> : vector<64x128xf32>
    %12 = tpu.matmul %10, %11, %cst_10 {dimension_numbers = #tpu.dot_dimension_numbers<[1], [0], [0], [1], [0, 0, 1, 1], [], []>} : vector<64x128xbf16>, vector<128x128xbf16>, vector<64x128xf32> -> vector<64x128xf32>
    %c0_11 = arith.constant 0 : index
    %c0_12 = arith.constant 0 : index
    %13 = vector.load %arg6[%c0_11, %c0_12] : memref<1x128xf32, #tpu.memory_space<vmem>>, vector<1x128xf32>
    %14 = vector.broadcast %13 : vector<1x128xf32> to vector<64x128xf32>
    %15 = arith.addf %12, %14 : vector<64x128xf32>
    %cst_13 = arith.constant 0.000000e+00 : f32
    %16 = vector.broadcast %cst_13 : f32 to vector<64x128xf32>
    %17 = arith.maximumf %15, %16 : vector<64x128xf32>
    %18 = arith.truncf %17 : vector<64x128xf32> to vector<64x128xbf16>
    %c0_14 = arith.constant 0 : index
    %c0_15 = arith.constant 0 : index
    %19 = vector.load %arg7[%c0_14, %c0_15] : memref<128x128xbf16, #tpu.memory_space<vmem>>, vector<128x128xbf16>
    %cst_16 = arith.constant dense<0.000000e+00> : vector<64x128xf32>
    %20 = tpu.matmul %18, %19, %cst_16 {dimension_numbers = #tpu.dot_dimension_numbers<[1], [0], [0], [1], [0, 0, 1, 1], [], []>} : vector<64x128xbf16>, vector<128x128xbf16>, vector<64x128xf32> -> vector<64x128xf32>
    %c0_17 = arith.constant 0 : index
    %c0_18 = arith.constant 0 : index
    %21 = vector.load %arg8[%c0_17, %c0_18] : memref<1x128xf32, #tpu.memory_space<vmem>>, vector<1x128xf32>
    %22 = vector.broadcast %21 : vector<1x128xf32> to vector<64x128xf32>
    %23 = arith.addf %20, %22 : vector<64x128xf32>
    %cst_19 = arith.constant dense<0.000000e+00> : vector<64xf32>
    %24 = vector.multi_reduction <add>, %23, %cst_19 [1] : vector<64x128xf32> to vector<64xf32>
    %25 = vector.shape_cast %24 : vector<64xf32> to vector<64x1xf32>
    %cst_20 = arith.constant 1.280000e+02 : f32
    %26 = vector.broadcast %cst_20 : f32 to vector<64x1xf32>
    %27 = arith.divf %25, %26 : vector<64x1xf32>
    %28 = vector.broadcast %27 : vector<64x1xf32> to vector<64x128xf32>
    %29 = arith.subf %23, %28 : vector<64x128xf32>
    %30 = arith.mulf %29, %29 : vector<64x128xf32>
    %cst_21 = arith.constant dense<0.000000e+00> : vector<64xf32>
    %31 = vector.multi_reduction <add>, %30, %cst_21 [1] : vector<64x128xf32> to vector<64xf32>
    %32 = vector.shape_cast %31 : vector<64xf32> to vector<64x1xf32>
    %cst_22 = arith.constant 1.280000e+02 : f32
    %33 = vector.broadcast %cst_22 : f32 to vector<64x1xf32>
    %34 = arith.divf %32, %33 : vector<64x1xf32>
    %35 = vector.broadcast %27 : vector<64x1xf32> to vector<64x128xf32>
    %36 = arith.subf %23, %35 : vector<64x128xf32>
    %cst_23 = arith.constant 9.99999974E-6 : f32
    %37 = vector.broadcast %cst_23 : f32 to vector<64x1xf32>
    %38 = arith.addf %34, %37 : vector<64x1xf32>
    %39 = math.rsqrt %38 : vector<64x1xf32>
    %40 = vector.broadcast %39 : vector<64x1xf32> to vector<64x128xf32>
    %41 = arith.mulf %36, %40 : vector<64x128xf32>
    %c0_24 = arith.constant 0 : index
    %c0_25 = arith.constant 0 : index
    %42 = vector.load %arg9[%c0_24, %c0_25] : memref<1x128xf32, #tpu.memory_space<vmem>>, vector<1x128xf32>
    %43 = vector.broadcast %42 : vector<1x128xf32> to vector<64x128xf32>
    %44 = arith.mulf %41, %43 : vector<64x128xf32>
    %c0_26 = arith.constant 0 : index
    %c0_27 = arith.constant 0 : index
    %45 = vector.load %arg10[%c0_26, %c0_27] : memref<1x128xf32, #tpu.memory_space<vmem>>, vector<1x128xf32>
    %46 = vector.broadcast %45 : vector<1x128xf32> to vector<64x128xf32>
    %47 = arith.addf %44, %46 : vector<64x128xf32>
    %c0_28 = arith.constant 0 : index
    %c0_29 = arith.constant 0 : index
    %48 = vector.load %arg1[%c0_28, %c0_29] : memref<64x128xbf16, #tpu.memory_space<vmem>>, vector<64x128xbf16>
    %49 = arith.extf %48 : vector<64x128xbf16> to vector<64x128xf32>
    %50 = arith.addf %47, %49 : vector<64x128xf32>
    %51 = arith.truncf %50 : vector<64x128xf32> to vector<64x128xbf16>
    %c0_30 = arith.constant 0 : index
    %c0_31 = arith.constant 0 : index
    %52 = vector.load %arg11[%c0_30, %c0_31] : memref<64x128xbf16, #tpu.memory_space<vmem>>, vector<64x128xbf16>
    tpu.vector_store %arg11[%c0_30, %c0_31], %51 {strides = array<i32>} : memref<64x128xbf16, #tpu.memory_space<vmem>>, vector<64x128xbf16>,
    return
  }
  func.func @transform_0(%arg0: i32) -> (i32, i32) {
    %c0_i32 = arith.constant 0 : i32
    %c0_i32_0 = arith.constant 0 : i32
    return %arg0, %c0_i32 : i32, i32
  }
  func.func @transform_1(%arg0: i32) -> (i32, i32) {
    %c0_i32 = arith.constant 0 : i32
    %c0_i32_0 = arith.constant 0 : i32
    return %arg0, %c0_i32 : i32, i32
  }
  func.func @transform_2(%arg0: i32) -> (i32, i32) {
    %c0_i32 = arith.constant 0 : i32
    %c0_i32_0 = arith.constant 0 : i32
    %c0_i32_1 = arith.constant 0 : i32
    return %c0_i32, %c0_i32_0 : i32, i32
  }
  func.func @transform_3(%arg0: i32) -> (i32, i32) {
    %c0_i32 = arith.constant 0 : i32
    %c0_i32_0 = arith.constant 0 : i32
    %c0_i32_1 = arith.constant 0 : i32
    return %c0_i32, %c0_i32_0 : i32, i32
  }
  func.func @transform_4(%arg0: i32) -> (i32, i32) {
    %c0_i32 = arith.constant 0 : i32
    %c0_i32_0 = arith.constant 0 : i32
    %c0_i32_1 = arith.constant 0 : i32
    return %c0_i32, %c0_i32_0 : i32, i32
  }
  func.func @transform_5(%arg0: i32) -> (i32, i32) {
    %c0_i32 = arith.constant 0 : i32
    %c0_i32_0 = arith.constant 0 : i32
    %c0_i32_1 = arith.constant 0 : i32
    return %c0_i32, %c0_i32_0 : i32, i32
  }
  func.func @transform_6(%arg0: i32) -> (i32, i32) {
    %c0_i32 = arith.constant 0 : i32
    %c0_i32_0 = arith.constant 0 : i32
    %c0_i32_1 = arith.constant 0 : i32
    return %c0_i32, %c0_i32_0 : i32, i32
  }
  func.func @transform_7(%arg0: i32) -> (i32, i32) {
    %c0_i32 = arith.constant 0 : i32
    %c0_i32_0 = arith.constant 0 : i32
    %c0_i32_1 = arith.constant 0 : i32
    return %c0_i32, %c0_i32_0 : i32, i32
  }
  func.func @transform_8(%arg0: i32) -> (i32, i32) {
    %c0_i32 = arith.constant 0 : i32
    %c0_i32_0 = arith.constant 0 : i32
    %c0_i32_1 = arith.constant 0 : i32
    return %c0_i32, %c0_i32_0 : i32, i32
  }
  func.func @transform_9(%arg0: i32) -> (i32, i32) {
    %c0_i32 = arith.constant 0 : i32
    %c0_i32_0 = arith.constant 0 : i32
    %c0_i32_1 = arith.constant 0 : i32
    return %c0_i32, %c0_i32_0 : i32, i32
  }
  func.func @transform_10(%arg0: i32) -> (i32, i32) {
    %c0_i32 = arith.constant 0 : i32
    %c0_i32_0 = arith.constant 0 : i32
    return %arg0, %c0_i32 : i32, i32
  }
}

module attributes {stable_mosaic.version = 11 : i64} {
  func.func @_fused_mlp_kernel(%arg0: i32, %arg1: memref<64x128xbf16, #tpu.memory_space<vmem>>, %arg2: memref<128x128xbf16, #tpu.memory_space<vmem>>, %arg3: memref<1x128xf32, #tpu.memory_space<vmem>>, %arg4: memref<128x128xbf16, #tpu.memory_space<vmem>>, %arg5: memref<1x128xf32, #tpu.memory_space<vmem>>, %arg6: memref<128x128xbf16, #tpu.memory_space<vmem>>, %arg7: memref<1x128xf32, #tpu.memory_space<vmem>>, %arg8: memref<64x128xf32, #tpu.memory_space<vmem>>) attributes {dimension_semantics = [#tpu.dimension_semantics<parallel>], iteration_bounds = array<i64: 1>, scalar_prefetch = 0 : i64, scratch_operands = 0 : i64, tpu.core_type = #tpu.core_type<tc>, window_params = [{transform_indices = @transform_0, window_bounds = array<i64: 64, 128>}, {pipeline_mode = #tpu.pipeline_mode<synchronous>, transform_indices = @transform_1, window_bounds = array<i64: 128, 128>}, {pipeline_mode = #tpu.pipeline_mode<synchronous>, transform_indices = @transform_2, window_bounds = array<i64: 1, 128>}, {pipeline_mode = #tpu.pipeline_mode<synchronous>, transform_indices = @transform_3, window_bounds = array<i64: 128, 128>}, {pipeline_mode = #tpu.pipeline_mode<synchronous>, transform_indices = @transform_4, window_bounds = array<i64: 1, 128>}, {pipeline_mode = #tpu.pipeline_mode<synchronous>, transform_indices = @transform_5, window_bounds = array<i64: 128, 128>}, {pipeline_mode = #tpu.pipeline_mode<synchronous>, transform_indices = @transform_6, window_bounds = array<i64: 1, 128>}, {transform_indices = @transform_7, window_bounds = array<i64: 64, 128>}]} {
    %c0 = arith.constant 0 : index
    %c0_0 = arith.constant 0 : index
    %0 = vector.load %arg1[%c0, %c0_0] : memref<64x128xbf16, #tpu.memory_space<vmem>>, vector<64x128xbf16>
    %c0_1 = arith.constant 0 : index
    %c0_2 = arith.constant 0 : index
    %1 = vector.load %arg2[%c0_1, %c0_2] : memref<128x128xbf16, #tpu.memory_space<vmem>>, vector<128x128xbf16>
    %cst = arith.constant dense<0.000000e+00> : vector<64x128xf32>
    %2 = tpu.matmul %0, %1, %cst {dimension_numbers = #tpu.dot_dimension_numbers<[1], [0], [0], [1], [0, 0, 1, 1], [], []>} : vector<64x128xbf16>, vector<128x128xbf16>, vector<64x128xf32> -> vector<64x128xf32>
    %c0_3 = arith.constant 0 : index
    %c0_4 = arith.constant 0 : index
    %3 = vector.load %arg3[%c0_3, %c0_4] : memref<1x128xf32, #tpu.memory_space<vmem>>, vector<1x128xf32>
    %4 = vector.broadcast %3 : vector<1x128xf32> to vector<64x128xf32>
    %5 = arith.addf %2, %4 : vector<64x128xf32>
    %cst_5 = arith.constant 0.000000e+00 : f32
    %6 = vector.broadcast %cst_5 : f32 to vector<64x128xf32>
    %7 = arith.maximumf %5, %6 : vector<64x128xf32>
    %8 = arith.truncf %7 : vector<64x128xf32> to vector<64x128xbf16>
    %c0_6 = arith.constant 0 : index
    %c0_7 = arith.constant 0 : index
    %9 = vector.load %arg4[%c0_6, %c0_7] : memref<128x128xbf16, #tpu.memory_space<vmem>>, vector<128x128xbf16>
    %cst_8 = arith.constant dense<0.000000e+00> : vector<64x128xf32>
    %10 = tpu.matmul %8, %9, %cst_8 {dimension_numbers = #tpu.dot_dimension_numbers<[1], [0], [0], [1], [0, 0, 1, 1], [], []>} : vector<64x128xbf16>, vector<128x128xbf16>, vector<64x128xf32> -> vector<64x128xf32>
    %c0_9 = arith.constant 0 : index
    %c0_10 = arith.constant 0 : index
    %11 = vector.load %arg5[%c0_9, %c0_10] : memref<1x128xf32, #tpu.memory_space<vmem>>, vector<1x128xf32>
    %12 = vector.broadcast %11 : vector<1x128xf32> to vector<64x128xf32>
    %13 = arith.addf %10, %12 : vector<64x128xf32>
    %cst_11 = arith.constant 0.000000e+00 : f32
    %14 = vector.broadcast %cst_11 : f32 to vector<64x128xf32>
    %15 = arith.maximumf %13, %14 : vector<64x128xf32>
    %16 = arith.truncf %15 : vector<64x128xf32> to vector<64x128xbf16>
    %c0_12 = arith.constant 0 : index
    %c0_13 = arith.constant 0 : index
    %17 = vector.load %arg6[%c0_12, %c0_13] : memref<128x128xbf16, #tpu.memory_space<vmem>>, vector<128x128xbf16>
    %cst_14 = arith.constant dense<0.000000e+00> : vector<64x128xf32>
    %18 = tpu.matmul %16, %17, %cst_14 {dimension_numbers = #tpu.dot_dimension_numbers<[1], [0], [0], [1], [0, 0, 1, 1], [], []>} : vector<64x128xbf16>, vector<128x128xbf16>, vector<64x128xf32> -> vector<64x128xf32>
    %c0_15 = arith.constant 0 : index
    %c0_16 = arith.constant 0 : index
    %19 = vector.load %arg7[%c0_15, %c0_16] : memref<1x128xf32, #tpu.memory_space<vmem>>, vector<1x128xf32>
    %20 = vector.broadcast %19 : vector<1x128xf32> to vector<64x128xf32>
    %21 = arith.addf %18, %20 : vector<64x128xf32>
    %c0_17 = arith.constant 0 : index
    %c0_18 = arith.constant 0 : index
    %22 = vector.load %arg8[%c0_17, %c0_18] : memref<64x128xf32, #tpu.memory_space<vmem>>, vector<64x128xf32>
    tpu.vector_store %arg8[%c0_17, %c0_18], %21 {strides = array<i32>} : memref<64x128xf32, #tpu.memory_space<vmem>>, vector<64x128xf32>,
    return
  }
  func.func @transform_0(%arg0: i32) -> (i32, i32) {
    %c0_i32 = arith.constant 0 : i32
    %c0_i32_0 = arith.constant 0 : i32
    return %arg0, %c0_i32 : i32, i32
  }
  func.func @transform_1(%arg0: i32) -> (i32, i32) {
    %c0_i32 = arith.constant 0 : i32
    %c0_i32_0 = arith.constant 0 : i32
    %c0_i32_1 = arith.constant 0 : i32
    return %c0_i32, %c0_i32_0 : i32, i32
  }
  func.func @transform_2(%arg0: i32) -> (i32, i32) {
    %c0_i32 = arith.constant 0 : i32
    %c0_i32_0 = arith.constant 0 : i32
    %c0_i32_1 = arith.constant 0 : i32
    return %c0_i32, %c0_i32_0 : i32, i32
  }
  func.func @transform_3(%arg0: i32) -> (i32, i32) {
    %c0_i32 = arith.constant 0 : i32
    %c0_i32_0 = arith.constant 0 : i32
    %c0_i32_1 = arith.constant 0 : i32
    return %c0_i32, %c0_i32_0 : i32, i32
  }
  func.func @transform_4(%arg0: i32) -> (i32, i32) {
    %c0_i32 = arith.constant 0 : i32
    %c0_i32_0 = arith.constant 0 : i32
    %c0_i32_1 = arith.constant 0 : i32
    return %c0_i32, %c0_i32_0 : i32, i32
  }
  func.func @transform_5(%arg0: i32) -> (i32, i32) {
    %c0_i32 = arith.constant 0 : i32
    %c0_i32_0 = arith.constant 0 : i32
    %c0_i32_1 = arith.constant 0 : i32
    return %c0_i32, %c0_i32_0 : i32, i32
  }
  func.func @transform_6(%arg0: i32) -> (i32, i32) {
    %c0_i32 = arith.constant 0 : i32
    %c0_i32_0 = arith.constant 0 : i32
    %c0_i32_1 = arith.constant 0 : i32
    return %c0_i32, %c0_i32_0 : i32, i32
  }
  func.func @transform_7(%arg0: i32) -> (i32, i32) {
    %c0_i32 = arith.constant 0 : i32
    %c0_i32_0 = arith.constant 0 : i32
    return %arg0, %c0_i32 : i32, i32
  }
}

</mosaic_0001>

<llo_original>
// kernel: flag_model_forward.9
$region0: #{flag_model_forward.9}
  #allocation0 [shape = 'u32[]', space=smem, size = 0x4, offset = 0x4, fixed_abs, tag = 'smem constant byte address 0x4 - core index']
  #allocation1 [shape = 'u32[144,128]{1,0:T(1,128)}', space=vmem, size = 0x12000, scoped, tag = 'internal scratch']
  %s0 = inlined_call_operand.vmem [shape: f32[64,128], index: 0, kind: input, shape index: {}]
  %s1 = inlined_call_operand.vmem [shape: bf16[128,128], index: 1, kind: input, shape index: {}]
  %s2 = inlined_call_operand.vmem [shape: f32[1,128], index: 2, kind: input, shape index: {}]
  %s3 = inlined_call_operand.vmem [shape: bf16[128,128], index: 3, kind: input, shape index: {}]
  %s4 = inlined_call_operand.vmem [shape: f32[1,128], index: 4, kind: input, shape index: {}]
  %s5 = inlined_call_operand.vmem [shape: bf16[128,128], index: 5, kind: input, shape index: {}]
  %s6 = inlined_call_operand.vmem [shape: f32[1,128], index: 6, kind: input, shape index: {}]
  %s7 = inlined_call_operand.vmem [shape: f32[1,128], index: 7, kind: input, shape index: {}]
  %s8 = inlined_call_operand.vmem [shape: f32[1,128], index: 8, kind: input, shape index: {}]
  %s9 = inlined_call_operand.vmem [shape: bf16[64,128], index: 9, kind: output, shape index: {}]
  %s10 = sld [smem:[#allocation0]]
  $region46: #{flag_model_forward.9} parent=0
    _
  %s12 = ssub.s32 1, %s10
  %s13 = scalar_select 0, %s12, %s10
  // Predicated region
  $region2: #{flag_model_forward.9} parent=0 // pred_check
    _
  $region3: #{flag_model_forward.9} parent=0 // pred_check_branch
    %15 = sbr.rel (0) target = $region5
  $region4: #{flag_model_forward.9} parent=0 // pred_region
    _
  $region5: #{flag_model_forward.9} parent=0 // pred_fallthru
    _
  // Predicated region
  $region6: #{flag_model_forward.9} parent=0 // pred_check
    _
  $region7: #{flag_model_forward.9} parent=0 // pred_check_branch
    %17 = sbr.rel (0) target = $region9
  $region8: #{flag_model_forward.9} parent=0 // pred_region
    _
  $region9: #{flag_model_forward.9} parent=0 // pred_fallthru
    _
  // Predicated region
  $region10: #{flag_model_forward.9} parent=0 // pred_check
    _
  $region11: #{flag_model_forward.9} parent=0 // pred_check_branch
    %19 = sbr.rel (0) target = $region13
  $region12: #{flag_model_forward.9} parent=0 // pred_region
    _
  $region13: #{flag_model_forward.9} parent=0 // pred_fallthru
    _
  // Predicated region
  $region14: #{flag_model_forward.9} parent=0 // pred_check
    _
  $region15: #{flag_model_forward.9} parent=0 // pred_check_branch
    %21 = sbr.rel (0) target = $region17
  $region16: #{flag_model_forward.9} parent=0 // pred_region
    _
  $region17: #{flag_model_forward.9} parent=0 // pred_fallthru
    _
  // Predicated region
  $region18: #{flag_model_forward.9} parent=0 // pred_check
    _
  $region19: #{flag_model_forward.9} parent=0 // pred_check_branch
    %23 = sbr.rel (0) target = $region21
  $region20: #{flag_model_forward.9} parent=0 // pred_region
    _
  $region21: #{flag_model_forward.9} parent=0 // pred_fallthru
    _
  // Predicated region
  $region22: #{flag_model_forward.9} parent=0 // pred_check
    _
  $region23: #{flag_model_forward.9} parent=0 // pred_check_branch
    %25 = sbr.rel (0) target = $region25
  $region24: #{flag_model_forward.9} parent=0 // pred_region
    _
  $region25: #{flag_model_forward.9} parent=0 // pred_fallthru
    _
  // Predicated region
  $region26: #{flag_model_forward.9} parent=0 // pred_check
    _
  $region27: #{flag_model_forward.9} parent=0 // pred_check_branch
    %27 = sbr.rel (0) target = $region29
  $region28: #{flag_model_forward.9} parent=0 // pred_region
    _
  $region29: #{flag_model_forward.9} parent=0 // pred_fallthru
    _
  // Predicated region
  $region30: #{flag_model_forward.9} parent=0 // pred_check
    _
  $region31: #{flag_model_forward.9} parent=0 // pred_check_branch
    %29 = sbr.rel (0) target = $region33
  $region32: #{flag_model_forward.9} parent=0 // pred_region
    _
  $region33: #{flag_model_forward.9} parent=0 // pred_fallthru
    _
  // Predicated region
  $region34: #{flag_model_forward.9} parent=0 // pred_check
    _
  $region35: #{flag_model_forward.9} parent=0 // pred_check_branch
    %31 = sbr.rel (0) target = $region37
  $region36: #{flag_model_forward.9} parent=0 // pred_region
    _
  $region37: #{flag_model_forward.9} parent=0 // pred_fallthru
    _
  %v33 = vld [vmem:[%s0] sm:$0xff]
  %v34 = vld [vmem:[%s0 + $0x8] sm:$0xff]
  %v35 = vld [vmem:[%s0 + $0x10] sm:$0xff]
  %v36 = vld [vmem:[%s0 + $0x18] sm:$0xff]
  %v37 = vld [vmem:[%s0 + $0x20] sm:$0xff]
  %v38 = vld [vmem:[%s0 + $0x28] sm:$0xff]
  %v39 = vld [vmem:[%s0 + $0x30] sm:$0xff]
  %v40 = vld [vmem:[%s0 + $0x38] sm:$0xff]
  %v41 = vpack.c.bf16 %v34, %v33
  %v42 = vpack.c.bf16 %v36, %v35
  %v43 = vpack.c.bf16 %v38, %v37
  %v44 = vpack.c.bf16 %v40, %v39
  %v45 = vld [vmem:[%s1] sm:$0xf]
  %v46 = vld [vmem:[%s1 + $0x4] sm:$0xf]
  %v47 = vld [vmem:[%s1 + $0x8] sm:$0xf]
  %v48 = vld [vmem:[%s1 + $0xc] sm:$0xf]
  %v49 = vld [vmem:[%s1 + $0x10] sm:$0xf]
  %v50 = vld [vmem:[%s1 + $0x14] sm:$0xf]
  %v51 = vld [vmem:[%s1 + $0x18] sm:$0xf]
  %v52 = vld [vmem:[%s1 + $0x1c] sm:$0xf]
  %v53 = vld [vmem:[%s1 + $0x20] sm:$0xf]
  %v54 = vld [vmem:[%s1 + $0x24] sm:$0xf]
  %v55 = vld [vmem:[%s1 + $0x28] sm:$0xf]
  %v56 = vld [vmem:[%s1 + $0x2c] sm:$0xf]
  %v57 = vld [vmem:[%s1 + $0x30] sm:$0xf]
  %v58 = vld [vmem:[%s1 + $0x34] sm:$0xf]
  %v59 = vld [vmem:[%s1 + $0x38] sm:$0xf]
  %v60 = vld [vmem:[%s1 + $0x3c] sm:$0xf]
  %v61 = vld [vmem:[%s2] sm:$0x1]
  %v63 = vlaneseq
  %v64 = vshrl.u32 %v63, 7
  %v65 = vsub.s32 0, %v64
  %v66 = vrot.slane %v61, %v65
  %v84 = vunpack.c.l.b16 %v45
  %v85 = vunpack.c.l.b16 %v46
  %v86 = vunpack.c.l.b16 %v47
  %v87 = vunpack.c.l.b16 %v48
  %v88 = vunpack.c.l.b16 %v49
  %v89 = vunpack.c.l.b16 %v50
  %v90 = vunpack.c.l.b16 %v51
  %v91 = vunpack.c.l.b16 %v52
  %v92 = vunpack.c.l.b16 %v53
  %v93 = vunpack.c.l.b16 %v54
  %v94 = vunpack.c.l.b16 %v55
  %v95 = vunpack.c.l.b16 %v56
  %v96 = vunpack.c.l.b16 %v57
  %v97 = vunpack.c.l.b16 %v58
  %v98 = vunpack.c.l.b16 %v59
  %v99 = vunpack.c.l.b16 %v60
  %v100 = vpack.c.b16 %v85, %v84
  %v101 = vpack.c.b16 %v87, %v86
  %v102 = vpack.c.b16 %v89, %v88
  %v103 = vpack.c.b16 %v91, %v90
  %v104 = vpack.c.b16 %v93, %v92
  %v105 = vpack.c.b16 %v95, %v94
  %v106 = vpack.c.b16 %v97, %v96
  %v107 = vpack.c.b16 %v99, %v98
  %116 = vmatprep.subr.bf16.mxu0 0
  %117 = vmatpush1.bf16.msra.mxu0 %v100
  %118 = vmatprep.subr.bf16.mxu0 0
  %119 = vmatpush1.bf16.msra.mxu0 %v101
  %120 = vmatprep.subr.bf16.mxu0 0
  %121 = vmatpush1.bf16.msra.mxu0 %v102
  %122 = vmatprep.subr.bf16.mxu0 0
  %123 = vmatpush1.bf16.msra.mxu0 %v103
  %124 = vmatprep.subr.bf16.mxu0 0
  %125 = vmatpush1.bf16.msra.mxu0 %v104
  %126 = vmatprep.subr.bf16.mxu0 0
  %127 = vmatpush1.bf16.msra.mxu0 %v105
  %128 = vmatprep.subr.bf16.mxu0 0
  %129 = vmatpush1.bf16.msra.mxu0 %v106
  %130 = vmatprep.subr.bf16.mxu0 0
  %131 = vmatpush1.bf16.msra.mxu0 %v107
  %132 = vmatprep.subr.bf16.mxu0 0
  %133 = vmatpush1.bf16.msra.mxu0 0
  %134 = vmatprep.subr.bf16.mxu0 0
  %135 = vmatpush1.bf16.msra.mxu0 0
  %136 = vmatprep.subr.bf16.mxu0 0
  %137 = vmatpush1.bf16.msra.mxu0 0
  %138 = vmatprep.subr.bf16.mxu0 0
  %139 = vmatpush1.bf16.msra.mxu0 0
  %140 = vmatprep.subr.bf16.mxu0 0
  %141 = vmatpush1.bf16.msra.mxu0 0
  %142 = vmatprep.subr.bf16.mxu0 0
  %143 = vmatpush1.bf16.msra.mxu0 0
  %144 = vmatprep.subr.bf16.mxu0 0
  %145 = vmatpush1.bf16.msra.mxu0 0
  %146 = vmatprep.subr.bf16.mxu0 0
  %147 = vmatpush1.bf16.msra.mxu0 0
  %148 = vmatprep.mubr.bf16.mxu0 0
  %149 = vmatmul.mubr.bf16.gmra.mrb[0].mxu0 %v41
  %v150 = vpop.f32.mrb[0].mxu0
  %v151 = vadd.f32 %v66, %v150
  %v152 = vpop.f32.mrb[0].mxu0
  %v153 = vpop.f32.mrb[0].mxu0
  %v154 = vadd.f32 %v66, %v153
  %v155 = vpop.f32.mrb[0].mxu0
  %156 = vmatprep.mubr.bf16.mxu0 0
  %157 = vmatmul.mubr.bf16.gmra.mrb[0].mxu0 %v42
  %v158 = vpop.f32.mrb[0].mxu0
  %v159 = vadd.f32 %v66, %v158
  %v160 = vpop.f32.mrb[0].mxu0
  %v161 = vpop.f32.mrb[0].mxu0
  %v162 = vadd.f32 %v66, %v161
  %v163 = vpop.f32.mrb[0].mxu0
  %164 = vmatprep.mubr.bf16.mxu0 0
  %165 = vmatmul.mubr.bf16.gmra.mrb[0].mxu0 %v43
  %v166 = vpop.f32.mrb[0].mxu0
  %v167 = vadd.f32 %v66, %v166
  %v168 = vpop.f32.mrb[0].mxu0
  %v169 = vpop.f32.mrb[0].mxu0
  %v170 = vadd.f32 %v66, %v169
  %v171 = vpop.f32.mrb[0].mxu0
  %172 = vmatprep.mubr.bf16.mxu0 0
  %173 = vmatmul.mubr.bf16.gmra.mrb[0].mxu0 %v44
  %v174 = vpop.f32.mrb[0].mxu0
  %v175 = vadd.f32 %v66, %v174
  %v176 = vpop.f32.mrb[0].mxu0
  %v177 = vpop.f32.mrb[0].mxu0
  %v178 = vadd.f32 %v66, %v177
  %v179 = vpop.f32.mrb[0].mxu0
  %180 = vdwg.mxu0
  %v181 = vmax.f32 %v151, 0.0
  %v182 = vmax.f32 %v154, 0.0
  %v183 = vmax.f32 %v159, 0.0
  %v184 = vmax.f32 %v162, 0.0
  %v185 = vmax.f32 %v167, 0.0
  %v186 = vmax.f32 %v170, 0.0
  %v187 = vmax.f32 %v175, 0.0
  %v188 = vmax.f32 %v178, 0.0
  %v189 = vpack.c.bf16 %v182, %v181
  %v190 = vpack.c.bf16 %v184, %v183
  %v191 = vpack.c.bf16 %v186, %v185
  %v192 = vpack.c.bf16 %v188, %v187
  %v193 = vld [vmem:[%s3] sm:$0xf]
  %v194 = vld [vmem:[%s3 + $0x4] sm:$0xf]
  %v195 = vld [vmem:[%s3 + $0x8] sm:$0xf]
  %v196 = vld [vmem:[%s3 + $0xc] sm:$0xf]
  %v197 = vld [vmem:[%s3 + $0x10] sm:$0xf]
  %v198 = vld [vmem:[%s3 + $0x14] sm:$0xf]
  %v199 = vld [vmem:[%s3 + $0x18] sm:$0xf]
  %v200 = vld [vmem:[%s3 + $0x1c] sm:$0xf]
  %v201 = vld [vmem:[%s3 + $0x20] sm:$0xf]
  %v202 = vld [vmem:[%s3 + $0x24] sm:$0xf]
  %v203 = vld [vmem:[%s3 + $0x28] sm:$0xf]
  %v204 = vld [vmem:[%s3 + $0x2c] sm:$0xf]
  %v205 = vld [vmem:[%s3 + $0x30] sm:$0xf]
  %v206 = vld [vmem:[%s3 + $0x34] sm:$0xf]
  %v207 = vld [vmem:[%s3 + $0x38] sm:$0xf]
  %v208 = vld [vmem:[%s3 + $0x3c] sm:$0xf]
  %v209 = vld [vmem:[%s4] sm:$0x1]
  %v211 = vlaneseq
  %v212 = vshrl.u32 %v211, 7
  %v213 = vsub.s32 0, %v212
  %v214 = vrot.slane %v209, %v213
  %v232 = vunpack.c.l.b16 %v193
  %v233 = vunpack.c.l.b16 %v194
  %v234 = vunpack.c.l.b16 %v195
  %v235 = vunpack.c.l.b16 %v196
  %v236 = vunpack.c.l.b16 %v197
  %v237 = vunpack.c.l.b16 %v198
  %v238 = vunpack.c.l.b16 %v199
  %v239 = vunpack.c.l.b16 %v200
  %v240 = vunpack.c.l.b16 %v201
  %v241 = vunpack.c.l.b16 %v202
  %v242 = vunpack.c.l.b16 %v203
  %v243 = vunpack.c.l.b16 %v204
  %v244 = vunpack.c.l.b16 %v205
  %v245 = vunpack.c.l.b16 %v206
  %v246 = vunpack.c.l.b16 %v207
  %v247 = vunpack.c.l.b16 %v208
  %v248 = vpack.c.b16 %v233, %v232
  %v249 = vpack.c.b16 %v235, %v234
  %v250 = vpack.c.b16 %v237, %v236
  %v251 = vpack.c.b16 %v239, %v238
  %v252 = vpack.c.b16 %v241, %v240
  %v253 = vpack.c.b16 %v243, %v242
  %v254 = vpack.c.b16 %v245, %v244
  %v255 = vpack.c.b16 %v247, %v246
  %264 = vmatprep.subr.bf16.mxu0 0
  %265 = vmatpush1.bf16.msra.mxu0 %v248
  %266 = vmatprep.subr.bf16.mxu0 0
  %267 = vmatpush1.bf16.msra.mxu0 %v249
  %268 = vmatprep.subr.bf16.mxu0 0
  %269 = vmatpush1.bf16.msra.mxu0 %v250
  %270 = vmatprep.subr.bf16.mxu0 0
  %271 = vmatpush1.bf16.msra.mxu0 %v251
  %272 = vmatprep.subr.bf16.mxu0 0
  %273 = vmatpush1.bf16.msra.mxu0 %v252
  %274 = vmatprep.subr.bf16.mxu0 0
  %275 = vmatpush1.bf16.msra.mxu0 %v253
  %276 = vmatprep.subr.bf16.mxu0 0
  %277 = vmatpush1.bf16.msra.mxu0 %v254
  %278 = vmatprep.subr.bf16.mxu0 0
  %279 = vmatpush1.bf16.msra.mxu0 %v255
  %280 = vmatprep.subr.bf16.mxu0 0
  %281 = vmatpush1.bf16.msra.mxu0 0
  %282 = vmatprep.subr.bf16.mxu0 0
  %283 = vmatpush1.bf16.msra.mxu0 0
  %284 = vmatprep.subr.bf16.mxu0 0
  %285 = vmatpush1.bf16.msra.mxu0 0
  %286 = vmatprep.subr.bf16.mxu0 0
  %287 = vmatpush1.bf16.msra.mxu0 0
  %288 = vmatprep.subr.bf16.mxu0 0
  %289 = vmatpush1.bf16.msra.mxu0 0
  %290 = vmatprep.subr.bf16.mxu0 0
  %291 = vmatpush1.bf16.msra.mxu0 0
  %292 = vmatprep.subr.bf16.mxu0 0
  %293 = vmatpush1.bf16.msra.mxu0 0
  %294 = vmatprep.subr.bf16.mxu0 0
  %295 = vmatpush1.bf16.msra.mxu0 0
  %296 = vmatprep.mubr.bf16.mxu0 0
  %297 = vmatmul.mubr.bf16.gmra.mrb[0].mxu0 %v189
  %v298 = vpop.f32.mrb[0].mxu0
  %v299 = vadd.f32 %v214, %v298
  %v300 = vpop.f32.mrb[0].mxu0
  %v301 = vpop.f32.mrb[0].mxu0
  %v302 = vadd.f32 %v214, %v301
  %v303 = vpop.f32.mrb[0].mxu0
  %304 = vmatprep.mubr.bf16.mxu0 0
  %305 = vmatmul.mubr.bf16.gmra.mrb[0].mxu0 %v190
  %v306 = vpop.f32.mrb[0].mxu0
  %v307 = vadd.f32 %v214, %v306
  %v308 = vpop.f32.mrb[0].mxu0
  %v309 = vpop.f32.mrb[0].mxu0
  %v310 = vadd.f32 %v214, %v309
  %v311 = vpop.f32.mrb[0].mxu0
  %312 = vmatprep.mubr.bf16.mxu0 0
  %313 = vmatmul.mubr.bf16.gmra.mrb[0].mxu0 %v191
  %v314 = vpop.f32.mrb[0].mxu0
  %v315 = vadd.f32 %v214, %v314
  %v316 = vpop.f32.mrb[0].mxu0
  %v317 = vpop.f32.mrb[0].mxu0
  %v318 = vadd.f32 %v214, %v317
  %v319 = vpop.f32.mrb[0].mxu0
  %320 = vmatprep.mubr.bf16.mxu0 0
  %321 = vmatmul.mubr.bf16.gmra.mrb[0].mxu0 %v192
  %v322 = vpop.f32.mrb[0].mxu0
  %v323 = vadd.f32 %v214, %v322
  %v324 = vpop.f32.mrb[0].mxu0
  %v325 = vpop.f32.mrb[0].mxu0
  %v326 = vadd.f32 %v214, %v325
  %v327 = vpop.f32.mrb[0].mxu0
  %328 = vdwg.mxu0
  %v329 = vmax.f32 %v299, 0.0
  %v330 = vmax.f32 %v302, 0.0
  %v331 = vmax.f32 %v307, 0.0
  %v332 = vmax.f32 %v310, 0.0
  %v333 = vmax.f32 %v315, 0.0
  %v334 = vmax.f32 %v318, 0.0
  %v335 = vmax.f32 %v323, 0.0
  %v336 = vmax.f32 %v326, 0.0
  %v337 = vpack.c.bf16 %v330, %v329
  %v338 = vpack.c.bf16 %v332, %v331
  %v339 = vpack.c.bf16 %v334, %v333
  %v340 = vpack.c.bf16 %v336, %v335
  %v341 = vld [vmem:[%s5] sm:$0xf]
  %v342 = vld [vmem:[%s5 + $0x4] sm:$0xf]
  %v343 = vld [vmem:[%s5 + $0x8] sm:$0xf]
  %v344 = vld [vmem:[%s5 + $0xc] sm:$0xf]
  %v345 = vld [vmem:[%s5 + $0x10] sm:$0xf]
  %v346 = vld [vmem:[%s5 + $0x14] sm:$0xf]
  %v347 = vld [vmem:[%s5 + $0x18] sm:$0xf]
  %v348 = vld [vmem:[%s5 + $0x1c] sm:$0xf]
  %v349 = vld [vmem:[%s5 + $0x20] sm:$0xf]
  %v350 = vld [vmem:[%s5 + $0x24] sm:$0xf]
  %v351 = vld [vmem:[%s5 + $0x28] sm:$0xf]
  %v352 = vld [vmem:[%s5 + $0x2c] sm:$0xf]
  %v353 = vld [vmem:[%s5 + $0x30] sm:$0xf]
  %v354 = vld [vmem:[%s5 + $0x34] sm:$0xf]
  %v355 = vld [vmem:[%s5 + $0x38] sm:$0xf]
  %v356 = vld [vmem:[%s5 + $0x3c] sm:$0xf]
  %v357 = vld [vmem:[%s6] sm:$0x1]
  %v359 = vlaneseq
  %v360 = vshrl.u32 %v359, 7
  %v361 = vsub.s32 0, %v360
  %v362 = vrot.slane %v357, %v361
  %v380 = vunpack.c.l.b16 %v341
  %v381 = vunpack.c.l.b16 %v342
  %v382 = vunpack.c.l.b16 %v343
  %v383 = vunpack.c.l.b16 %v344
  %v384 = vunpack.c.l.b16 %v345
  %v385 = vunpack.c.l.b16 %v346
  %v386 = vunpack.c.l.b16 %v347
  %v387 = vunpack.c.l.b16 %v348
  %v388 = vunpack.c.l.b16 %v349
  %v389 = vunpack.c.l.b16 %v350
  %v390 = vunpack.c.l.b16 %v351
  %v391 = vunpack.c.l.b16 %v352
  %v392 = vunpack.c.l.b16 %v353
  %v393 = vunpack.c.l.b16 %v354
  %v394 = vunpack.c.l.b16 %v355
  %v395 = vunpack.c.l.b16 %v356
  %v396 = vpack.c.b16 %v381, %v380
  %v397 = vpack.c.b16 %v383, %v382
  %v398 = vpack.c.b16 %v385, %v384
  %v399 = vpack.c.b16 %v387, %v386
  %v400 = vpack.c.b16 %v389, %v388
  %v401 = vpack.c.b16 %v391, %v390
  %v402 = vpack.c.b16 %v393, %v392
  %v403 = vpack.c.b16 %v395, %v394
  %412 = vmatprep.subr.bf16.mxu0 0
  %413 = vmatpush1.bf16.msra.mxu0 %v396
  %414 = vmatprep.subr.bf16.mxu0 0
  %415 = vmatpush1.bf16.msra.mxu0 %v397
  %416 = vmatprep.subr.bf16.mxu0 0
  %417 = vmatpush1.bf16.msra.mxu0 %v398
  %418 = vmatprep.subr.bf16.mxu0 0
  %419 = vmatpush1.bf16.msra.mxu0 %v399
  %420 = vmatprep.subr.bf16.mxu0 0
  %421 = vmatpush1.bf16.msra.mxu0 %v400
  %422 = vmatprep.subr.bf16.mxu0 0
  %423 = vmatpush1.bf16.msra.mxu0 %v401
  %424 = vmatprep.subr.bf16.mxu0 0
  %425 = vmatpush1.bf16.msra.mxu0 %v402
  %426 = vmatprep.subr.bf16.mxu0 0
  %427 = vmatpush1.bf16.msra.mxu0 %v403
  %428 = vmatprep.subr.bf16.mxu0 0
  %429 = vmatpush1.bf16.msra.mxu0 0
  %430 = vmatprep.subr.bf16.mxu0 0
  %431 = vmatpush1.bf16.msra.mxu0 0
  %432 = vmatprep.subr.bf16.mxu0 0
  %433 = vmatpush1.bf16.msra.mxu0 0
  %434 = vmatprep.subr.bf16.mxu0 0
  %435 = vmatpush1.bf16.msra.mxu0 0
  %436 = vmatprep.subr.bf16.mxu0 0
  %437 = vmatpush1.bf16.msra.mxu0 0
  %438 = vmatprep.subr.bf16.mxu0 0
  %439 = vmatpush1.bf16.msra.mxu0 0
  %440 = vmatprep.subr.bf16.mxu0 0
  %441 = vmatpush1.bf16.msra.mxu0 0
  %442 = vmatprep.subr.bf16.mxu0 0
  %443 = vmatpush1.bf16.msra.mxu0 0
  %444 = vmatprep.mubr.bf16.mxu0 0
  %445 = vmatmul.mubr.bf16.gmra.mrb[0].mxu0 %v337
  %v446 = vpop.f32.mrb[0].mxu0
  %v447 = vadd.f32 %v362, %v446
  %v448 = vpop.f32.mrb[0].mxu0
  %v449 = vpop.f32.mrb[0].mxu0
  %v450 = vadd.f32 %v362, %v449
  %v451 = vpop.f32.mrb[0].mxu0
  %452 = vmatprep.mubr.bf16.mxu0 0
  %453 = vmatmul.mubr.bf16.gmra.mrb[0].mxu0 %v338
  %v454 = vpop.f32.mrb[0].mxu0
  %v455 = vadd.f32 %v362, %v454
  %v456 = vpop.f32.mrb[0].mxu0
  %v457 = vpop.f32.mrb[0].mxu0
  %v458 = vadd.f32 %v362, %v457
  %v459 = vpop.f32.mrb[0].mxu0
  %460 = vmatprep.mubr.bf16.mxu0 0
  %461 = vmatmul.mubr.bf16.gmra.mrb[0].mxu0 %v339
  %v462 = vpop.f32.mrb[0].mxu0
  %v463 = vadd.f32 %v362, %v462
  %v464 = vpop.f32.mrb[0].mxu0
  %v465 = vpop.f32.mrb[0].mxu0
  %v466 = vadd.f32 %v362, %v465
  %v467 = vpop.f32.mrb[0].mxu0
  %468 = vmatprep.mubr.bf16.mxu0 0
  %469 = vmatmul.mubr.bf16.gmra.mrb[0].mxu0 %v340
  %v470 = vpop.f32.mrb[0].mxu0
  %v471 = vadd.f32 %v362, %v470
  %v472 = vpop.f32.mrb[0].mxu0
  %v473 = vpop.f32.mrb[0].mxu0
  %v474 = vadd.f32 %v362, %v473
  %v475 = vpop.f32.mrb[0].mxu0
  %476 = vdwg.mxu0
  %477 = vadd.xlane.f32.xlu0 %v447
  %v478 = vpop.xlane.xlu0 %477
  %479 = vadd.xlane.f32.xlu0 %v450
  %v480 = vpop.xlane.xlu0 %479
  %481 = vadd.xlane.f32.xlu0 %v455
  %v482 = vpop.xlane.xlu0 %481
  %483 = vadd.xlane.f32.xlu0 %v458
  %v484 = vpop.xlane.xlu0 %483
  %485 = vadd.xlane.f32.xlu0 %v463
  %v486 = vpop.xlane.xlu0 %485
  %487 = vadd.xlane.f32.xlu0 %v466
  %v488 = vpop.xlane.xlu0 %487
  %489 = vadd.xlane.f32.xlu0 %v471
  %v490 = vpop.xlane.xlu0 %489
  %491 = vadd.xlane.f32.xlu0 %v474
  %v492 = vpop.xlane.xlu0 %491
  %v493 = vrcp.pop 128.0
  %v494 = vmul.f32 %v478, %v493
  %v495 = vmul.f32 %v480, %v493
  %v496 = vmul.f32 %v482, %v493
  %v497 = vmul.f32 %v484, %v493
  %v498 = vmul.f32 %v486, %v493
  %v499 = vmul.f32 %v488, %v493
  %v500 = vmul.f32 %v490, %v493
  %v501 = vmul.f32 %v492, %v493
  %v502 = vsub.f32 %v447, %v494
  %v503 = vsub.f32 %v450, %v495
  %v504 = vsub.f32 %v455, %v496
  %v505 = vsub.f32 %v458, %v497
  %v506 = vsub.f32 %v463, %v498
  %v507 = vsub.f32 %v466, %v499
  %v508 = vsub.f32 %v471, %v500
  %v509 = vsub.f32 %v474, %v501
  %v510 = vmul.f32 %v502, %v502
  %v511 = vmul.f32 %v503, %v503
  %v512 = vmul.f32 %v504, %v504
  %v513 = vmul.f32 %v505, %v505
  %v514 = vmul.f32 %v506, %v506
  %v515 = vmul.f32 %v507, %v507
  %v516 = vmul.f32 %v508, %v508
  %v517 = vmul.f32 %v509, %v509
  %518 = vadd.xlane.f32.xlu0 %v510
  %v519 = vpop.xlane.xlu0 %518
  %520 = vadd.xlane.f32.xlu0 %v511
  %v521 = vpop.xlane.xlu0 %520
  %522 = vadd.xlane.f32.xlu0 %v512
  %v523 = vpop.xlane.xlu0 %522
  %524 = vadd.xlane.f32.xlu0 %v513
  %v525 = vpop.xlane.xlu0 %524
  %526 = vadd.xlane.f32.xlu0 %v514
  %v527 = vpop.xlane.xlu0 %526
  %528 = vadd.xlane.f32.xlu0 %v515
  %v529 = vpop.xlane.xlu0 %528
  %530 = vadd.xlane.f32.xlu0 %v516
  %v531 = vpop.xlane.xlu0 %530
  %532 = vadd.xlane.f32.xlu0 %v517
  %v533 = vpop.xlane.xlu0 %532
  %v534 = vmul.f32 %v519, %v493
  %v535 = vmul.f32 %v521, %v493
  %v536 = vmul.f32 %v523, %v493
  %v537 = vmul.f32 %v525, %v493
  %v538 = vmul.f32 %v527, %v493
  %v539 = vmul.f32 %v529, %v493
  %v540 = vmul.f32 %v531, %v493
  %v541 = vmul.f32 %v533, %v493
  %v542 = vadd.f32 %v534, 1e-05
  %v543 = vadd.f32 %v535, 1e-05
  %v544 = vadd.f32 %v536, 1e-05
  %v545 = vadd.f32 %v537, 1e-05
  %v546 = vadd.f32 %v538, 1e-05
  %v547 = vadd.f32 %v539, 1e-05
  %v548 = vadd.f32 %v540, 1e-05
  %v549 = vadd.f32 %v541, 1e-05
  %v550 = vrsqrt.pop %v542
  %v551 = vrsqrt.pop %v543
  %v552 = vrsqrt.pop %v544
  %v553 = vrsqrt.pop %v545
  %v554 = vrsqrt.pop %v546
  %v555 = vrsqrt.pop %v547
  %v556 = vrsqrt.pop %v548
  %v557 = vrsqrt.pop %v549
  %v558 = vmul.f32 %v502, %v550
  %v559 = vmul.f32 %v503, %v551
  %v560 = vmul.f32 %v504, %v552
  %v561 = vmul.f32 %v505, %v553
  %v562 = vmul.f32 %v506, %v554
  %v563 = vmul.f32 %v507, %v555
  %v564 = vmul.f32 %v508, %v556
  %v565 = vmul.f32 %v509, %v557
  %v566 = vld [vmem:[%s7] sm:$0x1]
  %v568 = vlaneseq
  %v569 = vshrl.u32 %v568, 7
  %v570 = vsub.s32 0, %v569
  %v571 = vrot.slane %v566, %v570
  %v573 = vmul.f32 %v558, %v571
  %v574 = vmul.f32 %v559, %v571
  %v575 = vmul.f32 %v560, %v571
  %v576 = vmul.f32 %v561, %v571
  %v577 = vmul.f32 %v562, %v571
  %v578 = vmul.f32 %v563, %v571
  %v579 = vmul.f32 %v564, %v571
  %v580 = vmul.f32 %v565, %v571
  %v581 = vld [vmem:[%s8] sm:$0x1]
  %v583 = vlaneseq
  %v584 = vshrl.u32 %v583, 7
  %v585 = vsub.s32 0, %v584
  %v586 = vrot.slane %v581, %v585
  %v588 = vadd.f32 %v573, %v586
  %v589 = vadd.f32 %v574, %v586
  %v590 = vadd.f32 %v575, %v586
  %v591 = vadd.f32 %v576, %v586
  %v592 = vadd.f32 %v577, %v586
  %v593 = vadd.f32 %v578, %v586
  %v594 = vadd.f32 %v579, %v586
  %v595 = vadd.f32 %v580, %v586
  %v596 = vpack.c.bf16 %v589, %v588
  %v597 = vpack.c.bf16 %v591, %v590
  %v598 = vpack.c.bf16 %v593, %v592
  %v599 = vpack.c.bf16 %v595, %v594
  %v604 = vunpack.c.l.b16 %v596
  %v605 = vunpack.c.h.b16 %v596
  %v606 = vunpack.c.l.b16 %v597
  %v607 = vunpack.c.h.b16 %v597
  %v608 = vunpack.c.l.b16 %v598
  %v609 = vunpack.c.h.b16 %v598
  %v610 = vunpack.c.l.b16 %v599
  %v611 = vunpack.c.h.b16 %v599
  %v612 = vpack.c.b16 %v604, %v604
  %v613 = vpack.c.b16 %v605, %v605
  %v614 = vpack.c.b16 %v606, %v606
  %v615 = vpack.c.b16 %v607, %v607
  %v616 = vpack.c.b16 %v608, %v608
  %v617 = vpack.c.b16 %v609, %v609
  %v618 = vpack.c.b16 %v610, %v610
  %v619 = vpack.c.b16 %v611, %v611
  %628 = vst [vmem:[%s9] sm:$0xf] %v612
  %629 = vst [vmem:[%s9 + $0x4] sm:$0xf] %v613
  %630 = vst [vmem:[%s9 + $0x8] sm:$0xf] %v614
  %631 = vst [vmem:[%s9 + $0xc] sm:$0xf] %v615
  %632 = vst [vmem:[%s9 + $0x10] sm:$0xf] %v616
  %633 = vst [vmem:[%s9 + $0x14] sm:$0xf] %v617
  %634 = vst [vmem:[%s9 + $0x18] sm:$0xf] %v618
  %635 = vst [vmem:[%s9 + $0x1c] sm:$0xf] %v619
  // Predicated region
  $region38: #{flag_model_forward.9} parent=0 // pred_check
    _
  $region39: #{flag_model_forward.9} parent=0 // pred_check_branch
    %637 = sbr.rel (0) target = $region41
  $region40: #{flag_model_forward.9} parent=0 // pred_region
    _
  $region41: #{flag_model_forward.9} parent=0 // pred_fallthru
    _
  // Predicated region
  $region42: #{flag_model_forward.9} parent=0 // pred_check
    _
  $region43: #{flag_model_forward.9} parent=0 // pred_check_branch
    %639 = sbr.rel (0) target = $region45
  $region44: #{flag_model_forward.9} parent=0 // pred_region
    _
  $region45: #{flag_model_forward.9} parent=0 // pred_fallthru
    _

// kernel: flag_model_forward.10
$region0: #{flag_model_forward.10}
  #allocation0 [shape = 'u32[]', space=smem, size = 0x4, offset = 0x4, fixed_abs, tag = 'smem constant byte address 0x4 - core index']
  #allocation1 [shape = 'u32[144,128]{1,0:T(1,128)}', space=vmem, size = 0x12000, scoped, tag = 'internal scratch']
  %s0 = inlined_call_operand.vmem [shape: f32[256,128], index: 0, kind: input, shape index: {}]
  %s1 = inlined_call_operand.vmem [shape: bf16[128,128], index: 1, kind: input, shape index: {}]
  %s2 = inlined_call_operand.vmem [shape: f32[1,128], index: 2, kind: input, shape index: {}]
  %s3 = inlined_call_operand.vmem [shape: bf16[128,128], index: 3, kind: input, shape index: {}]
  %s4 = inlined_call_operand.vmem [shape: f32[1,128], index: 4, kind: input, shape index: {}]
  %s5 = inlined_call_operand.vmem [shape: bf16[128,128], index: 5, kind: input, shape index: {}]
  %s6 = inlined_call_operand.vmem [shape: f32[1,128], index: 6, kind: input, shape index: {}]
  %s7 = inlined_call_operand.vmem [shape: f32[1,128], index: 7, kind: input, shape index: {}]
  %s8 = inlined_call_operand.vmem [shape: f32[1,128], index: 8, kind: input, shape index: {}]
  %s9 = inlined_call_operand.vmem [shape: bf16[256,128], index: 9, kind: output, shape index: {}]
  %s10 = sld [smem:[#allocation0]]
  $region46: #{flag_model_forward.10} parent=0
    _
  %s12 = ssub.s32 1, %s10
  %s13 = scalar_select 0, %s12, %s10
  // Predicated region
  $region2: #{flag_model_forward.10} parent=0 // pred_check
    _
  $region3: #{flag_model_forward.10} parent=0 // pred_check_branch
    %15 = sbr.rel (0) target = $region5
  $region4: #{flag_model_forward.10} parent=0 // pred_region
    _
  $region5: #{flag_model_forward.10} parent=0 // pred_fallthru
    _
  // Predicated region
  $region6: #{flag_model_forward.10} parent=0 // pred_check
    _
  $region7: #{flag_model_forward.10} parent=0 // pred_check_branch
    %17 = sbr.rel (0) target = $region9
  $region8: #{flag_model_forward.10} parent=0 // pred_region
    _
  $region9: #{flag_model_forward.10} parent=0 // pred_fallthru
    _
  // Predicated region
  $region10: #{flag_model_forward.10} parent=0 // pred_check
    _
  $region11: #{flag_model_forward.10} parent=0 // pred_check_branch
    %19 = sbr.rel (0) target = $region13
  $region12: #{flag_model_forward.10} parent=0 // pred_region
    _
  $region13: #{flag_model_forward.10} parent=0 // pred_fallthru
    _
  // Predicated region
  $region14: #{flag_model_forward.10} parent=0 // pred_check
    _
  $region15: #{flag_model_forward.10} parent=0 // pred_check_branch
    %21 = sbr.rel (0) target = $region17
  $region16: #{flag_model_forward.10} parent=0 // pred_region
    _
  $region17: #{flag_model_forward.10} parent=0 // pred_fallthru
    _
  // Predicated region
  $region18: #{flag_model_forward.10} parent=0 // pred_check
    _
  $region19: #{flag_model_forward.10} parent=0 // pred_check_branch
    %23 = sbr.rel (0) target = $region21
  $region20: #{flag_model_forward.10} parent=0 // pred_region
    _
  $region21: #{flag_model_forward.10} parent=0 // pred_fallthru
    _
  // Predicated region
  $region22: #{flag_model_forward.10} parent=0 // pred_check
    _
  $region23: #{flag_model_forward.10} parent=0 // pred_check_branch
    %25 = sbr.rel (0) target = $region25
  $region24: #{flag_model_forward.10} parent=0 // pred_region
    _
  $region25: #{flag_model_forward.10} parent=0 // pred_fallthru
    _
  // Predicated region
  $region26: #{flag_model_forward.10} parent=0 // pred_check
    _
  $region27: #{flag_model_forward.10} parent=0 // pred_check_branch
    %27 = sbr.rel (0) target = $region29
  $region28: #{flag_model_forward.10} parent=0 // pred_region
    _
  $region29: #{flag_model_forward.10} parent=0 // pred_fallthru
    _
  // Predicated region
  $region30: #{flag_model_forward.10} parent=0 // pred_check
    _
  $region31: #{flag_model_forward.10} parent=0 // pred_check_branch
    %29 = sbr.rel (0) target = $region33
  $region32: #{flag_model_forward.10} parent=0 // pred_region
    _
  $region33: #{flag_model_forward.10} parent=0 // pred_fallthru
    _
  // Predicated region
  $region34: #{flag_model_forward.10} parent=0 // pred_check
    _
  $region35: #{flag_model_forward.10} parent=0 // pred_check_branch
    %31 = sbr.rel (0) target = $region37
  $region36: #{flag_model_forward.10} parent=0 // pred_region
    _
  $region37: #{flag_model_forward.10} parent=0 // pred_fallthru
    _
  %v33 = vld [vmem:[%s0] sm:$0xff]
  %v34 = vld [vmem:[%s0 + $0x8] sm:$0xff]
  %v35 = vld [vmem:[%s0 + $0x10] sm:$0xff]
  %v36 = vld [vmem:[%s0 + $0x18] sm:$0xff]
  %v37 = vld [vmem:[%s0 + $0x20] sm:$0xff]
  %v38 = vld [vmem:[%s0 + $0x28] sm:$0xff]
  %v39 = vld [vmem:[%s0 + $0x30] sm:$0xff]
  %v40 = vld [vmem:[%s0 + $0x38] sm:$0xff]
  %v41 = vld [vmem:[%s0 + $0x40] sm:$0xff]
  %v42 = vld [vmem:[%s0 + $0x48] sm:$0xff]
  %v43 = vld [vmem:[%s0 + $0x50] sm:$0xff]
  %v44 = vld [vmem:[%s0 + $0x58] sm:$0xff]
  %v45 = vld [vmem:[%s0 + $0x60] sm:$0xff]
  %v46 = vld [vmem:[%s0 + $0x68] sm:$0xff]
  %v47 = vld [vmem:[%s0 + $0x70] sm:$0xff]
  %v48 = vld [vmem:[%s0 + $0x78] sm:$0xff]
  %v49 = vld [vmem:[%s0 + $0x80] sm:$0xff]
  %v50 = vld [vmem:[%s0 + $0x88] sm:$0xff]
  %v51 = vld [vmem:[%s0 + $0x90] sm:$0xff]
  %v52 = vld [vmem:[%s0 + $0x98] sm:$0xff]
  %v53 = vld [vmem:[%s0 + $0xa0] sm:$0xff]
  %v54 = vld [vmem:[%s0 + $0xa8] sm:$0xff]
  %v55 = vld [vmem:[%s0 + $0xb0] sm:$0xff]
  %v56 = vld [vmem:[%s0 + $0xb8] sm:$0xff]
  %v57 = vld [vmem:[%s0 + $0xc0] sm:$0xff]
  %v58 = vld [vmem:[%s0 + $0xc8] sm:$0xff]
  %v59 = vld [vmem:[%s0 + $0xd0] sm:$0xff]
  %v60 = vld [vmem:[%s0 + $0xd8] sm:$0xff]
  %v61 = vld [vmem:[%s0 + $0xe0] sm:$0xff]
  %v62 = vld [vmem:[%s0 + $0xe8] sm:$0xff]
  %v63 = vld [vmem:[%s0 + $0xf0] sm:$0xff]
  %v64 = vld [vmem:[%s0 + $0xf8] sm:$0xff]
  %v65 = vpack.c.bf16 %v34, %v33
  %v66 = vpack.c.bf16 %v36, %v35
  %v67 = vpack.c.bf16 %v38, %v37
  %v68 = vpack.c.bf16 %v40, %v39
  %v69 = vpack.c.bf16 %v42, %v41
  %v70 = vpack.c.bf16 %v44, %v43
  %v71 = vpack.c.bf16 %v46, %v45
  %v72 = vpack.c.bf16 %v48, %v47
  %v73 = vpack.c.bf16 %v50, %v49
  %v74 = vpack.c.bf16 %v52, %v51
  %v75 = vpack.c.bf16 %v54, %v53
  %v76 = vpack.c.bf16 %v56, %v55
  %v77 = vpack.c.bf16 %v58, %v57
  %v78 = vpack.c.bf16 %v60, %v59
  %v79 = vpack.c.bf16 %v62, %v61
  %v80 = vpack.c.bf16 %v64, %v63
  %v81 = vld [vmem:[%s1] sm:$0xf]
  %v82 = vld [vmem:[%s1 + $0x4] sm:$0xf]
  %v83 = vld [vmem:[%s1 + $0x8] sm:$0xf]
  %v84 = vld [vmem:[%s1 + $0xc] sm:$0xf]
  %v85 = vld [vmem:[%s1 + $0x10] sm:$0xf]
  %v86 = vld [vmem:[%s1 + $0x14] sm:$0xf]
  %v87 = vld [vmem:[%s1 + $0x18] sm:$0xf]
  %v88 = vld [vmem:[%s1 + $0x1c] sm:$0xf]
  %v89 = vld [vmem:[%s1 + $0x20] sm:$0xf]
  %v90 = vld [vmem:[%s1 + $0x24] sm:$0xf]
  %v91 = vld [vmem:[%s1 + $0x28] sm:$0xf]
  %v92 = vld [vmem:[%s1 + $0x2c] sm:$0xf]
  %v93 = vld [vmem:[%s1 + $0x30] sm:$0xf]
  %v94 = vld [vmem:[%s1 + $0x34] sm:$0xf]
  %v95 = vld [vmem:[%s1 + $0x38] sm:$0xf]
  %v96 = vld [vmem:[%s1 + $0x3c] sm:$0xf]
  %v97 = vld [vmem:[%s2] sm:$0x1]
  %v99 = vlaneseq
  %v100 = vshrl.u32 %v99, 7
  %v101 = vsub.s32 0, %v100
  %v102 = vrot.slane %v97, %v101
  %v120 = vunpack.c.l.b16 %v81
  %v121 = vunpack.c.l.b16 %v82
  %v122 = vunpack.c.l.b16 %v83
  %v123 = vunpack.c.l.b16 %v84
  %v124 = vunpack.c.l.b16 %v85
  %v125 = vunpack.c.l.b16 %v86
  %v126 = vunpack.c.l.b16 %v87
  %v127 = vunpack.c.l.b16 %v88
  %v128 = vunpack.c.l.b16 %v89
  %v129 = vunpack.c.l.b16 %v90
  %v130 = vunpack.c.l.b16 %v91
  %v131 = vunpack.c.l.b16 %v92
  %v132 = vunpack.c.l.b16 %v93
  %v133 = vunpack.c.l.b16 %v94
  %v134 = vunpack.c.l.b16 %v95
  %v135 = vunpack.c.l.b16 %v96
  %v136 = vpack.c.b16 %v121, %v120
  %v137 = vpack.c.b16 %v123, %v122
  %v138 = vpack.c.b16 %v125, %v124
  %v139 = vpack.c.b16 %v127, %v126
  %v140 = vpack.c.b16 %v129, %v128
  %v141 = vpack.c.b16 %v131, %v130
  %v142 = vpack.c.b16 %v133, %v132
  %v143 = vpack.c.b16 %v135, %v134
  %152 = vmatprep.subr.bf16.mxu0 0
  %153 = vmatpush1.bf16.msra.mxu0 %v136
  %154 = vmatprep.subr.bf16.mxu0 0
  %155 = vmatpush1.bf16.msra.mxu0 %v137
  %156 = vmatprep.subr.bf16.mxu0 0
  %157 = vmatpush1.bf16.msra.mxu0 %v138
  %158 = vmatprep.subr.bf16.mxu0 0
  %159 = vmatpush1.bf16.msra.mxu0 %v139
  %160 = vmatprep.subr.bf16.mxu0 0
  %161 = vmatpush1.bf16.msra.mxu0 %v140
  %162 = vmatprep.subr.bf16.mxu0 0
  %163 = vmatpush1.bf16.msra.mxu0 %v141
  %164 = vmatprep.subr.bf16.mxu0 0
  %165 = vmatpush1.bf16.msra.mxu0 %v142
  %166 = vmatprep.subr.bf16.mxu0 0
  %167 = vmatpush1.bf16.msra.mxu0 %v143
  %168 = vmatprep.subr.bf16.mxu0 0
  %169 = vmatpush1.bf16.msra.mxu0 0
  %170 = vmatprep.subr.bf16.mxu0 0
  %171 = vmatpush1.bf16.msra.mxu0 0
  %172 = vmatprep.subr.bf16.mxu0 0
  %173 = vmatpush1.bf16.msra.mxu0 0
  %174 = vmatprep.subr.bf16.mxu0 0
  %175 = vmatpush1.bf16.msra.mxu0 0
  %176 = vmatprep.subr.bf16.mxu0 0
  %177 = vmatpush1.bf16.msra.mxu0 0
  %178 = vmatprep.subr.bf16.mxu0 0
  %179 = vmatpush1.bf16.msra.mxu0 0
  %180 = vmatprep.subr.bf16.mxu0 0
  %181 = vmatpush1.bf16.msra.mxu0 0
  %182 = vmatprep.subr.bf16.mxu0 0
  %183 = vmatpush1.bf16.msra.mxu0 0
  %184 = vmatprep.mubr.bf16.mxu0 0
  %185 = vmatmul.mubr.bf16.gmra.mrb[0].mxu0 %v65
  %v186 = vpop.f32.mrb[0].mxu0
  %v187 = vadd.f32 %v102, %v186
  %v188 = vpop.f32.mrb[0].mxu0
  %v189 = vpop.f32.mrb[0].mxu0
  %v190 = vadd.f32 %v102, %v189
  %v191 = vpop.f32.mrb[0].mxu0
  %192 = vmatprep.mubr.bf16.mxu0 0
  %193 = vmatmul.mubr.bf16.gmra.mrb[0].mxu0 %v66
  %v194 = vpop.f32.mrb[0].mxu0
  %v195 = vadd.f32 %v102, %v194
  %v196 = vpop.f32.mrb[0].mxu0
  %v197 = vpop.f32.mrb[0].mxu0
  %v198 = vadd.f32 %v102, %v197
  %v199 = vpop.f32.mrb[0].mxu0
  %200 = vmatprep.mubr.bf16.mxu0 0
  %201 = vmatmul.mubr.bf16.gmra.mrb[0].mxu0 %v67
  %v202 = vpop.f32.mrb[0].mxu0
  %v203 = vadd.f32 %v102, %v202
  %v204 = vpop.f32.mrb[0].mxu0
  %v205 = vpop.f32.mrb[0].mxu0
  %v206 = vadd.f32 %v102, %v205
  %v207 = vpop.f32.mrb[0].mxu0
  %208 = vmatprep.mubr.bf16.mxu0 0
  %209 = vmatmul.mubr.bf16.gmra.mrb[0].mxu0 %v68
  %v210 = vpop.f32.mrb[0].mxu0
  %v211 = vadd.f32 %v102, %v210
  %v212 = vpop.f32.mrb[0].mxu0
  %v213 = vpop.f32.mrb[0].mxu0
  %v214 = vadd.f32 %v102, %v213
  %v215 = vpop.f32.mrb[0].mxu0
  %216 = vmatprep.mubr.bf16.mxu0 0
  %217 = vmatmul.mubr.bf16.gmra.mrb[0].mxu0 %v69
  %v218 = vpop.f32.mrb[0].mxu0
  %v219 = vadd.f32 %v102, %v218
  %v220 = vpop.f32.mrb[0].mxu0
  %v221 = vpop.f32.mrb[0].mxu0
  %v222 = vadd.f32 %v102, %v221
  %v223 = vpop.f32.mrb[0].mxu0
  %224 = vmatprep.mubr.bf16.mxu0 0
  %225 = vmatmul.mubr.bf16.gmra.mrb[0].mxu0 %v70
  %v226 = vpop.f32.mrb[0].mxu0
  %v227 = vadd.f32 %v102, %v226
  %v228 = vpop.f32.mrb[0].mxu0
  %v229 = vpop.f32.mrb[0].mxu0
  %v230 = vadd.f32 %v102, %v229
  %v231 = vpop.f32.mrb[0].mxu0
  %232 = vmatprep.mubr.bf16.mxu0 0
  %233 = vmatmul.mubr.bf16.gmra.mrb[0].mxu0 %v71
  %v234 = vpop.f32.mrb[0].mxu0
  %v235 = vadd.f32 %v102, %v234
  %v236 = vpop.f32.mrb[0].mxu0
  %v237 = vpop.f32.mrb[0].mxu0
  %v238 = vadd.f32 %v102, %v237
  %v239 = vpop.f32.mrb[0].mxu0
  %240 = vmatprep.mubr.bf16.mxu0 0
  %241 = vmatmul.mubr.bf16.gmra.mrb[0].mxu0 %v72
  %v242 = vpop.f32.mrb[0].mxu0
  %v243 = vadd.f32 %v102, %v242
  %v244 = vpop.f32.mrb[0].mxu0
  %v245 = vpop.f32.mrb[0].mxu0
  %v246 = vadd.f32 %v102, %v245
  %v247 = vpop.f32.mrb[0].mxu0
  %248 = vmatprep.mubr.bf16.mxu0 0
  %249 = vmatmul.mubr.bf16.gmra.mrb[0].mxu0 %v73
  %v250 = vpop.f32.mrb[0].mxu0
  %v251 = vadd.f32 %v102, %v250
  %v252 = vpop.f32.mrb[0].mxu0
  %v253 = vpop.f32.mrb[0].mxu0
  %v254 = vadd.f32 %v102, %v253
  %v255 = vpop.f32.mrb[0].mxu0
  %256 = vmatprep.mubr.bf16.mxu0 0
  %257 = vmatmul.mubr.bf16.gmra.mrb[0].mxu0 %v74
  %v258 = vpop.f32.mrb[0].mxu0
  %v259 = vadd.f32 %v102, %v258
  %v260 = vpop.f32.mrb[0].mxu0
  %v261 = vpop.f32.mrb[0].mxu0
  %v262 = vadd.f32 %v102, %v261
  %v263 = vpop.f32.mrb[0].mxu0
  %264 = vmatprep.mubr.bf16.mxu0 0
  %265 = vmatmul.mubr.bf16.gmra.mrb[0].mxu0 %v75
  %v266 = vpop.f32.mrb[0].mxu0
  %v267 = vadd.f32 %v102, %v266
  %v268 = vpop.f32.mrb[0].mxu0
  %v269 = vpop.f32.mrb[0].mxu0
  %v270 = vadd.f32 %v102, %v269
  %v271 = vpop.f32.mrb[0].mxu0
  %272 = vmatprep.mubr.bf16.mxu0 0
  %273 = vmatmul.mubr.bf16.gmra.mrb[0].mxu0 %v76
  %v274 = vpop.f32.mrb[0].mxu0
  %v275 = vadd.f32 %v102, %v274
  %v276 = vpop.f32.mrb[0].mxu0
  %v277 = vpop.f32.mrb[0].mxu0
  %v278 = vadd.f32 %v102, %v277
  %v279 = vpop.f32.mrb[0].mxu0
  %280 = vmatprep.mubr.bf16.mxu0 0
  %281 = vmatmul.mubr.bf16.gmra.mrb[0].mxu0 %v77
  %v282 = vpop.f32.mrb[0].mxu0
  %v283 = vadd.f32 %v102, %v282
  %v284 = vpop.f32.mrb[0].mxu0
  %v285 = vpop.f32.mrb[0].mxu0
  %v286 = vadd.f32 %v102, %v285
  %v287 = vpop.f32.mrb[0].mxu0
  %288 = vmatprep.mubr.bf16.mxu0 0
  %289 = vmatmul.mubr.bf16.gmra.mrb[0].mxu0 %v78
  %v290 = vpop.f32.mrb[0].mxu0
  %v291 = vadd.f32 %v102, %v290
  %v292 = vpop.f32.mrb[0].mxu0
  %v293 = vpop.f32.mrb[0].mxu0
  %v294 = vadd.f32 %v102, %v293
  %v295 = vpop.f32.mrb[0].mxu0
  %296 = vmatprep.mubr.bf16.mxu0 0
  %297 = vmatmul.mubr.bf16.gmra.mrb[0].mxu0 %v79
  %v298 = vpop.f32.mrb[0].mxu0
  %v299 = vadd.f32 %v102, %v298
  %v300 = vpop.f32.mrb[0].mxu0
  %v301 = vpop.f32.mrb[0].mxu0
  %v302 = vadd.f32 %v102, %v301
  %v303 = vpop.f32.mrb[0].mxu0
  %304 = vmatprep.mubr.bf16.mxu0 0
  %305 = vmatmul.mubr.bf16.gmra.mrb[0].mxu0 %v80
  %v306 = vpop.f32.mrb[0].mxu0
  %v307 = vadd.f32 %v102, %v306
  %v308 = vpop.f32.mrb[0].mxu0
  %v309 = vpop.f32.mrb[0].mxu0
  %v310 = vadd.f32 %v102, %v309
  %v311 = vpop.f32.mrb[0].mxu0
  %312 = vdwg.mxu0
  %v313 = vmax.f32 %v187, 0.0
  %v314 = vmax.f32 %v190, 0.0
  %v315 = vmax.f32 %v195, 0.0
  %v316 = vmax.f32 %v198, 0.0
  %v317 = vmax.f32 %v203, 0.0
  %v318 = vmax.f32 %v206, 0.0
  %v319 = vmax.f32 %v211, 0.0
  %v320 = vmax.f32 %v214, 0.0
  %v321 = vmax.f32 %v219, 0.0
  %v322 = vmax.f32 %v222, 0.0
  %v323 = vmax.f32 %v227, 0.0
  %v324 = vmax.f32 %v230, 0.0
  %v325 = vmax.f32 %v235, 0.0
  %v326 = vmax.f32 %v238, 0.0
  %v327 = vmax.f32 %v243, 0.0
  %v328 = vmax.f32 %v246, 0.0
  %v329 = vmax.f32 %v251, 0.0
  %v330 = vmax.f32 %v254, 0.0
  %v331 = vmax.f32 %v259, 0.0
  %v332 = vmax.f32 %v262, 0.0
  %v333 = vmax.f32 %v267, 0.0
  %v334 = vmax.f32 %v270, 0.0
  %v335 = vmax.f32 %v275, 0.0
  %v336 = vmax.f32 %v278, 0.0
  %v337 = vmax.f32 %v283, 0.0
  %v338 = vmax.f32 %v286, 0.0
  %v339 = vmax.f32 %v291, 0.0
  %v340 = vmax.f32 %v294, 0.0
  %v341 = vmax.f32 %v299, 0.0
  %v342 = vmax.f32 %v302, 0.0
  %v343 = vmax.f32 %v307, 0.0
  %v344 = vmax.f32 %v310, 0.0
  %v345 = vpack.c.bf16 %v314, %v313
  %v346 = vpack.c.bf16 %v316, %v315
  %v347 = vpack.c.bf16 %v318, %v317
  %v348 = vpack.c.bf16 %v320, %v319
  %v349 = vpack.c.bf16 %v322, %v321
  %v350 = vpack.c.bf16 %v324, %v323
  %v351 = vpack.c.bf16 %v326, %v325
  %v352 = vpack.c.bf16 %v328, %v327
  %v353 = vpack.c.bf16 %v330, %v329
  %v354 = vpack.c.bf16 %v332, %v331
  %v355 = vpack.c.bf16 %v334, %v333
  %v356 = vpack.c.bf16 %v336, %v335
  %v357 = vpack.c.bf16 %v338, %v337
  %v358 = vpack.c.bf16 %v340, %v339
  %v359 = vpack.c.bf16 %v342, %v341
  %v360 = vpack.c.bf16 %v344, %v343
  %v361 = vld [vmem:[%s3] sm:$0xf]
  %v362 = vld [vmem:[%s3 + $0x4] sm:$0xf]
  %v363 = vld [vmem:[%s3 + $0x8] sm:$0xf]
  %v364 = vld [vmem:[%s3 + $0xc] sm:$0xf]
  %v365 = vld [vmem:[%s3 + $0x10] sm:$0xf]
  %v366 = vld [vmem:[%s3 + $0x14] sm:$0xf]
  %v367 = vld [vmem:[%s3 + $0x18] sm:$0xf]
  %v368 = vld [vmem:[%s3 + $0x1c] sm:$0xf]
  %v369 = vld [vmem:[%s3 + $0x20] sm:$0xf]
  %v370 = vld [vmem:[%s3 + $0x24] sm:$0xf]
  %v371 = vld [vmem:[%s3 + $0x28] sm:$0xf]
  %v372 = vld [vmem:[%s3 + $0x2c] sm:$0xf]
  %v373 = vld [vmem:[%s3 + $0x30] sm:$0xf]
  %v374 = vld [vmem:[%s3 + $0x34] sm:$0xf]
  %v375 = vld [vmem:[%s3 + $0x38] sm:$0xf]
  %v376 = vld [vmem:[%s3 + $0x3c] sm:$0xf]
  %v377 = vld [vmem:[%s4] sm:$0x1]
  %v379 = vlaneseq
  %v380 = vshrl.u32 %v379, 7
  %v381 = vsub.s32 0, %v380
  %v382 = vrot.slane %v377, %v381
  %v400 = vunpack.c.l.b16 %v361
  %v401 = vunpack.c.l.b16 %v362
  %v402 = vunpack.c.l.b16 %v363
  %v403 = vunpack.c.l.b16 %v364
  %v404 = vunpack.c.l.b16 %v365
  %v405 = vunpack.c.l.b16 %v366
  %v406 = vunpack.c.l.b16 %v367
  %v407 = vunpack.c.l.b16 %v368
  %v408 = vunpack.c.l.b16 %v369
  %v409 = vunpack.c.l.b16 %v370
  %v410 = vunpack.c.l.b16 %v371
  %v411 = vunpack.c.l.b16 %v372
  %v412 = vunpack.c.l.b16 %v373
  %v413 = vunpack.c.l.b16 %v374
  %v414 = vunpack.c.l.b16 %v375
  %v415 = vunpack.c.l.b16 %v376
  %v416 = vpack.c.b16 %v401, %v400
  %v417 = vpack.c.b16 %v403, %v402
  %v418 = vpack.c.b16 %v405, %v404
  %v419 = vpack.c.b16 %v407, %v406
  %v420 = vpack.c.b16 %v409, %v408
  %v421 = vpack.c.b16 %v411, %v410
  %v422 = vpack.c.b16 %v413, %v412
  %v423 = vpack.c.b16 %v415, %v414
  %432 = vmatprep.subr.bf16.mxu0 0
  %433 = vmatpush1.bf16.msra.mxu0 %v416
  %434 = vmatprep.subr.bf16.mxu0 0
  %435 = vmatpush1.bf16.msra.mxu0 %v417
  %436 = vmatprep.subr.bf16.mxu0 0
  %437 = vmatpush1.bf16.msra.mxu0 %v418
  %438 = vmatprep.subr.bf16.mxu0 0
  %439 = vmatpush1.bf16.msra.mxu0 %v419
  %440 = vmatprep.subr.bf16.mxu0 0
  %441 = vmatpush1.bf16.msra.mxu0 %v420
  %442 = vmatprep.subr.bf16.mxu0 0
  %443 = vmatpush1.bf16.msra.mxu0 %v421
  %444 = vmatprep.subr.bf16.mxu0 0
  %445 = vmatpush1.bf16.msra.mxu0 %v422
  %446 = vmatprep.subr.bf16.mxu0 0
  %447 = vmatpush1.bf16.msra.mxu0 %v423
  %448 = vmatprep.subr.bf16.mxu0 0
  %449 = vmatpush1.bf16.msra.mxu0 0
  %450 = vmatprep.subr.bf16.mxu0 0
  %451 = vmatpush1.bf16.msra.mxu0 0
  %452 = vmatprep.subr.bf16.mxu0 0
  %453 = vmatpush1.bf16.msra.mxu0 0
  %454 = vmatprep.subr.bf16.mxu0 0
  %455 = vmatpush1.bf16.msra.mxu0 0
  %456 = vmatprep.subr.bf16.mxu0 0
  %457 = vmatpush1.bf16.msra.mxu0 0
  %458 = vmatprep.subr.bf16.mxu0 0
  %459 = vmatpush1.bf16.msra.mxu0 0
  %460 = vmatprep.subr.bf16.mxu0 0
  %461 = vmatpush1.bf16.msra.mxu0 0
  %462 = vmatprep.subr.bf16.mxu0 0
  %463 = vmatpush1.bf16.msra.mxu0 0
  %464 = vmatprep.mubr.bf16.mxu0 0
  %465 = vmatmul.mubr.bf16.gmra.mrb[0].mxu0 %v345
  %v466 = vpop.f32.mrb[0].mxu0
  %v467 = vadd.f32 %v382, %v466
  %v468 = vpop.f32.mrb[0].mxu0
  %v469 = vpop.f32.mrb[0].mxu0
  %v470 = vadd.f32 %v382, %v469
  %v471 = vpop.f32.mrb[0].mxu0
  %472 = vmatprep.mubr.bf16.mxu0 0
  %473 = vmatmul.mubr.bf16.gmra.mrb[0].mxu0 %v346
  %v474 = vpop.f32.mrb[0].mxu0
  %v475 = vadd.f32 %v382, %v474
  %v476 = vpop.f32.mrb[0].mxu0
  %v477 = vpop.f32.mrb[0].mxu0
  %v478 = vadd.f32 %v382, %v477
  %v479 = vpop.f32.mrb[0].mxu0
  %480 = vmatprep.mubr.bf16.mxu0 0
  %481 = vmatmul.mubr.bf16.gmra.mrb[0].mxu0 %v347
  %v482 = vpop.f32.mrb[0].mxu0
  %v483 = vadd.f32 %v382, %v482
  %v484 = vpop.f32.mrb[0].mxu0
  %v485 = vpop.f32.mrb[0].mxu0
  %v486 = vadd.f32 %v382, %v485
  %v487 = vpop.f32.mrb[0].mxu0
  %488 = vmatprep.mubr.bf16.mxu0 0
  %489 = vmatmul.mubr.bf16.gmra.mrb[0].mxu0 %v348
  %v490 = vpop.f32.mrb[0].mxu0
  %v491 = vadd.f32 %v382, %v490
  %v492 = vpop.f32.mrb[0].mxu0
  %v493 = vpop.f32.mrb[0].mxu0
  %v494 = vadd.f32 %v382, %v493
  %v495 = vpop.f32.mrb[0].mxu0
  %496 = vmatprep.mubr.bf16.mxu0 0
  %497 = vmatmul.mubr.bf16.gmra.mrb[0].mxu0 %v349
  %v498 = vpop.f32.mrb[0].mxu0
  %v499 = vadd.f32 %v382, %v498
  %v500 = vpop.f32.mrb[0].mxu0
  %v501 = vpop.f32.mrb[0].mxu0
  %v502 = vadd.f32 %v382, %v501
  %v503 = vpop.f32.mrb[0].mxu0
  %504 = vmatprep.mubr.bf16.mxu0 0
  %505 = vmatmul.mubr.bf16.gmra.mrb[0].mxu0 %v350
  %v506 = vpop.f32.mrb[0].mxu0
  %v507 = vadd.f32 %v382, %v506
  %v508 = vpop.f32.mrb[0].mxu0
  %v509 = vpop.f32.mrb[0].mxu0
  %v510 = vadd.f32 %v382, %v509
  %v511 = vpop.f32.mrb[0].mxu0
  %512 = vmatprep.mubr.bf16.mxu0 0
  %513 = vmatmul.mubr.bf16.gmra.mrb[0].mxu0 %v351
  %v514 = vpop.f32.mrb[0].mxu0
  %v515 = vadd.f32 %v382, %v514
  %v516 = vpop.f32.mrb[0].mxu0
  %v517 = vpop.f32.mrb[0].mxu0
  %v518 = vadd.f32 %v382, %v517
  %v519 = vpop.f32.mrb[0].mxu0
  %520 = vmatprep.mubr.bf16.mxu0 0
  %521 = vmatmul.mubr.bf16.gmra.mrb[0].mxu0 %v352
  %v522 = vpop.f32.mrb[0].mxu0
  %v523 = vadd.f32 %v382, %v522
  %v524 = vpop.f32.mrb[0].mxu0
  %v525 = vpop.f32.mrb[0].mxu0
  %v526 = vadd.f32 %v382, %v525
  %v527 = vpop.f32.mrb[0].mxu0
  %528 = vmatprep.mubr.bf16.mxu0 0
  %529 = vmatmul.mubr.bf16.gmra.mrb[0].mxu0 %v353
  %v530 = vpop.f32.mrb[0].mxu0
  %v531 = vadd.f32 %v382, %v530
  %v532 = vpop.f32.mrb[0].mxu0
  %v533 = vpop.f32.mrb[0].mxu0
  %v534 = vadd.f32 %v382, %v533
  %v535 = vpop.f32.mrb[0].mxu0
  %536 = vmatprep.mubr.bf16.mxu0 0
  %537 = vmatmul.mubr.bf16.gmra.mrb[0].mxu0 %v354
  %v538 = vpop.f32.mrb[0].mxu0
  %v539 = vadd.f32 %v382, %v538
  %v540 = vpop.f32.mrb[0].mxu0
  %v541 = vpop.f32.mrb[0].mxu0
  %v542 = vadd.f32 %v382, %v541
  %v543 = vpop.f32.mrb[0].mxu0
  %544 = vmatprep.mubr.bf16.mxu0 0
  %545 = vmatmul.mubr.bf16.gmra.mrb[0].mxu0 %v355
  %v546 = vpop.f32.mrb[0].mxu0
  %v547 = vadd.f32 %v382, %v546
  %v548 = vpop.f32.mrb[0].mxu0
  %v549 = vpop.f32.mrb[0].mxu0
  %v550 = vadd.f32 %v382, %v549
  %v551 = vpop.f32.mrb[0].mxu0
  %552 = vmatprep.mubr.bf16.mxu0 0
  %553 = vmatmul.mubr.bf16.gmra.mrb[0].mxu0 %v356
  %v554 = vpop.f32.mrb[0].mxu0
  %v555 = vadd.f32 %v382, %v554
  %v556 = vpop.f32.mrb[0].mxu0
  %v557 = vpop.f32.mrb[0].mxu0
  %v558 = vadd.f32 %v382, %v557
  %v559 = vpop.f32.mrb[0].mxu0
  %560 = vmatprep.mubr.bf16.mxu0 0
  %561 = vmatmul.mubr.bf16.gmra.mrb[0].mxu0 %v357
  %v562 = vpop.f32.mrb[0].mxu0
  %v563 = vadd.f32 %v382, %v562
  %v564 = vpop.f32.mrb[0].mxu0
  %v565 = vpop.f32.mrb[0].mxu0
  %v566 = vadd.f32 %v382, %v565
  %v567 = vpop.f32.mrb[0].mxu0
  %568 = vmatprep.mubr.bf16.mxu0 0
  %569 = vmatmul.mubr.bf16.gmra.mrb[0].mxu0 %v358
  %v570 = vpop.f32.mrb[0].mxu0
  %v571 = vadd.f32 %v382, %v570
  %v572 = vpop.f32.mrb[0].mxu0
  %v573 = vpop.f32.mrb[0].mxu0
  %v574 = vadd.f32 %v382, %v573
  %v575 = vpop.f32.mrb[0].mxu0
  %576 = vmatprep.mubr.bf16.mxu0 0
  %577 = vmatmul.mubr.bf16.gmra.mrb[0].mxu0 %v359
  %v578 = vpop.f32.mrb[0].mxu0
  %v579 = vadd.f32 %v382, %v578
  %v580 = vpop.f32.mrb[0].mxu0
  %v581 = vpop.f32.mrb[0].mxu0
  %v582 = vadd.f32 %v382, %v581
  %v583 = vpop.f32.mrb[0].mxu0
  %584 = vmatprep.mubr.bf16.mxu0 0
  %585 = vmatmul.mubr.bf16.gmra.mrb[0].mxu0 %v360
  %v586 = vpop.f32.mrb[0].mxu0
  %v587 = vadd.f32 %v382, %v586
  %v588 = vpop.f32.mrb[0].mxu0
  %v589 = vpop.f32.mrb[0].mxu0
  %v590 = vadd.f32 %v382, %v589
  %v591 = vpop.f32.mrb[0].mxu0
  %592 = vdwg.mxu0
  %v593 = vmax.f32 %v467, 0.0
  %v594 = vmax.f32 %v470, 0.0
  %v595 = vmax.f32 %v475, 0.0
  %v596 = vmax.f32 %v478, 0.0
  %v597 = vmax.f32 %v483, 0.0
  %v598 = vmax.f32 %v486, 0.0
  %v599 = vmax.f32 %v491, 0.0
  %v600 = vmax.f32 %v494, 0.0
  %v601 = vmax.f32 %v499, 0.0
  %v602 = vmax.f32 %v502, 0.0
  %v603 = vmax.f32 %v507, 0.0
  %v604 = vmax.f32 %v510, 0.0
  %v605 = vmax.f32 %v515, 0.0
  %v606 = vmax.f32 %v518, 0.0
  %v607 = vmax.f32 %v523, 0.0
  %v608 = vmax.f32 %v526, 0.0
  %v609 = vmax.f32 %v531, 0.0
  %v610 = vmax.f32 %v534, 0.0
  %v611 = vmax.f32 %v539, 0.0
  %v612 = vmax.f32 %v542, 0.0
  %v613 = vmax.f32 %v547, 0.0
  %v614 = vmax.f32 %v550, 0.0
  %v615 = vmax.f32 %v555, 0.0
  %v616 = vmax.f32 %v558, 0.0
  %v617 = vmax.f32 %v563, 0.0
  %v618 = vmax.f32 %v566, 0.0
  %v619 = vmax.f32 %v571, 0.0
  %v620 = vmax.f32 %v574, 0.0
  %v621 = vmax.f32 %v579, 0.0
  %v622 = vmax.f32 %v582, 0.0
  %v623 = vmax.f32 %v587, 0.0
  %v624 = vmax.f32 %v590, 0.0
  %v625 = vpack.c.bf16 %v594, %v593
  %v626 = vpack.c.bf16 %v596, %v595
  %v627 = vpack.c.bf16 %v598, %v597
  %v628 = vpack.c.bf16 %v600, %v599
  %v629 = vpack.c.bf16 %v602, %v601
  %v630 = vpack.c.bf16 %v604, %v603
  %v631 = vpack.c.bf16 %v606, %v605
  %v632 = vpack.c.bf16 %v608, %v607
  %v633 = vpack.c.bf16 %v610, %v609
  %v634 = vpack.c.bf16 %v612, %v611
  %v635 = vpack.c.bf16 %v614, %v613
  %v636 = vpack.c.bf16 %v616, %v615
  %v637 = vpack.c.bf16 %v618, %v617
  %v638 = vpack.c.bf16 %v620, %v619
  %v639 = vpack.c.bf16 %v622, %v621
  %v640 = vpack.c.bf16 %v624, %v623
  %v641 = vld [vmem:[%s5] sm:$0xf]
  %v642 = vld [vmem:[%s5 + $0x4] sm:$0xf]
  %v643 = vld [vmem:[%s5 + $0x8] sm:$0xf]
  %v644 = vld [vmem:[%s5 + $0xc] sm:$0xf]
  %v645 = vld [vmem:[%s5 + $0x10] sm:$0xf]
  %v646 = vld [vmem:[%s5 + $0x14] sm:$0xf]
  %v647 = vld [vmem:[%s5 + $0x18] sm:$0xf]
  %v648 = vld [vmem:[%s5 + $0x1c] sm:$0xf]
  %v649 = vld [vmem:[%s5 + $0x20] sm:$0xf]
  %v650 = vld [vmem:[%s5 + $0x24] sm:$0xf]
  %v651 = vld [vmem:[%s5 + $0x28] sm:$0xf]
  %v652 = vld [vmem:[%s5 + $0x2c] sm:$0xf]
  %v653 = vld [vmem:[%s5 + $0x30] sm:$0xf]
  %v654 = vld [vmem:[%s5 + $0x34] sm:$0xf]
  %v655 = vld [vmem:[%s5 + $0x38] sm:$0xf]
  %v656 = vld [vmem:[%s5 + $0x3c] sm:$0xf]
  %v657 = vld [vmem:[%s6] sm:$0x1]
  %v659 = vlaneseq
  %v660 = vshrl.u32 %v659, 7
  %v661 = vsub.s32 0, %v660
  %v662 = vrot.slane %v657, %v661
  %v680 = vunpack.c.l.b16 %v641
  %v681 = vunpack.c.l.b16 %v642
  %v682 = vunpack.c.l.b16 %v643
  %v683 = vunpack.c.l.b16 %v644
  %v684 = vunpack.c.l.b16 %v645
  %v685 = vunpack.c.l.b16 %v646
  %v686 = vunpack.c.l.b16 %v647
  %v687 = vunpack.c.l.b16 %v648
  %v688 = vunpack.c.l.b16 %v649
  %v689 = vunpack.c.l.b16 %v650
  %v690 = vunpack.c.l.b16 %v651
  %v691 = vunpack.c.l.b16 %v652
  %v692 = vunpack.c.l.b16 %v653
  %v693 = vunpack.c.l.b16 %v654
  %v694 = vunpack.c.l.b16 %v655
  %v695 = vunpack.c.l.b16 %v656
  %v696 = vpack.c.b16 %v681, %v680
  %v697 = vpack.c.b16 %v683, %v682
  %v698 = vpack.c.b16 %v685, %v684
  %v699 = vpack.c.b16 %v687, %v686
  %v700 = vpack.c.b16 %v689, %v688
  %v701 = vpack.c.b16 %v691, %v690
  %v702 = vpack.c.b16 %v693, %v692
  %v703 = vpack.c.b16 %v695, %v694
  %712 = vmatprep.subr.bf16.mxu0 0
  %713 = vmatpush1.bf16.msra.mxu0 %v696
  %714 = vmatprep.subr.bf16.mxu0 0
  %715 = vmatpush1.bf16.msra.mxu0 %v697
  %716 = vmatprep.subr.bf16.mxu0 0
  %717 = vmatpush1.bf16.msra.mxu0 %v698
  %718 = vmatprep.subr.bf16.mxu0 0
  %719 = vmatpush1.bf16.msra.mxu0 %v699
  %720 = vmatprep.subr.bf16.mxu0 0
  %721 = vmatpush1.bf16.msra.mxu0 %v700
  %722 = vmatprep.subr.bf16.mxu0 0
  %723 = vmatpush1.bf16.msra.mxu0 %v701
  %724 = vmatprep.subr.bf16.mxu0 0
  %725 = vmatpush1.bf16.msra.mxu0 %v702
  %726 = vmatprep.subr.bf16.mxu0 0
  %727 = vmatpush1.bf16.msra.mxu0 %v703
  %728 = vmatprep.subr.bf16.mxu0 0
  %729 = vmatpush1.bf16.msra.mxu0 0
  %730 = vmatprep.subr.bf16.mxu0 0
  %731 = vmatpush1.bf16.msra.mxu0 0
  %732 = vmatprep.subr.bf16.mxu0 0
  %733 = vmatpush1.bf16.msra.mxu0 0
  %734 = vmatprep.subr.bf16.mxu0 0
  %735 = vmatpush1.bf16.msra.mxu0 0
  %736 = vmatprep.subr.bf16.mxu0 0
  %737 = vmatpush1.bf16.msra.mxu0 0
  %738 = vmatprep.subr.bf16.mxu0 0
  %739 = vmatpush1.bf16.msra.mxu0 0
  %740 = vmatprep.subr.bf16.mxu0 0
  %741 = vmatpush1.bf16.msra.mxu0 0
  %742 = vmatprep.subr.bf16.mxu0 0
  %743 = vmatpush1.bf16.msra.mxu0 0
  %744 = vmatprep.mubr.bf16.mxu0 0
  %745 = vmatmul.mubr.bf16.gmra.mrb[0].mxu0 %v625
  %v746 = vpop.f32.mrb[0].mxu0
  %v747 = vadd.f32 %v662, %v746
  %v748 = vpop.f32.mrb[0].mxu0
  %v749 = vpop.f32.mrb[0].mxu0
  %v750 = vadd.f32 %v662, %v749
  %v751 = vpop.f32.mrb[0].mxu0
  %752 = vmatprep.mubr.bf16.mxu0 0
  %753 = vmatmul.mubr.bf16.gmra.mrb[0].mxu0 %v626
  %v754 = vpop.f32.mrb[0].mxu0
  %v755 = vadd.f32 %v662, %v754
  %v756 = vpop.f32.mrb[0].mxu0
  %v757 = vpop.f32.mrb[0].mxu0
  %v758 = vadd.f32 %v662, %v757
  %v759 = vpop.f32.mrb[0].mxu0
  %760 = vmatprep.mubr.bf16.mxu0 0
  %761 = vmatmul.mubr.bf16.gmra.mrb[0].mxu0 %v627
  %v762 = vpop.f32.mrb[0].mxu0
  %v763 = vadd.f32 %v662, %v762
  %v764 = vpop.f32.mrb[0].mxu0
  %v765 = vpop.f32.mrb[0].mxu0
  %v766 = vadd.f32 %v662, %v765
  %v767 = vpop.f32.mrb[0].mxu0
  %768 = vmatprep.mubr.bf16.mxu0 0
  %769 = vmatmul.mubr.bf16.gmra.mrb[0].mxu0 %v628
  %v770 = vpop.f32.mrb[0].mxu0
  %v771 = vadd.f32 %v662, %v770
  %v772 = vpop.f32.mrb[0].mxu0
  %v773 = vpop.f32.mrb[0].mxu0
  %v774 = vadd.f32 %v662, %v773
  %v775 = vpop.f32.mrb[0].mxu0
  %776 = vmatprep.mubr.bf16.mxu0 0
  %777 = vmatmul.mubr.bf16.gmra.mrb[0].mxu0 %v629
  %v778 = vpop.f32.mrb[0].mxu0
  %v779 = vadd.f32 %v662, %v778
  %v780 = vpop.f32.mrb[0].mxu0
  %v781 = vpop.f32.mrb[0].mxu0
  %v782 = vadd.f32 %v662, %v781
  %v783 = vpop.f32.mrb[0].mxu0
  %784 = vmatprep.mubr.bf16.mxu0 0
  %785 = vmatmul.mubr.bf16.gmra.mrb[0].mxu0 %v630
  %v786 = vpop.f32.mrb[0].mxu0
  %v787 = vadd.f32 %v662, %v786
  %v788 = vpop.f32.mrb[0].mxu0
  %v789 = vpop.f32.mrb[0].mxu0
  %v790 = vadd.f32 %v662, %v789
  %v791 = vpop.f32.mrb[0].mxu0
  %792 = vmatprep.mubr.bf16.mxu0 0
  %793 = vmatmul.mubr.bf16.gmra.mrb[0].mxu0 %v631
  %v794 = vpop.f32.mrb[0].mxu0
  %v795 = vadd.f32 %v662, %v794
  %v796 = vpop.f32.mrb[0].mxu0
  %v797 = vpop.f32.mrb[0].mxu0
  %v798 = vadd.f32 %v662, %v797
  %v799 = vpop.f32.mrb[0].mxu0
  %800 = vmatprep.mubr.bf16.mxu0 0
  %801 = vmatmul.mubr.bf16.gmra.mrb[0].mxu0 %v632
  %v802 = vpop.f32.mrb[0].mxu0
  %v803 = vadd.f32 %v662, %v802
  %v804 = vpop.f32.mrb[0].mxu0
  %v805 = vpop.f32.mrb[0].mxu0
  %v806 = vadd.f32 %v662, %v805
  %v807 = vpop.f32.mrb[0].mxu0
  %808 = vmatprep.mubr.bf16.mxu0 0
  %809 = vmatmul.mubr.bf16.gmra.mrb[0].mxu0 %v633
  %v810 = vpop.f32.mrb[0].mxu0
  %v811 = vadd.f32 %v662, %v810
  %v812 = vpop.f32.mrb[0].mxu0
  %v813 = vpop.f32.mrb[0].mxu0
  %v814 = vadd.f32 %v662, %v813
  %v815 = vpop.f32.mrb[0].mxu0
  %816 = vmatprep.mubr.bf16.mxu0 0
  %817 = vmatmul.mubr.bf16.gmra.mrb[0].mxu0 %v634
  %v818 = vpop.f32.mrb[0].mxu0
  %v819 = vadd.f32 %v662, %v818
  %v820 = vpop.f32.mrb[0].mxu0
  %v821 = vpop.f32.mrb[0].mxu0
  %v822 = vadd.f32 %v662, %v821
  %v823 = vpop.f32.mrb[0].mxu0
  %824 = vmatprep.mubr.bf16.mxu0 0
  %825 = vmatmul.mubr.bf16.gmra.mrb[0].mxu0 %v635
  %v826 = vpop.f32.mrb[0].mxu0
  %v827 = vadd.f32 %v662, %v826
  %v828 = vpop.f32.mrb[0].mxu0
  %v829 = vpop.f32.mrb[0].mxu0
  %v830 = vadd.f32 %v662, %v829
  %v831 = vpop.f32.mrb[0].mxu0
  %832 = vmatprep.mubr.bf16.mxu0 0
  %833 = vmatmul.mubr.bf16.gmra.mrb[0].mxu0 %v636
  %v834 = vpop.f32.mrb[0].mxu0
  %v835 = vadd.f32 %v662, %v834
  %v836 = vpop.f32.mrb[0].mxu0
  %v837 = vpop.f32.mrb[0].mxu0
  %v838 = vadd.f32 %v662, %v837
  %v839 = vpop.f32.mrb[0].mxu0
  %840 = vmatprep.mubr.bf16.mxu0 0
  %841 = vmatmul.mubr.bf16.gmra.mrb[0].mxu0 %v637
  %v842 = vpop.f32.mrb[0].mxu0
  %v843 = vadd.f32 %v662, %v842
  %v844 = vpop.f32.mrb[0].mxu0
  %v845 = vpop.f32.mrb[0].mxu0
  %v846 = vadd.f32 %v662, %v845
  %v847 = vpop.f32.mrb[0].mxu0
  %848 = vmatprep.mubr.bf16.mxu0 0
  %849 = vmatmul.mubr.bf16.gmra.mrb[0].mxu0 %v638
  %v850 = vpop.f32.mrb[0].mxu0
  %v851 = vadd.f32 %v662, %v850
  %v852 = vpop.f32.mrb[0].mxu0
  %v853 = vpop.f32.mrb[0].mxu0
  %v854 = vadd.f32 %v662, %v853
  %v855 = vpop.f32.mrb[0].mxu0
  %856 = vmatprep.mubr.bf16.mxu0 0
  %857 = vmatmul.mubr.bf16.gmra.mrb[0].mxu0 %v639
  %v858 = vpop.f32.mrb[0].mxu0
  %v859 = vadd.f32 %v662, %v858
  %v860 = vpop.f32.mrb[0].mxu0
  %v861 = vpop.f32.mrb[0].mxu0
  %v862 = vadd.f32 %v662, %v861
  %v863 = vpop.f32.mrb[0].mxu0
  %864 = vmatprep.mubr.bf16.mxu0 0
  %865 = vmatmul.mubr.bf16.gmra.mrb[0].mxu0 %v640
  %v866 = vpop.f32.mrb[0].mxu0
  %v867 = vadd.f32 %v662, %v866
  %v868 = vpop.f32.mrb[0].mxu0
  %v869 = vpop.f32.mrb[0].mxu0
  %v870 = vadd.f32 %v662, %v869
  %v871 = vpop.f32.mrb[0].mxu0
  %872 = vdwg.mxu0
  %873 = vadd.xlane.f32.xlu0 %v747
  %v874 = vpop.xlane.xlu0 %873
  %875 = vadd.xlane.f32.xlu0 %v750
  %v876 = vpop.xlane.xlu0 %875
  %877 = vadd.xlane.f32.xlu0 %v755
  %v878 = vpop.xlane.xlu0 %877
  %879 = vadd.xlane.f32.xlu0 %v758
  %v880 = vpop.xlane.xlu0 %879
  %881 = vadd.xlane.f32.xlu0 %v763
  %v882 = vpop.xlane.xlu0 %881
  %883 = vadd.xlane.f32.xlu0 %v766
  %v884 = vpop.xlane.xlu0 %883
  %885 = vadd.xlane.f32.xlu0 %v771
  %v886 = vpop.xlane.xlu0 %885
  %887 = vadd.xlane.f32.xlu0 %v774
  %v888 = vpop.xlane.xlu0 %887
  %889 = vadd.xlane.f32.xlu0 %v779
  %v890 = vpop.xlane.xlu0 %889
  %891 = vadd.xlane.f32.xlu0 %v782
  %v892 = vpop.xlane.xlu0 %891
  %893 = vadd.xlane.f32.xlu0 %v787
  %v894 = vpop.xlane.xlu0 %893
  %895 = vadd.xlane.f32.xlu0 %v790
  %v896 = vpop.xlane.xlu0 %895
  %897 = vadd.xlane.f32.xlu0 %v795
  %v898 = vpop.xlane.xlu0 %897
  %899 = vadd.xlane.f32.xlu0 %v798
  %v900 = vpop.xlane.xlu0 %899
  %901 = vadd.xlane.f32.xlu0 %v803
  %v902 = vpop.xlane.xlu0 %901
  %903 = vadd.xlane.f32.xlu0 %v806
  %v904 = vpop.xlane.xlu0 %903
  %905 = vadd.xlane.f32.xlu0 %v811
  %v906 = vpop.xlane.xlu0 %905
  %907 = vadd.xlane.f32.xlu0 %v814
  %v908 = vpop.xlane.xlu0 %907
  %909 = vadd.xlane.f32.xlu0 %v819
  %v910 = vpop.xlane.xlu0 %909
  %911 = vadd.xlane.f32.xlu0 %v822
  %v912 = vpop.xlane.xlu0 %911
  %913 = vadd.xlane.f32.xlu0 %v827
  %v914 = vpop.xlane.xlu0 %913
  %915 = vadd.xlane.f32.xlu0 %v830
  %v916 = vpop.xlane.xlu0 %915
  %917 = vadd.xlane.f32.xlu0 %v835
  %v918 = vpop.xlane.xlu0 %917
  %919 = vadd.xlane.f32.xlu0 %v838
  %v920 = vpop.xlane.xlu0 %919
  %921 = vadd.xlane.f32.xlu0 %v843
  %v922 = vpop.xlane.xlu0 %921
  %923 = vadd.xlane.f32.xlu0 %v846
  %v924 = vpop.xlane.xlu0 %923
  %925 = vadd.xlane.f32.xlu0 %v851
  %v926 = vpop.xlane.xlu0 %925
  %927 = vadd.xlane.f32.xlu0 %v854
  %v928 = vpop.xlane.xlu0 %927
  %929 = vadd.xlane.f32.xlu0 %v859
  %v930 = vpop.xlane.xlu0 %929
  %931 = vadd.xlane.f32.xlu0 %v862
  %v932 = vpop.xlane.xlu0 %931
  %933 = vadd.xlane.f32.xlu0 %v867
  %v934 = vpop.xlane.xlu0 %933
  %935 = vadd.xlane.f32.xlu0 %v870
  %v936 = vpop.xlane.xlu0 %935
  %v937 = vrcp.pop 128.0
  %v938 = vmul.f32 %v874, %v937
  %v939 = vmul.f32 %v876, %v937
  %v940 = vmul.f32 %v878, %v937
  %v941 = vmul.f32 %v880, %v937
  %v942 = vmul.f32 %v882, %v937
  %v943 = vmul.f32 %v884, %v937
  %v944 = vmul.f32 %v886, %v937
  %v945 = vmul.f32 %v888, %v937
  %v946 = vmul.f32 %v890, %v937
  %v947 = vmul.f32 %v892, %v937
  %v948 = vmul.f32 %v894, %v937
  %v949 = vmul.f32 %v896, %v937
  %v950 = vmul.f32 %v898, %v937
  %v951 = vmul.f32 %v900, %v937
  %v952 = vmul.f32 %v902, %v937
  %v953 = vmul.f32 %v904, %v937
  %v954 = vmul.f32 %v906, %v937
  %v955 = vmul.f32 %v908, %v937
  %v956 = vmul.f32 %v910, %v937
  %v957 = vmul.f32 %v912, %v937
  %v958 = vmul.f32 %v914, %v937
  %v959 = vmul.f32 %v916, %v937
  %v960 = vmul.f32 %v918, %v937
  %v961 = vmul.f32 %v920, %v937
  %v962 = vmul.f32 %v922, %v937
  %v963 = vmul.f32 %v924, %v937
  %v964 = vmul.f32 %v926, %v937
  %v965 = vmul.f32 %v928, %v937
  %v966 = vmul.f32 %v930, %v937
  %v967 = vmul.f32 %v932, %v937
  %v968 = vmul.f32 %v934, %v937
  %v969 = vmul.f32 %v936, %v937
  %v970 = vsub.f32 %v747, %v938
  %v971 = vsub.f32 %v750, %v939
  %v972 = vsub.f32 %v755, %v940
  %v973 = vsub.f32 %v758, %v941
  %v974 = vsub.f32 %v763, %v942
  %v975 = vsub.f32 %v766, %v943
  %v976 = vsub.f32 %v771, %v944
  %v977 = vsub.f32 %v774, %v945
  %v978 = vsub.f32 %v779, %v946
  %v979 = vsub.f32 %v782, %v947
  %v980 = vsub.f32 %v787, %v948
  %v981 = vsub.f32 %v790, %v949
  %v982 = vsub.f32 %v795, %v950
  %v983 = vsub.f32 %v798, %v951
  %v984 = vsub.f32 %v803, %v952
  %v985 = vsub.f32 %v806, %v953
  %v986 = vsub.f32 %v811, %v954
  %v987 = vsub.f32 %v814, %v955
  %v988 = vsub.f32 %v819, %v956
  %v989 = vsub.f32 %v822, %v957
  %v990 = vsub.f32 %v827, %v958
  %v991 = vsub.f32 %v830, %v959
  %v992 = vsub.f32 %v835, %v960
  %v993 = vsub.f32 %v838, %v961
  %v994 = vsub.f32 %v843, %v962
  %v995 = vsub.f32 %v846, %v963
  %v996 = vsub.f32 %v851, %v964
  %v997 = vsub.f32 %v854, %v965
  %v998 = vsub.f32 %v859, %v966
  %v999 = vsub.f32 %v862, %v967
  %v1000 = vsub.f32 %v867, %v968
  %v1001 = vsub.f32 %v870, %v969
  %v1002 = vmul.f32 %v970, %v970
  %v1003 = vmul.f32 %v971, %v971
  %v1004 = vmul.f32 %v972, %v972
  %v1005 = vmul.f32 %v973, %v973
  %v1006 = vmul.f32 %v974, %v974
  %v1007 = vmul.f32 %v975, %v975
  %v1008 = vmul.f32 %v976, %v976
  %v1009 = vmul.f32 %v977, %v977
  %v1010 = vmul.f32 %v978, %v978
  %v1011 = vmul.f32 %v979, %v979
  %v1012 = vmul.f32 %v980, %v980
  %v1013 = vmul.f32 %v981, %v981
  %v1014 = vmul.f32 %v982, %v982
  %v1015 = vmul.f32 %v983, %v983
  %v1016 = vmul.f32 %v984, %v984
  %v1017 = vmul.f32 %v985, %v985
  %v1018 = vmul.f32 %v986, %v986
  %v1019 = vmul.f32 %v987, %v987
  %v1020 = vmul.f32 %v988, %v988
  %v1021 = vmul.f32 %v989, %v989
  %v1022 = vmul.f32 %v990, %v990
  %v1023 = vmul.f32 %v991, %v991
  %v1024 = vmul.f32 %v992, %v992
  %v1025 = vmul.f32 %v993, %v993
  %v1026 = vmul.f32 %v994, %v994
  %v1027 = vmul.f32 %v995, %v995
  %v1028 = vmul.f32 %v996, %v996
  %v1029 = vmul.f32 %v997, %v997
  %v1030 = vmul.f32 %v998, %v998
  %v1031 = vmul.f32 %v999, %v999
  %v1032 = vmul.f32 %v1000, %v1000
  %v1033 = vmul.f32 %v1001, %v1001
  %1034 = vadd.xlane.f32.xlu0 %v1002
  %v1035 = vpop.xlane.xlu0 %1034
  %1036 = vadd.xlane.f32.xlu0 %v1003
  %v1037 = vpop.xlane.xlu0 %1036
  %1038 = vadd.xlane.f32.xlu0 %v1004
  %v1039 = vpop.xlane.xlu0 %1038
  %1040 = vadd.xlane.f32.xlu0 %v1005
  %v1041 = vpop.xlane.xlu0 %1040
  %1042 = vadd.xlane.f32.xlu0 %v1006
  %v1043 = vpop.xlane.xlu0 %1042
  %1044 = vadd.xlane.f32.xlu0 %v1007
  %v1045 = vpop.xlane.xlu0 %1044
  %1046 = vadd.xlane.f32.xlu0 %v1008
  %v1047 = vpop.xlane.xlu0 %1046
  %1048 = vadd.xlane.f32.xlu0 %v1009
  %v1049 = vpop.xlane.xlu0 %1048
  %1050 = vadd.xlane.f32.xlu0 %v1010
  %v1051 = vpop.xlane.xlu0 %1050
  %1052 = vadd.xlane.f32.xlu0 %v1011
  %v1053 = vpop.xlane.xlu0 %1052
  %1054 = vadd.xlane.f32.xlu0 %v1012
  %v1055 = vpop.xlane.xlu0 %1054
  %1056 = vadd.xlane.f32.xlu0 %v1013
  %v1057 = vpop.xlane.xlu0 %1056
  %1058 = vadd.xlane.f32.xlu0 %v1014
  %v1059 = vpop.xlane.xlu0 %1058
  %1060 = vadd.xlane.f32.xlu0 %v1015
  %v1061 = vpop.xlane.xlu0 %1060
  %1062 = vadd.xlane.f32.xlu0 %v1016
  %v1063 = vpop.xlane.xlu0 %1062
  %1064 = vadd.xlane.f32.xlu0 %v1017
  %v1065 = vpop.xlane.xlu0 %1064
  %1066 = vadd.xlane.f32.xlu0 %v1018
  %v1067 = vpop.xlane.xlu0 %1066
  %1068 = vadd.xlane.f32.xlu0 %v1019
  %v1069 = vpop.xlane.xlu0 %1068
  %1070 = vadd.xlane.f32.xlu0 %v1020
  %v1071 = vpop.xlane.xlu0 %1070
  %1072 = vadd.xlane.f32.xlu0 %v1021
  %v1073 = vpop.xlane.xlu0 %1072
  %1074 = vadd.xlane.f32.xlu0 %v1022
  %v1075 = vpop.xlane.xlu0 %1074
  %1076 = vadd.xlane.f32.xlu0 %v1023
  %v1077 = vpop.xlane.xlu0 %1076
  %1078 = vadd.xlane.f32.xlu0 %v1024
  %v1079 = vpop.xlane.xlu0 %1078
  %1080 = vadd.xlane.f32.xlu0 %v1025
  %v1081 = vpop.xlane.xlu0 %1080
  %1082 = vadd.xlane.f32.xlu0 %v1026
  %v1083 = vpop.xlane.xlu0 %1082
  %1084 = vadd.xlane.f32.xlu0 %v1027
  %v1085 = vpop.xlane.xlu0 %1084
  %1086 = vadd.xlane.f32.xlu0 %v1028
  %v1087 = vpop.xlane.xlu0 %1086
  %1088 = vadd.xlane.f32.xlu0 %v1029
  %v1089 = vpop.xlane.xlu0 %1088
  %1090 = vadd.xlane.f32.xlu0 %v1030
  %v1091 = vpop.xlane.xlu0 %1090
  %1092 = vadd.xlane.f32.xlu0 %v1031
  %v1093 = vpop.xlane.xlu0 %1092
  %1094 = vadd.xlane.f32.xlu0 %v1032
  %v1095 = vpop.xlane.xlu0 %1094
  %1096 = vadd.xlane.f32.xlu0 %v1033
  %v1097 = vpop.xlane.xlu0 %1096
  %v1098 = vmul.f32 %v1035, %v937
  %v1099 = vmul.f32 %v1037, %v937
  %v1100 = vmul.f32 %v1039, %v937
  %v1101 = vmul.f32 %v1041, %v937
  %v1102 = vmul.f32 %v1043, %v937
  %v1103 = vmul.f32 %v1045, %v937
  %v1104 = vmul.f32 %v1047, %v937
  %v1105 = vmul.f32 %v1049, %v937
  %v1106 = vmul.f32 %v1051, %v937
  %v1107 = vmul.f32 %v1053, %v937
  %v1108 = vmul.f32 %v1055, %v937
  %v1109 = vmul.f32 %v1057, %v937
  %v1110 = vmul.f32 %v1059, %v937
  %v1111 = vmul.f32 %v1061, %v937
  %v1112 = vmul.f32 %v1063, %v937
  %v1113 = vmul.f32 %v1065, %v937
  %v1114 = vmul.f32 %v1067, %v937
  %v1115 = vmul.f32 %v1069, %v937
  %v1116 = vmul.f32 %v1071, %v937
  %v1117 = vmul.f32 %v1073, %v937
  %v1118 = vmul.f32 %v1075, %v937
  %v1119 = vmul.f32 %v1077, %v937
  %v1120 = vmul.f32 %v1079, %v937
  %v1121 = vmul.f32 %v1081, %v937
  %v1122 = vmul.f32 %v1083, %v937
  %v1123 = vmul.f32 %v1085, %v937
  %v1124 = vmul.f32 %v1087, %v937
  %v1125 = vmul.f32 %v1089, %v937
  %v1126 = vmul.f32 %v1091, %v937
  %v1127 = vmul.f32 %v1093, %v937
  %v1128 = vmul.f32 %v1095, %v937
  %v1129 = vmul.f32 %v1097, %v937
  %v1130 = vadd.f32 %v1098, 1e-05
  %v1131 = vadd.f32 %v1099, 1e-05
  %v1132 = vadd.f32 %v1100, 1e-05
  %v1133 = vadd.f32 %v1101, 1e-05
  %v1134 = vadd.f32 %v1102, 1e-05
  %v1135 = vadd.f32 %v1103, 1e-05
  %v1136 = vadd.f32 %v1104, 1e-05
  %v1137 = vadd.f32 %v1105, 1e-05
  %v1138 = vadd.f32 %v1106, 1e-05
  %v1139 = vadd.f32 %v1107, 1e-05
  %v1140 = vadd.f32 %v1108, 1e-05
  %v1141 = vadd.f32 %v1109, 1e-05
  %v1142 = vadd.f32 %v1110, 1e-05
  %v1143 = vadd.f32 %v1111, 1e-05
  %v1144 = vadd.f32 %v1112, 1e-05
  %v1145 = vadd.f32 %v1113, 1e-05
  %v1146 = vadd.f32 %v1114, 1e-05
  %v1147 = vadd.f32 %v1115, 1e-05
  %v1148 = vadd.f32 %v1116, 1e-05
  %v1149 = vadd.f32 %v1117, 1e-05
  %v1150 = vadd.f32 %v1118, 1e-05
  %v1151 = vadd.f32 %v1119, 1e-05
  %v1152 = vadd.f32 %v1120, 1e-05
  %v1153 = vadd.f32 %v1121, 1e-05
  %v1154 = vadd.f32 %v1122, 1e-05
  %v1155 = vadd.f32 %v1123, 1e-05
  %v1156 = vadd.f32 %v1124, 1e-05
  %v1157 = vadd.f32 %v1125, 1e-05
  %v1158 = vadd.f32 %v1126, 1e-05
  %v1159 = vadd.f32 %v1127, 1e-05
  %v1160 = vadd.f32 %v1128, 1e-05
  %v1161 = vadd.f32 %v1129, 1e-05
  %v1162 = vrsqrt.pop %v1130
  %v1163 = vrsqrt.pop %v1131
  %v1164 = vrsqrt.pop %v1132
  %v1165 = vrsqrt.pop %v1133
  %v1166 = vrsqrt.pop %v1134
  %v1167 = vrsqrt.pop %v1135
  %v1168 = vrsqrt.pop %v1136
  %v1169 = vrsqrt.pop %v1137
  %v1170 = vrsqrt.pop %v1138
  %v1171 = vrsqrt.pop %v1139
  %v1172 = vrsqrt.pop %v1140
  %v1173 = vrsqrt.pop %v1141
  %v1174 = vrsqrt.pop %v1142
  %v1175 = vrsqrt.pop %v1143
  %v1176 = vrsqrt.pop %v1144
  %v1177 = vrsqrt.pop %v1145
  %v1178 = vrsqrt.pop %v1146
  %v1179 = vrsqrt.pop %v1147
  %v1180 = vrsqrt.pop %v1148
  %v1181 = vrsqrt.pop %v1149
  %v1182 = vrsqrt.pop %v1150
  %v1183 = vrsqrt.pop %v1151
  %v1184 = vrsqrt.pop %v1152
  %v1185 = vrsqrt.pop %v1153
  %v1186 = vrsqrt.pop %v1154
  %v1187 = vrsqrt.pop %v1155
  %v1188 = vrsqrt.pop %v1156
  %v1189 = vrsqrt.pop %v1157
  %v1190 = vrsqrt.pop %v1158
  %v1191 = vrsqrt.pop %v1159
  %v1192 = vrsqrt.pop %v1160
  %v1193 = vrsqrt.pop %v1161
  %v1194 = vmul.f32 %v970, %v1162
  %v1195 = vmul.f32 %v971, %v1163
  %v1196 = vmul.f32 %v972, %v1164
  %v1197 = vmul.f32 %v973, %v1165
  %v1198 = vmul.f32 %v974, %v1166
  %v1199 = vmul.f32 %v975, %v1167
  %v1200 = vmul.f32 %v976, %v1168
  %v1201 = vmul.f32 %v977, %v1169
  %v1202 = vmul.f32 %v978, %v1170
  %v1203 = vmul.f32 %v979, %v1171
  %v1204 = vmul.f32 %v980, %v1172
  %v1205 = vmul.f32 %v981, %v1173
  %v1206 = vmul.f32 %v982, %v1174
  %v1207 = vmul.f32 %v983, %v1175
  %v1208 = vmul.f32 %v984, %v1176
  %v1209 = vmul.f32 %v985, %v1177
  %v1210 = vmul.f32 %v986, %v1178
  %v1211 = vmul.f32 %v987, %v1179
  %v1212 = vmul.f32 %v988, %v1180
  %v1213 = vmul.f32 %v989, %v1181
  %v1214 = vmul.f32 %v990, %v1182
  %v1215 = vmul.f32 %v991, %v1183
  %v1216 = vmul.f32 %v992, %v1184
  %v1217 = vmul.f32 %v993, %v1185
  %v1218 = vmul.f32 %v994, %v1186
  %v1219 = vmul.f32 %v995, %v1187
  %v1220 = vmul.f32 %v996, %v1188
  %v1221 = vmul.f32 %v997, %v1189
  %v1222 = vmul.f32 %v998, %v1190
  %v1223 = vmul.f32 %v999, %v1191
  %v1224 = vmul.f32 %v1000, %v1192
  %v1225 = vmul.f32 %v1001, %v1193
  %v1226 = vld [vmem:[%s7] sm:$0x1]
  %v1228 = vlaneseq
  %v1229 = vshrl.u32 %v1228, 7
  %v1230 = vsub.s32 0, %v1229
  %v1231 = vrot.slane %v1226, %v1230
  %v1233 = vmul.f32 %v1194, %v1231
  %v1234 = vmul.f32 %v1195, %v1231
  %v1235 = vmul.f32 %v1196, %v1231
  %v1236 = vmul.f32 %v1197, %v1231
  %v1237 = vmul.f32 %v1198, %v1231
  %v1238 = vmul.f32 %v1199, %v1231
  %v1239 = vmul.f32 %v1200, %v1231
  %v1240 = vmul.f32 %v1201, %v1231
  %v1241 = vmul.f32 %v1202, %v1231
  %v1242 = vmul.f32 %v1203, %v1231
  %v1243 = vmul.f32 %v1204, %v1231
  %v1244 = vmul.f32 %v1205, %v1231
  %v1245 = vmul.f32 %v1206, %v1231
  %v1246 = vmul.f32 %v1207, %v1231
  %v1247 = vmul.f32 %v1208, %v1231
  %v1248 = vmul.f32 %v1209, %v1231
  %v1249 = vmul.f32 %v1210, %v1231
  %v1250 = vmul.f32 %v1211, %v1231
  %v1251 = vmul.f32 %v1212, %v1231
  %v1252 = vmul.f32 %v1213, %v1231
  %v1253 = vmul.f32 %v1214, %v1231
  %v1254 = vmul.f32 %v1215, %v1231
  %v1255 = vmul.f32 %v1216, %v1231
  %v1256 = vmul.f32 %v1217, %v1231
  %v1257 = vmul.f32 %v1218, %v1231
  %v1258 = vmul.f32 %v1219, %v1231
  %v1259 = vmul.f32 %v1220, %v1231
  %v1260 = vmul.f32 %v1221, %v1231
  %v1261 = vmul.f32 %v1222, %v1231
  %v1262 = vmul.f32 %v1223, %v1231
  %v1263 = vmul.f32 %v1224, %v1231
  %v1264 = vmul.f32 %v1225, %v1231
  %v1265 = vld [vmem:[%s8] sm:$0x1]
  %v1267 = vlaneseq
  %v1268 = vshrl.u32 %v1267, 7
  %v1269 = vsub.s32 0, %v1268
  %v1270 = vrot.slane %v1265, %v1269
  %v1272 = vadd.f32 %v1233, %v1270
  %v1273 = vadd.f32 %v1234, %v1270
  %v1274 = vadd.f32 %v1235, %v1270
  %v1275 = vadd.f32 %v1236, %v1270
  %v1276 = vadd.f32 %v1237, %v1270
  %v1277 = vadd.f32 %v1238, %v1270
  %v1278 = vadd.f32 %v1239, %v1270
  %v1279 = vadd.f32 %v1240, %v1270
  %v1280 = vadd.f32 %v1241, %v1270
  %v1281 = vadd.f32 %v1242, %v1270
  %v1282 = vadd.f32 %v1243, %v1270
  %v1283 = vadd.f32 %v1244, %v1270
  %v1284 = vadd.f32 %v1245, %v1270
  %v1285 = vadd.f32 %v1246, %v1270
  %v1286 = vadd.f32 %v1247, %v1270
  %v1287 = vadd.f32 %v1248, %v1270
  %v1288 = vadd.f32 %v1249, %v1270
  %v1289 = vadd.f32 %v1250, %v1270
  %v1290 = vadd.f32 %v1251, %v1270
  %v1291 = vadd.f32 %v1252, %v1270
  %v1292 = vadd.f32 %v1253, %v1270
  %v1293 = vadd.f32 %v1254, %v1270
  %v1294 = vadd.f32 %v1255, %v1270
  %v1295 = vadd.f32 %v1256, %v1270
  %v1296 = vadd.f32 %v1257, %v1270
  %v1297 = vadd.f32 %v1258, %v1270
  %v1298 = vadd.f32 %v1259, %v1270
  %v1299 = vadd.f32 %v1260, %v1270
  %v1300 = vadd.f32 %v1261, %v1270
  %v1301 = vadd.f32 %v1262, %v1270
  %v1302 = vadd.f32 %v1263, %v1270
  %v1303 = vadd.f32 %v1264, %v1270
  %v1304 = vpack.c.bf16 %v1273, %v1272
  %v1305 = vpack.c.bf16 %v1275, %v1274
  %v1306 = vpack.c.bf16 %v1277, %v1276
  %v1307 = vpack.c.bf16 %v1279, %v1278
  %v1308 = vpack.c.bf16 %v1281, %v1280
  %v1309 = vpack.c.bf16 %v1283, %v1282
  %v1310 = vpack.c.bf16 %v1285, %v1284
  %v1311 = vpack.c.bf16 %v1287, %v1286
  %v1312 = vpack.c.bf16 %v1289, %v1288
  %v1313 = vpack.c.bf16 %v1291, %v1290
  %v1314 = vpack.c.bf16 %v1293, %v1292
  %v1315 = vpack.c.bf16 %v1295, %v1294
  %v1316 = vpack.c.bf16 %v1297, %v1296
  %v1317 = vpack.c.bf16 %v1299, %v1298
  %v1318 = vpack.c.bf16 %v1301, %v1300
  %v1319 = vpack.c.bf16 %v1303, %v1302
  %v1336 = vunpack.c.l.b16 %v1304
  %v1337 = vunpack.c.h.b16 %v1304
  %v1338 = vunpack.c.l.b16 %v1305
  %v1339 = vunpack.c.h.b16 %v1305
  %v1340 = vunpack.c.l.b16 %v1306
  %v1341 = vunpack.c.h.b16 %v1306
  %v1342 = vunpack.c.l.b16 %v1307
  %v1343 = vunpack.c.h.b16 %v1307
  %v1344 = vunpack.c.l.b16 %v1308
  %v1345 = vunpack.c.h.b16 %v1308
  %v1346 = vunpack.c.l.b16 %v1309
  %v1347 = vunpack.c.h.b16 %v1309
  %v1348 = vunpack.c.l.b16 %v1310
  %v1349 = vunpack.c.h.b16 %v1310
  %v1350 = vunpack.c.l.b16 %v1311
  %v1351 = vunpack.c.h.b16 %v1311
  %v1352 = vunpack.c.l.b16 %v1312
  %v1353 = vunpack.c.h.b16 %v1312
  %v1354 = vunpack.c.l.b16 %v1313
  %v1355 = vunpack.c.h.b16 %v1313
  %v1356 = vunpack.c.l.b16 %v1314
  %v1357 = vunpack.c.h.b16 %v1314
  %v1358 = vunpack.c.l.b16 %v1315
  %v1359 = vunpack.c.h.b16 %v1315
  %v1360 = vunpack.c.l.b16 %v1316
  %v1361 = vunpack.c.h.b16 %v1316
  %v1362 = vunpack.c.l.b16 %v1317
  %v1363 = vunpack.c.h.b16 %v1317
  %v1364 = vunpack.c.l.b16 %v1318
  %v1365 = vunpack.c.h.b16 %v1318
  %v1366 = vunpack.c.l.b16 %v1319
  %v1367 = vunpack.c.h.b16 %v1319
  %v1368 = vpack.c.b16 %v1336, %v1336
  %v1369 = vpack.c.b16 %v1337, %v1337
  %v1370 = vpack.c.b16 %v1338, %v1338
  %v1371 = vpack.c.b16 %v1339, %v1339
  %v1372 = vpack.c.b16 %v1340, %v1340
  %v1373 = vpack.c.b16 %v1341, %v1341
  %v1374 = vpack.c.b16 %v1342, %v1342
  %v1375 = vpack.c.b16 %v1343, %v1343
  %v1376 = vpack.c.b16 %v1344, %v1344
  %v1377 = vpack.c.b16 %v1345, %v1345
  %v1378 = vpack.c.b16 %v1346, %v1346
  %v1379 = vpack.c.b16 %v1347, %v1347
  %v1380 = vpack.c.b16 %v1348, %v1348
  %v1381 = vpack.c.b16 %v1349, %v1349
  %v1382 = vpack.c.b16 %v1350, %v1350
  %v1383 = vpack.c.b16 %v1351, %v1351
  %v1384 = vpack.c.b16 %v1352, %v1352
  %v1385 = vpack.c.b16 %v1353, %v1353
  %v1386 = vpack.c.b16 %v1354, %v1354
  %v1387 = vpack.c.b16 %v1355, %v1355
  %v1388 = vpack.c.b16 %v1356, %v1356
  %v1389 = vpack.c.b16 %v1357, %v1357
  %v1390 = vpack.c.b16 %v1358, %v1358
  %v1391 = vpack.c.b16 %v1359, %v1359
  %v1392 = vpack.c.b16 %v1360, %v1360
  %v1393 = vpack.c.b16 %v1361, %v1361
  %v1394 = vpack.c.b16 %v1362, %v1362
  %v1395 = vpack.c.b16 %v1363, %v1363
  %v1396 = vpack.c.b16 %v1364, %v1364
  %v1397 = vpack.c.b16 %v1365, %v1365
  %v1398 = vpack.c.b16 %v1366, %v1366
  %v1399 = vpack.c.b16 %v1367, %v1367
  %1432 = vst [vmem:[%s9] sm:$0xf] %v1368
  %1433 = vst [vmem:[%s9 + $0x4] sm:$0xf] %v1369
  %1434 = vst [vmem:[%s9 + $0x8] sm:$0xf] %v1370
  %1435 = vst [vmem:[%s9 + $0xc] sm:$0xf] %v1371
  %1436 = vst [vmem:[%s9 + $0x10] sm:$0xf] %v1372
  %1437 = vst [vmem:[%s9 + $0x14] sm:$0xf] %v1373
  %1438 = vst [vmem:[%s9 + $0x18] sm:$0xf] %v1374
  %1439 = vst [vmem:[%s9 + $0x1c] sm:$0xf] %v1375
  %1440 = vst [vmem:[%s9 + $0x20] sm:$0xf] %v1376
  %1441 = vst [vmem:[%s9 + $0x24] sm:$0xf] %v1377
  %1442 = vst [vmem:[%s9 + $0x28] sm:$0xf] %v1378
  %1443 = vst [vmem:[%s9 + $0x2c] sm:$0xf] %v1379
  %1444 = vst [vmem:[%s9 + $0x30] sm:$0xf] %v1380
  %1445 = vst [vmem:[%s9 + $0x34] sm:$0xf] %v1381
  %1446 = vst [vmem:[%s9 + $0x38] sm:$0xf] %v1382
  %1447 = vst [vmem:[%s9 + $0x3c] sm:$0xf] %v1383
  %1448 = vst [vmem:[%s9 + $0x40] sm:$0xf] %v1384
  %1449 = vst [vmem:[%s9 + $0x44] sm:$0xf] %v1385
  %1450 = vst [vmem:[%s9 + $0x48] sm:$0xf] %v1386
  %1451 = vst [vmem:[%s9 + $0x4c] sm:$0xf] %v1387
  %1452 = vst [vmem:[%s9 + $0x50] sm:$0xf] %v1388
  %1453 = vst [vmem:[%s9 + $0x54] sm:$0xf] %v1389
  %1454 = vst [vmem:[%s9 + $0x58] sm:$0xf] %v1390
  %1455 = vst [vmem:[%s9 + $0x5c] sm:$0xf] %v1391
  %1456 = vst [vmem:[%s9 + $0x60] sm:$0xf] %v1392
  %1457 = vst [vmem:[%s9 + $0x64] sm:$0xf] %v1393
  %1458 = vst [vmem:[%s9 + $0x68] sm:$0xf] %v1394
  %1459 = vst [vmem:[%s9 + $0x6c] sm:$0xf] %v1395
  %1460 = vst [vmem:[%s9 + $0x70] sm:$0xf] %v1396
  %1461 = vst [vmem:[%s9 + $0x74] sm:$0xf] %v1397
  %1462 = vst [vmem:[%s9 + $0x78] sm:$0xf] %v1398
  %1463 = vst [vmem:[%s9 + $0x7c] sm:$0xf] %v1399
  // Predicated region
  $region38: #{flag_model_forward.10} parent=0 // pred_check
    _
  $region39: #{flag_model_forward.10} parent=0 // pred_check_branch
    %1465 = sbr.rel (0) target = $region41
  $region40: #{flag_model_forward.10} parent=0 // pred_region
    _
  $region41: #{flag_model_forward.10} parent=0 // pred_fallthru
    _
  // Predicated region
  $region42: #{flag_model_forward.10} parent=0 // pred_check
    _
  $region43: #{flag_model_forward.10} parent=0 // pred_check_branch
    %1467 = sbr.rel (0) target = $region45
  $region44: #{flag_model_forward.10} parent=0 // pred_region
    _
  $region45: #{flag_model_forward.10} parent=0 // pred_fallthru
    _

// kernel: flag_model_forward.12
$region0: #{flag_model_forward.12}
  #allocation0 [shape = 'u32[]', space=smem, size = 0x4, offset = 0x4, fixed_abs, tag = 'smem constant byte address 0x4 - core index']
  #allocation1 [shape = 'u32[144,128]{1,0:T(1,128)}', space=vmem, size = 0x12000, scoped, tag = 'internal scratch']
  #allocation2 [shape = 'f32[64,128]{1,0:T(8,128)}', space=vmem, size = 0x8000, scoped, tag = 'scratch operand']
  #allocation3 [shape = 's32[1]{0}', space=sflag, size = 0x4, scoped, tag = 'scoped memory for flag_model_forward.12']
  #allocation4 [shape = 'u8[512]{0}', space=smem, size = 0x200, scoped, tag = 'prefetched SMEM operand 0']
  #allocation5 [shape = 'u8[512]{0}', space=smem, size = 0x200, scoped, tag = 'prefetched SMEM operand 1']
  #allocation6 [shape = 'u8[512]{0}', space=smem, size = 0x200, scoped, tag = 'prefetched SMEM operand 2']
  #allocation7 [shape = 'u8[512]{0}', space=smem, size = 0x200, scoped, tag = 'prefetched SMEM operand 3']
  %s0 = inlined_call_operand.vmem [shape: s32[2], index: 0, kind: input, shape index: {}]
  %s1 = inlined_call_operand.vmem [shape: s32[2], index: 1, kind: input, shape index: {}]
  %s2 = inlined_call_operand.vmem [shape: s32[2], index: 2, kind: input, shape index: {}]
  %s3 = inlined_call_operand.vmem [shape: s32[2], index: 3, kind: input, shape index: {}]
  %s4 = inlined_call_operand.vmem [shape: s32[1,256], index: 4, kind: input, shape index: {}]
  %s5 = inlined_call_operand.vmem [shape: bf16[256,128], index: 5, kind: input, shape index: {}]
  %s6 = inlined_call_operand.vmem [shape: bf16[64,128], index: 6, kind: output, shape index: {}]
  %s7 = sld [smem:[#allocation0]]
  $region49: #{flag_model_forward.12} parent=0
    _
  %s9 = ssub.s32 1, %s7
  %s10 = scalar_select 0, %s9, %s7
  %s11 = sshll.u32 %s0, 4
  %s12 = int_to_ptr.vmem [resolvable:$true] %s11
  %14 = dma.vmem_to_smem %s12, 16, [#allocation4], [#allocation3]
  %s15 = sshll.u32 %s1, 4
  %s16 = int_to_ptr.vmem [resolvable:$true] %s15
  %18 = dma.vmem_to_smem %s16, 16, [#allocation5], [#allocation3]
  %s19 = sshll.u32 %s2, 4
  %s20 = int_to_ptr.vmem [resolvable:$true] %s19
  %22 = dma.vmem_to_smem %s20, 16, [#allocation6], [#allocation3]
  %s23 = sshll.u32 %s3, 4
  %s24 = int_to_ptr.vmem [resolvable:$true] %s23
  %26 = dma.vmem_to_smem %s24, 16, [#allocation7], [#allocation3]
  %27 = dma.done [#allocation3], 64
  %28 = sfence
  loop: start=0, step=1, limit=4
  $region2: #{flag_model_forward.12} parent=0 // loop_pre_header
    _
  $region3: #{flag_model_forward.12} parent=0 // loop_header
    %s30 = sphi 0, %s34
    %p31 = scmp.ge.s32.totalorder %s30, 4
    %s42 = sphi 0, %s44
    %s45 = sphi 0, %s42
    %s46 = sphi 0, %s45
    %s62 = sphi 0, %s46
    %s70 = sphi 0, %s72
    %s73 = sphi 0, %s70
    %s74 = sphi 0, %s73
    %s90 = sphi 0, %s74
    %s98 = sphi 0, %s100
    %s101 = sphi 0, %s98
    %s102 = sphi 0, %s101
    %s118 = sphi 0, %s102
  $region4: #{flag_model_forward.12} parent=0 // loop_header_branch
    %33 = sbr.rel (%p31) target = $region8
  $region5: #{flag_model_forward.12} parent=0 // loop_body
    %s35 = ssub.s32 %s30, 1
    %s36 = ssub.s32 %s30, 2
    %s37 = sadd.s32 %s30, 1
    %s38 = sld [smem:[#allocation5 + %s30]]
    %s39 = sld [smem:[#allocation5 + %s37]]
    %s40 = ssub.s32 %s38, %s39
    %p41 = scmp.eq.s32.totalorder %s40, 0
    %s43 = sadd.s32 %s42, 1
    %s44 = scalar_select %p41, %s42, %s43
    %p47 = pneg %p41
    %p48 = scmp.eq.s32.totalorder %s30, 1
    %p49 = por %p47, %p48
    %p50 = scmp.ne.s32.totalorder %s42, %s45
    %p51 = scmp.eq.s32.totalorder %s30, 0
    %p52 = por %p50, %p51
    %p53 = scmp.ne.s32.totalorder %s42, %s45
    %p54 = scmp.eq.s32.totalorder %s35, 1
    %p55 = por %p53, %p54
    %p56 = scmp.ne.s32.totalorder %s45, %s46
    %p57 = scmp.eq.s32.totalorder %s35, 0
    %p58 = por %p56, %p57
    %p59 = scmp.ne.s32.totalorder %s45, %s46
    %p60 = scmp.eq.s32.totalorder %s36, 1
    %p61 = por %p59, %p60
    %p63 = scmp.ne.s32.totalorder %s46, %s62
    %p64 = scmp.eq.s32.totalorder %s36, 0
    %p65 = por %p63, %p64
    %s66 = sld [smem:[#allocation5 + %s30]]
    %s67 = sld [smem:[#allocation5 + %s37]]
    %s68 = ssub.s32 %s66, %s67
    %p69 = scmp.eq.s32.totalorder %s68, 0
    %s71 = sadd.s32 %s70, 1
    %s72 = scalar_select %p69, %s70, %s71
    %p75 = pneg %p69
    %p76 = scmp.eq.s32.totalorder %s30, 1
    %p77 = por %p75, %p76
    %p78 = scmp.ne.s32.totalorder %s70, %s73
    %p79 = scmp.eq.s32.totalorder %s30, 0
    %p80 = por %p78, %p79
    %p81 = scmp.ne.s32.totalorder %s70, %s73
    %p82 = scmp.eq.s32.totalorder %s35, 1
    %p83 = por %p81, %p82
    %p84 = scmp.ne.s32.totalorder %s73, %s74
    %p85 = scmp.eq.s32.totalorder %s35, 0
    %p86 = por %p84, %p85
    %p87 = scmp.ne.s32.totalorder %s73, %s74
    %p88 = scmp.eq.s32.totalorder %s36, 1
    %p89 = por %p87, %p88
    %p91 = scmp.ne.s32.totalorder %s74, %s90
    %p92 = scmp.eq.s32.totalorder %s36, 0
    %p93 = por %p91, %p92
    %s94 = sld [smem:[#allocation4 + %s30]]
    %s95 = sld [smem:[#allocation4 + %s37]]
    %s96 = ssub.s32 %s94, %s95
    %p97 = scmp.eq.s32.totalorder %s96, 0
    %s99 = sadd.s32 %s98, 1
    %s100 = scalar_select %p97, %s98, %s99
    %p103 = pneg %p97
    %p104 = scmp.eq.s32.totalorder %s30, 1
    %p105 = por %p103, %p104
    %p106 = scmp.ne.s32.totalorder %s98, %s101
    %p107 = scmp.eq.s32.totalorder %s30, 0
    %p108 = por %p106, %p107
    %p109 = scmp.ne.s32.totalorder %s98, %s101
    %p110 = scmp.eq.s32.totalorder %s35, 1
    %p111 = por %p109, %p110
    %p112 = scmp.ne.s32.totalorder %s101, %s102
    %p113 = scmp.eq.s32.totalorder %s35, 0
    %p114 = por %p112, %p113
    %p115 = scmp.ne.s32.totalorder %s101, %s102
    %p116 = scmp.eq.s32.totalorder %s36, 1
    %p117 = por %p115, %p116
    %p119 = scmp.ne.s32.totalorder %s102, %s118
    %p120 = scmp.eq.s32.totalorder %s36, 0
    %p121 = por %p119, %p120
    %p122 = scmp.le.s32.totalorder 1, %s30
    %p123 = scmp.lt.s32.totalorder %s30, 3
    %p124 = pnand %p122, %p123
    %p125 = pneg %p124
    // Predicated region
    $region9: #{flag_model_forward.12} parent=5 // pred_check
      _
    $region10: #{flag_model_forward.12} parent=5 // pred_check_branch
      %127 = sbr.rel (%p124) target = $region12
    $region11: #{flag_model_forward.12} parent=5 // pred_region
      %s128 = ssub.s32 %s30, 1
    $region12: #{flag_model_forward.12} parent=5 // pred_fallthru
      _
    %p129 = scmp.lt.s32.totalorder %s30, 2
    // Predicated region
    $region13: #{flag_model_forward.12} parent=5 // pred_check
      %p130 = pneg %p129
    $region14: #{flag_model_forward.12} parent=5 // pred_check_branch
      %132 = sbr.rel (%p130) target = $region16
    $region15: #{flag_model_forward.12} parent=5 // pred_region
      // Predicated region
      $region17: #{flag_model_forward.12} parent=15 // pred_check
        %p133 = pneg %p52
      $region18: #{flag_model_forward.12} parent=15 // pred_check_branch
        %135 = sbr.rel (%p133) target = $region20
      $region19: #{flag_model_forward.12} parent=15 // pred_region
        %s136 = sld [smem:[#allocation5 + %s30]]
        %s137 = smul.u32 2, %s136
        %p138 = scmp.lt.s32.totalorder %s137, 1
        %s139 = scalar_select %p138, %s137, 1
        %s140 = scalar_lea.vmem %s4, %s139
        %s141 = sld [smem:[#allocation5 + %s30]]
        %s142 = smul.u32 2, %s141
      $region20: #{flag_model_forward.12} parent=15 // pred_fallthru
        _
      // Predicated region
      $region21: #{flag_model_forward.12} parent=15 // pred_check
        %p143 = pneg %p80
      $region22: #{flag_model_forward.12} parent=15 // pred_check_branch
        %145 = sbr.rel (%p143) target = $region24
      $region23: #{flag_model_forward.12} parent=15 // pred_region
        %s146 = sld [smem:[#allocation5 + %s30]]
        %s147 = smul.u32 32, %s146
        %p148 = scmp.lt.s32.totalorder %s147, 31
        %s149 = scalar_select %p148, %s147, 31
        %s150 = smul.addr %s149, 4
        %s151 = scalar_lea.vmem %s5, %s150
        %s152 = sld [smem:[#allocation5 + %s30]]
        %s153 = smul.u32 32, %s152
      $region24: #{flag_model_forward.12} parent=15 // pred_fallthru
        _
    $region16: #{flag_model_forward.12} parent=5 // pred_fallthru
      _
    %p154 = scmp.le.s32.totalorder 1, %s30
    %p155 = scmp.lt.s32.totalorder %s30, 3
    %p156 = pnand %p154, %p155
    %p157 = pneg %p156
    // Predicated region
    $region25: #{flag_model_forward.12} parent=5 // pred_check
      _
    $region26: #{flag_model_forward.12} parent=5 // pred_check_branch
      %159 = sbr.rel (%p156) target = $region28
    $region27: #{flag_model_forward.12} parent=5 // pred_region
      %s160 = ssub.s32 %s30, 1
      %s161 = sld [smem:[#allocation5 + %s35]]
      %s162 = smul.u32 2, %s161
      %p163 = scmp.lt.s32.totalorder %s162, 1
      %s164 = scalar_select %p163, %s162, 1
      %s165 = scalar_lea.vmem %s4, %s164
      %p166 = pneg %p58
      %p167 = pneg %p55
      %s168 = sld [smem:[#allocation5 + %s35]]
      %s169 = smul.u32 32, %s168
      %p170 = scmp.lt.s32.totalorder %s169, 31
      %s171 = scalar_select %p170, %s169, 31
      %s172 = smul.addr %s171, 4
      %s173 = scalar_lea.vmem %s5, %s172
      %p174 = pneg %p86
      %p175 = pneg %p83
      %p176 = pneg %p114
      %p177 = pneg %p111
      %s178 = sld [smem:[#allocation4 + %s35]]
      %s179 = smul.u32 8, %s178
      %p180 = scmp.lt.s32.totalorder %s179, 7
      %s181 = scalar_select %p180, %s179, 7
      %s182 = smul.addr %s181, 4
      %s183 = scalar_lea.vmem %s6, %s182
      %s184 = sld [smem:[#allocation5 + %s35]]
      %s185 = smul.u32 2, %s184
      %p186 = scmp.lt.s32.totalorder %s185, 1
      %s187 = scalar_select %p186, %s185, 1
      %s188 = scalar_lea.vmem %s4, %s187
      %s189 = sld [smem:[#allocation5 + %s35]]
      %s190 = smul.u32 2, %s189
      %s191 = sld [smem:[#allocation5 + %s35]]
      %s192 = smul.u32 32, %s191
      %p193 = scmp.lt.s32.totalorder %s192, 31
      %s194 = scalar_select %p193, %s192, 31
      %s195 = smul.addr %s194, 4
      %s196 = scalar_lea.vmem %s5, %s195
      %s197 = sld [smem:[#allocation5 + %s35]]
      %s198 = smul.u32 32, %s197
      %s199 = sld [smem:[#allocation4 + %s35]]
      %s200 = smul.u32 8, %s199
      %p201 = scmp.lt.s32.totalorder %s200, 7
      %s202 = scalar_select %p201, %s200, 7
      %s203 = smul.addr %s202, 4
      %s204 = scalar_lea.vmem %s6, %s203
      %s205 = sld [smem:[#allocation4 + %s35]]
      %s206 = smul.u32 8, %s205
      %s208 = sld [smem:[#allocation6 + %s35]]
      %p209 = scmp.eq.s32.totalorder %s208, 1
      // Predicated region
      $region29: #{flag_model_forward.12} parent=27 // pred_check
        %p210 = pneg %p209
      $region30: #{flag_model_forward.12} parent=27 // pred_check_branch
        %212 = sbr.rel (%p210) target = $region32
      $region31: #{flag_model_forward.12} parent=27 // pred_region
        %213 = vst [vmem:[#allocation2] sm:$0xff] 0.0
        %214 = vst [vmem:[#allocation2 + $0x8] sm:$0xff] 0.0
        %215 = vst [vmem:[#allocation2 + $0x10] sm:$0xff] 0.0
        %216 = vst [vmem:[#allocation2 + $0x18] sm:$0xff] 0.0
        %217 = vst [vmem:[#allocation2 + $0x20] sm:$0xff] 0.0
        %218 = vst [vmem:[#allocation2 + $0x28] sm:$0xff] 0.0
        %219 = vst [vmem:[#allocation2 + $0x30] sm:$0xff] 0.0
        %220 = vst [vmem:[#allocation2 + $0x38] sm:$0xff] 0.0
      $region32: #{flag_model_forward.12} parent=27 // pred_fallthru
        _
      %s221 = sld [smem:[#allocation7 + %s35]]
      %p222 = scmp.eq.s32.totalorder %s221, 1
      // Predicated region
      $region33: #{flag_model_forward.12} parent=27 // pred_check
        %p223 = pneg %p222
      $region34: #{flag_model_forward.12} parent=27 // pred_check_branch
        %225 = sbr.rel (%p223) target = $region36
      $region35: #{flag_model_forward.12} parent=27 // pred_region
        %s226 = sld [smem:[#allocation4 + %s35]]
        %s227 = smul.u32 %s226, 64
        %v228 = vld [vmem:[%s188] sm:$0x3]
        %v229 = vstv %s227
        %v230 = vsub.s32 %v228, %v229
        %v231 = vlaneseq
        %v232 = vshrl.u32 %v231, 7
        %v233 = vadd.s32 %v232, 8
        %v234 = vadd.s32 %v232, 16
        %v235 = vadd.s32 %v232, 24
        %v236 = vadd.s32 %v232, 32
        %v237 = vadd.s32 %v232, 40
        %v238 = vadd.s32 %v232, 48
        %v239 = vadd.s32 %v232, 56
        %v240 = vlaneseq
        %v241 = vshrl.u32 %v240, 7
        %v242 = vsub.s32 0, %v241
        %v243 = vrot.slane %v230, %v242
        %v244 = vlaneseq
        %v245 = vshrl.u32 %v244, 7
        %v246 = vsub.s32 1, %v245
        %v247 = vrot.slane %v230, %v246
        %vm248 = vcmp.eq.s32.totalorder %v232, %v243
        %vm249 = vcmp.eq.s32.totalorder %v232, %v247
        %vm250 = vcmp.eq.s32.totalorder %v233, %v243
        %vm251 = vcmp.eq.s32.totalorder %v233, %v247
        %vm252 = vcmp.eq.s32.totalorder %v234, %v243
        %vm253 = vcmp.eq.s32.totalorder %v234, %v247
        %vm254 = vcmp.eq.s32.totalorder %v235, %v243
        %vm255 = vcmp.eq.s32.totalorder %v235, %v247
        %vm256 = vcmp.eq.s32.totalorder %v236, %v243
        %vm257 = vcmp.eq.s32.totalorder %v236, %v247
        %vm258 = vcmp.eq.s32.totalorder %v237, %v243
        %vm259 = vcmp.eq.s32.totalorder %v237, %v247
        %vm260 = vcmp.eq.s32.totalorder %v238, %v243
        %vm261 = vcmp.eq.s32.totalorder %v238, %v247
        %vm262 = vcmp.eq.s32.totalorder %v239, %v243
        %vm263 = vcmp.eq.s32.totalorder %v239, %v247
        %v264 = vsel %vm248, 1, 0
        %v265 = vsel %vm249, 1, 0
        %v266 = vsel %vm250, 1, 0
        %v267 = vsel %vm251, 1, 0
        %v268 = vsel %vm252, 1, 0
        %v269 = vsel %vm253, 1, 0
        %v270 = vsel %vm254, 1, 0
        %v271 = vsel %vm255, 1, 0
        %v272 = vsel %vm256, 1, 0
        %v273 = vsel %vm257, 1, 0
        %v274 = vsel %vm258, 1, 0
        %v275 = vsel %vm259, 1, 0
        %v276 = vsel %vm260, 1, 0
        %v277 = vsel %vm261, 1, 0
        %v278 = vsel %vm262, 1, 0
        %v279 = vsel %vm263, 1, 0
        %v280 = vcvt.s32.f32 %v264
        %v281 = vcvt.s32.f32 %v265
        %v282 = vcvt.s32.f32 %v266
        %v283 = vcvt.s32.f32 %v267
        %v284 = vcvt.s32.f32 %v268
        %v285 = vcvt.s32.f32 %v269
        %v286 = vcvt.s32.f32 %v270
        %v287 = vcvt.s32.f32 %v271
        %v288 = vcvt.s32.f32 %v272
        %v289 = vcvt.s32.f32 %v273
        %v290 = vcvt.s32.f32 %v274
        %v291 = vcvt.s32.f32 %v275
        %v292 = vcvt.s32.f32 %v276
        %v293 = vcvt.s32.f32 %v277
        %v294 = vcvt.s32.f32 %v278
        %v295 = vcvt.s32.f32 %v279
        %v296 = vpack.c.bf16 %v282, %v280
        %v297 = vpack.c.bf16 %v283, %v281
        %v298 = vpack.c.bf16 %v286, %v284
        %v299 = vpack.c.bf16 %v287, %v285
        %v300 = vpack.c.bf16 %v290, %v288
        %v301 = vpack.c.bf16 %v291, %v289
        %v302 = vpack.c.bf16 %v294, %v292
        %v303 = vpack.c.bf16 %v295, %v293
        %v304 = vld [vmem:[#allocation2] sm:$0xff]
        %v305 = vld [vmem:[#allocation2 + $0x8] sm:$0xff]
        %v306 = vld [vmem:[#allocation2 + $0x10] sm:$0xff]
        %v307 = vld [vmem:[#allocation2 + $0x18] sm:$0xff]
        %v308 = vld [vmem:[#allocation2 + $0x20] sm:$0xff]
        %v309 = vld [vmem:[#allocation2 + $0x28] sm:$0xff]
        %v310 = vld [vmem:[#allocation2 + $0x30] sm:$0xff]
        %v311 = vld [vmem:[#allocation2 + $0x38] sm:$0xff]
        %v312 = vld [vmem:[%s196] sm:$0xf]
        %v313 = vld [vmem:[%s196 + $0x4] sm:$0xf]
        %v314 = vld [vmem:[%s196 + $0x8] sm:$0xf]
        %v315 = vld [vmem:[%s196 + $0xc] sm:$0xf]
        %v316 = vld [vmem:[%s196 + $0x10] sm:$0xf]
        %v317 = vld [vmem:[%s196 + $0x14] sm:$0xf]
        %v318 = vld [vmem:[%s196 + $0x18] sm:$0xf]
        %v319 = vld [vmem:[%s196 + $0x1c] sm:$0xf]
        %v320 = vld [vmem:[%s196 + $0x20] sm:$0xf]
        %v321 = vld [vmem:[%s196 + $0x24] sm:$0xf]
        %v322 = vld [vmem:[%s196 + $0x28] sm:$0xf]
        %v323 = vld [vmem:[%s196 + $0x2c] sm:$0xf]
        %v324 = vld [vmem:[%s196 + $0x30] sm:$0xf]
        %v325 = vld [vmem:[%s196 + $0x34] sm:$0xf]
        %v326 = vld [vmem:[%s196 + $0x38] sm:$0xf]
        %v327 = vld [vmem:[%s196 + $0x3c] sm:$0xf]
        %v328 = vld [vmem:[%s196 + $0x40] sm:$0xf]
        %v329 = vld [vmem:[%s196 + $0x44] sm:$0xf]
        %v330 = vld [vmem:[%s196 + $0x48] sm:$0xf]
        %v331 = vld [vmem:[%s196 + $0x4c] sm:$0xf]
        %v332 = vld [vmem:[%s196 + $0x50] sm:$0xf]
        %v333 = vld [vmem:[%s196 + $0x54] sm:$0xf]
        %v334 = vld [vmem:[%s196 + $0x58] sm:$0xf]
        %v335 = vld [vmem:[%s196 + $0x5c] sm:$0xf]
        %v336 = vld [vmem:[%s196 + $0x60] sm:$0xf]
        %v337 = vld [vmem:[%s196 + $0x64] sm:$0xf]
        %v338 = vld [vmem:[%s196 + $0x68] sm:$0xf]
        %v339 = vld [vmem:[%s196 + $0x6c] sm:$0xf]
        %v340 = vld [vmem:[%s196 + $0x70] sm:$0xf]
        %v341 = vld [vmem:[%s196 + $0x74] sm:$0xf]
        %v342 = vld [vmem:[%s196 + $0x78] sm:$0xf]
        %v343 = vld [vmem:[%s196 + $0x7c] sm:$0xf]
        %v376 = vunpack.c.l.b16 %v312
        %v377 = vunpack.c.l.b16 %v313
        %v378 = vunpack.c.l.b16 %v314
        %v379 = vunpack.c.l.b16 %v315
        %v380 = vunpack.c.l.b16 %v316
        %v381 = vunpack.c.l.b16 %v317
        %v382 = vunpack.c.l.b16 %v318
        %v383 = vunpack.c.l.b16 %v319
        %v384 = vunpack.c.l.b16 %v320
        %v385 = vunpack.c.l.b16 %v321
        %v386 = vunpack.c.l.b16 %v322
        %v387 = vunpack.c.l.b16 %v323
        %v388 = vunpack.c.l.b16 %v324
        %v389 = vunpack.c.l.b16 %v325
        %v390 = vunpack.c.l.b16 %v326
        %v391 = vunpack.c.l.b16 %v327
        %v392 = vunpack.c.l.b16 %v328
        %v393 = vunpack.c.l.b16 %v329
        %v394 = vunpack.c.l.b16 %v330
        %v395 = vunpack.c.l.b16 %v331
        %v396 = vunpack.c.l.b16 %v332
        %v397 = vunpack.c.l.b16 %v333
        %v398 = vunpack.c.l.b16 %v334
        %v399 = vunpack.c.l.b16 %v335
        %v400 = vunpack.c.l.b16 %v336
        %v401 = vunpack.c.l.b16 %v337
        %v402 = vunpack.c.l.b16 %v338
        %v403 = vunpack.c.l.b16 %v339
        %v404 = vunpack.c.l.b16 %v340
        %v405 = vunpack.c.l.b16 %v341
        %v406 = vunpack.c.l.b16 %v342
        %v407 = vunpack.c.l.b16 %v343
        %v408 = vpack.c.b16 %v377, %v376
        %v409 = vpack.c.b16 %v379, %v378
        %v410 = vpack.c.b16 %v381, %v380
        %v411 = vpack.c.b16 %v383, %v382
        %v412 = vpack.c.b16 %v385, %v384
        %v413 = vpack.c.b16 %v387, %v386
        %v414 = vpack.c.b16 %v389, %v388
        %v415 = vpack.c.b16 %v391, %v390
        %v416 = vpack.c.b16 %v393, %v392
        %v417 = vpack.c.b16 %v395, %v394
        %v418 = vpack.c.b16 %v397, %v396
        %v419 = vpack.c.b16 %v399, %v398
        %v420 = vpack.c.b16 %v401, %v400
        %v421 = vpack.c.b16 %v403, %v402
        %v422 = vpack.c.b16 %v405, %v404
        %v423 = vpack.c.b16 %v407, %v406
        %440 = vmatprep.subr.bf16.mxu0 0
        %441 = vmatpush1.bf16.msra.mxu0 %v408
        %442 = vmatprep.subr.bf16.mxu0 0
        %443 = vmatpush1.bf16.msra.mxu0 %v409
        %444 = vmatprep.subr.bf16.mxu0 0
        %445 = vmatpush1.bf16.msra.mxu0 %v410
        %446 = vmatprep.subr.bf16.mxu0 0
        %447 = vmatpush1.bf16.msra.mxu0 %v411
        %448 = vmatprep.subr.bf16.mxu0 0
        %449 = vmatpush1.bf16.msra.mxu0 %v412
        %450 = vmatprep.subr.bf16.mxu0 0
        %451 = vmatpush1.bf16.msra.mxu0 %v413
        %452 = vmatprep.subr.bf16.mxu0 0
        %453 = vmatpush1.bf16.msra.mxu0 %v414
        %454 = vmatprep.subr.bf16.mxu0 0
        %455 = vmatpush1.bf16.msra.mxu0 %v415
        %456 = vmatprep.subr.bf16.mxu0 0
        %457 = vmatpush1.bf16.msra.mxu0 %v416
        %458 = vmatprep.subr.bf16.mxu0 0
        %459 = vmatpush1.bf16.msra.mxu0 %v417
        %460 = vmatprep.subr.bf16.mxu0 0
        %461 = vmatpush1.bf16.msra.mxu0 %v418
        %462 = vmatprep.subr.bf16.mxu0 0
        %463 = vmatpush1.bf16.msra.mxu0 %v419
        %464 = vmatprep.subr.bf16.mxu0 0
        %465 = vmatpush1.bf16.msra.mxu0 %v420
        %466 = vmatprep.subr.bf16.mxu0 0
        %467 = vmatpush1.bf16.msra.mxu0 %v421
        %468 = vmatprep.subr.bf16.mxu0 0
        %469 = vmatpush1.bf16.msra.mxu0 %v422
        %470 = vmatprep.subr.bf16.mxu0 0
        %471 = vmatpush1.bf16.msra.mxu0 %v423
        %472 = vmatprep.mubr.bf16.mxu0 %v297
        %473 = vmatmul.mubr.bf16.gmra.mrb[0].mxu0 %v296
        %v474 = vpop.f32.mrb[0].mxu0
        %v475 = vadd.f32 0.0, %v474
        %v476 = vpop.f32.mrb[0].mxu0
        %v477 = vpop.f32.mrb[0].mxu0
        %v478 = vadd.f32 0.0, %v477
        %v479 = vpop.f32.mrb[0].mxu0
        %480 = vmatprep.mubr.bf16.mxu0 %v299
        %481 = vmatmul.mubr.bf16.gmra.mrb[0].mxu0 %v298
        %v482 = vpop.f32.mrb[0].mxu0
        %v483 = vadd.f32 0.0, %v482
        %v484 = vpop.f32.mrb[0].mxu0
        %v485 = vpop.f32.mrb[0].mxu0
        %v486 = vadd.f32 0.0, %v485
        %v487 = vpop.f32.mrb[0].mxu0
        %488 = vmatprep.mubr.bf16.mxu0 %v301
        %489 = vmatmul.mubr.bf16.gmra.mrb[0].mxu0 %v300
        %v490 = vpop.f32.mrb[0].mxu0
        %v491 = vadd.f32 0.0, %v490
        %v492 = vpop.f32.mrb[0].mxu0
        %v493 = vpop.f32.mrb[0].mxu0
        %v494 = vadd.f32 0.0, %v493
        %v495 = vpop.f32.mrb[0].mxu0
        %496 = vmatprep.mubr.bf16.mxu0 %v303
        %497 = vmatmul.mubr.bf16.gmra.mrb[0].mxu0 %v302
        %v498 = vpop.f32.mrb[0].mxu0
        %v499 = vadd.f32 0.0, %v498
        %v500 = vpop.f32.mrb[0].mxu0
        %v501 = vpop.f32.mrb[0].mxu0
        %v502 = vadd.f32 0.0, %v501
        %v503 = vpop.f32.mrb[0].mxu0
        %504 = vdwg.mxu0
        %v505 = vadd.f32 %v304, %v475
        %v506 = vadd.f32 %v305, %v478
        %v507 = vadd.f32 %v306, %v483
        %v508 = vadd.f32 %v307, %v486
        %v509 = vadd.f32 %v308, %v491
        %v510 = vadd.f32 %v309, %v494
        %v511 = vadd.f32 %v310, %v499
        %v512 = vadd.f32 %v311, %v502
        %513 = vst [vmem:[#allocation2] sm:$0xff] %v505
        %514 = vst [vmem:[#allocation2 + $0x8] sm:$0xff] %v506
        %515 = vst [vmem:[#allocation2 + $0x10] sm:$0xff] %v507
        %516 = vst [vmem:[#allocation2 + $0x18] sm:$0xff] %v508
        %517 = vst [vmem:[#allocation2 + $0x20] sm:$0xff] %v509
        %518 = vst [vmem:[#allocation2 + $0x28] sm:$0xff] %v510
        %519 = vst [vmem:[#allocation2 + $0x30] sm:$0xff] %v511
        %520 = vst [vmem:[#allocation2 + $0x38] sm:$0xff] %v512
      $region36: #{flag_model_forward.12} parent=27 // pred_fallthru
        _
      %v521 = vld [vmem:[#allocation2] sm:$0xff]
      %v522 = vld [vmem:[#allocation2 + $0x8] sm:$0xff]
      %v523 = vld [vmem:[#allocation2 + $0x10] sm:$0xff]
      %v524 = vld [vmem:[#allocation2 + $0x18] sm:$0xff]
      %v525 = vld [vmem:[#allocation2 + $0x20] sm:$0xff]
      %v526 = vld [vmem:[#allocation2 + $0x28] sm:$0xff]
      %v527 = vld [vmem:[#allocation2 + $0x30] sm:$0xff]
      %v528 = vld [vmem:[#allocation2 + $0x38] sm:$0xff]
      %v529 = vpack.c.bf16 %v522, %v521
      %v530 = vpack.c.bf16 %v524, %v523
      %v531 = vpack.c.bf16 %v526, %v525
      %v532 = vpack.c.bf16 %v528, %v527
      %v537 = vunpack.c.l.b16 %v529
      %v538 = vunpack.c.h.b16 %v529
      %v539 = vunpack.c.l.b16 %v530
      %v540 = vunpack.c.h.b16 %v530
      %v541 = vunpack.c.l.b16 %v531
      %v542 = vunpack.c.h.b16 %v531
      %v543 = vunpack.c.l.b16 %v532
      %v544 = vunpack.c.h.b16 %v532
      %v545 = vpack.c.b16 %v537, %v537
      %v546 = vpack.c.b16 %v538, %v538
      %v547 = vpack.c.b16 %v539, %v539
      %v548 = vpack.c.b16 %v540, %v540
      %v549 = vpack.c.b16 %v541, %v541
      %v550 = vpack.c.b16 %v542, %v542
      %v551 = vpack.c.b16 %v543, %v543
      %v552 = vpack.c.b16 %v544, %v544
      %561 = vst [vmem:[%s204] sm:$0xf] %v545
      %562 = vst [vmem:[%s204 + $0x4] sm:$0xf] %v546
      %563 = vst [vmem:[%s204 + $0x8] sm:$0xf] %v547
      %564 = vst [vmem:[%s204 + $0xc] sm:$0xf] %v548
      %565 = vst [vmem:[%s204 + $0x10] sm:$0xf] %v549
      %566 = vst [vmem:[%s204 + $0x14] sm:$0xf] %v550
      %567 = vst [vmem:[%s204 + $0x18] sm:$0xf] %v551
      %568 = vst [vmem:[%s204 + $0x1c] sm:$0xf] %v552
      %s569 = sld [smem:[#allocation4 + %s35]]
      %s570 = smul.u32 8, %s569
      %p571 = scmp.lt.s32.totalorder %s570, 7
      %s572 = scalar_select %p571, %s570, 7
      %s573 = smul.addr %s572, 4
      %s574 = scalar_lea.vmem %s6, %s573
      // Predicated region
      $region37: #{flag_model_forward.12} parent=27 // pred_check
        %p575 = pneg %p111
      $region38: #{flag_model_forward.12} parent=27 // pred_check_branch
        %577 = sbr.rel (%p575) target = $region40
      $region39: #{flag_model_forward.12} parent=27 // pred_region
        %s578 = sld [smem:[#allocation4 + %s35]]
        %s579 = smul.u32 8, %s578
      $region40: #{flag_model_forward.12} parent=27 // pred_fallthru
        _
    $region28: #{flag_model_forward.12} parent=5 // pred_fallthru
      _
    %p580 = scmp.le.s32.totalorder 2, %s30
    // Predicated region
    $region41: #{flag_model_forward.12} parent=5 // pred_check
      %p581 = pneg %p580
    $region42: #{flag_model_forward.12} parent=5 // pred_check_branch
      %583 = sbr.rel (%p581) target = $region44
    $region43: #{flag_model_forward.12} parent=5 // pred_region
      %s584 = ssub.s32 %s30, 2
      // Predicated region
      $region45: #{flag_model_forward.12} parent=43 // pred_check
        %p585 = pneg %p117
      $region46: #{flag_model_forward.12} parent=43 // pred_check_branch
        %587 = sbr.rel (%p585) target = $region48
      $region47: #{flag_model_forward.12} parent=43 // pred_region
        %s588 = sld [smem:[#allocation4 + %s36]]
        %s589 = smul.u32 8, %s588
        %p590 = scmp.lt.s32.totalorder %s589, 7
        %s591 = scalar_select %p590, %s589, 7
        %s592 = smul.addr %s591, 4
        %s593 = scalar_lea.vmem %s6, %s592
      $region48: #{flag_model_forward.12} parent=43 // pred_fallthru
        _
    $region44: #{flag_model_forward.12} parent=5 // pred_fallthru
      _
  $region6: #{flag_model_forward.12} parent=0 // loop_footer
    %s34 = sadd.s32 1, %s30
  $region7: #{flag_model_forward.12} parent=0 // loop_footer_branch
    %29 = sbr.rel target = $region3
  $region8: #{flag_model_forward.12} parent=0 // loop_exit
    _

// kernel: flag_model_forward.11
$region0: #{flag_model_forward.11}
  #allocation0 [shape = 'u32[]', space=smem, size = 0x4, offset = 0x4, fixed_abs, tag = 'smem constant byte address 0x4 - core index']
  #allocation1 [shape = 'u32[144,128]{1,0:T(1,128)}', space=vmem, size = 0x12000, scoped, tag = 'internal scratch']
  %s0 = inlined_call_operand.vmem [shape: bf16[256,128], index: 0, kind: input, shape index: {}]
  %s1 = inlined_call_operand.vmem [shape: bf16[256,128], index: 1, kind: input, shape index: {}]
  %s2 = inlined_call_operand.vmem [shape: bf16[256,128], index: 2, kind: input, shape index: {}]
  %s3 = inlined_call_operand.vmem [shape: bf16[384,128], index: 3, kind: input, shape index: {}]
  %s4 = inlined_call_operand.vmem [shape: f32[1,128], index: 4, kind: input, shape index: {}]
  %s5 = inlined_call_operand.vmem [shape: bf16[128,128], index: 5, kind: input, shape index: {}]
  %s6 = inlined_call_operand.vmem [shape: f32[1,128], index: 6, kind: input, shape index: {}]
  %s7 = inlined_call_operand.vmem [shape: bf16[128,128], index: 7, kind: input, shape index: {}]
  %s8 = inlined_call_operand.vmem [shape: f32[1,128], index: 8, kind: input, shape index: {}]
  %s9 = inlined_call_operand.vmem [shape: f32[1,128], index: 9, kind: input, shape index: {}]
  %s10 = inlined_call_operand.vmem [shape: f32[1,128], index: 10, kind: input, shape index: {}]
  %s11 = inlined_call_operand.vmem [shape: bf16[256,128], index: 11, kind: output, shape index: {}]
  %s12 = sld [smem:[#allocation0]]
  $region54: #{flag_model_forward.11} parent=0
    _
  %s14 = ssub.s32 1, %s12
  %s15 = scalar_select 0, %s14, %s12
  // Predicated region
  $region2: #{flag_model_forward.11} parent=0 // pred_check
    _
  $region3: #{flag_model_forward.11} parent=0 // pred_check_branch
    %17 = sbr.rel (0) target = $region5
  $region4: #{flag_model_forward.11} parent=0 // pred_region
    _
  $region5: #{flag_model_forward.11} parent=0 // pred_fallthru
    _
  // Predicated region
  $region6: #{flag_model_forward.11} parent=0 // pred_check
    _
  $region7: #{flag_model_forward.11} parent=0 // pred_check_branch
    %19 = sbr.rel (0) target = $region9
  $region8: #{flag_model_forward.11} parent=0 // pred_region
    _
  $region9: #{flag_model_forward.11} parent=0 // pred_fallthru
    _
  // Predicated region
  $region10: #{flag_model_forward.11} parent=0 // pred_check
    _
  $region11: #{flag_model_forward.11} parent=0 // pred_check_branch
    %21 = sbr.rel (0) target = $region13
  $region12: #{flag_model_forward.11} parent=0 // pred_region
    _
  $region13: #{flag_model_forward.11} parent=0 // pred_fallthru
    _
  // Predicated region
  $region14: #{flag_model_forward.11} parent=0 // pred_check
    _
  $region15: #{flag_model_forward.11} parent=0 // pred_check_branch
    %23 = sbr.rel (0) target = $region17
  $region16: #{flag_model_forward.11} parent=0 // pred_region
    _
  $region17: #{flag_model_forward.11} parent=0 // pred_fallthru
    _
  // Predicated region
  $region18: #{flag_model_forward.11} parent=0 // pred_check
    _
  $region19: #{flag_model_forward.11} parent=0 // pred_check_branch
    %25 = sbr.rel (0) target = $region21
  $region20: #{flag_model_forward.11} parent=0 // pred_region
    _
  $region21: #{flag_model_forward.11} parent=0 // pred_fallthru
    _
  // Predicated region
  $region22: #{flag_model_forward.11} parent=0 // pred_check
    _
  $region23: #{flag_model_forward.11} parent=0 // pred_check_branch
    %27 = sbr.rel (0) target = $region25
  $region24: #{flag_model_forward.11} parent=0 // pred_region
    _
  $region25: #{flag_model_forward.11} parent=0 // pred_fallthru
    _
  // Predicated region
  $region26: #{flag_model_forward.11} parent=0 // pred_check
    _
  $region27: #{flag_model_forward.11} parent=0 // pred_check_branch
    %29 = sbr.rel (0) target = $region29
  $region28: #{flag_model_forward.11} parent=0 // pred_region
    _
  $region29: #{flag_model_forward.11} parent=0 // pred_fallthru
    _
  // Predicated region
  $region30: #{flag_model_forward.11} parent=0 // pred_check
    _
  $region31: #{flag_model_forward.11} parent=0 // pred_check_branch
    %31 = sbr.rel (0) target = $region33
  $region32: #{flag_model_forward.11} parent=0 // pred_region
    _
  $region33: #{flag_model_forward.11} parent=0 // pred_fallthru
    _
  // Predicated region
  $region34: #{flag_model_forward.11} parent=0 // pred_check
    _
  $region35: #{flag_model_forward.11} parent=0 // pred_check_branch
    %33 = sbr.rel (0) target = $region37
  $region36: #{flag_model_forward.11} parent=0 // pred_region
    _
  $region37: #{flag_model_forward.11} parent=0 // pred_fallthru
    _
  // Predicated region
  $region38: #{flag_model_forward.11} parent=0 // pred_check
    _
  $region39: #{flag_model_forward.11} parent=0 // pred_check_branch
    %35 = sbr.rel (0) target = $region41
  $region40: #{flag_model_forward.11} parent=0 // pred_region
    _
  $region41: #{flag_model_forward.11} parent=0 // pred_fallthru
    _
  // Predicated region
  $region42: #{flag_model_forward.11} parent=0 // pred_check
    _
  $region43: #{flag_model_forward.11} parent=0 // pred_check_branch
    %37 = sbr.rel (0) target = $region45
  $region44: #{flag_model_forward.11} parent=0 // pred_region
    _
  $region45: #{flag_model_forward.11} parent=0 // pred_fallthru
    _
  %v39 = vld [vmem:[%s0] sm:$0xf]
  %v40 = vld [vmem:[%s0 + $0x4] sm:$0xf]
  %v41 = vld [vmem:[%s0 + $0x8] sm:$0xf]
  %v42 = vld [vmem:[%s0 + $0xc] sm:$0xf]
  %v43 = vld [vmem:[%s0 + $0x10] sm:$0xf]
  %v44 = vld [vmem:[%s0 + $0x14] sm:$0xf]
  %v45 = vld [vmem:[%s0 + $0x18] sm:$0xf]
  %v46 = vld [vmem:[%s0 + $0x1c] sm:$0xf]
  %v47 = vld [vmem:[%s0 + $0x20] sm:$0xf]
  %v48 = vld [vmem:[%s0 + $0x24] sm:$0xf]
  %v49 = vld [vmem:[%s0 + $0x28] sm:$0xf]
  %v50 = vld [vmem:[%s0 + $0x2c] sm:$0xf]
  %v51 = vld [vmem:[%s0 + $0x30] sm:$0xf]
  %v52 = vld [vmem:[%s0 + $0x34] sm:$0xf]
  %v53 = vld [vmem:[%s0 + $0x38] sm:$0xf]
  %v54 = vld [vmem:[%s0 + $0x3c] sm:$0xf]
  %v55 = vld [vmem:[%s0 + $0x40] sm:$0xf]
  %v56 = vld [vmem:[%s0 + $0x44] sm:$0xf]
  %v57 = vld [vmem:[%s0 + $0x48] sm:$0xf]
  %v58 = vld [vmem:[%s0 + $0x4c] sm:$0xf]
  %v59 = vld [vmem:[%s0 + $0x50] sm:$0xf]
  %v60 = vld [vmem:[%s0 + $0x54] sm:$0xf]
  %v61 = vld [vmem:[%s0 + $0x58] sm:$0xf]
  %v62 = vld [vmem:[%s0 + $0x5c] sm:$0xf]
  %v63 = vld [vmem:[%s0 + $0x60] sm:$0xf]
  %v64 = vld [vmem:[%s0 + $0x64] sm:$0xf]
  %v65 = vld [vmem:[%s0 + $0x68] sm:$0xf]
  %v66 = vld [vmem:[%s0 + $0x6c] sm:$0xf]
  %v67 = vld [vmem:[%s0 + $0x70] sm:$0xf]
  %v68 = vld [vmem:[%s0 + $0x74] sm:$0xf]
  %v69 = vld [vmem:[%s0 + $0x78] sm:$0xf]
  %v70 = vld [vmem:[%s0 + $0x7c] sm:$0xf]
  %v71 = vld [vmem:[%s1] sm:$0xf]
  %v72 = vld [vmem:[%s1 + $0x4] sm:$0xf]
  %v73 = vld [vmem:[%s1 + $0x8] sm:$0xf]
  %v74 = vld [vmem:[%s1 + $0xc] sm:$0xf]
  %v75 = vld [vmem:[%s1 + $0x10] sm:$0xf]
  %v76 = vld [vmem:[%s1 + $0x14] sm:$0xf]
  %v77 = vld [vmem:[%s1 + $0x18] sm:$0xf]
  %v78 = vld [vmem:[%s1 + $0x1c] sm:$0xf]
  %v79 = vld [vmem:[%s1 + $0x20] sm:$0xf]
  %v80 = vld [vmem:[%s1 + $0x24] sm:$0xf]
  %v81 = vld [vmem:[%s1 + $0x28] sm:$0xf]
  %v82 = vld [vmem:[%s1 + $0x2c] sm:$0xf]
  %v83 = vld [vmem:[%s1 + $0x30] sm:$0xf]
  %v84 = vld [vmem:[%s1 + $0x34] sm:$0xf]
  %v85 = vld [vmem:[%s1 + $0x38] sm:$0xf]
  %v86 = vld [vmem:[%s1 + $0x3c] sm:$0xf]
  %v87 = vld [vmem:[%s1 + $0x40] sm:$0xf]
  %v88 = vld [vmem:[%s1 + $0x44] sm:$0xf]
  %v89 = vld [vmem:[%s1 + $0x48] sm:$0xf]
  %v90 = vld [vmem:[%s1 + $0x4c] sm:$0xf]
  %v91 = vld [vmem:[%s1 + $0x50] sm:$0xf]
  %v92 = vld [vmem:[%s1 + $0x54] sm:$0xf]
  %v93 = vld [vmem:[%s1 + $0x58] sm:$0xf]
  %v94 = vld [vmem:[%s1 + $0x5c] sm:$0xf]
  %v95 = vld [vmem:[%s1 + $0x60] sm:$0xf]
  %v96 = vld [vmem:[%s1 + $0x64] sm:$0xf]
  %v97 = vld [vmem:[%s1 + $0x68] sm:$0xf]
  %v98 = vld [vmem:[%s1 + $0x6c] sm:$0xf]
  %v99 = vld [vmem:[%s1 + $0x70] sm:$0xf]
  %v100 = vld [vmem:[%s1 + $0x74] sm:$0xf]
  %v101 = vld [vmem:[%s1 + $0x78] sm:$0xf]
  %v102 = vld [vmem:[%s1 + $0x7c] sm:$0xf]
  %v103 = vld [vmem:[%s2] sm:$0xf]
  %v104 = vld [vmem:[%s2 + $0x4] sm:$0xf]
  %v105 = vld [vmem:[%s2 + $0x8] sm:$0xf]
  %v106 = vld [vmem:[%s2 + $0xc] sm:$0xf]
  %v107 = vld [vmem:[%s2 + $0x10] sm:$0xf]
  %v108 = vld [vmem:[%s2 + $0x14] sm:$0xf]
  %v109 = vld [vmem:[%s2 + $0x18] sm:$0xf]
  %v110 = vld [vmem:[%s2 + $0x1c] sm:$0xf]
  %v111 = vld [vmem:[%s2 + $0x20] sm:$0xf]
  %v112 = vld [vmem:[%s2 + $0x24] sm:$0xf]
  %v113 = vld [vmem:[%s2 + $0x28] sm:$0xf]
  %v114 = vld [vmem:[%s2 + $0x2c] sm:$0xf]
  %v115 = vld [vmem:[%s2 + $0x30] sm:$0xf]
  %v116 = vld [vmem:[%s2 + $0x34] sm:$0xf]
  %v117 = vld [vmem:[%s2 + $0x38] sm:$0xf]
  %v118 = vld [vmem:[%s2 + $0x3c] sm:$0xf]
  %v119 = vld [vmem:[%s2 + $0x40] sm:$0xf]
  %v120 = vld [vmem:[%s2 + $0x44] sm:$0xf]
  %v121 = vld [vmem:[%s2 + $0x48] sm:$0xf]
  %v122 = vld [vmem:[%s2 + $0x4c] sm:$0xf]
  %v123 = vld [vmem:[%s2 + $0x50] sm:$0xf]
  %v124 = vld [vmem:[%s2 + $0x54] sm:$0xf]
  %v125 = vld [vmem:[%s2 + $0x58] sm:$0xf]
  %v126 = vld [vmem:[%s2 + $0x5c] sm:$0xf]
  %v127 = vld [vmem:[%s2 + $0x60] sm:$0xf]
  %v128 = vld [vmem:[%s2 + $0x64] sm:$0xf]
  %v129 = vld [vmem:[%s2 + $0x68] sm:$0xf]
  %v130 = vld [vmem:[%s2 + $0x6c] sm:$0xf]
  %v131 = vld [vmem:[%s2 + $0x70] sm:$0xf]
  %v132 = vld [vmem:[%s2 + $0x74] sm:$0xf]
  %v133 = vld [vmem:[%s2 + $0x78] sm:$0xf]
  %v134 = vld [vmem:[%s2 + $0x7c] sm:$0xf]
  %v167 = vunpack.c.l.b16 %v39
  %v168 = vunpack.c.l.b16 %v40
  %v169 = vunpack.c.l.b16 %v41
  %v170 = vunpack.c.l.b16 %v42
  %v171 = vunpack.c.l.b16 %v43
  %v172 = vunpack.c.l.b16 %v44
  %v173 = vunpack.c.l.b16 %v45
  %v174 = vunpack.c.l.b16 %v46
  %v175 = vunpack.c.l.b16 %v47
  %v176 = vunpack.c.l.b16 %v48
  %v177 = vunpack.c.l.b16 %v49
  %v178 = vunpack.c.l.b16 %v50
  %v179 = vunpack.c.l.b16 %v51
  %v180 = vunpack.c.l.b16 %v52
  %v181 = vunpack.c.l.b16 %v53
  %v182 = vunpack.c.l.b16 %v54
  %v183 = vunpack.c.l.b16 %v55
  %v184 = vunpack.c.l.b16 %v56
  %v185 = vunpack.c.l.b16 %v57
  %v186 = vunpack.c.l.b16 %v58
  %v187 = vunpack.c.l.b16 %v59
  %v188 = vunpack.c.l.b16 %v60
  %v189 = vunpack.c.l.b16 %v61
  %v190 = vunpack.c.l.b16 %v62
  %v191 = vunpack.c.l.b16 %v63
  %v192 = vunpack.c.l.b16 %v64
  %v193 = vunpack.c.l.b16 %v65
  %v194 = vunpack.c.l.b16 %v66
  %v195 = vunpack.c.l.b16 %v67
  %v196 = vunpack.c.l.b16 %v68
  %v197 = vunpack.c.l.b16 %v69
  %v198 = vunpack.c.l.b16 %v70
  %v199 = vpack.c.b16 %v168, %v167
  %v200 = vpack.c.b16 %v170, %v169
  %v201 = vpack.c.b16 %v172, %v171
  %v202 = vpack.c.b16 %v174, %v173
  %v203 = vpack.c.b16 %v176, %v175
  %v204 = vpack.c.b16 %v178, %v177
  %v205 = vpack.c.b16 %v180, %v179
  %v206 = vpack.c.b16 %v182, %v181
  %v207 = vpack.c.b16 %v184, %v183
  %v208 = vpack.c.b16 %v186, %v185
  %v209 = vpack.c.b16 %v188, %v187
  %v210 = vpack.c.b16 %v190, %v189
  %v211 = vpack.c.b16 %v192, %v191
  %v212 = vpack.c.b16 %v194, %v193
  %v213 = vpack.c.b16 %v196, %v195
  %v214 = vpack.c.b16 %v198, %v197
  %v263 = vunpack.c.l.b16 %v71
  %v264 = vunpack.c.l.b16 %v72
  %v265 = vunpack.c.l.b16 %v73
  %v266 = vunpack.c.l.b16 %v74
  %v267 = vunpack.c.l.b16 %v75
  %v268 = vunpack.c.l.b16 %v76
  %v269 = vunpack.c.l.b16 %v77
  %v270 = vunpack.c.l.b16 %v78
  %v271 = vunpack.c.l.b16 %v79
  %v272 = vunpack.c.l.b16 %v80
  %v273 = vunpack.c.l.b16 %v81
  %v274 = vunpack.c.l.b16 %v82
  %v275 = vunpack.c.l.b16 %v83
  %v276 = vunpack.c.l.b16 %v84
  %v277 = vunpack.c.l.b16 %v85
  %v278 = vunpack.c.l.b16 %v86
  %v279 = vunpack.c.l.b16 %v87
  %v280 = vunpack.c.l.b16 %v88
  %v281 = vunpack.c.l.b16 %v89
  %v282 = vunpack.c.l.b16 %v90
  %v283 = vunpack.c.l.b16 %v91
  %v284 = vunpack.c.l.b16 %v92
  %v285 = vunpack.c.l.b16 %v93
  %v286 = vunpack.c.l.b16 %v94
  %v287 = vunpack.c.l.b16 %v95
  %v288 = vunpack.c.l.b16 %v96
  %v289 = vunpack.c.l.b16 %v97
  %v290 = vunpack.c.l.b16 %v98
  %v291 = vunpack.c.l.b16 %v99
  %v292 = vunpack.c.l.b16 %v100
  %v293 = vunpack.c.l.b16 %v101
  %v294 = vunpack.c.l.b16 %v102
  %v295 = vpack.c.b16 %v264, %v263
  %v296 = vpack.c.b16 %v266, %v265
  %v297 = vpack.c.b16 %v268, %v267
  %v298 = vpack.c.b16 %v270, %v269
  %v299 = vpack.c.b16 %v272, %v271
  %v300 = vpack.c.b16 %v274, %v273
  %v301 = vpack.c.b16 %v276, %v275
  %v302 = vpack.c.b16 %v278, %v277
  %v303 = vpack.c.b16 %v280, %v279
  %v304 = vpack.c.b16 %v282, %v281
  %v305 = vpack.c.b16 %v284, %v283
  %v306 = vpack.c.b16 %v286, %v285
  %v307 = vpack.c.b16 %v288, %v287
  %v308 = vpack.c.b16 %v290, %v289
  %v309 = vpack.c.b16 %v292, %v291
  %v310 = vpack.c.b16 %v294, %v293
  %v359 = vunpack.c.l.b16 %v103
  %v360 = vunpack.c.l.b16 %v104
  %v361 = vunpack.c.l.b16 %v105
  %v362 = vunpack.c.l.b16 %v106
  %v363 = vunpack.c.l.b16 %v107
  %v364 = vunpack.c.l.b16 %v108
  %v365 = vunpack.c.l.b16 %v109
  %v366 = vunpack.c.l.b16 %v110
  %v367 = vunpack.c.l.b16 %v111
  %v368 = vunpack.c.l.b16 %v112
  %v369 = vunpack.c.l.b16 %v113
  %v370 = vunpack.c.l.b16 %v114
  %v371 = vunpack.c.l.b16 %v115
  %v372 = vunpack.c.l.b16 %v116
  %v373 = vunpack.c.l.b16 %v117
  %v374 = vunpack.c.l.b16 %v118
  %v375 = vunpack.c.l.b16 %v119
  %v376 = vunpack.c.l.b16 %v120
  %v377 = vunpack.c.l.b16 %v121
  %v378 = vunpack.c.l.b16 %v122
  %v379 = vunpack.c.l.b16 %v123
  %v380 = vunpack.c.l.b16 %v124
  %v381 = vunpack.c.l.b16 %v125
  %v382 = vunpack.c.l.b16 %v126
  %v383 = vunpack.c.l.b16 %v127
  %v384 = vunpack.c.l.b16 %v128
  %v385 = vunpack.c.l.b16 %v129
  %v386 = vunpack.c.l.b16 %v130
  %v387 = vunpack.c.l.b16 %v131
  %v388 = vunpack.c.l.b16 %v132
  %v389 = vunpack.c.l.b16 %v133
  %v390 = vunpack.c.l.b16 %v134
  %v391 = vpack.c.b16 %v360, %v359
  %v392 = vpack.c.b16 %v362, %v361
  %v393 = vpack.c.b16 %v364, %v363
  %v394 = vpack.c.b16 %v366, %v365
  %v395 = vpack.c.b16 %v368, %v367
  %v396 = vpack.c.b16 %v370, %v369
  %v397 = vpack.c.b16 %v372, %v371
  %v398 = vpack.c.b16 %v374, %v373
  %v399 = vpack.c.b16 %v376, %v375
  %v400 = vpack.c.b16 %v378, %v377
  %v401 = vpack.c.b16 %v380, %v379
  %v402 = vpack.c.b16 %v382, %v381
  %v403 = vpack.c.b16 %v384, %v383
  %v404 = vpack.c.b16 %v386, %v385
  %v405 = vpack.c.b16 %v388, %v387
  %v406 = vpack.c.b16 %v390, %v389
  %v423 = vld [vmem:[%s3] sm:$0xf]
  %v424 = vld [vmem:[%s3 + $0x4] sm:$0xf]
  %v425 = vld [vmem:[%s3 + $0x8] sm:$0xf]
  %v426 = vld [vmem:[%s3 + $0xc] sm:$0xf]
  %v427 = vld [vmem:[%s3 + $0x10] sm:$0xf]
  %v428 = vld [vmem:[%s3 + $0x14] sm:$0xf]
  %v429 = vld [vmem:[%s3 + $0x18] sm:$0xf]
  %v430 = vld [vmem:[%s3 + $0x1c] sm:$0xf]
  %v431 = vld [vmem:[%s3 + $0x20] sm:$0xf]
  %v432 = vld [vmem:[%s3 + $0x24] sm:$0xf]
  %v433 = vld [vmem:[%s3 + $0x28] sm:$0xf]
  %v434 = vld [vmem:[%s3 + $0x2c] sm:$0xf]
  %v435 = vld [vmem:[%s3 + $0x30] sm:$0xf]
  %v436 = vld [vmem:[%s3 + $0x34] sm:$0xf]
  %v437 = vld [vmem:[%s3 + $0x38] sm:$0xf]
  %v438 = vld [vmem:[%s3 + $0x3c] sm:$0xf]
  %v439 = vld [vmem:[%s3 + $0x40] sm:$0xf]
  %v440 = vld [vmem:[%s3 + $0x44] sm:$0xf]
  %v441 = vld [vmem:[%s3 + $0x48] sm:$0xf]
  %v442 = vld [vmem:[%s3 + $0x4c] sm:$0xf]
  %v443 = vld [vmem:[%s3 + $0x50] sm:$0xf]
  %v444 = vld [vmem:[%s3 + $0x54] sm:$0xf]
  %v445 = vld [vmem:[%s3 + $0x58] sm:$0xf]
  %v446 = vld [vmem:[%s3 + $0x5c] sm:$0xf]
  %v447 = vld [vmem:[%s3 + $0x60] sm:$0xf]
  %v448 = vld [vmem:[%s3 + $0x64] sm:$0xf]
  %v449 = vld [vmem:[%s3 + $0x68] sm:$0xf]
  %v450 = vld [vmem:[%s3 + $0x6c] sm:$0xf]
  %v451 = vld [vmem:[%s3 + $0x70] sm:$0xf]
  %v452 = vld [vmem:[%s3 + $0x74] sm:$0xf]
  %v453 = vld [vmem:[%s3 + $0x78] sm:$0xf]
  %v454 = vld [vmem:[%s3 + $0x7c] sm:$0xf]
  %v455 = vld [vmem:[%s3 + $0x80] sm:$0xf]
  %v456 = vld [vmem:[%s3 + $0x84] sm:$0xf]
  %v457 = vld [vmem:[%s3 + $0x88] sm:$0xf]
  %v458 = vld [vmem:[%s3 + $0x8c] sm:$0xf]
  %v459 = vld [vmem:[%s3 + $0x90] sm:$0xf]
  %v460 = vld [vmem:[%s3 + $0x94] sm:$0xf]
  %v461 = vld [vmem:[%s3 + $0x98] sm:$0xf]
  %v462 = vld [vmem:[%s3 + $0x9c] sm:$0xf]
  %v463 = vld [vmem:[%s3 + $0xa0] sm:$0xf]
  %v464 = vld [vmem:[%s3 + $0xa4] sm:$0xf]
  %v465 = vld [vmem:[%s3 + $0xa8] sm:$0xf]
  %v466 = vld [vmem:[%s3 + $0xac] sm:$0xf]
  %v467 = vld [vmem:[%s3 + $0xb0] sm:$0xf]
  %v468 = vld [vmem:[%s3 + $0xb4] sm:$0xf]
  %v469 = vld [vmem:[%s3 + $0xb8] sm:$0xf]
  %v470 = vld [vmem:[%s3 + $0xbc] sm:$0xf]
  %v471 = vld [vmem:[%s4] sm:$0x1]
  %v473 = vlaneseq
  %v474 = vshrl.u32 %v473, 7
  %v475 = vsub.s32 0, %v474
  %v476 = vrot.slane %v471, %v475
  %v526 = vunpack.c.l.b16 %v423
  %v527 = vunpack.c.l.b16 %v424
  %v528 = vunpack.c.l.b16 %v425
  %v529 = vunpack.c.l.b16 %v426
  %v530 = vunpack.c.l.b16 %v427
  %v531 = vunpack.c.l.b16 %v428
  %v532 = vunpack.c.l.b16 %v429
  %v533 = vunpack.c.l.b16 %v430
  %v534 = vunpack.c.l.b16 %v431
  %v535 = vunpack.c.l.b16 %v432
  %v536 = vunpack.c.l.b16 %v433
  %v537 = vunpack.c.l.b16 %v434
  %v538 = vunpack.c.l.b16 %v435
  %v539 = vunpack.c.l.b16 %v436
  %v540 = vunpack.c.l.b16 %v437
  %v541 = vunpack.c.l.b16 %v438
  %v542 = vunpack.c.l.b16 %v439
  %v543 = vunpack.c.l.b16 %v440
  %v544 = vunpack.c.l.b16 %v441
  %v545 = vunpack.c.l.b16 %v442
  %v546 = vunpack.c.l.b16 %v443
  %v547 = vunpack.c.l.b16 %v444
  %v548 = vunpack.c.l.b16 %v445
  %v549 = vunpack.c.l.b16 %v446
  %v550 = vunpack.c.l.b16 %v447
  %v551 = vunpack.c.l.b16 %v448
  %v552 = vunpack.c.l.b16 %v449
  %v553 = vunpack.c.l.b16 %v450
  %v554 = vunpack.c.l.b16 %v451
  %v555 = vunpack.c.l.b16 %v452
  %v556 = vunpack.c.l.b16 %v453
  %v557 = vunpack.c.l.b16 %v454
  %v558 = vunpack.c.l.b16 %v455
  %v559 = vunpack.c.l.b16 %v456
  %v560 = vunpack.c.l.b16 %v457
  %v561 = vunpack.c.l.b16 %v458
  %v562 = vunpack.c.l.b16 %v459
  %v563 = vunpack.c.l.b16 %v460
  %v564 = vunpack.c.l.b16 %v461
  %v565 = vunpack.c.l.b16 %v462
  %v566 = vunpack.c.l.b16 %v463
  %v567 = vunpack.c.l.b16 %v464
  %v568 = vunpack.c.l.b16 %v465
  %v569 = vunpack.c.l.b16 %v466
  %v570 = vunpack.c.l.b16 %v467
  %v571 = vunpack.c.l.b16 %v468
  %v572 = vunpack.c.l.b16 %v469
  %v573 = vunpack.c.l.b16 %v470
  %v574 = vpack.c.b16 %v527, %v526
  %v575 = vpack.c.b16 %v529, %v528
  %v576 = vpack.c.b16 %v531, %v530
  %v577 = vpack.c.b16 %v533, %v532
  %v578 = vpack.c.b16 %v535, %v534
  %v579 = vpack.c.b16 %v537, %v536
  %v580 = vpack.c.b16 %v539, %v538
  %v581 = vpack.c.b16 %v541, %v540
  %v582 = vpack.c.b16 %v543, %v542
  %v583 = vpack.c.b16 %v545, %v544
  %v584 = vpack.c.b16 %v547, %v546
  %v585 = vpack.c.b16 %v549, %v548
  %v586 = vpack.c.b16 %v551, %v550
  %v587 = vpack.c.b16 %v553, %v552
  %v588 = vpack.c.b16 %v555, %v554
  %v589 = vpack.c.b16 %v557, %v556
  %v590 = vpack.c.b16 %v559, %v558
  %v591 = vpack.c.b16 %v561, %v560
  %v592 = vpack.c.b16 %v563, %v562
  %v593 = vpack.c.b16 %v565, %v564
  %v594 = vpack.c.b16 %v567, %v566
  %v595 = vpack.c.b16 %v569, %v568
  %v596 = vpack.c.b16 %v571, %v570
  %v597 = vpack.c.b16 %v573, %v572
  %622 = vmatprep.subr.bf16.mxu0 0
  %623 = vmatpush1.bf16.msra.mxu0 %v574
  %624 = vmatprep.subr.bf16.mxu0 0
  %625 = vmatpush1.bf16.msra.mxu0 %v575
  %626 = vmatprep.subr.bf16.mxu0 0
  %627 = vmatpush1.bf16.msra.mxu0 %v576
  %628 = vmatprep.subr.bf16.mxu0 0
  %629 = vmatpush1.bf16.msra.mxu0 %v577
  %630 = vmatprep.subr.bf16.mxu0 0
  %631 = vmatpush1.bf16.msra.mxu0 %v578
  %632 = vmatprep.subr.bf16.mxu0 0
  %633 = vmatpush1.bf16.msra.mxu0 %v579
  %634 = vmatprep.subr.bf16.mxu0 0
  %635 = vmatpush1.bf16.msra.mxu0 %v580
  %636 = vmatprep.subr.bf16.mxu0 0
  %637 = vmatpush1.bf16.msra.mxu0 %v581
  %638 = vmatprep.subr.bf16.mxu0 0
  %639 = vmatpush1.bf16.msra.mxu0 %v582
  %640 = vmatprep.subr.bf16.mxu0 0
  %641 = vmatpush1.bf16.msra.mxu0 %v583
  %642 = vmatprep.subr.bf16.mxu0 0
  %643 = vmatpush1.bf16.msra.mxu0 %v584
  %644 = vmatprep.subr.bf16.mxu0 0
  %645 = vmatpush1.bf16.msra.mxu0 %v585
  %646 = vmatprep.subr.bf16.mxu0 0
  %647 = vmatpush1.bf16.msra.mxu0 %v586
  %648 = vmatprep.subr.bf16.mxu0 0
  %649 = vmatpush1.bf16.msra.mxu0 %v587
  %650 = vmatprep.subr.bf16.mxu0 0
  %651 = vmatpush1.bf16.msra.mxu0 %v588
  %652 = vmatprep.subr.bf16.mxu0 0
  %653 = vmatpush1.bf16.msra.mxu0 %v589
  %654 = vmatprep.mubr.bf16.mxu0 %v295
  %655 = vmatmul.mubr.bf16.gmra.mrb[0].mxu0 %v199
  %v656 = vpop.f32.mrb[0].mxu0
  %v657 = vadd.f32 %v476, %v656
  %v658 = vpop.f32.mrb[0].mxu0
  %v659 = vpop.f32.mrb[0].mxu0
  %v660 = vadd.f32 %v476, %v659
  %v661 = vpop.f32.mrb[0].mxu0
  %662 = vmatprep.mubr.bf16.mxu0 %v296
  %663 = vmatmul.mubr.bf16.gmra.mrb[0].mxu0 %v200
  %v664 = vpop.f32.mrb[0].mxu0
  %v665 = vadd.f32 %v476, %v664
  %v666 = vpop.f32.mrb[0].mxu0
  %v667 = vpop.f32.mrb[0].mxu0
  %v668 = vadd.f32 %v476, %v667
  %v669 = vpop.f32.mrb[0].mxu0
  %670 = vmatprep.mubr.bf16.mxu0 %v297
  %671 = vmatmul.mubr.bf16.gmra.mrb[0].mxu0 %v201
  %v672 = vpop.f32.mrb[0].mxu0
  %v673 = vadd.f32 %v476, %v672
  %v674 = vpop.f32.mrb[0].mxu0
  %v675 = vpop.f32.mrb[0].mxu0
  %v676 = vadd.f32 %v476, %v675
  %v677 = vpop.f32.mrb[0].mxu0
  %678 = vmatprep.mubr.bf16.mxu0 %v298
  %679 = vmatmul.mubr.bf16.gmra.mrb[0].mxu0 %v202
  %v680 = vpop.f32.mrb[0].mxu0
  %v681 = vadd.f32 %v476, %v680
  %v682 = vpop.f32.mrb[0].mxu0
  %v683 = vpop.f32.mrb[0].mxu0
  %v684 = vadd.f32 %v476, %v683
  %v685 = vpop.f32.mrb[0].mxu0
  %686 = vmatprep.mubr.bf16.mxu0 %v299
  %687 = vmatmul.mubr.bf16.gmra.mrb[0].mxu0 %v203
  %v688 = vpop.f32.mrb[0].mxu0
  %v689 = vadd.f32 %v476, %v688
  %v690 = vpop.f32.mrb[0].mxu0
  %v691 = vpop.f32.mrb[0].mxu0
  %v692 = vadd.f32 %v476, %v691
  %v693 = vpop.f32.mrb[0].mxu0
  %694 = vmatprep.mubr.bf16.mxu0 %v300
  %695 = vmatmul.mubr.bf16.gmra.mrb[0].mxu0 %v204
  %v696 = vpop.f32.mrb[0].mxu0
  %v697 = vadd.f32 %v476, %v696
  %v698 = vpop.f32.mrb[0].mxu0
  %v699 = vpop.f32.mrb[0].mxu0
  %v700 = vadd.f32 %v476, %v699
  %v701 = vpop.f32.mrb[0].mxu0
  %702 = vmatprep.mubr.bf16.mxu0 %v301
  %703 = vmatmul.mubr.bf16.gmra.mrb[0].mxu0 %v205
  %v704 = vpop.f32.mrb[0].mxu0
  %v705 = vadd.f32 %v476, %v704
  %v706 = vpop.f32.mrb[0].mxu0
  %v707 = vpop.f32.mrb[0].mxu0
  %v708 = vadd.f32 %v476, %v707
  %v709 = vpop.f32.mrb[0].mxu0
  %710 = vmatprep.mubr.bf16.mxu0 %v302
  %711 = vmatmul.mubr.bf16.gmra.mrb[0].mxu0 %v206
  %v712 = vpop.f32.mrb[0].mxu0
  %v713 = vadd.f32 %v476, %v712
  %v714 = vpop.f32.mrb[0].mxu0
  %v715 = vpop.f32.mrb[0].mxu0
  %v716 = vadd.f32 %v476, %v715
  %v717 = vpop.f32.mrb[0].mxu0
  %718 = vmatprep.mubr.bf16.mxu0 %v303
  %719 = vmatmul.mubr.bf16.gmra.mrb[0].mxu0 %v207
  %v720 = vpop.f32.mrb[0].mxu0
  %v721 = vadd.f32 %v476, %v720
  %v722 = vpop.f32.mrb[0].mxu0
  %v723 = vpop.f32.mrb[0].mxu0
  %v724 = vadd.f32 %v476, %v723
  %v725 = vpop.f32.mrb[0].mxu0
  %726 = vmatprep.mubr.bf16.mxu0 %v304
  %727 = vmatmul.mubr.bf16.gmra.mrb[0].mxu0 %v208
  %v728 = vpop.f32.mrb[0].mxu0
  %v729 = vadd.f32 %v476, %v728
  %v730 = vpop.f32.mrb[0].mxu0
  %v731 = vpop.f32.mrb[0].mxu0
  %v732 = vadd.f32 %v476, %v731
  %v733 = vpop.f32.mrb[0].mxu0
  %734 = vmatprep.mubr.bf16.mxu0 %v305
  %735 = vmatmul.mubr.bf16.gmra.mrb[0].mxu0 %v209
  %v736 = vpop.f32.mrb[0].mxu0
  %v737 = vadd.f32 %v476, %v736
  %v738 = vpop.f32.mrb[0].mxu0
  %v739 = vpop.f32.mrb[0].mxu0
  %v740 = vadd.f32 %v476, %v739
  %v741 = vpop.f32.mrb[0].mxu0
  %742 = vmatprep.mubr.bf16.mxu0 %v306
  %743 = vmatmul.mubr.bf16.gmra.mrb[0].mxu0 %v210
  %v744 = vpop.f32.mrb[0].mxu0
  %v745 = vadd.f32 %v476, %v744
  %v746 = vpop.f32.mrb[0].mxu0
  %v747 = vpop.f32.mrb[0].mxu0
  %v748 = vadd.f32 %v476, %v747
  %v749 = vpop.f32.mrb[0].mxu0
  %750 = vmatprep.mubr.bf16.mxu0 %v307
  %751 = vmatmul.mubr.bf16.gmra.mrb[0].mxu0 %v211
  %v752 = vpop.f32.mrb[0].mxu0
  %v753 = vadd.f32 %v476, %v752
  %v754 = vpop.f32.mrb[0].mxu0
  %v755 = vpop.f32.mrb[0].mxu0
  %v756 = vadd.f32 %v476, %v755
  %v757 = vpop.f32.mrb[0].mxu0
  %758 = vmatprep.mubr.bf16.mxu0 %v308
  %759 = vmatmul.mubr.bf16.gmra.mrb[0].mxu0 %v212
  %v760 = vpop.f32.mrb[0].mxu0
  %v761 = vadd.f32 %v476, %v760
  %v762 = vpop.f32.mrb[0].mxu0
  %v763 = vpop.f32.mrb[0].mxu0
  %v764 = vadd.f32 %v476, %v763
  %v765 = vpop.f32.mrb[0].mxu0
  %766 = vmatprep.mubr.bf16.mxu0 %v309
  %767 = vmatmul.mubr.bf16.gmra.mrb[0].mxu0 %v213
  %v768 = vpop.f32.mrb[0].mxu0
  %v769 = vadd.f32 %v476, %v768
  %v770 = vpop.f32.mrb[0].mxu0
  %v771 = vpop.f32.mrb[0].mxu0
  %v772 = vadd.f32 %v476, %v771
  %v773 = vpop.f32.mrb[0].mxu0
  %774 = vmatprep.mubr.bf16.mxu0 %v310
  %775 = vmatmul.mubr.bf16.gmra.mrb[0].mxu0 %v214
  %v776 = vpop.f32.mrb[0].mxu0
  %v777 = vadd.f32 %v476, %v776
  %v778 = vpop.f32.mrb[0].mxu0
  %v779 = vpop.f32.mrb[0].mxu0
  %v780 = vadd.f32 %v476, %v779
  %v781 = vpop.f32.mrb[0].mxu0
  %782 = vdwg.mxu0
  %783 = vmatprep.subr.bf16.mxu0 0
  %784 = vmatpush1.bf16.msra.mxu0 %v590
  %785 = vmatprep.subr.bf16.mxu0 0
  %786 = vmatpush1.bf16.msra.mxu0 %v591
  %787 = vmatprep.subr.bf16.mxu0 0
  %788 = vmatpush1.bf16.msra.mxu0 %v592
  %789 = vmatprep.subr.bf16.mxu0 0
  %790 = vmatpush1.bf16.msra.mxu0 %v593
  %791 = vmatprep.subr.bf16.mxu0 0
  %792 = vmatpush1.bf16.msra.mxu0 %v594
  %793 = vmatprep.subr.bf16.mxu0 0
  %794 = vmatpush1.bf16.msra.mxu0 %v595
  %795 = vmatprep.subr.bf16.mxu0 0
  %796 = vmatpush1.bf16.msra.mxu0 %v596
  %797 = vmatprep.subr.bf16.mxu0 0
  %798 = vmatpush1.bf16.msra.mxu0 %v597
  %799 = vmatprep.subr.bf16.mxu0 0
  %800 = vmatpush1.bf16.msra.mxu0 0
  %801 = vmatprep.subr.bf16.mxu0 0
  %802 = vmatpush1.bf16.msra.mxu0 0
  %803 = vmatprep.subr.bf16.mxu0 0
  %804 = vmatpush1.bf16.msra.mxu0 0
  %805 = vmatprep.subr.bf16.mxu0 0
  %806 = vmatpush1.bf16.msra.mxu0 0
  %807 = vmatprep.subr.bf16.mxu0 0
  %808 = vmatpush1.bf16.msra.mxu0 0
  %809 = vmatprep.subr.bf16.mxu0 0
  %810 = vmatpush1.bf16.msra.mxu0 0
  %811 = vmatprep.subr.bf16.mxu0 0
  %812 = vmatpush1.bf16.msra.mxu0 0
  %813 = vmatprep.subr.bf16.mxu0 0
  %814 = vmatpush1.bf16.msra.mxu0 0
  %815 = vmatprep.mubr.bf16.mxu0 0
  %816 = vmatmul.mubr.bf16.gmra.mrb[0].mxu0 %v391
  %v817 = vpop.f32.mrb[0].mxu0
  %v818 = vadd.f32 %v657, %v817
  %v819 = vpop.f32.mrb[0].mxu0
  %v820 = vpop.f32.mrb[0].mxu0
  %v821 = vadd.f32 %v660, %v820
  %v822 = vpop.f32.mrb[0].mxu0
  %823 = vmatprep.mubr.bf16.mxu0 0
  %824 = vmatmul.mubr.bf16.gmra.mrb[0].mxu0 %v392
  %v825 = vpop.f32.mrb[0].mxu0
  %v826 = vadd.f32 %v665, %v825
  %v827 = vpop.f32.mrb[0].mxu0
  %v828 = vpop.f32.mrb[0].mxu0
  %v829 = vadd.f32 %v668, %v828
  %v830 = vpop.f32.mrb[0].mxu0
  %831 = vmatprep.mubr.bf16.mxu0 0
  %832 = vmatmul.mubr.bf16.gmra.mrb[0].mxu0 %v393
  %v833 = vpop.f32.mrb[0].mxu0
  %v834 = vadd.f32 %v673, %v833
  %v835 = vpop.f32.mrb[0].mxu0
  %v836 = vpop.f32.mrb[0].mxu0
  %v837 = vadd.f32 %v676, %v836
  %v838 = vpop.f32.mrb[0].mxu0
  %839 = vmatprep.mubr.bf16.mxu0 0
  %840 = vmatmul.mubr.bf16.gmra.mrb[0].mxu0 %v394
  %v841 = vpop.f32.mrb[0].mxu0
  %v842 = vadd.f32 %v681, %v841
  %v843 = vpop.f32.mrb[0].mxu0
  %v844 = vpop.f32.mrb[0].mxu0
  %v845 = vadd.f32 %v684, %v844
  %v846 = vpop.f32.mrb[0].mxu0
  %847 = vmatprep.mubr.bf16.mxu0 0
  %848 = vmatmul.mubr.bf16.gmra.mrb[0].mxu0 %v395
  %v849 = vpop.f32.mrb[0].mxu0
  %v850 = vadd.f32 %v689, %v849
  %v851 = vpop.f32.mrb[0].mxu0
  %v852 = vpop.f32.mrb[0].mxu0
  %v853 = vadd.f32 %v692, %v852
  %v854 = vpop.f32.mrb[0].mxu0
  %855 = vmatprep.mubr.bf16.mxu0 0
  %856 = vmatmul.mubr.bf16.gmra.mrb[0].mxu0 %v396
  %v857 = vpop.f32.mrb[0].mxu0
  %v858 = vadd.f32 %v697, %v857
  %v859 = vpop.f32.mrb[0].mxu0
  %v860 = vpop.f32.mrb[0].mxu0
  %v861 = vadd.f32 %v700, %v860
  %v862 = vpop.f32.mrb[0].mxu0
  %863 = vmatprep.mubr.bf16.mxu0 0
  %864 = vmatmul.mubr.bf16.gmra.mrb[0].mxu0 %v397
  %v865 = vpop.f32.mrb[0].mxu0
  %v866 = vadd.f32 %v705, %v865
  %v867 = vpop.f32.mrb[0].mxu0
  %v868 = vpop.f32.mrb[0].mxu0
  %v869 = vadd.f32 %v708, %v868
  %v870 = vpop.f32.mrb[0].mxu0
  %871 = vmatprep.mubr.bf16.mxu0 0
  %872 = vmatmul.mubr.bf16.gmra.mrb[0].mxu0 %v398
  %v873 = vpop.f32.mrb[0].mxu0
  %v874 = vadd.f32 %v713, %v873
  %v875 = vpop.f32.mrb[0].mxu0
  %v876 = vpop.f32.mrb[0].mxu0
  %v877 = vadd.f32 %v716, %v876
  %v878 = vpop.f32.mrb[0].mxu0
  %879 = vmatprep.mubr.bf16.mxu0 0
  %880 = vmatmul.mubr.bf16.gmra.mrb[0].mxu0 %v399
  %v881 = vpop.f32.mrb[0].mxu0
  %v882 = vadd.f32 %v721, %v881
  %v883 = vpop.f32.mrb[0].mxu0
  %v884 = vpop.f32.mrb[0].mxu0
  %v885 = vadd.f32 %v724, %v884
  %v886 = vpop.f32.mrb[0].mxu0
  %887 = vmatprep.mubr.bf16.mxu0 0
  %888 = vmatmul.mubr.bf16.gmra.mrb[0].mxu0 %v400
  %v889 = vpop.f32.mrb[0].mxu0
  %v890 = vadd.f32 %v729, %v889
  %v891 = vpop.f32.mrb[0].mxu0
  %v892 = vpop.f32.mrb[0].mxu0
  %v893 = vadd.f32 %v732, %v892
  %v894 = vpop.f32.mrb[0].mxu0
  %895 = vmatprep.mubr.bf16.mxu0 0
  %896 = vmatmul.mubr.bf16.gmra.mrb[0].mxu0 %v401
  %v897 = vpop.f32.mrb[0].mxu0
  %v898 = vadd.f32 %v737, %v897
  %v899 = vpop.f32.mrb[0].mxu0
  %v900 = vpop.f32.mrb[0].mxu0
  %v901 = vadd.f32 %v740, %v900
  %v902 = vpop.f32.mrb[0].mxu0
  %903 = vmatprep.mubr.bf16.mxu0 0
  %904 = vmatmul.mubr.bf16.gmra.mrb[0].mxu0 %v402
  %v905 = vpop.f32.mrb[0].mxu0
  %v906 = vadd.f32 %v745, %v905
  %v907 = vpop.f32.mrb[0].mxu0
  %v908 = vpop.f32.mrb[0].mxu0
  %v909 = vadd.f32 %v748, %v908
  %v910 = vpop.f32.mrb[0].mxu0
  %911 = vmatprep.mubr.bf16.mxu0 0
  %912 = vmatmul.mubr.bf16.gmra.mrb[0].mxu0 %v403
  %v913 = vpop.f32.mrb[0].mxu0
  %v914 = vadd.f32 %v753, %v913
  %v915 = vpop.f32.mrb[0].mxu0
  %v916 = vpop.f32.mrb[0].mxu0
  %v917 = vadd.f32 %v756, %v916
  %v918 = vpop.f32.mrb[0].mxu0
  %919 = vmatprep.mubr.bf16.mxu0 0
  %920 = vmatmul.mubr.bf16.gmra.mrb[0].mxu0 %v404
  %v921 = vpop.f32.mrb[0].mxu0
  %v922 = vadd.f32 %v761, %v921
  %v923 = vpop.f32.mrb[0].mxu0
  %v924 = vpop.f32.mrb[0].mxu0
  %v925 = vadd.f32 %v764, %v924
  %v926 = vpop.f32.mrb[0].mxu0
  %927 = vmatprep.mubr.bf16.mxu0 0
  %928 = vmatmul.mubr.bf16.gmra.mrb[0].mxu0 %v405
  %v929 = vpop.f32.mrb[0].mxu0
  %v930 = vadd.f32 %v769, %v929
  %v931 = vpop.f32.mrb[0].mxu0
  %v932 = vpop.f32.mrb[0].mxu0
  %v933 = vadd.f32 %v772, %v932
  %v934 = vpop.f32.mrb[0].mxu0
  %935 = vmatprep.mubr.bf16.mxu0 0
  %936 = vmatmul.mubr.bf16.gmra.mrb[0].mxu0 %v406
  %v937 = vpop.f32.mrb[0].mxu0
  %v938 = vadd.f32 %v777, %v937
  %v939 = vpop.f32.mrb[0].mxu0
  %v940 = vpop.f32.mrb[0].mxu0
  %v941 = vadd.f32 %v780, %v940
  %v942 = vpop.f32.mrb[0].mxu0
  %943 = vdwg.mxu0
  %v944 = vmax.f32 %v818, 0.0
  %v945 = vmax.f32 %v821, 0.0
  %v946 = vmax.f32 %v826, 0.0
  %v947 = vmax.f32 %v829, 0.0
  %v948 = vmax.f32 %v834, 0.0
  %v949 = vmax.f32 %v837, 0.0
  %v950 = vmax.f32 %v842, 0.0
  %v951 = vmax.f32 %v845, 0.0
  %v952 = vmax.f32 %v850, 0.0
  %v953 = vmax.f32 %v853, 0.0
  %v954 = vmax.f32 %v858, 0.0
  %v955 = vmax.f32 %v861, 0.0
  %v956 = vmax.f32 %v866, 0.0
  %v957 = vmax.f32 %v869, 0.0
  %v958 = vmax.f32 %v874, 0.0
  %v959 = vmax.f32 %v877, 0.0
  %v960 = vmax.f32 %v882, 0.0
  %v961 = vmax.f32 %v885, 0.0
  %v962 = vmax.f32 %v890, 0.0
  %v963 = vmax.f32 %v893, 0.0
  %v964 = vmax.f32 %v898, 0.0
  %v965 = vmax.f32 %v901, 0.0
  %v966 = vmax.f32 %v906, 0.0
  %v967 = vmax.f32 %v909, 0.0
  %v968 = vmax.f32 %v914, 0.0
  %v969 = vmax.f32 %v917, 0.0
  %v970 = vmax.f32 %v922, 0.0
  %v971 = vmax.f32 %v925, 0.0
  %v972 = vmax.f32 %v930, 0.0
  %v973 = vmax.f32 %v933, 0.0
  %v974 = vmax.f32 %v938, 0.0
  %v975 = vmax.f32 %v941, 0.0
  %v976 = vpack.c.bf16 %v945, %v944
  %v977 = vpack.c.bf16 %v947, %v946
  %v978 = vpack.c.bf16 %v949, %v948
  %v979 = vpack.c.bf16 %v951, %v950
  %v980 = vpack.c.bf16 %v953, %v952
  %v981 = vpack.c.bf16 %v955, %v954
  %v982 = vpack.c.bf16 %v957, %v956
  %v983 = vpack.c.bf16 %v959, %v958
  %v984 = vpack.c.bf16 %v961, %v960
  %v985 = vpack.c.bf16 %v963, %v962
  %v986 = vpack.c.bf16 %v965, %v964
  %v987 = vpack.c.bf16 %v967, %v966
  %v988 = vpack.c.bf16 %v969, %v968
  %v989 = vpack.c.bf16 %v971, %v970
  %v990 = vpack.c.bf16 %v973, %v972
  %v991 = vpack.c.bf16 %v975, %v974
  %v992 = vld [vmem:[%s5] sm:$0xf]
  %v993 = vld [vmem:[%s5 + $0x4] sm:$0xf]
  %v994 = vld [vmem:[%s5 + $0x8] sm:$0xf]
  %v995 = vld [vmem:[%s5 + $0xc] sm:$0xf]
  %v996 = vld [vmem:[%s5 + $0x10] sm:$0xf]
  %v997 = vld [vmem:[%s5 + $0x14] sm:$0xf]
  %v998 = vld [vmem:[%s5 + $0x18] sm:$0xf]
  %v999 = vld [vmem:[%s5 + $0x1c] sm:$0xf]
  %v1000 = vld [vmem:[%s5 + $0x20] sm:$0xf]
  %v1001 = vld [vmem:[%s5 + $0x24] sm:$0xf]
  %v1002 = vld [vmem:[%s5 + $0x28] sm:$0xf]
  %v1003 = vld [vmem:[%s5 + $0x2c] sm:$0xf]
  %v1004 = vld [vmem:[%s5 + $0x30] sm:$0xf]
  %v1005 = vld [vmem:[%s5 + $0x34] sm:$0xf]
  %v1006 = vld [vmem:[%s5 + $0x38] sm:$0xf]
  %v1007 = vld [vmem:[%s5 + $0x3c] sm:$0xf]
  %v1008 = vld [vmem:[%s6] sm:$0x1]
  %v1010 = vlaneseq
  %v1011 = vshrl.u32 %v1010, 7
  %v1012 = vsub.s32 0, %v1011
  %v1013 = vrot.slane %v1008, %v1012
  %v1031 = vunpack.c.l.b16 %v992
  %v1032 = vunpack.c.l.b16 %v993
  %v1033 = vunpack.c.l.b16 %v994
  %v1034 = vunpack.c.l.b16 %v995
  %v1035 = vunpack.c.l.b16 %v996
  %v1036 = vunpack.c.l.b16 %v997
  %v1037 = vunpack.c.l.b16 %v998
  %v1038 = vunpack.c.l.b16 %v999
  %v1039 = vunpack.c.l.b16 %v1000
  %v1040 = vunpack.c.l.b16 %v1001
  %v1041 = vunpack.c.l.b16 %v1002
  %v1042 = vunpack.c.l.b16 %v1003
  %v1043 = vunpack.c.l.b16 %v1004
  %v1044 = vunpack.c.l.b16 %v1005
  %v1045 = vunpack.c.l.b16 %v1006
  %v1046 = vunpack.c.l.b16 %v1007
  %v1047 = vpack.c.b16 %v1032, %v1031
  %v1048 = vpack.c.b16 %v1034, %v1033
  %v1049 = vpack.c.b16 %v1036, %v1035
  %v1050 = vpack.c.b16 %v1038, %v1037
  %v1051 = vpack.c.b16 %v1040, %v1039
  %v1052 = vpack.c.b16 %v1042, %v1041
  %v1053 = vpack.c.b16 %v1044, %v1043
  %v1054 = vpack.c.b16 %v1046, %v1045
  %1063 = vmatprep.subr.bf16.mxu0 0
  %1064 = vmatpush1.bf16.msra.mxu0 %v1047
  %1065 = vmatprep.subr.bf16.mxu0 0
  %1066 = vmatpush1.bf16.msra.mxu0 %v1048
  %1067 = vmatprep.subr.bf16.mxu0 0
  %1068 = vmatpush1.bf16.msra.mxu0 %v1049
  %1069 = vmatprep.subr.bf16.mxu0 0
  %1070 = vmatpush1.bf16.msra.mxu0 %v1050
  %1071 = vmatprep.subr.bf16.mxu0 0
  %1072 = vmatpush1.bf16.msra.mxu0 %v1051
  %1073 = vmatprep.subr.bf16.mxu0 0
  %1074 = vmatpush1.bf16.msra.mxu0 %v1052
  %1075 = vmatprep.subr.bf16.mxu0 0
  %1076 = vmatpush1.bf16.msra.mxu0 %v1053
  %1077 = vmatprep.subr.bf16.mxu0 0
  %1078 = vmatpush1.bf16.msra.mxu0 %v1054
  %1079 = vmatprep.subr.bf16.mxu0 0
  %1080 = vmatpush1.bf16.msra.mxu0 0
  %1081 = vmatprep.subr.bf16.mxu0 0
  %1082 = vmatpush1.bf16.msra.mxu0 0
  %1083 = vmatprep.subr.bf16.mxu0 0
  %1084 = vmatpush1.bf16.msra.mxu0 0
  %1085 = vmatprep.subr.bf16.mxu0 0
  %1086 = vmatpush1.bf16.msra.mxu0 0
  %1087 = vmatprep.subr.bf16.mxu0 0
  %1088 = vmatpush1.bf16.msra.mxu0 0
  %1089 = vmatprep.subr.bf16.mxu0 0
  %1090 = vmatpush1.bf16.msra.mxu0 0
  %1091 = vmatprep.subr.bf16.mxu0 0
  %1092 = vmatpush1.bf16.msra.mxu0 0
  %1093 = vmatprep.subr.bf16.mxu0 0
  %1094 = vmatpush1.bf16.msra.mxu0 0
  %1095 = vmatprep.mubr.bf16.mxu0 0
  %1096 = vmatmul.mubr.bf16.gmra.mrb[0].mxu0 %v976
  %v1097 = vpop.f32.mrb[0].mxu0
  %v1098 = vadd.f32 %v1013, %v1097
  %v1099 = vpop.f32.mrb[0].mxu0
  %v1100 = vpop.f32.mrb[0].mxu0
  %v1101 = vadd.f32 %v1013, %v1100
  %v1102 = vpop.f32.mrb[0].mxu0
  %1103 = vmatprep.mubr.bf16.mxu0 0
  %1104 = vmatmul.mubr.bf16.gmra.mrb[0].mxu0 %v977
  %v1105 = vpop.f32.mrb[0].mxu0
  %v1106 = vadd.f32 %v1013, %v1105
  %v1107 = vpop.f32.mrb[0].mxu0
  %v1108 = vpop.f32.mrb[0].mxu0
  %v1109 = vadd.f32 %v1013, %v1108
  %v1110 = vpop.f32.mrb[0].mxu0
  %1111 = vmatprep.mubr.bf16.mxu0 0
  %1112 = vmatmul.mubr.bf16.gmra.mrb[0].mxu0 %v978
  %v1113 = vpop.f32.mrb[0].mxu0
  %v1114 = vadd.f32 %v1013, %v1113
  %v1115 = vpop.f32.mrb[0].mxu0
  %v1116 = vpop.f32.mrb[0].mxu0
  %v1117 = vadd.f32 %v1013, %v1116
  %v1118 = vpop.f32.mrb[0].mxu0
  %1119 = vmatprep.mubr.bf16.mxu0 0
  %1120 = vmatmul.mubr.bf16.gmra.mrb[0].mxu0 %v979
  %v1121 = vpop.f32.mrb[0].mxu0
  %v1122 = vadd.f32 %v1013, %v1121
  %v1123 = vpop.f32.mrb[0].mxu0
  %v1124 = vpop.f32.mrb[0].mxu0
  %v1125 = vadd.f32 %v1013, %v1124
  %v1126 = vpop.f32.mrb[0].mxu0
  %1127 = vmatprep.mubr.bf16.mxu0 0
  %1128 = vmatmul.mubr.bf16.gmra.mrb[0].mxu0 %v980
  %v1129 = vpop.f32.mrb[0].mxu0
  %v1130 = vadd.f32 %v1013, %v1129
  %v1131 = vpop.f32.mrb[0].mxu0
  %v1132 = vpop.f32.mrb[0].mxu0
  %v1133 = vadd.f32 %v1013, %v1132
  %v1134 = vpop.f32.mrb[0].mxu0
  %1135 = vmatprep.mubr.bf16.mxu0 0
  %1136 = vmatmul.mubr.bf16.gmra.mrb[0].mxu0 %v981
  %v1137 = vpop.f32.mrb[0].mxu0
  %v1138 = vadd.f32 %v1013, %v1137
  %v1139 = vpop.f32.mrb[0].mxu0
  %v1140 = vpop.f32.mrb[0].mxu0
  %v1141 = vadd.f32 %v1013, %v1140
  %v1142 = vpop.f32.mrb[0].mxu0
  %1143 = vmatprep.mubr.bf16.mxu0 0
  %1144 = vmatmul.mubr.bf16.gmra.mrb[0].mxu0 %v982
  %v1145 = vpop.f32.mrb[0].mxu0
  %v1146 = vadd.f32 %v1013, %v1145
  %v1147 = vpop.f32.mrb[0].mxu0
  %v1148 = vpop.f32.mrb[0].mxu0
  %v1149 = vadd.f32 %v1013, %v1148
  %v1150 = vpop.f32.mrb[0].mxu0
  %1151 = vmatprep.mubr.bf16.mxu0 0
  %1152 = vmatmul.mubr.bf16.gmra.mrb[0].mxu0 %v983
  %v1153 = vpop.f32.mrb[0].mxu0
  %v1154 = vadd.f32 %v1013, %v1153
  %v1155 = vpop.f32.mrb[0].mxu0
  %v1156 = vpop.f32.mrb[0].mxu0
  %v1157 = vadd.f32 %v1013, %v1156
  %v1158 = vpop.f32.mrb[0].mxu0
  %1159 = vmatprep.mubr.bf16.mxu0 0
  %1160 = vmatmul.mubr.bf16.gmra.mrb[0].mxu0 %v984
  %v1161 = vpop.f32.mrb[0].mxu0
  %v1162 = vadd.f32 %v1013, %v1161
  %v1163 = vpop.f32.mrb[0].mxu0
  %v1164 = vpop.f32.mrb[0].mxu0
  %v1165 = vadd.f32 %v1013, %v1164
  %v1166 = vpop.f32.mrb[0].mxu0
  %1167 = vmatprep.mubr.bf16.mxu0 0
  %1168 = vmatmul.mubr.bf16.gmra.mrb[0].mxu0 %v985
  %v1169 = vpop.f32.mrb[0].mxu0
  %v1170 = vadd.f32 %v1013, %v1169
  %v1171 = vpop.f32.mrb[0].mxu0
  %v1172 = vpop.f32.mrb[0].mxu0
  %v1173 = vadd.f32 %v1013, %v1172
  %v1174 = vpop.f32.mrb[0].mxu0
  %1175 = vmatprep.mubr.bf16.mxu0 0
  %1176 = vmatmul.mubr.bf16.gmra.mrb[0].mxu0 %v986
  %v1177 = vpop.f32.mrb[0].mxu0
  %v1178 = vadd.f32 %v1013, %v1177
  %v1179 = vpop.f32.mrb[0].mxu0
  %v1180 = vpop.f32.mrb[0].mxu0
  %v1181 = vadd.f32 %v1013, %v1180
  %v1182 = vpop.f32.mrb[0].mxu0
  %1183 = vmatprep.mubr.bf16.mxu0 0
  %1184 = vmatmul.mubr.bf16.gmra.mrb[0].mxu0 %v987
  %v1185 = vpop.f32.mrb[0].mxu0
  %v1186 = vadd.f32 %v1013, %v1185
  %v1187 = vpop.f32.mrb[0].mxu0
  %v1188 = vpop.f32.mrb[0].mxu0
  %v1189 = vadd.f32 %v1013, %v1188
  %v1190 = vpop.f32.mrb[0].mxu0
  %1191 = vmatprep.mubr.bf16.mxu0 0
  %1192 = vmatmul.mubr.bf16.gmra.mrb[0].mxu0 %v988
  %v1193 = vpop.f32.mrb[0].mxu0
  %v1194 = vadd.f32 %v1013, %v1193
  %v1195 = vpop.f32.mrb[0].mxu0
  %v1196 = vpop.f32.mrb[0].mxu0
  %v1197 = vadd.f32 %v1013, %v1196
  %v1198 = vpop.f32.mrb[0].mxu0
  %1199 = vmatprep.mubr.bf16.mxu0 0
  %1200 = vmatmul.mubr.bf16.gmra.mrb[0].mxu0 %v989
  %v1201 = vpop.f32.mrb[0].mxu0
  %v1202 = vadd.f32 %v1013, %v1201
  %v1203 = vpop.f32.mrb[0].mxu0
  %v1204 = vpop.f32.mrb[0].mxu0
  %v1205 = vadd.f32 %v1013, %v1204
  %v1206 = vpop.f32.mrb[0].mxu0
  %1207 = vmatprep.mubr.bf16.mxu0 0
  %1208 = vmatmul.mubr.bf16.gmra.mrb[0].mxu0 %v990
  %v1209 = vpop.f32.mrb[0].mxu0
  %v1210 = vadd.f32 %v1013, %v1209
  %v1211 = vpop.f32.mrb[0].mxu0
  %v1212 = vpop.f32.mrb[0].mxu0
  %v1213 = vadd.f32 %v1013, %v1212
  %v1214 = vpop.f32.mrb[0].mxu0
  %1215 = vmatprep.mubr.bf16.mxu0 0
  %1216 = vmatmul.mubr.bf16.gmra.mrb[0].mxu0 %v991
  %v1217 = vpop.f32.mrb[0].mxu0
  %v1218 = vadd.f32 %v1013, %v1217
  %v1219 = vpop.f32.mrb[0].mxu0
  %v1220 = vpop.f32.mrb[0].mxu0
  %v1221 = vadd.f32 %v1013, %v1220
  %v1222 = vpop.f32.mrb[0].mxu0
  %1223 = vdwg.mxu0
  %v1224 = vmax.f32 %v1098, 0.0
  %v1225 = vmax.f32 %v1101, 0.0
  %v1226 = vmax.f32 %v1106, 0.0
  %v1227 = vmax.f32 %v1109, 0.0
  %v1228 = vmax.f32 %v1114, 0.0
  %v1229 = vmax.f32 %v1117, 0.0
  %v1230 = vmax.f32 %v1122, 0.0
  %v1231 = vmax.f32 %v1125, 0.0
  %v1232 = vmax.f32 %v1130, 0.0
  %v1233 = vmax.f32 %v1133, 0.0
  %v1234 = vmax.f32 %v1138, 0.0
  %v1235 = vmax.f32 %v1141, 0.0
  %v1236 = vmax.f32 %v1146, 0.0
  %v1237 = vmax.f32 %v1149, 0.0
  %v1238 = vmax.f32 %v1154, 0.0
  %v1239 = vmax.f32 %v1157, 0.0
  %v1240 = vmax.f32 %v1162, 0.0
  %v1241 = vmax.f32 %v1165, 0.0
  %v1242 = vmax.f32 %v1170, 0.0
  %v1243 = vmax.f32 %v1173, 0.0
  %v1244 = vmax.f32 %v1178, 0.0
  %v1245 = vmax.f32 %v1181, 0.0
  %v1246 = vmax.f32 %v1186, 0.0
  %v1247 = vmax.f32 %v1189, 0.0
  %v1248 = vmax.f32 %v1194, 0.0
  %v1249 = vmax.f32 %v1197, 0.0
  %v1250 = vmax.f32 %v1202, 0.0
  %v1251 = vmax.f32 %v1205, 0.0
  %v1252 = vmax.f32 %v1210, 0.0
  %v1253 = vmax.f32 %v1213, 0.0
  %v1254 = vmax.f32 %v1218, 0.0
  %v1255 = vmax.f32 %v1221, 0.0
  %v1256 = vpack.c.bf16 %v1225, %v1224
  %v1257 = vpack.c.bf16 %v1227, %v1226
  %v1258 = vpack.c.bf16 %v1229, %v1228
  %v1259 = vpack.c.bf16 %v1231, %v1230
  %v1260 = vpack.c.bf16 %v1233, %v1232
  %v1261 = vpack.c.bf16 %v1235, %v1234
  %v1262 = vpack.c.bf16 %v1237, %v1236
  %v1263 = vpack.c.bf16 %v1239, %v1238
  %v1264 = vpack.c.bf16 %v1241, %v1240
  %v1265 = vpack.c.bf16 %v1243, %v1242
  %v1266 = vpack.c.bf16 %v1245, %v1244
  %v1267 = vpack.c.bf16 %v1247, %v1246
  %v1268 = vpack.c.bf16 %v1249, %v1248
  %v1269 = vpack.c.bf16 %v1251, %v1250
  %v1270 = vpack.c.bf16 %v1253, %v1252
  %v1271 = vpack.c.bf16 %v1255, %v1254
  %v1272 = vld [vmem:[%s7] sm:$0xf]
  %v1273 = vld [vmem:[%s7 + $0x4] sm:$0xf]
  %v1274 = vld [vmem:[%s7 + $0x8] sm:$0xf]
  %v1275 = vld [vmem:[%s7 + $0xc] sm:$0xf]
  %v1276 = vld [vmem:[%s7 + $0x10] sm:$0xf]
  %v1277 = vld [vmem:[%s7 + $0x14] sm:$0xf]
  %v1278 = vld [vmem:[%s7 + $0x18] sm:$0xf]
  %v1279 = vld [vmem:[%s7 + $0x1c] sm:$0xf]
  %v1280 = vld [vmem:[%s7 + $0x20] sm:$0xf]
  %v1281 = vld [vmem:[%s7 + $0x24] sm:$0xf]
  %v1282 = vld [vmem:[%s7 + $0x28] sm:$0xf]
  %v1283 = vld [vmem:[%s7 + $0x2c] sm:$0xf]
  %v1284 = vld [vmem:[%s7 + $0x30] sm:$0xf]
  %v1285 = vld [vmem:[%s7 + $0x34] sm:$0xf]
  %v1286 = vld [vmem:[%s7 + $0x38] sm:$0xf]
  %v1287 = vld [vmem:[%s7 + $0x3c] sm:$0xf]
  %v1288 = vld [vmem:[%s8] sm:$0x1]
  %v1290 = vlaneseq
  %v1291 = vshrl.u32 %v1290, 7
  %v1292 = vsub.s32 0, %v1291
  %v1293 = vrot.slane %v1288, %v1292
  %v1311 = vunpack.c.l.b16 %v1272
  %v1312 = vunpack.c.l.b16 %v1273
  %v1313 = vunpack.c.l.b16 %v1274
  %v1314 = vunpack.c.l.b16 %v1275
  %v1315 = vunpack.c.l.b16 %v1276
  %v1316 = vunpack.c.l.b16 %v1277
  %v1317 = vunpack.c.l.b16 %v1278
  %v1318 = vunpack.c.l.b16 %v1279
  %v1319 = vunpack.c.l.b16 %v1280
  %v1320 = vunpack.c.l.b16 %v1281
  %v1321 = vunpack.c.l.b16 %v1282
  %v1322 = vunpack.c.l.b16 %v1283
  %v1323 = vunpack.c.l.b16 %v1284
  %v1324 = vunpack.c.l.b16 %v1285
  %v1325 = vunpack.c.l.b16 %v1286
  %v1326 = vunpack.c.l.b16 %v1287
  %v1327 = vpack.c.b16 %v1312, %v1311
  %v1328 = vpack.c.b16 %v1314, %v1313
  %v1329 = vpack.c.b16 %v1316, %v1315
  %v1330 = vpack.c.b16 %v1318, %v1317
  %v1331 = vpack.c.b16 %v1320, %v1319
  %v1332 = vpack.c.b16 %v1322, %v1321
  %v1333 = vpack.c.b16 %v1324, %v1323
  %v1334 = vpack.c.b16 %v1326, %v1325
  %1343 = vmatprep.subr.bf16.mxu0 0
  %1344 = vmatpush1.bf16.msra.mxu0 %v1327
  %1345 = vmatprep.subr.bf16.mxu0 0
  %1346 = vmatpush1.bf16.msra.mxu0 %v1328
  %1347 = vmatprep.subr.bf16.mxu0 0
  %1348 = vmatpush1.bf16.msra.mxu0 %v1329
  %1349 = vmatprep.subr.bf16.mxu0 0
  %1350 = vmatpush1.bf16.msra.mxu0 %v1330
  %1351 = vmatprep.subr.bf16.mxu0 0
  %1352 = vmatpush1.bf16.msra.mxu0 %v1331
  %1353 = vmatprep.subr.bf16.mxu0 0
  %1354 = vmatpush1.bf16.msra.mxu0 %v1332
  %1355 = vmatprep.subr.bf16.mxu0 0
  %1356 = vmatpush1.bf16.msra.mxu0 %v1333
  %1357 = vmatprep.subr.bf16.mxu0 0
  %1358 = vmatpush1.bf16.msra.mxu0 %v1334
  %1359 = vmatprep.subr.bf16.mxu0 0
  %1360 = vmatpush1.bf16.msra.mxu0 0
  %1361 = vmatprep.subr.bf16.mxu0 0
  %1362 = vmatpush1.bf16.msra.mxu0 0
  %1363 = vmatprep.subr.bf16.mxu0 0
  %1364 = vmatpush1.bf16.msra.mxu0 0
  %1365 = vmatprep.subr.bf16.mxu0 0
  %1366 = vmatpush1.bf16.msra.mxu0 0
  %1367 = vmatprep.subr.bf16.mxu0 0
  %1368 = vmatpush1.bf16.msra.mxu0 0
  %1369 = vmatprep.subr.bf16.mxu0 0
  %1370 = vmatpush1.bf16.msra.mxu0 0
  %1371 = vmatprep.subr.bf16.mxu0 0
  %1372 = vmatpush1.bf16.msra.mxu0 0
  %1373 = vmatprep.subr.bf16.mxu0 0
  %1374 = vmatpush1.bf16.msra.mxu0 0
  %1375 = vmatprep.mubr.bf16.mxu0 0
  %1376 = vmatmul.mubr.bf16.gmra.mrb[0].mxu0 %v1256
  %v1377 = vpop.f32.mrb[0].mxu0
  %v1378 = vadd.f32 %v1293, %v1377
  %v1379 = vpop.f32.mrb[0].mxu0
  %v1380 = vpop.f32.mrb[0].mxu0
  %v1381 = vadd.f32 %v1293, %v1380
  %v1382 = vpop.f32.mrb[0].mxu0
  %1383 = vmatprep.mubr.bf16.mxu0 0
  %1384 = vmatmul.mubr.bf16.gmra.mrb[0].mxu0 %v1257
  %v1385 = vpop.f32.mrb[0].mxu0
  %v1386 = vadd.f32 %v1293, %v1385
  %v1387 = vpop.f32.mrb[0].mxu0
  %v1388 = vpop.f32.mrb[0].mxu0
  %v1389 = vadd.f32 %v1293, %v1388
  %v1390 = vpop.f32.mrb[0].mxu0
  %1391 = vmatprep.mubr.bf16.mxu0 0
  %1392 = vmatmul.mubr.bf16.gmra.mrb[0].mxu0 %v1258
  %v1393 = vpop.f32.mrb[0].mxu0
  %v1394 = vadd.f32 %v1293, %v1393
  %v1395 = vpop.f32.mrb[0].mxu0
  %v1396 = vpop.f32.mrb[0].mxu0
  %v1397 = vadd.f32 %v1293, %v1396
  %v1398 = vpop.f32.mrb[0].mxu0
  %1399 = vmatprep.mubr.bf16.mxu0 0
  %1400 = vmatmul.mubr.bf16.gmra.mrb[0].mxu0 %v1259
  %v1401 = vpop.f32.mrb[0].mxu0
  %v1402 = vadd.f32 %v1293, %v1401
  %v1403 = vpop.f32.mrb[0].mxu0
  %v1404 = vpop.f32.mrb[0].mxu0
  %v1405 = vadd.f32 %v1293, %v1404
  %v1406 = vpop.f32.mrb[0].mxu0
  %1407 = vmatprep.mubr.bf16.mxu0 0
  %1408 = vmatmul.mubr.bf16.gmra.mrb[0].mxu0 %v1260
  %v1409 = vpop.f32.mrb[0].mxu0
  %v1410 = vadd.f32 %v1293, %v1409
  %v1411 = vpop.f32.mrb[0].mxu0
  %v1412 = vpop.f32.mrb[0].mxu0
  %v1413 = vadd.f32 %v1293, %v1412
  %v1414 = vpop.f32.mrb[0].mxu0
  %1415 = vmatprep.mubr.bf16.mxu0 0
  %1416 = vmatmul.mubr.bf16.gmra.mrb[0].mxu0 %v1261
  %v1417 = vpop.f32.mrb[0].mxu0
  %v1418 = vadd.f32 %v1293, %v1417
  %v1419 = vpop.f32.mrb[0].mxu0
  %v1420 = vpop.f32.mrb[0].mxu0
  %v1421 = vadd.f32 %v1293, %v1420
  %v1422 = vpop.f32.mrb[0].mxu0
  %1423 = vmatprep.mubr.bf16.mxu0 0
  %1424 = vmatmul.mubr.bf16.gmra.mrb[0].mxu0 %v1262
  %v1425 = vpop.f32.mrb[0].mxu0
  %v1426 = vadd.f32 %v1293, %v1425
  %v1427 = vpop.f32.mrb[0].mxu0
  %v1428 = vpop.f32.mrb[0].mxu0
  %v1429 = vadd.f32 %v1293, %v1428
  %v1430 = vpop.f32.mrb[0].mxu0
  %1431 = vmatprep.mubr.bf16.mxu0 0
  %1432 = vmatmul.mubr.bf16.gmra.mrb[0].mxu0 %v1263
  %v1433 = vpop.f32.mrb[0].mxu0
  %v1434 = vadd.f32 %v1293, %v1433
  %v1435 = vpop.f32.mrb[0].mxu0
  %v1436 = vpop.f32.mrb[0].mxu0
  %v1437 = vadd.f32 %v1293, %v1436
  %v1438 = vpop.f32.mrb[0].mxu0
  %1439 = vmatprep.mubr.bf16.mxu0 0
  %1440 = vmatmul.mubr.bf16.gmra.mrb[0].mxu0 %v1264
  %v1441 = vpop.f32.mrb[0].mxu0
  %v1442 = vadd.f32 %v1293, %v1441
  %v1443 = vpop.f32.mrb[0].mxu0
  %v1444 = vpop.f32.mrb[0].mxu0
  %v1445 = vadd.f32 %v1293, %v1444
  %v1446 = vpop.f32.mrb[0].mxu0
  %1447 = vmatprep.mubr.bf16.mxu0 0
  %1448 = vmatmul.mubr.bf16.gmra.mrb[0].mxu0 %v1265
  %v1449 = vpop.f32.mrb[0].mxu0
  %v1450 = vadd.f32 %v1293, %v1449
  %v1451 = vpop.f32.mrb[0].mxu0
  %v1452 = vpop.f32.mrb[0].mxu0
  %v1453 = vadd.f32 %v1293, %v1452
  %v1454 = vpop.f32.mrb[0].mxu0
  %1455 = vmatprep.mubr.bf16.mxu0 0
  %1456 = vmatmul.mubr.bf16.gmra.mrb[0].mxu0 %v1266
  %v1457 = vpop.f32.mrb[0].mxu0
  %v1458 = vadd.f32 %v1293, %v1457
  %v1459 = vpop.f32.mrb[0].mxu0
  %v1460 = vpop.f32.mrb[0].mxu0
  %v1461 = vadd.f32 %v1293, %v1460
  %v1462 = vpop.f32.mrb[0].mxu0
  %1463 = vmatprep.mubr.bf16.mxu0 0
  %1464 = vmatmul.mubr.bf16.gmra.mrb[0].mxu0 %v1267
  %v1465 = vpop.f32.mrb[0].mxu0
  %v1466 = vadd.f32 %v1293, %v1465
  %v1467 = vpop.f32.mrb[0].mxu0
  %v1468 = vpop.f32.mrb[0].mxu0
  %v1469 = vadd.f32 %v1293, %v1468
  %v1470 = vpop.f32.mrb[0].mxu0
  %1471 = vmatprep.mubr.bf16.mxu0 0
  %1472 = vmatmul.mubr.bf16.gmra.mrb[0].mxu0 %v1268
  %v1473 = vpop.f32.mrb[0].mxu0
  %v1474 = vadd.f32 %v1293, %v1473
  %v1475 = vpop.f32.mrb[0].mxu0
  %v1476 = vpop.f32.mrb[0].mxu0
  %v1477 = vadd.f32 %v1293, %v1476
  %v1478 = vpop.f32.mrb[0].mxu0
  %1479 = vmatprep.mubr.bf16.mxu0 0
  %1480 = vmatmul.mubr.bf16.gmra.mrb[0].mxu0 %v1269
  %v1481 = vpop.f32.mrb[0].mxu0
  %v1482 = vadd.f32 %v1293, %v1481
  %v1483 = vpop.f32.mrb[0].mxu0
  %v1484 = vpop.f32.mrb[0].mxu0
  %v1485 = vadd.f32 %v1293, %v1484
  %v1486 = vpop.f32.mrb[0].mxu0
  %1487 = vmatprep.mubr.bf16.mxu0 0
  %1488 = vmatmul.mubr.bf16.gmra.mrb[0].mxu0 %v1270
  %v1489 = vpop.f32.mrb[0].mxu0
  %v1490 = vadd.f32 %v1293, %v1489
  %v1491 = vpop.f32.mrb[0].mxu0
  %v1492 = vpop.f32.mrb[0].mxu0
  %v1493 = vadd.f32 %v1293, %v1492
  %v1494 = vpop.f32.mrb[0].mxu0
  %1495 = vmatprep.mubr.bf16.mxu0 0
  %1496 = vmatmul.mubr.bf16.gmra.mrb[0].mxu0 %v1271
  %v1497 = vpop.f32.mrb[0].mxu0
  %v1498 = vadd.f32 %v1293, %v1497
  %v1499 = vpop.f32.mrb[0].mxu0
  %v1500 = vpop.f32.mrb[0].mxu0
  %v1501 = vadd.f32 %v1293, %v1500
  %v1502 = vpop.f32.mrb[0].mxu0
  %1503 = vdwg.mxu0
  %1504 = vadd.xlane.f32.xlu0 %v1378
  %v1505 = vpop.xlane.xlu0 %1504
  %1506 = vadd.xlane.f32.xlu0 %v1381
  %v1507 = vpop.xlane.xlu0 %1506
  %1508 = vadd.xlane.f32.xlu0 %v1386
  %v1509 = vpop.xlane.xlu0 %1508
  %1510 = vadd.xlane.f32.xlu0 %v1389
  %v1511 = vpop.xlane.xlu0 %1510
  %1512 = vadd.xlane.f32.xlu0 %v1394
  %v1513 = vpop.xlane.xlu0 %1512
  %1514 = vadd.xlane.f32.xlu0 %v1397
  %v1515 = vpop.xlane.xlu0 %1514
  %1516 = vadd.xlane.f32.xlu0 %v1402
  %v1517 = vpop.xlane.xlu0 %1516
  %1518 = vadd.xlane.f32.xlu0 %v1405
  %v1519 = vpop.xlane.xlu0 %1518
  %1520 = vadd.xlane.f32.xlu0 %v1410
  %v1521 = vpop.xlane.xlu0 %1520
  %1522 = vadd.xlane.f32.xlu0 %v1413
  %v1523 = vpop.xlane.xlu0 %1522
  %1524 = vadd.xlane.f32.xlu0 %v1418
  %v1525 = vpop.xlane.xlu0 %1524
  %1526 = vadd.xlane.f32.xlu0 %v1421
  %v1527 = vpop.xlane.xlu0 %1526
  %1528 = vadd.xlane.f32.xlu0 %v1426
  %v1529 = vpop.xlane.xlu0 %1528
  %1530 = vadd.xlane.f32.xlu0 %v1429
  %v1531 = vpop.xlane.xlu0 %1530
  %1532 = vadd.xlane.f32.xlu0 %v1434
  %v1533 = vpop.xlane.xlu0 %1532
  %1534 = vadd.xlane.f32.xlu0 %v1437
  %v1535 = vpop.xlane.xlu0 %1534
  %1536 = vadd.xlane.f32.xlu0 %v1442
  %v1537 = vpop.xlane.xlu0 %1536
  %1538 = vadd.xlane.f32.xlu0 %v1445
  %v1539 = vpop.xlane.xlu0 %1538
  %1540 = vadd.xlane.f32.xlu0 %v1450
  %v1541 = vpop.xlane.xlu0 %1540
  %1542 = vadd.xlane.f32.xlu0 %v1453
  %v1543 = vpop.xlane.xlu0 %1542
  %1544 = vadd.xlane.f32.xlu0 %v1458
  %v1545 = vpop.xlane.xlu0 %1544
  %1546 = vadd.xlane.f32.xlu0 %v1461
  %v1547 = vpop.xlane.xlu0 %1546
  %1548 = vadd.xlane.f32.xlu0 %v1466
  %v1549 = vpop.xlane.xlu0 %1548
  %1550 = vadd.xlane.f32.xlu0 %v1469
  %v1551 = vpop.xlane.xlu0 %1550
  %1552 = vadd.xlane.f32.xlu0 %v1474
  %v1553 = vpop.xlane.xlu0 %1552
  %1554 = vadd.xlane.f32.xlu0 %v1477
  %v1555 = vpop.xlane.xlu0 %1554
  %1556 = vadd.xlane.f32.xlu0 %v1482
  %v1557 = vpop.xlane.xlu0 %1556
  %1558 = vadd.xlane.f32.xlu0 %v1485
  %v1559 = vpop.xlane.xlu0 %1558
  %1560 = vadd.xlane.f32.xlu0 %v1490
  %v1561 = vpop.xlane.xlu0 %1560
  %1562 = vadd.xlane.f32.xlu0 %v1493
  %v1563 = vpop.xlane.xlu0 %1562
  %1564 = vadd.xlane.f32.xlu0 %v1498
  %v1565 = vpop.xlane.xlu0 %1564
  %1566 = vadd.xlane.f32.xlu0 %v1501
  %v1567 = vpop.xlane.xlu0 %1566
  %v1568 = vrcp.pop 128.0
  %v1569 = vmul.f32 %v1505, %v1568
  %v1570 = vmul.f32 %v1507, %v1568
  %v1571 = vmul.f32 %v1509, %v1568
  %v1572 = vmul.f32 %v1511, %v1568
  %v1573 = vmul.f32 %v1513, %v1568
  %v1574 = vmul.f32 %v1515, %v1568
  %v1575 = vmul.f32 %v1517, %v1568
  %v1576 = vmul.f32 %v1519, %v1568
  %v1577 = vmul.f32 %v1521, %v1568
  %v1578 = vmul.f32 %v1523, %v1568
  %v1579 = vmul.f32 %v1525, %v1568
  %v1580 = vmul.f32 %v1527, %v1568
  %v1581 = vmul.f32 %v1529, %v1568
  %v1582 = vmul.f32 %v1531, %v1568
  %v1583 = vmul.f32 %v1533, %v1568
  %v1584 = vmul.f32 %v1535, %v1568
  %v1585 = vmul.f32 %v1537, %v1568
  %v1586 = vmul.f32 %v1539, %v1568
  %v1587 = vmul.f32 %v1541, %v1568
  %v1588 = vmul.f32 %v1543, %v1568
  %v1589 = vmul.f32 %v1545, %v1568
  %v1590 = vmul.f32 %v1547, %v1568
  %v1591 = vmul.f32 %v1549, %v1568
  %v1592 = vmul.f32 %v1551, %v1568
  %v1593 = vmul.f32 %v1553, %v1568
  %v1594 = vmul.f32 %v1555, %v1568
  %v1595 = vmul.f32 %v1557, %v1568
  %v1596 = vmul.f32 %v1559, %v1568
  %v1597 = vmul.f32 %v1561, %v1568
  %v1598 = vmul.f32 %v1563, %v1568
  %v1599 = vmul.f32 %v1565, %v1568
  %v1600 = vmul.f32 %v1567, %v1568
  %v1601 = vsub.f32 %v1378, %v1569
  %v1602 = vsub.f32 %v1381, %v1570
  %v1603 = vsub.f32 %v1386, %v1571
  %v1604 = vsub.f32 %v1389, %v1572
  %v1605 = vsub.f32 %v1394, %v1573
  %v1606 = vsub.f32 %v1397, %v1574
  %v1607 = vsub.f32 %v1402, %v1575
  %v1608 = vsub.f32 %v1405, %v1576
  %v1609 = vsub.f32 %v1410, %v1577
  %v1610 = vsub.f32 %v1413, %v1578
  %v1611 = vsub.f32 %v1418, %v1579
  %v1612 = vsub.f32 %v1421, %v1580
  %v1613 = vsub.f32 %v1426, %v1581
  %v1614 = vsub.f32 %v1429, %v1582
  %v1615 = vsub.f32 %v1434, %v1583
  %v1616 = vsub.f32 %v1437, %v1584
  %v1617 = vsub.f32 %v1442, %v1585
  %v1618 = vsub.f32 %v1445, %v1586
  %v1619 = vsub.f32 %v1450, %v1587
  %v1620 = vsub.f32 %v1453, %v1588
  %v1621 = vsub.f32 %v1458, %v1589
  %v1622 = vsub.f32 %v1461, %v1590
  %v1623 = vsub.f32 %v1466, %v1591
  %v1624 = vsub.f32 %v1469, %v1592
  %v1625 = vsub.f32 %v1474, %v1593
  %v1626 = vsub.f32 %v1477, %v1594
  %v1627 = vsub.f32 %v1482, %v1595
  %v1628 = vsub.f32 %v1485, %v1596
  %v1629 = vsub.f32 %v1490, %v1597
  %v1630 = vsub.f32 %v1493, %v1598
  %v1631 = vsub.f32 %v1498, %v1599
  %v1632 = vsub.f32 %v1501, %v1600
  %v1633 = vmul.f32 %v1601, %v1601
  %v1634 = vmul.f32 %v1602, %v1602
  %v1635 = vmul.f32 %v1603, %v1603
  %v1636 = vmul.f32 %v1604, %v1604
  %v1637 = vmul.f32 %v1605, %v1605
  %v1638 = vmul.f32 %v1606, %v1606
  %v1639 = vmul.f32 %v1607, %v1607
  %v1640 = vmul.f32 %v1608, %v1608
  %v1641 = vmul.f32 %v1609, %v1609
  %v1642 = vmul.f32 %v1610, %v1610
  %v1643 = vmul.f32 %v1611, %v1611
  %v1644 = vmul.f32 %v1612, %v1612
  %v1645 = vmul.f32 %v1613, %v1613
  %v1646 = vmul.f32 %v1614, %v1614
  %v1647 = vmul.f32 %v1615, %v1615
  %v1648 = vmul.f32 %v1616, %v1616
  %v1649 = vmul.f32 %v1617, %v1617
  %v1650 = vmul.f32 %v1618, %v1618
  %v1651 = vmul.f32 %v1619, %v1619
  %v1652 = vmul.f32 %v1620, %v1620
  %v1653 = vmul.f32 %v1621, %v1621
  %v1654 = vmul.f32 %v1622, %v1622
  %v1655 = vmul.f32 %v1623, %v1623
  %v1656 = vmul.f32 %v1624, %v1624
  %v1657 = vmul.f32 %v1625, %v1625
  %v1658 = vmul.f32 %v1626, %v1626
  %v1659 = vmul.f32 %v1627, %v1627
  %v1660 = vmul.f32 %v1628, %v1628
  %v1661 = vmul.f32 %v1629, %v1629
  %v1662 = vmul.f32 %v1630, %v1630
  %v1663 = vmul.f32 %v1631, %v1631
  %v1664 = vmul.f32 %v1632, %v1632
  %1665 = vadd.xlane.f32.xlu0 %v1633
  %v1666 = vpop.xlane.xlu0 %1665
  %1667 = vadd.xlane.f32.xlu0 %v1634
  %v1668 = vpop.xlane.xlu0 %1667
  %1669 = vadd.xlane.f32.xlu0 %v1635
  %v1670 = vpop.xlane.xlu0 %1669
  %1671 = vadd.xlane.f32.xlu0 %v1636
  %v1672 = vpop.xlane.xlu0 %1671
  %1673 = vadd.xlane.f32.xlu0 %v1637
  %v1674 = vpop.xlane.xlu0 %1673
  %1675 = vadd.xlane.f32.xlu0 %v1638
  %v1676 = vpop.xlane.xlu0 %1675
  %1677 = vadd.xlane.f32.xlu0 %v1639
  %v1678 = vpop.xlane.xlu0 %1677
  %1679 = vadd.xlane.f32.xlu0 %v1640
  %v1680 = vpop.xlane.xlu0 %1679
  %1681 = vadd.xlane.f32.xlu0 %v1641
  %v1682 = vpop.xlane.xlu0 %1681
  %1683 = vadd.xlane.f32.xlu0 %v1642
  %v1684 = vpop.xlane.xlu0 %1683
  %1685 = vadd.xlane.f32.xlu0 %v1643
  %v1686 = vpop.xlane.xlu0 %1685
  %1687 = vadd.xlane.f32.xlu0 %v1644
  %v1688 = vpop.xlane.xlu0 %1687
  %1689 = vadd.xlane.f32.xlu0 %v1645
  %v1690 = vpop.xlane.xlu0 %1689
  %1691 = vadd.xlane.f32.xlu0 %v1646
  %v1692 = vpop.xlane.xlu0 %1691
  %1693 = vadd.xlane.f32.xlu0 %v1647
  %v1694 = vpop.xlane.xlu0 %1693
  %1695 = vadd.xlane.f32.xlu0 %v1648
  %v1696 = vpop.xlane.xlu0 %1695
  %1697 = vadd.xlane.f32.xlu0 %v1649
  %v1698 = vpop.xlane.xlu0 %1697
  %1699 = vadd.xlane.f32.xlu0 %v1650
  %v1700 = vpop.xlane.xlu0 %1699
  %1701 = vadd.xlane.f32.xlu0 %v1651
  %v1702 = vpop.xlane.xlu0 %1701
  %1703 = vadd.xlane.f32.xlu0 %v1652
  %v1704 = vpop.xlane.xlu0 %1703
  %1705 = vadd.xlane.f32.xlu0 %v1653
  %v1706 = vpop.xlane.xlu0 %1705
  %1707 = vadd.xlane.f32.xlu0 %v1654
  %v1708 = vpop.xlane.xlu0 %1707
  %1709 = vadd.xlane.f32.xlu0 %v1655
  %v1710 = vpop.xlane.xlu0 %1709
  %1711 = vadd.xlane.f32.xlu0 %v1656
  %v1712 = vpop.xlane.xlu0 %1711
  %1713 = vadd.xlane.f32.xlu0 %v1657
  %v1714 = vpop.xlane.xlu0 %1713
  %1715 = vadd.xlane.f32.xlu0 %v1658
  %v1716 = vpop.xlane.xlu0 %1715
  %1717 = vadd.xlane.f32.xlu0 %v1659
  %v1718 = vpop.xlane.xlu0 %1717
  %1719 = vadd.xlane.f32.xlu0 %v1660
  %v1720 = vpop.xlane.xlu0 %1719
  %1721 = vadd.xlane.f32.xlu0 %v1661
  %v1722 = vpop.xlane.xlu0 %1721
  %1723 = vadd.xlane.f32.xlu0 %v1662
  %v1724 = vpop.xlane.xlu0 %1723
  %1725 = vadd.xlane.f32.xlu0 %v1663
  %v1726 = vpop.xlane.xlu0 %1725
  %1727 = vadd.xlane.f32.xlu0 %v1664
  %v1728 = vpop.xlane.xlu0 %1727
  %v1729 = vmul.f32 %v1666, %v1568
  %v1730 = vmul.f32 %v1668, %v1568
  %v1731 = vmul.f32 %v1670, %v1568
  %v1732 = vmul.f32 %v1672, %v1568
  %v1733 = vmul.f32 %v1674, %v1568
  %v1734 = vmul.f32 %v1676, %v1568
  %v1735 = vmul.f32 %v1678, %v1568
  %v1736 = vmul.f32 %v1680, %v1568
  %v1737 = vmul.f32 %v1682, %v1568
  %v1738 = vmul.f32 %v1684, %v1568
  %v1739 = vmul.f32 %v1686, %v1568
  %v1740 = vmul.f32 %v1688, %v1568
  %v1741 = vmul.f32 %v1690, %v1568
  %v1742 = vmul.f32 %v1692, %v1568
  %v1743 = vmul.f32 %v1694, %v1568
  %v1744 = vmul.f32 %v1696, %v1568
  %v1745 = vmul.f32 %v1698, %v1568
  %v1746 = vmul.f32 %v1700, %v1568
  %v1747 = vmul.f32 %v1702, %v1568
  %v1748 = vmul.f32 %v1704, %v1568
  %v1749 = vmul.f32 %v1706, %v1568
  %v1750 = vmul.f32 %v1708, %v1568
  %v1751 = vmul.f32 %v1710, %v1568
  %v1752 = vmul.f32 %v1712, %v1568
  %v1753 = vmul.f32 %v1714, %v1568
  %v1754 = vmul.f32 %v1716, %v1568
  %v1755 = vmul.f32 %v1718, %v1568
  %v1756 = vmul.f32 %v1720, %v1568
  %v1757 = vmul.f32 %v1722, %v1568
  %v1758 = vmul.f32 %v1724, %v1568
  %v1759 = vmul.f32 %v1726, %v1568
  %v1760 = vmul.f32 %v1728, %v1568
  %v1761 = vadd.f32 %v1729, 1e-05
  %v1762 = vadd.f32 %v1730, 1e-05
  %v1763 = vadd.f32 %v1731, 1e-05
  %v1764 = vadd.f32 %v1732, 1e-05
  %v1765 = vadd.f32 %v1733, 1e-05
  %v1766 = vadd.f32 %v1734, 1e-05
  %v1767 = vadd.f32 %v1735, 1e-05
  %v1768 = vadd.f32 %v1736, 1e-05
  %v1769 = vadd.f32 %v1737, 1e-05
  %v1770 = vadd.f32 %v1738, 1e-05
  %v1771 = vadd.f32 %v1739, 1e-05
  %v1772 = vadd.f32 %v1740, 1e-05
  %v1773 = vadd.f32 %v1741, 1e-05
  %v1774 = vadd.f32 %v1742, 1e-05
  %v1775 = vadd.f32 %v1743, 1e-05
  %v1776 = vadd.f32 %v1744, 1e-05
  %v1777 = vadd.f32 %v1745, 1e-05
  %v1778 = vadd.f32 %v1746, 1e-05
  %v1779 = vadd.f32 %v1747, 1e-05
  %v1780 = vadd.f32 %v1748, 1e-05
  %v1781 = vadd.f32 %v1749, 1e-05
  %v1782 = vadd.f32 %v1750, 1e-05
  %v1783 = vadd.f32 %v1751, 1e-05
  %v1784 = vadd.f32 %v1752, 1e-05
  %v1785 = vadd.f32 %v1753, 1e-05
  %v1786 = vadd.f32 %v1754, 1e-05
  %v1787 = vadd.f32 %v1755, 1e-05
  %v1788 = vadd.f32 %v1756, 1e-05
  %v1789 = vadd.f32 %v1757, 1e-05
  %v1790 = vadd.f32 %v1758, 1e-05
  %v1791 = vadd.f32 %v1759, 1e-05
  %v1792 = vadd.f32 %v1760, 1e-05
  %v1793 = vrsqrt.pop %v1761
  %v1794 = vrsqrt.pop %v1762
  %v1795 = vrsqrt.pop %v1763
  %v1796 = vrsqrt.pop %v1764
  %v1797 = vrsqrt.pop %v1765
  %v1798 = vrsqrt.pop %v1766
  %v1799 = vrsqrt.pop %v1767
  %v1800 = vrsqrt.pop %v1768
  %v1801 = vrsqrt.pop %v1769
  %v1802 = vrsqrt.pop %v1770
  %v1803 = vrsqrt.pop %v1771
  %v1804 = vrsqrt.pop %v1772
  %v1805 = vrsqrt.pop %v1773
  %v1806 = vrsqrt.pop %v1774
  %v1807 = vrsqrt.pop %v1775
  %v1808 = vrsqrt.pop %v1776
  %v1809 = vrsqrt.pop %v1777
  %v1810 = vrsqrt.pop %v1778
  %v1811 = vrsqrt.pop %v1779
  %v1812 = vrsqrt.pop %v1780
  %v1813 = vrsqrt.pop %v1781
  %v1814 = vrsqrt.pop %v1782
  %v1815 = vrsqrt.pop %v1783
  %v1816 = vrsqrt.pop %v1784
  %v1817 = vrsqrt.pop %v1785
  %v1818 = vrsqrt.pop %v1786
  %v1819 = vrsqrt.pop %v1787
  %v1820 = vrsqrt.pop %v1788
  %v1821 = vrsqrt.pop %v1789
  %v1822 = vrsqrt.pop %v1790
  %v1823 = vrsqrt.pop %v1791
  %v1824 = vrsqrt.pop %v1792
  %v1825 = vmul.f32 %v1601, %v1793
  %v1826 = vmul.f32 %v1602, %v1794
  %v1827 = vmul.f32 %v1603, %v1795
  %v1828 = vmul.f32 %v1604, %v1796
  %v1829 = vmul.f32 %v1605, %v1797
  %v1830 = vmul.f32 %v1606, %v1798
  %v1831 = vmul.f32 %v1607, %v1799
  %v1832 = vmul.f32 %v1608, %v1800
  %v1833 = vmul.f32 %v1609, %v1801
  %v1834 = vmul.f32 %v1610, %v1802
  %v1835 = vmul.f32 %v1611, %v1803
  %v1836 = vmul.f32 %v1612, %v1804
  %v1837 = vmul.f32 %v1613, %v1805
  %v1838 = vmul.f32 %v1614, %v1806
  %v1839 = vmul.f32 %v1615, %v1807
  %v1840 = vmul.f32 %v1616, %v1808
  %v1841 = vmul.f32 %v1617, %v1809
  %v1842 = vmul.f32 %v1618, %v1810
  %v1843 = vmul.f32 %v1619, %v1811
  %v1844 = vmul.f32 %v1620, %v1812
  %v1845 = vmul.f32 %v1621, %v1813
  %v1846 = vmul.f32 %v1622, %v1814
  %v1847 = vmul.f32 %v1623, %v1815
  %v1848 = vmul.f32 %v1624, %v1816
  %v1849 = vmul.f32 %v1625, %v1817
  %v1850 = vmul.f32 %v1626, %v1818
  %v1851 = vmul.f32 %v1627, %v1819
  %v1852 = vmul.f32 %v1628, %v1820
  %v1853 = vmul.f32 %v1629, %v1821
  %v1854 = vmul.f32 %v1630, %v1822
  %v1855 = vmul.f32 %v1631, %v1823
  %v1856 = vmul.f32 %v1632, %v1824
  %v1857 = vld [vmem:[%s9] sm:$0x1]
  %v1859 = vlaneseq
  %v1860 = vshrl.u32 %v1859, 7
  %v1861 = vsub.s32 0, %v1860
  %v1862 = vrot.slane %v1857, %v1861
  %v1864 = vmul.f32 %v1825, %v1862
  %v1865 = vmul.f32 %v1826, %v1862
  %v1866 = vmul.f32 %v1827, %v1862
  %v1867 = vmul.f32 %v1828, %v1862
  %v1868 = vmul.f32 %v1829, %v1862
  %v1869 = vmul.f32 %v1830, %v1862
  %v1870 = vmul.f32 %v1831, %v1862
  %v1871 = vmul.f32 %v1832, %v1862
  %v1872 = vmul.f32 %v1833, %v1862
  %v1873 = vmul.f32 %v1834, %v1862
  %v1874 = vmul.f32 %v1835, %v1862
  %v1875 = vmul.f32 %v1836, %v1862
  %v1876 = vmul.f32 %v1837, %v1862
  %v1877 = vmul.f32 %v1838, %v1862
  %v1878 = vmul.f32 %v1839, %v1862
  %v1879 = vmul.f32 %v1840, %v1862
  %v1880 = vmul.f32 %v1841, %v1862
  %v1881 = vmul.f32 %v1842, %v1862
  %v1882 = vmul.f32 %v1843, %v1862
  %v1883 = vmul.f32 %v1844, %v1862
  %v1884 = vmul.f32 %v1845, %v1862
  %v1885 = vmul.f32 %v1846, %v1862
  %v1886 = vmul.f32 %v1847, %v1862
  %v1887 = vmul.f32 %v1848, %v1862
  %v1888 = vmul.f32 %v1849, %v1862
  %v1889 = vmul.f32 %v1850, %v1862
  %v1890 = vmul.f32 %v1851, %v1862
  %v1891 = vmul.f32 %v1852, %v1862
  %v1892 = vmul.f32 %v1853, %v1862
  %v1893 = vmul.f32 %v1854, %v1862
  %v1894 = vmul.f32 %v1855, %v1862
  %v1895 = vmul.f32 %v1856, %v1862
  %v1896 = vld [vmem:[%s10] sm:$0x1]
  %v1898 = vlaneseq
  %v1899 = vshrl.u32 %v1898, 7
  %v1900 = vsub.s32 0, %v1899
  %v1901 = vrot.slane %v1896, %v1900
  %v1903 = vadd.f32 %v1864, %v1901
  %v1904 = vadd.f32 %v1865, %v1901
  %v1905 = vadd.f32 %v1866, %v1901
  %v1906 = vadd.f32 %v1867, %v1901
  %v1907 = vadd.f32 %v1868, %v1901
  %v1908 = vadd.f32 %v1869, %v1901
  %v1909 = vadd.f32 %v1870, %v1901
  %v1910 = vadd.f32 %v1871, %v1901
  %v1911 = vadd.f32 %v1872, %v1901
  %v1912 = vadd.f32 %v1873, %v1901
  %v1913 = vadd.f32 %v1874, %v1901
  %v1914 = vadd.f32 %v1875, %v1901
  %v1915 = vadd.f32 %v1876, %v1901
  %v1916 = vadd.f32 %v1877, %v1901
  %v1917 = vadd.f32 %v1878, %v1901
  %v1918 = vadd.f32 %v1879, %v1901
  %v1919 = vadd.f32 %v1880, %v1901
  %v1920 = vadd.f32 %v1881, %v1901
  %v1921 = vadd.f32 %v1882, %v1901
  %v1922 = vadd.f32 %v1883, %v1901
  %v1923 = vadd.f32 %v1884, %v1901
  %v1924 = vadd.f32 %v1885, %v1901
  %v1925 = vadd.f32 %v1886, %v1901
  %v1926 = vadd.f32 %v1887, %v1901
  %v1927 = vadd.f32 %v1888, %v1901
  %v1928 = vadd.f32 %v1889, %v1901
  %v1929 = vadd.f32 %v1890, %v1901
  %v1930 = vadd.f32 %v1891, %v1901
  %v1931 = vadd.f32 %v1892, %v1901
  %v1932 = vadd.f32 %v1893, %v1901
  %v1933 = vadd.f32 %v1894, %v1901
  %v1934 = vadd.f32 %v1895, %v1901
  %v1935 = vunpack.c.l.bf16 %v103
  %v1936 = vunpack.c.l.bf16 %v104
  %v1937 = vunpack.c.l.bf16 %v105
  %v1938 = vunpack.c.l.bf16 %v106
  %v1939 = vunpack.c.l.bf16 %v107
  %v1940 = vunpack.c.l.bf16 %v108
  %v1941 = vunpack.c.l.bf16 %v109
  %v1942 = vunpack.c.l.bf16 %v110
  %v1943 = vunpack.c.l.bf16 %v111
  %v1944 = vunpack.c.l.bf16 %v112
  %v1945 = vunpack.c.l.bf16 %v113
  %v1946 = vunpack.c.l.bf16 %v114
  %v1947 = vunpack.c.l.bf16 %v115
  %v1948 = vunpack.c.l.bf16 %v116
  %v1949 = vunpack.c.l.bf16 %v117
  %v1950 = vunpack.c.l.bf16 %v118
  %v1951 = vunpack.c.l.bf16 %v119
  %v1952 = vunpack.c.l.bf16 %v120
  %v1953 = vunpack.c.l.bf16 %v121
  %v1954 = vunpack.c.l.bf16 %v122
  %v1955 = vunpack.c.l.bf16 %v123
  %v1956 = vunpack.c.l.bf16 %v124
  %v1957 = vunpack.c.l.bf16 %v125
  %v1958 = vunpack.c.l.bf16 %v126
  %v1959 = vunpack.c.l.bf16 %v127
  %v1960 = vunpack.c.l.bf16 %v128
  %v1961 = vunpack.c.l.bf16 %v129
  %v1962 = vunpack.c.l.bf16 %v130
  %v1963 = vunpack.c.l.bf16 %v131
  %v1964 = vunpack.c.l.bf16 %v132
  %v1965 = vunpack.c.l.bf16 %v133
  %v1966 = vunpack.c.l.bf16 %v134
  %v1967 = vadd.f32 %v1903, %v1935
  %v1968 = vadd.f32 %v1904, %v1936
  %v1969 = vadd.f32 %v1905, %v1937
  %v1970 = vadd.f32 %v1906, %v1938
  %v1971 = vadd.f32 %v1907, %v1939
  %v1972 = vadd.f32 %v1908, %v1940
  %v1973 = vadd.f32 %v1909, %v1941
  %v1974 = vadd.f32 %v1910, %v1942
  %v1975 = vadd.f32 %v1911, %v1943
  %v1976 = vadd.f32 %v1912, %v1944
  %v1977 = vadd.f32 %v1913, %v1945
  %v1978 = vadd.f32 %v1914, %v1946
  %v1979 = vadd.f32 %v1915, %v1947
  %v1980 = vadd.f32 %v1916, %v1948
  %v1981 = vadd.f32 %v1917, %v1949
  %v1982 = vadd.f32 %v1918, %v1950
  %v1983 = vadd.f32 %v1919, %v1951
  %v1984 = vadd.f32 %v1920, %v1952
  %v1985 = vadd.f32 %v1921, %v1953
  %v1986 = vadd.f32 %v1922, %v1954
  %v1987 = vadd.f32 %v1923, %v1955
  %v1988 = vadd.f32 %v1924, %v1956
  %v1989 = vadd.f32 %v1925, %v1957
  %v1990 = vadd.f32 %v1926, %v1958
  %v1991 = vadd.f32 %v1927, %v1959
  %v1992 = vadd.f32 %v1928, %v1960
  %v1993 = vadd.f32 %v1929, %v1961
  %v1994 = vadd.f32 %v1930, %v1962
  %v1995 = vadd.f32 %v1931, %v1963
  %v1996 = vadd.f32 %v1932, %v1964
  %v1997 = vadd.f32 %v1933, %v1965
  %v1998 = vadd.f32 %v1934, %v1966
  %v1999 = vpack.c.bf16 %v1968, %v1967
  %v2000 = vpack.c.bf16 %v1970, %v1969
  %v2001 = vpack.c.bf16 %v1972, %v1971
  %v2002 = vpack.c.bf16 %v1974, %v1973
  %v2003 = vpack.c.bf16 %v1976, %v1975
  %v2004 = vpack.c.bf16 %v1978, %v1977
  %v2005 = vpack.c.bf16 %v1980, %v1979
  %v2006 = vpack.c.bf16 %v1982, %v1981
  %v2007 = vpack.c.bf16 %v1984, %v1983
  %v2008 = vpack.c.bf16 %v1986, %v1985
  %v2009 = vpack.c.bf16 %v1988, %v1987
  %v2010 = vpack.c.bf16 %v1990, %v1989
  %v2011 = vpack.c.bf16 %v1992, %v1991
  %v2012 = vpack.c.bf16 %v1994, %v1993
  %v2013 = vpack.c.bf16 %v1996, %v1995
  %v2014 = vpack.c.bf16 %v1998, %v1997
  %v2031 = vunpack.c.l.b16 %v1999
  %v2032 = vunpack.c.h.b16 %v1999
  %v2033 = vunpack.c.l.b16 %v2000
  %v2034 = vunpack.c.h.b16 %v2000
  %v2035 = vunpack.c.l.b16 %v2001
  %v2036 = vunpack.c.h.b16 %v2001
  %v2037 = vunpack.c.l.b16 %v2002
  %v2038 = vunpack.c.h.b16 %v2002
  %v2039 = vunpack.c.l.b16 %v2003
  %v2040 = vunpack.c.h.b16 %v2003
  %v2041 = vunpack.c.l.b16 %v2004
  %v2042 = vunpack.c.h.b16 %v2004
  %v2043 = vunpack.c.l.b16 %v2005
  %v2044 = vunpack.c.h.b16 %v2005
  %v2045 = vunpack.c.l.b16 %v2006
  %v2046 = vunpack.c.h.b16 %v2006
  %v2047 = vunpack.c.l.b16 %v2007
  %v2048 = vunpack.c.h.b16 %v2007
  %v2049 = vunpack.c.l.b16 %v2008
  %v2050 = vunpack.c.h.b16 %v2008
  %v2051 = vunpack.c.l.b16 %v2009
  %v2052 = vunpack.c.h.b16 %v2009
  %v2053 = vunpack.c.l.b16 %v2010
  %v2054 = vunpack.c.h.b16 %v2010
  %v2055 = vunpack.c.l.b16 %v2011
  %v2056 = vunpack.c.h.b16 %v2011
  %v2057 = vunpack.c.l.b16 %v2012
  %v2058 = vunpack.c.h.b16 %v2012
  %v2059 = vunpack.c.l.b16 %v2013
  %v2060 = vunpack.c.h.b16 %v2013
  %v2061 = vunpack.c.l.b16 %v2014
  %v2062 = vunpack.c.h.b16 %v2014
  %v2063 = vpack.c.b16 %v2031, %v2031
  %v2064 = vpack.c.b16 %v2032, %v2032
  %v2065 = vpack.c.b16 %v2033, %v2033
  %v2066 = vpack.c.b16 %v2034, %v2034
  %v2067 = vpack.c.b16 %v2035, %v2035
  %v2068 = vpack.c.b16 %v2036, %v2036
  %v2069 = vpack.c.b16 %v2037, %v2037
  %v2070 = vpack.c.b16 %v2038, %v2038
  %v2071 = vpack.c.b16 %v2039, %v2039
  %v2072 = vpack.c.b16 %v2040, %v2040
  %v2073 = vpack.c.b16 %v2041, %v2041
  %v2074 = vpack.c.b16 %v2042, %v2042
  %v2075 = vpack.c.b16 %v2043, %v2043
  %v2076 = vpack.c.b16 %v2044, %v2044
  %v2077 = vpack.c.b16 %v2045, %v2045
  %v2078 = vpack.c.b16 %v2046, %v2046
  %v2079 = vpack.c.b16 %v2047, %v2047
  %v2080 = vpack.c.b16 %v2048, %v2048
  %v2081 = vpack.c.b16 %v2049, %v2049
  %v2082 = vpack.c.b16 %v2050, %v2050
  %v2083 = vpack.c.b16 %v2051, %v2051
  %v2084 = vpack.c.b16 %v2052, %v2052
  %v2085 = vpack.c.b16 %v2053, %v2053
  %v2086 = vpack.c.b16 %v2054, %v2054
  %v2087 = vpack.c.b16 %v2055, %v2055
  %v2088 = vpack.c.b16 %v2056, %v2056
  %v2089 = vpack.c.b16 %v2057, %v2057
  %v2090 = vpack.c.b16 %v2058, %v2058
  %v2091 = vpack.c.b16 %v2059, %v2059
  %v2092 = vpack.c.b16 %v2060, %v2060
  %v2093 = vpack.c.b16 %v2061, %v2061
  %v2094 = vpack.c.b16 %v2062, %v2062
  %2127 = vst [vmem:[%s11] sm:$0xf] %v2063
  %2128 = vst [vmem:[%s11 + $0x4] sm:$0xf] %v2064
  %2129 = vst [vmem:[%s11 + $0x8] sm:$0xf] %v2065
  %2130 = vst [vmem:[%s11 + $0xc] sm:$0xf] %v2066
  %2131 = vst [vmem:[%s11 + $0x10] sm:$0xf] %v2067
  %2132 = vst [vmem:[%s11 + $0x14] sm:$0xf] %v2068
  %2133 = vst [vmem:[%s11 + $0x18] sm:$0xf] %v2069
  %2134 = vst [vmem:[%s11 + $0x1c] sm:$0xf] %v2070
  %2135 = vst [vmem:[%s11 + $0x20] sm:$0xf] %v2071
  %2136 = vst [vmem:[%s11 + $0x24] sm:$0xf] %v2072
  %2137 = vst [vmem:[%s11 + $0x28] sm:$0xf] %v2073
  %2138 = vst [vmem:[%s11 + $0x2c] sm:$0xf] %v2074
  %2139 = vst [vmem:[%s11 + $0x30] sm:$0xf] %v2075
  %2140 = vst [vmem:[%s11 + $0x34] sm:$0xf] %v2076
  %2141 = vst [vmem:[%s11 + $0x38] sm:$0xf] %v2077
  %2142 = vst [vmem:[%s11 + $0x3c] sm:$0xf] %v2078
  %2143 = vst [vmem:[%s11 + $0x40] sm:$0xf] %v2079
  %2144 = vst [vmem:[%s11 + $0x44] sm:$0xf] %v2080
  %2145 = vst [vmem:[%s11 + $0x48] sm:$0xf] %v2081
  %2146 = vst [vmem:[%s11 + $0x4c] sm:$0xf] %v2082
  %2147 = vst [vmem:[%s11 + $0x50] sm:$0xf] %v2083
  %2148 = vst [vmem:[%s11 + $0x54] sm:$0xf] %v2084
  %2149 = vst [vmem:[%s11 + $0x58] sm:$0xf] %v2085
  %2150 = vst [vmem:[%s11 + $0x5c] sm:$0xf] %v2086
  %2151 = vst [vmem:[%s11 + $0x60] sm:$0xf] %v2087
  %2152 = vst [vmem:[%s11 + $0x64] sm:$0xf] %v2088
  %2153 = vst [vmem:[%s11 + $0x68] sm:$0xf] %v2089
  %2154 = vst [vmem:[%s11 + $0x6c] sm:$0xf] %v2090
  %2155 = vst [vmem:[%s11 + $0x70] sm:$0xf] %v2091
  %2156 = vst [vmem:[%s11 + $0x74] sm:$0xf] %v2092
  %2157 = vst [vmem:[%s11 + $0x78] sm:$0xf] %v2093
  %2158 = vst [vmem:[%s11 + $0x7c] sm:$0xf] %v2094
  // Predicated region
  $region46: #{flag_model_forward.11} parent=0 // pred_check
    _
  $region47: #{flag_model_forward.11} parent=0 // pred_check_branch
    %2160 = sbr.rel (0) target = $region49
  $region48: #{flag_model_forward.11} parent=0 // pred_region
    _
  $region49: #{flag_model_forward.11} parent=0 // pred_fallthru
    _
  // Predicated region
  $region50: #{flag_model_forward.11} parent=0 // pred_check
    _
  $region51: #{flag_model_forward.11} parent=0 // pred_check_branch
    %2162 = sbr.rel (0) target = $region53
  $region52: #{flag_model_forward.11} parent=0 // pred_region
    _
  $region53: #{flag_model_forward.11} parent=0 // pred_fallthru
    _

// kernel: flag_model_forward.13
$region0: #{flag_model_forward.13}
  #allocation0 [shape = 'u32[]', space=smem, size = 0x4, offset = 0x4, fixed_abs, tag = 'smem constant byte address 0x4 - core index']
  #allocation1 [shape = 'u32[144,128]{1,0:T(1,128)}', space=vmem, size = 0x12000, scoped, tag = 'internal scratch']
  %s0 = inlined_call_operand.vmem [shape: bf16[64,128], index: 0, kind: input, shape index: {}]
  %s1 = inlined_call_operand.vmem [shape: bf16[64,128], index: 1, kind: input, shape index: {}]
  %s2 = inlined_call_operand.vmem [shape: bf16[256,128], index: 2, kind: input, shape index: {}]
  %s3 = inlined_call_operand.vmem [shape: f32[1,128], index: 3, kind: input, shape index: {}]
  %s4 = inlined_call_operand.vmem [shape: bf16[128,128], index: 4, kind: input, shape index: {}]
  %s5 = inlined_call_operand.vmem [shape: f32[1,128], index: 5, kind: input, shape index: {}]
  %s6 = inlined_call_operand.vmem [shape: bf16[128,128], index: 6, kind: input, shape index: {}]
  %s7 = inlined_call_operand.vmem [shape: f32[1,128], index: 7, kind: input, shape index: {}]
  %s8 = inlined_call_operand.vmem [shape: f32[1,128], index: 8, kind: input, shape index: {}]
  %s9 = inlined_call_operand.vmem [shape: f32[1,128], index: 9, kind: input, shape index: {}]
  %s10 = inlined_call_operand.vmem [shape: bf16[64,128], index: 10, kind: output, shape index: {}]
  %s11 = sld [smem:[#allocation0]]
  $region50: #{flag_model_forward.13} parent=0
    _
  %s13 = ssub.s32 1, %s11
  %s14 = scalar_select 0, %s13, %s11
  // Predicated region
  $region2: #{flag_model_forward.13} parent=0 // pred_check
    _
  $region3: #{flag_model_forward.13} parent=0 // pred_check_branch
    %16 = sbr.rel (0) target = $region5
  $region4: #{flag_model_forward.13} parent=0 // pred_region
    _
  $region5: #{flag_model_forward.13} parent=0 // pred_fallthru
    _
  // Predicated region
  $region6: #{flag_model_forward.13} parent=0 // pred_check
    _
  $region7: #{flag_model_forward.13} parent=0 // pred_check_branch
    %18 = sbr.rel (0) target = $region9
  $region8: #{flag_model_forward.13} parent=0 // pred_region
    _
  $region9: #{flag_model_forward.13} parent=0 // pred_fallthru
    _
  // Predicated region
  $region10: #{flag_model_forward.13} parent=0 // pred_check
    _
  $region11: #{flag_model_forward.13} parent=0 // pred_check_branch
    %20 = sbr.rel (0) target = $region13
  $region12: #{flag_model_forward.13} parent=0 // pred_region
    _
  $region13: #{flag_model_forward.13} parent=0 // pred_fallthru
    _
  // Predicated region
  $region14: #{flag_model_forward.13} parent=0 // pred_check
    _
  $region15: #{flag_model_forward.13} parent=0 // pred_check_branch
    %22 = sbr.rel (0) target = $region17
  $region16: #{flag_model_forward.13} parent=0 // pred_region
    _
  $region17: #{flag_model_forward.13} parent=0 // pred_fallthru
    _
  // Predicated region
  $region18: #{flag_model_forward.13} parent=0 // pred_check
    _
  $region19: #{flag_model_forward.13} parent=0 // pred_check_branch
    %24 = sbr.rel (0) target = $region21
  $region20: #{flag_model_forward.13} parent=0 // pred_region
    _
  $region21: #{flag_model_forward.13} parent=0 // pred_fallthru
    _
  // Predicated region
  $region22: #{flag_model_forward.13} parent=0 // pred_check
    _
  $region23: #{flag_model_forward.13} parent=0 // pred_check_branch
    %26 = sbr.rel (0) target = $region25
  $region24: #{flag_model_forward.13} parent=0 // pred_region
    _
  $region25: #{flag_model_forward.13} parent=0 // pred_fallthru
    _
  // Predicated region
  $region26: #{flag_model_forward.13} parent=0 // pred_check
    _
  $region27: #{flag_model_forward.13} parent=0 // pred_check_branch
    %28 = sbr.rel (0) target = $region29
  $region28: #{flag_model_forward.13} parent=0 // pred_region
    _
  $region29: #{flag_model_forward.13} parent=0 // pred_fallthru
    _
  // Predicated region
  $region30: #{flag_model_forward.13} parent=0 // pred_check
    _
  $region31: #{flag_model_forward.13} parent=0 // pred_check_branch
    %30 = sbr.rel (0) target = $region33
  $region32: #{flag_model_forward.13} parent=0 // pred_region
    _
  $region33: #{flag_model_forward.13} parent=0 // pred_fallthru
    _
  // Predicated region
  $region34: #{flag_model_forward.13} parent=0 // pred_check
    _
  $region35: #{flag_model_forward.13} parent=0 // pred_check_branch
    %32 = sbr.rel (0) target = $region37
  $region36: #{flag_model_forward.13} parent=0 // pred_region
    _
  $region37: #{flag_model_forward.13} parent=0 // pred_fallthru
    _
  // Predicated region
  $region38: #{flag_model_forward.13} parent=0 // pred_check
    _
  $region39: #{flag_model_forward.13} parent=0 // pred_check_branch
    %34 = sbr.rel (0) target = $region41
  $region40: #{flag_model_forward.13} parent=0 // pred_region
    _
  $region41: #{flag_model_forward.13} parent=0 // pred_fallthru
    _
  %v36 = vld [vmem:[%s0] sm:$0xf]
  %v37 = vld [vmem:[%s0 + $0x4] sm:$0xf]
  %v38 = vld [vmem:[%s0 + $0x8] sm:$0xf]
  %v39 = vld [vmem:[%s0 + $0xc] sm:$0xf]
  %v40 = vld [vmem:[%s0 + $0x10] sm:$0xf]
  %v41 = vld [vmem:[%s0 + $0x14] sm:$0xf]
  %v42 = vld [vmem:[%s0 + $0x18] sm:$0xf]
  %v43 = vld [vmem:[%s0 + $0x1c] sm:$0xf]
  %v44 = vld [vmem:[%s1] sm:$0xf]
  %v45 = vld [vmem:[%s1 + $0x4] sm:$0xf]
  %v46 = vld [vmem:[%s1 + $0x8] sm:$0xf]
  %v47 = vld [vmem:[%s1 + $0xc] sm:$0xf]
  %v48 = vld [vmem:[%s1 + $0x10] sm:$0xf]
  %v49 = vld [vmem:[%s1 + $0x14] sm:$0xf]
  %v50 = vld [vmem:[%s1 + $0x18] sm:$0xf]
  %v51 = vld [vmem:[%s1 + $0x1c] sm:$0xf]
  %v60 = vunpack.c.l.b16 %v36
  %v61 = vunpack.c.l.b16 %v37
  %v62 = vunpack.c.l.b16 %v38
  %v63 = vunpack.c.l.b16 %v39
  %v64 = vunpack.c.l.b16 %v40
  %v65 = vunpack.c.l.b16 %v41
  %v66 = vunpack.c.l.b16 %v42
  %v67 = vunpack.c.l.b16 %v43
  %v68 = vpack.c.b16 %v61, %v60
  %v69 = vpack.c.b16 %v63, %v62
  %v70 = vpack.c.b16 %v65, %v64
  %v71 = vpack.c.b16 %v67, %v66
  %v84 = vunpack.c.l.b16 %v44
  %v85 = vunpack.c.l.b16 %v45
  %v86 = vunpack.c.l.b16 %v46
  %v87 = vunpack.c.l.b16 %v47
  %v88 = vunpack.c.l.b16 %v48
  %v89 = vunpack.c.l.b16 %v49
  %v90 = vunpack.c.l.b16 %v50
  %v91 = vunpack.c.l.b16 %v51
  %v92 = vpack.c.b16 %v85, %v84
  %v93 = vpack.c.b16 %v87, %v86
  %v94 = vpack.c.b16 %v89, %v88
  %v95 = vpack.c.b16 %v91, %v90
  %v100 = vld [vmem:[%s2] sm:$0xf]
  %v101 = vld [vmem:[%s2 + $0x4] sm:$0xf]
  %v102 = vld [vmem:[%s2 + $0x8] sm:$0xf]
  %v103 = vld [vmem:[%s2 + $0xc] sm:$0xf]
  %v104 = vld [vmem:[%s2 + $0x10] sm:$0xf]
  %v105 = vld [vmem:[%s2 + $0x14] sm:$0xf]
  %v106 = vld [vmem:[%s2 + $0x18] sm:$0xf]
  %v107 = vld [vmem:[%s2 + $0x1c] sm:$0xf]
  %v108 = vld [vmem:[%s2 + $0x20] sm:$0xf]
  %v109 = vld [vmem:[%s2 + $0x24] sm:$0xf]
  %v110 = vld [vmem:[%s2 + $0x28] sm:$0xf]
  %v111 = vld [vmem:[%s2 + $0x2c] sm:$0xf]
  %v112 = vld [vmem:[%s2 + $0x30] sm:$0xf]
  %v113 = vld [vmem:[%s2 + $0x34] sm:$0xf]
  %v114 = vld [vmem:[%s2 + $0x38] sm:$0xf]
  %v115 = vld [vmem:[%s2 + $0x3c] sm:$0xf]
  %v116 = vld [vmem:[%s2 + $0x40] sm:$0xf]
  %v117 = vld [vmem:[%s2 + $0x44] sm:$0xf]
  %v118 = vld [vmem:[%s2 + $0x48] sm:$0xf]
  %v119 = vld [vmem:[%s2 + $0x4c] sm:$0xf]
  %v120 = vld [vmem:[%s2 + $0x50] sm:$0xf]
  %v121 = vld [vmem:[%s2 + $0x54] sm:$0xf]
  %v122 = vld [vmem:[%s2 + $0x58] sm:$0xf]
  %v123 = vld [vmem:[%s2 + $0x5c] sm:$0xf]
  %v124 = vld [vmem:[%s2 + $0x60] sm:$0xf]
  %v125 = vld [vmem:[%s2 + $0x64] sm:$0xf]
  %v126 = vld [vmem:[%s2 + $0x68] sm:$0xf]
  %v127 = vld [vmem:[%s2 + $0x6c] sm:$0xf]
  %v128 = vld [vmem:[%s2 + $0x70] sm:$0xf]
  %v129 = vld [vmem:[%s2 + $0x74] sm:$0xf]
  %v130 = vld [vmem:[%s2 + $0x78] sm:$0xf]
  %v131 = vld [vmem:[%s2 + $0x7c] sm:$0xf]
  %v132 = vld [vmem:[%s3] sm:$0x1]
  %v134 = vlaneseq
  %v135 = vshrl.u32 %v134, 7
  %v136 = vsub.s32 0, %v135
  %v137 = vrot.slane %v132, %v136
  %v171 = vunpack.c.l.b16 %v100
  %v172 = vunpack.c.l.b16 %v101
  %v173 = vunpack.c.l.b16 %v102
  %v174 = vunpack.c.l.b16 %v103
  %v175 = vunpack.c.l.b16 %v104
  %v176 = vunpack.c.l.b16 %v105
  %v177 = vunpack.c.l.b16 %v106
  %v178 = vunpack.c.l.b16 %v107
  %v179 = vunpack.c.l.b16 %v108
  %v180 = vunpack.c.l.b16 %v109
  %v181 = vunpack.c.l.b16 %v110
  %v182 = vunpack.c.l.b16 %v111
  %v183 = vunpack.c.l.b16 %v112
  %v184 = vunpack.c.l.b16 %v113
  %v185 = vunpack.c.l.b16 %v114
  %v186 = vunpack.c.l.b16 %v115
  %v187 = vunpack.c.l.b16 %v116
  %v188 = vunpack.c.l.b16 %v117
  %v189 = vunpack.c.l.b16 %v118
  %v190 = vunpack.c.l.b16 %v119
  %v191 = vunpack.c.l.b16 %v120
  %v192 = vunpack.c.l.b16 %v121
  %v193 = vunpack.c.l.b16 %v122
  %v194 = vunpack.c.l.b16 %v123
  %v195 = vunpack.c.l.b16 %v124
  %v196 = vunpack.c.l.b16 %v125
  %v197 = vunpack.c.l.b16 %v126
  %v198 = vunpack.c.l.b16 %v127
  %v199 = vunpack.c.l.b16 %v128
  %v200 = vunpack.c.l.b16 %v129
  %v201 = vunpack.c.l.b16 %v130
  %v202 = vunpack.c.l.b16 %v131
  %v203 = vpack.c.b16 %v172, %v171
  %v204 = vpack.c.b16 %v174, %v173
  %v205 = vpack.c.b16 %v176, %v175
  %v206 = vpack.c.b16 %v178, %v177
  %v207 = vpack.c.b16 %v180, %v179
  %v208 = vpack.c.b16 %v182, %v181
  %v209 = vpack.c.b16 %v184, %v183
  %v210 = vpack.c.b16 %v186, %v185
  %v211 = vpack.c.b16 %v188, %v187
  %v212 = vpack.c.b16 %v190, %v189
  %v213 = vpack.c.b16 %v192, %v191
  %v214 = vpack.c.b16 %v194, %v193
  %v215 = vpack.c.b16 %v196, %v195
  %v216 = vpack.c.b16 %v198, %v197
  %v217 = vpack.c.b16 %v200, %v199
  %v218 = vpack.c.b16 %v202, %v201
  %235 = vmatprep.subr.bf16.mxu0 0
  %236 = vmatpush1.bf16.msra.mxu0 %v203
  %237 = vmatprep.subr.bf16.mxu0 0
  %238 = vmatpush1.bf16.msra.mxu0 %v204
  %239 = vmatprep.subr.bf16.mxu0 0
  %240 = vmatpush1.bf16.msra.mxu0 %v205
  %241 = vmatprep.subr.bf16.mxu0 0
  %242 = vmatpush1.bf16.msra.mxu0 %v206
  %243 = vmatprep.subr.bf16.mxu0 0
  %244 = vmatpush1.bf16.msra.mxu0 %v207
  %245 = vmatprep.subr.bf16.mxu0 0
  %246 = vmatpush1.bf16.msra.mxu0 %v208
  %247 = vmatprep.subr.bf16.mxu0 0
  %248 = vmatpush1.bf16.msra.mxu0 %v209
  %249 = vmatprep.subr.bf16.mxu0 0
  %250 = vmatpush1.bf16.msra.mxu0 %v210
  %251 = vmatprep.subr.bf16.mxu0 0
  %252 = vmatpush1.bf16.msra.mxu0 %v211
  %253 = vmatprep.subr.bf16.mxu0 0
  %254 = vmatpush1.bf16.msra.mxu0 %v212
  %255 = vmatprep.subr.bf16.mxu0 0
  %256 = vmatpush1.bf16.msra.mxu0 %v213
  %257 = vmatprep.subr.bf16.mxu0 0
  %258 = vmatpush1.bf16.msra.mxu0 %v214
  %259 = vmatprep.subr.bf16.mxu0 0
  %260 = vmatpush1.bf16.msra.mxu0 %v215
  %261 = vmatprep.subr.bf16.mxu0 0
  %262 = vmatpush1.bf16.msra.mxu0 %v216
  %263 = vmatprep.subr.bf16.mxu0 0
  %264 = vmatpush1.bf16.msra.mxu0 %v217
  %265 = vmatprep.subr.bf16.mxu0 0
  %266 = vmatpush1.bf16.msra.mxu0 %v218
  %267 = vmatprep.mubr.bf16.mxu0 %v92
  %268 = vmatmul.mubr.bf16.gmra.mrb[0].mxu0 %v68
  %v269 = vpop.f32.mrb[0].mxu0
  %v270 = vadd.f32 %v137, %v269
  %v271 = vpop.f32.mrb[0].mxu0
  %v272 = vpop.f32.mrb[0].mxu0
  %v273 = vadd.f32 %v137, %v272
  %v274 = vpop.f32.mrb[0].mxu0
  %275 = vmatprep.mubr.bf16.mxu0 %v93
  %276 = vmatmul.mubr.bf16.gmra.mrb[0].mxu0 %v69
  %v277 = vpop.f32.mrb[0].mxu0
  %v278 = vadd.f32 %v137, %v277
  %v279 = vpop.f32.mrb[0].mxu0
  %v280 = vpop.f32.mrb[0].mxu0
  %v281 = vadd.f32 %v137, %v280
  %v282 = vpop.f32.mrb[0].mxu0
  %283 = vmatprep.mubr.bf16.mxu0 %v94
  %284 = vmatmul.mubr.bf16.gmra.mrb[0].mxu0 %v70
  %v285 = vpop.f32.mrb[0].mxu0
  %v286 = vadd.f32 %v137, %v285
  %v287 = vpop.f32.mrb[0].mxu0
  %v288 = vpop.f32.mrb[0].mxu0
  %v289 = vadd.f32 %v137, %v288
  %v290 = vpop.f32.mrb[0].mxu0
  %291 = vmatprep.mubr.bf16.mxu0 %v95
  %292 = vmatmul.mubr.bf16.gmra.mrb[0].mxu0 %v71
  %v293 = vpop.f32.mrb[0].mxu0
  %v294 = vadd.f32 %v137, %v293
  %v295 = vpop.f32.mrb[0].mxu0
  %v296 = vpop.f32.mrb[0].mxu0
  %v297 = vadd.f32 %v137, %v296
  %v298 = vpop.f32.mrb[0].mxu0
  %299 = vdwg.mxu0
  %v300 = vmax.f32 %v270, 0.0
  %v301 = vmax.f32 %v273, 0.0
  %v302 = vmax.f32 %v278, 0.0
  %v303 = vmax.f32 %v281, 0.0
  %v304 = vmax.f32 %v286, 0.0
  %v305 = vmax.f32 %v289, 0.0
  %v306 = vmax.f32 %v294, 0.0
  %v307 = vmax.f32 %v297, 0.0
  %v308 = vpack.c.bf16 %v301, %v300
  %v309 = vpack.c.bf16 %v303, %v302
  %v310 = vpack.c.bf16 %v305, %v304
  %v311 = vpack.c.bf16 %v307, %v306
  %v312 = vld [vmem:[%s4] sm:$0xf]
  %v313 = vld [vmem:[%s4 + $0x4] sm:$0xf]
  %v314 = vld [vmem:[%s4 + $0x8] sm:$0xf]
  %v315 = vld [vmem:[%s4 + $0xc] sm:$0xf]
  %v316 = vld [vmem:[%s4 + $0x10] sm:$0xf]
  %v317 = vld [vmem:[%s4 + $0x14] sm:$0xf]
  %v318 = vld [vmem:[%s4 + $0x18] sm:$0xf]
  %v319 = vld [vmem:[%s4 + $0x1c] sm:$0xf]
  %v320 = vld [vmem:[%s4 + $0x20] sm:$0xf]
  %v321 = vld [vmem:[%s4 + $0x24] sm:$0xf]
  %v322 = vld [vmem:[%s4 + $0x28] sm:$0xf]
  %v323 = vld [vmem:[%s4 + $0x2c] sm:$0xf]
  %v324 = vld [vmem:[%s4 + $0x30] sm:$0xf]
  %v325 = vld [vmem:[%s4 + $0x34] sm:$0xf]
  %v326 = vld [vmem:[%s4 + $0x38] sm:$0xf]
  %v327 = vld [vmem:[%s4 + $0x3c] sm:$0xf]
  %v328 = vld [vmem:[%s5] sm:$0x1]
  %v330 = vlaneseq
  %v331 = vshrl.u32 %v330, 7
  %v332 = vsub.s32 0, %v331
  %v333 = vrot.slane %v328, %v332
  %v351 = vunpack.c.l.b16 %v312
  %v352 = vunpack.c.l.b16 %v313
  %v353 = vunpack.c.l.b16 %v314
  %v354 = vunpack.c.l.b16 %v315
  %v355 = vunpack.c.l.b16 %v316
  %v356 = vunpack.c.l.b16 %v317
  %v357 = vunpack.c.l.b16 %v318
  %v358 = vunpack.c.l.b16 %v319
  %v359 = vunpack.c.l.b16 %v320
  %v360 = vunpack.c.l.b16 %v321
  %v361 = vunpack.c.l.b16 %v322
  %v362 = vunpack.c.l.b16 %v323
  %v363 = vunpack.c.l.b16 %v324
  %v364 = vunpack.c.l.b16 %v325
  %v365 = vunpack.c.l.b16 %v326
  %v366 = vunpack.c.l.b16 %v327
  %v367 = vpack.c.b16 %v352, %v351
  %v368 = vpack.c.b16 %v354, %v353
  %v369 = vpack.c.b16 %v356, %v355
  %v370 = vpack.c.b16 %v358, %v357
  %v371 = vpack.c.b16 %v360, %v359
  %v372 = vpack.c.b16 %v362, %v361
  %v373 = vpack.c.b16 %v364, %v363
  %v374 = vpack.c.b16 %v366, %v365
  %383 = vmatprep.subr.bf16.mxu0 0
  %384 = vmatpush1.bf16.msra.mxu0 %v367
  %385 = vmatprep.subr.bf16.mxu0 0
  %386 = vmatpush1.bf16.msra.mxu0 %v368
  %387 = vmatprep.subr.bf16.mxu0 0
  %388 = vmatpush1.bf16.msra.mxu0 %v369
  %389 = vmatprep.subr.bf16.mxu0 0
  %390 = vmatpush1.bf16.msra.mxu0 %v370
  %391 = vmatprep.subr.bf16.mxu0 0
  %392 = vmatpush1.bf16.msra.mxu0 %v371
  %393 = vmatprep.subr.bf16.mxu0 0
  %394 = vmatpush1.bf16.msra.mxu0 %v372
  %395 = vmatprep.subr.bf16.mxu0 0
  %396 = vmatpush1.bf16.msra.mxu0 %v373
  %397 = vmatprep.subr.bf16.mxu0 0
  %398 = vmatpush1.bf16.msra.mxu0 %v374
  %399 = vmatprep.subr.bf16.mxu0 0
  %400 = vmatpush1.bf16.msra.mxu0 0
  %401 = vmatprep.subr.bf16.mxu0 0
  %402 = vmatpush1.bf16.msra.mxu0 0
  %403 = vmatprep.subr.bf16.mxu0 0
  %404 = vmatpush1.bf16.msra.mxu0 0
  %405 = vmatprep.subr.bf16.mxu0 0
  %406 = vmatpush1.bf16.msra.mxu0 0
  %407 = vmatprep.subr.bf16.mxu0 0
  %408 = vmatpush1.bf16.msra.mxu0 0
  %409 = vmatprep.subr.bf16.mxu0 0
  %410 = vmatpush1.bf16.msra.mxu0 0
  %411 = vmatprep.subr.bf16.mxu0 0
  %412 = vmatpush1.bf16.msra.mxu0 0
  %413 = vmatprep.subr.bf16.mxu0 0
  %414 = vmatpush1.bf16.msra.mxu0 0
  %415 = vmatprep.mubr.bf16.mxu0 0
  %416 = vmatmul.mubr.bf16.gmra.mrb[0].mxu0 %v308
  %v417 = vpop.f32.mrb[0].mxu0
  %v418 = vadd.f32 %v333, %v417
  %v419 = vpop.f32.mrb[0].mxu0
  %v420 = vpop.f32.mrb[0].mxu0
  %v421 = vadd.f32 %v333, %v420
  %v422 = vpop.f32.mrb[0].mxu0
  %423 = vmatprep.mubr.bf16.mxu0 0
  %424 = vmatmul.mubr.bf16.gmra.mrb[0].mxu0 %v309
  %v425 = vpop.f32.mrb[0].mxu0
  %v426 = vadd.f32 %v333, %v425
  %v427 = vpop.f32.mrb[0].mxu0
  %v428 = vpop.f32.mrb[0].mxu0
  %v429 = vadd.f32 %v333, %v428
  %v430 = vpop.f32.mrb[0].mxu0
  %431 = vmatprep.mubr.bf16.mxu0 0
  %432 = vmatmul.mubr.bf16.gmra.mrb[0].mxu0 %v310
  %v433 = vpop.f32.mrb[0].mxu0
  %v434 = vadd.f32 %v333, %v433
  %v435 = vpop.f32.mrb[0].mxu0
  %v436 = vpop.f32.mrb[0].mxu0
  %v437 = vadd.f32 %v333, %v436
  %v438 = vpop.f32.mrb[0].mxu0
  %439 = vmatprep.mubr.bf16.mxu0 0
  %440 = vmatmul.mubr.bf16.gmra.mrb[0].mxu0 %v311
  %v441 = vpop.f32.mrb[0].mxu0
  %v442 = vadd.f32 %v333, %v441
  %v443 = vpop.f32.mrb[0].mxu0
  %v444 = vpop.f32.mrb[0].mxu0
  %v445 = vadd.f32 %v333, %v444
  %v446 = vpop.f32.mrb[0].mxu0
  %447 = vdwg.mxu0
  %v448 = vmax.f32 %v418, 0.0
  %v449 = vmax.f32 %v421, 0.0
  %v450 = vmax.f32 %v426, 0.0
  %v451 = vmax.f32 %v429, 0.0
  %v452 = vmax.f32 %v434, 0.0
  %v453 = vmax.f32 %v437, 0.0
  %v454 = vmax.f32 %v442, 0.0
  %v455 = vmax.f32 %v445, 0.0
  %v456 = vpack.c.bf16 %v449, %v448
  %v457 = vpack.c.bf16 %v451, %v450
  %v458 = vpack.c.bf16 %v453, %v452
  %v459 = vpack.c.bf16 %v455, %v454
  %v460 = vld [vmem:[%s6] sm:$0xf]
  %v461 = vld [vmem:[%s6 + $0x4] sm:$0xf]
  %v462 = vld [vmem:[%s6 + $0x8] sm:$0xf]
  %v463 = vld [vmem:[%s6 + $0xc] sm:$0xf]
  %v464 = vld [vmem:[%s6 + $0x10] sm:$0xf]
  %v465 = vld [vmem:[%s6 + $0x14] sm:$0xf]
  %v466 = vld [vmem:[%s6 + $0x18] sm:$0xf]
  %v467 = vld [vmem:[%s6 + $0x1c] sm:$0xf]
  %v468 = vld [vmem:[%s6 + $0x20] sm:$0xf]
  %v469 = vld [vmem:[%s6 + $0x24] sm:$0xf]
  %v470 = vld [vmem:[%s6 + $0x28] sm:$0xf]
  %v471 = vld [vmem:[%s6 + $0x2c] sm:$0xf]
  %v472 = vld [vmem:[%s6 + $0x30] sm:$0xf]
  %v473 = vld [vmem:[%s6 + $0x34] sm:$0xf]
  %v474 = vld [vmem:[%s6 + $0x38] sm:$0xf]
  %v475 = vld [vmem:[%s6 + $0x3c] sm:$0xf]
  %v476 = vld [vmem:[%s7] sm:$0x1]
  %v478 = vlaneseq
  %v479 = vshrl.u32 %v478, 7
  %v480 = vsub.s32 0, %v479
  %v481 = vrot.slane %v476, %v480
  %v499 = vunpack.c.l.b16 %v460
  %v500 = vunpack.c.l.b16 %v461
  %v501 = vunpack.c.l.b16 %v462
  %v502 = vunpack.c.l.b16 %v463
  %v503 = vunpack.c.l.b16 %v464
  %v504 = vunpack.c.l.b16 %v465
  %v505 = vunpack.c.l.b16 %v466
  %v506 = vunpack.c.l.b16 %v467
  %v507 = vunpack.c.l.b16 %v468
  %v508 = vunpack.c.l.b16 %v469
  %v509 = vunpack.c.l.b16 %v470
  %v510 = vunpack.c.l.b16 %v471
  %v511 = vunpack.c.l.b16 %v472
  %v512 = vunpack.c.l.b16 %v473
  %v513 = vunpack.c.l.b16 %v474
  %v514 = vunpack.c.l.b16 %v475
  %v515 = vpack.c.b16 %v500, %v499
  %v516 = vpack.c.b16 %v502, %v501
  %v517 = vpack.c.b16 %v504, %v503
  %v518 = vpack.c.b16 %v506, %v505
  %v519 = vpack.c.b16 %v508, %v507
  %v520 = vpack.c.b16 %v510, %v509
  %v521 = vpack.c.b16 %v512, %v511
  %v522 = vpack.c.b16 %v514, %v513
  %531 = vmatprep.subr.bf16.mxu0 0
  %532 = vmatpush1.bf16.msra.mxu0 %v515
  %533 = vmatprep.subr.bf16.mxu0 0
  %534 = vmatpush1.bf16.msra.mxu0 %v516
  %535 = vmatprep.subr.bf16.mxu0 0
  %536 = vmatpush1.bf16.msra.mxu0 %v517
  %537 = vmatprep.subr.bf16.mxu0 0
  %538 = vmatpush1.bf16.msra.mxu0 %v518
  %539 = vmatprep.subr.bf16.mxu0 0
  %540 = vmatpush1.bf16.msra.mxu0 %v519
  %541 = vmatprep.subr.bf16.mxu0 0
  %542 = vmatpush1.bf16.msra.mxu0 %v520
  %543 = vmatprep.subr.bf16.mxu0 0
  %544 = vmatpush1.bf16.msra.mxu0 %v521
  %545 = vmatprep.subr.bf16.mxu0 0
  %546 = vmatpush1.bf16.msra.mxu0 %v522
  %547 = vmatprep.subr.bf16.mxu0 0
  %548 = vmatpush1.bf16.msra.mxu0 0
  %549 = vmatprep.subr.bf16.mxu0 0
  %550 = vmatpush1.bf16.msra.mxu0 0
  %551 = vmatprep.subr.bf16.mxu0 0
  %552 = vmatpush1.bf16.msra.mxu0 0
  %553 = vmatprep.subr.bf16.mxu0 0
  %554 = vmatpush1.bf16.msra.mxu0 0
  %555 = vmatprep.subr.bf16.mxu0 0
  %556 = vmatpush1.bf16.msra.mxu0 0
  %557 = vmatprep.subr.bf16.mxu0 0
  %558 = vmatpush1.bf16.msra.mxu0 0
  %559 = vmatprep.subr.bf16.mxu0 0
  %560 = vmatpush1.bf16.msra.mxu0 0
  %561 = vmatprep.subr.bf16.mxu0 0
  %562 = vmatpush1.bf16.msra.mxu0 0
  %563 = vmatprep.mubr.bf16.mxu0 0
  %564 = vmatmul.mubr.bf16.gmra.mrb[0].mxu0 %v456
  %v565 = vpop.f32.mrb[0].mxu0
  %v566 = vadd.f32 %v481, %v565
  %v567 = vpop.f32.mrb[0].mxu0
  %v568 = vpop.f32.mrb[0].mxu0
  %v569 = vadd.f32 %v481, %v568
  %v570 = vpop.f32.mrb[0].mxu0
  %571 = vmatprep.mubr.bf16.mxu0 0
  %572 = vmatmul.mubr.bf16.gmra.mrb[0].mxu0 %v457
  %v573 = vpop.f32.mrb[0].mxu0
  %v574 = vadd.f32 %v481, %v573
  %v575 = vpop.f32.mrb[0].mxu0
  %v576 = vpop.f32.mrb[0].mxu0
  %v577 = vadd.f32 %v481, %v576
  %v578 = vpop.f32.mrb[0].mxu0
  %579 = vmatprep.mubr.bf16.mxu0 0
  %580 = vmatmul.mubr.bf16.gmra.mrb[0].mxu0 %v458
  %v581 = vpop.f32.mrb[0].mxu0
  %v582 = vadd.f32 %v481, %v581
  %v583 = vpop.f32.mrb[0].mxu0
  %v584 = vpop.f32.mrb[0].mxu0
  %v585 = vadd.f32 %v481, %v584
  %v586 = vpop.f32.mrb[0].mxu0
  %587 = vmatprep.mubr.bf16.mxu0 0
  %588 = vmatmul.mubr.bf16.gmra.mrb[0].mxu0 %v459
  %v589 = vpop.f32.mrb[0].mxu0
  %v590 = vadd.f32 %v481, %v589
  %v591 = vpop.f32.mrb[0].mxu0
  %v592 = vpop.f32.mrb[0].mxu0
  %v593 = vadd.f32 %v481, %v592
  %v594 = vpop.f32.mrb[0].mxu0
  %595 = vdwg.mxu0
  %596 = vadd.xlane.f32.xlu0 %v566
  %v597 = vpop.xlane.xlu0 %596
  %598 = vadd.xlane.f32.xlu0 %v569
  %v599 = vpop.xlane.xlu0 %598
  %600 = vadd.xlane.f32.xlu0 %v574
  %v601 = vpop.xlane.xlu0 %600
  %602 = vadd.xlane.f32.xlu0 %v577
  %v603 = vpop.xlane.xlu0 %602
  %604 = vadd.xlane.f32.xlu0 %v582
  %v605 = vpop.xlane.xlu0 %604
  %606 = vadd.xlane.f32.xlu0 %v585
  %v607 = vpop.xlane.xlu0 %606
  %608 = vadd.xlane.f32.xlu0 %v590
  %v609 = vpop.xlane.xlu0 %608
  %610 = vadd.xlane.f32.xlu0 %v593
  %v611 = vpop.xlane.xlu0 %610
  %v612 = vrcp.pop 128.0
  %v613 = vmul.f32 %v597, %v612
  %v614 = vmul.f32 %v599, %v612
  %v615 = vmul.f32 %v601, %v612
  %v616 = vmul.f32 %v603, %v612
  %v617 = vmul.f32 %v605, %v612
  %v618 = vmul.f32 %v607, %v612
  %v619 = vmul.f32 %v609, %v612
  %v620 = vmul.f32 %v611, %v612
  %v621 = vsub.f32 %v566, %v613
  %v622 = vsub.f32 %v569, %v614
  %v623 = vsub.f32 %v574, %v615
  %v624 = vsub.f32 %v577, %v616
  %v625 = vsub.f32 %v582, %v617
  %v626 = vsub.f32 %v585, %v618
  %v627 = vsub.f32 %v590, %v619
  %v628 = vsub.f32 %v593, %v620
  %v629 = vmul.f32 %v621, %v621
  %v630 = vmul.f32 %v622, %v622
  %v631 = vmul.f32 %v623, %v623
  %v632 = vmul.f32 %v624, %v624
  %v633 = vmul.f32 %v625, %v625
  %v634 = vmul.f32 %v626, %v626
  %v635 = vmul.f32 %v627, %v627
  %v636 = vmul.f32 %v628, %v628
  %637 = vadd.xlane.f32.xlu0 %v629
  %v638 = vpop.xlane.xlu0 %637
  %639 = vadd.xlane.f32.xlu0 %v630
  %v640 = vpop.xlane.xlu0 %639
  %641 = vadd.xlane.f32.xlu0 %v631
  %v642 = vpop.xlane.xlu0 %641
  %643 = vadd.xlane.f32.xlu0 %v632
  %v644 = vpop.xlane.xlu0 %643
  %645 = vadd.xlane.f32.xlu0 %v633
  %v646 = vpop.xlane.xlu0 %645
  %647 = vadd.xlane.f32.xlu0 %v634
  %v648 = vpop.xlane.xlu0 %647
  %649 = vadd.xlane.f32.xlu0 %v635
  %v650 = vpop.xlane.xlu0 %649
  %651 = vadd.xlane.f32.xlu0 %v636
  %v652 = vpop.xlane.xlu0 %651
  %v653 = vmul.f32 %v638, %v612
  %v654 = vmul.f32 %v640, %v612
  %v655 = vmul.f32 %v642, %v612
  %v656 = vmul.f32 %v644, %v612
  %v657 = vmul.f32 %v646, %v612
  %v658 = vmul.f32 %v648, %v612
  %v659 = vmul.f32 %v650, %v612
  %v660 = vmul.f32 %v652, %v612
  %v661 = vadd.f32 %v653, 1e-05
  %v662 = vadd.f32 %v654, 1e-05
  %v663 = vadd.f32 %v655, 1e-05
  %v664 = vadd.f32 %v656, 1e-05
  %v665 = vadd.f32 %v657, 1e-05
  %v666 = vadd.f32 %v658, 1e-05
  %v667 = vadd.f32 %v659, 1e-05
  %v668 = vadd.f32 %v660, 1e-05
  %v669 = vrsqrt.pop %v661
  %v670 = vrsqrt.pop %v662
  %v671 = vrsqrt.pop %v663
  %v672 = vrsqrt.pop %v664
  %v673 = vrsqrt.pop %v665
  %v674 = vrsqrt.pop %v666
  %v675 = vrsqrt.pop %v667
  %v676 = vrsqrt.pop %v668
  %v677 = vmul.f32 %v621, %v669
  %v678 = vmul.f32 %v622, %v670
  %v679 = vmul.f32 %v623, %v671
  %v680 = vmul.f32 %v624, %v672
  %v681 = vmul.f32 %v625, %v673
  %v682 = vmul.f32 %v626, %v674
  %v683 = vmul.f32 %v627, %v675
  %v684 = vmul.f32 %v628, %v676
  %v685 = vld [vmem:[%s8] sm:$0x1]
  %v687 = vlaneseq
  %v688 = vshrl.u32 %v687, 7
  %v689 = vsub.s32 0, %v688
  %v690 = vrot.slane %v685, %v689
  %v692 = vmul.f32 %v677, %v690
  %v693 = vmul.f32 %v678, %v690
  %v694 = vmul.f32 %v679, %v690
  %v695 = vmul.f32 %v680, %v690
  %v696 = vmul.f32 %v681, %v690
  %v697 = vmul.f32 %v682, %v690
  %v698 = vmul.f32 %v683, %v690
  %v699 = vmul.f32 %v684, %v690
  %v700 = vld [vmem:[%s9] sm:$0x1]
  %v702 = vlaneseq
  %v703 = vshrl.u32 %v702, 7
  %v704 = vsub.s32 0, %v703
  %v705 = vrot.slane %v700, %v704
  %v707 = vadd.f32 %v692, %v705
  %v708 = vadd.f32 %v693, %v705
  %v709 = vadd.f32 %v694, %v705
  %v710 = vadd.f32 %v695, %v705
  %v711 = vadd.f32 %v696, %v705
  %v712 = vadd.f32 %v697, %v705
  %v713 = vadd.f32 %v698, %v705
  %v714 = vadd.f32 %v699, %v705
  %v715 = vunpack.c.l.bf16 %v36
  %v716 = vunpack.c.l.bf16 %v37
  %v717 = vunpack.c.l.bf16 %v38
  %v718 = vunpack.c.l.bf16 %v39
  %v719 = vunpack.c.l.bf16 %v40
  %v720 = vunpack.c.l.bf16 %v41
  %v721 = vunpack.c.l.bf16 %v42
  %v722 = vunpack.c.l.bf16 %v43
  %v723 = vadd.f32 %v707, %v715
  %v724 = vadd.f32 %v708, %v716
  %v725 = vadd.f32 %v709, %v717
  %v726 = vadd.f32 %v710, %v718
  %v727 = vadd.f32 %v711, %v719
  %v728 = vadd.f32 %v712, %v720
  %v729 = vadd.f32 %v713, %v721
  %v730 = vadd.f32 %v714, %v722
  %v731 = vpack.c.bf16 %v724, %v723
  %v732 = vpack.c.bf16 %v726, %v725
  %v733 = vpack.c.bf16 %v728, %v727
  %v734 = vpack.c.bf16 %v730, %v729
  %v739 = vunpack.c.l.b16 %v731
  %v740 = vunpack.c.h.b16 %v731
  %v741 = vunpack.c.l.b16 %v732
  %v742 = vunpack.c.h.b16 %v732
  %v743 = vunpack.c.l.b16 %v733
  %v744 = vunpack.c.h.b16 %v733
  %v745 = vunpack.c.l.b16 %v734
  %v746 = vunpack.c.h.b16 %v734
  %v747 = vpack.c.b16 %v739, %v739
  %v748 = vpack.c.b16 %v740, %v740
  %v749 = vpack.c.b16 %v741, %v741
  %v750 = vpack.c.b16 %v742, %v742
  %v751 = vpack.c.b16 %v743, %v743
  %v752 = vpack.c.b16 %v744, %v744
  %v753 = vpack.c.b16 %v745, %v745
  %v754 = vpack.c.b16 %v746, %v746
  %763 = vst [vmem:[%s10] sm:$0xf] %v747
  %764 = vst [vmem:[%s10 + $0x4] sm:$0xf] %v748
  %765 = vst [vmem:[%s10 + $0x8] sm:$0xf] %v749
  %766 = vst [vmem:[%s10 + $0xc] sm:$0xf] %v750
  %767 = vst [vmem:[%s10 + $0x10] sm:$0xf] %v751
  %768 = vst [vmem:[%s10 + $0x14] sm:$0xf] %v752
  %769 = vst [vmem:[%s10 + $0x18] sm:$0xf] %v753
  %770 = vst [vmem:[%s10 + $0x1c] sm:$0xf] %v754
  // Predicated region
  $region42: #{flag_model_forward.13} parent=0 // pred_check
    _
  $region43: #{flag_model_forward.13} parent=0 // pred_check_branch
    %772 = sbr.rel (0) target = $region45
  $region44: #{flag_model_forward.13} parent=0 // pred_region
    _
  $region45: #{flag_model_forward.13} parent=0 // pred_fallthru
    _
  // Predicated region
  $region46: #{flag_model_forward.13} parent=0 // pred_check
    _
  $region47: #{flag_model_forward.13} parent=0 // pred_check_branch
    %774 = sbr.rel (0) target = $region49
  $region48: #{flag_model_forward.13} parent=0 // pred_region
    _
  $region49: #{flag_model_forward.13} parent=0 // pred_fallthru
    _

// kernel: flag_model_forward.17
$region0: #{flag_model_forward.17}
  #allocation0 [shape = 'u32[]', space=smem, size = 0x4, offset = 0x4, fixed_abs, tag = 'smem constant byte address 0x4 - core index']
  #allocation1 [shape = 'u32[144,128]{1,0:T(1,128)}', space=vmem, size = 0x12000, scoped, tag = 'internal scratch']
  %s0 = inlined_call_operand.vmem [shape: bf16[64,128], index: 0, kind: input, shape index: {}]
  %s1 = inlined_call_operand.vmem [shape: bf16[128,128], index: 1, kind: input, shape index: {}]
  %s2 = inlined_call_operand.vmem [shape: f32[1,128], index: 2, kind: input, shape index: {}]
  %s3 = inlined_call_operand.vmem [shape: bf16[128,128], index: 3, kind: input, shape index: {}]
  %s4 = inlined_call_operand.vmem [shape: f32[1,128], index: 4, kind: input, shape index: {}]
  %s5 = inlined_call_operand.vmem [shape: bf16[128,128], index: 5, kind: input, shape index: {}]
  %s6 = inlined_call_operand.vmem [shape: f32[1,128], index: 6, kind: input, shape index: {}]
  %s7 = inlined_call_operand.vmem [shape: f32[64,128], index: 7, kind: output, shape index: {}]
  %s8 = sld [smem:[#allocation0]]
  $region38: #{flag_model_forward.17} parent=0
    _
  %s10 = ssub.s32 1, %s8
  %s11 = scalar_select 0, %s10, %s8
  // Predicated region
  $region2: #{flag_model_forward.17} parent=0 // pred_check
    _
  $region3: #{flag_model_forward.17} parent=0 // pred_check_branch
    %13 = sbr.rel (0) target = $region5
  $region4: #{flag_model_forward.17} parent=0 // pred_region
    _
  $region5: #{flag_model_forward.17} parent=0 // pred_fallthru
    _
  // Predicated region
  $region6: #{flag_model_forward.17} parent=0 // pred_check
    _
  $region7: #{flag_model_forward.17} parent=0 // pred_check_branch
    %15 = sbr.rel (0) target = $region9
  $region8: #{flag_model_forward.17} parent=0 // pred_region
    _
  $region9: #{flag_model_forward.17} parent=0 // pred_fallthru
    _
  // Predicated region
  $region10: #{flag_model_forward.17} parent=0 // pred_check
    _
  $region11: #{flag_model_forward.17} parent=0 // pred_check_branch
    %17 = sbr.rel (0) target = $region13
  $region12: #{flag_model_forward.17} parent=0 // pred_region
    _
  $region13: #{flag_model_forward.17} parent=0 // pred_fallthru
    _
  // Predicated region
  $region14: #{flag_model_forward.17} parent=0 // pred_check
    _
  $region15: #{flag_model_forward.17} parent=0 // pred_check_branch
    %19 = sbr.rel (0) target = $region17
  $region16: #{flag_model_forward.17} parent=0 // pred_region
    _
  $region17: #{flag_model_forward.17} parent=0 // pred_fallthru
    _
  // Predicated region
  $region18: #{flag_model_forward.17} parent=0 // pred_check
    _
  $region19: #{flag_model_forward.17} parent=0 // pred_check_branch
    %21 = sbr.rel (0) target = $region21
  $region20: #{flag_model_forward.17} parent=0 // pred_region
    _
  $region21: #{flag_model_forward.17} parent=0 // pred_fallthru
    _
  // Predicated region
  $region22: #{flag_model_forward.17} parent=0 // pred_check
    _
  $region23: #{flag_model_forward.17} parent=0 // pred_check_branch
    %23 = sbr.rel (0) target = $region25
  $region24: #{flag_model_forward.17} parent=0 // pred_region
    _
  $region25: #{flag_model_forward.17} parent=0 // pred_fallthru
    _
  // Predicated region
  $region26: #{flag_model_forward.17} parent=0 // pred_check
    _
  $region27: #{flag_model_forward.17} parent=0 // pred_check_branch
    %25 = sbr.rel (0) target = $region29
  $region28: #{flag_model_forward.17} parent=0 // pred_region
    _
  $region29: #{flag_model_forward.17} parent=0 // pred_fallthru
    _
  %v27 = vld [vmem:[%s0] sm:$0xf]
  %v28 = vld [vmem:[%s0 + $0x4] sm:$0xf]
  %v29 = vld [vmem:[%s0 + $0x8] sm:$0xf]
  %v30 = vld [vmem:[%s0 + $0xc] sm:$0xf]
  %v31 = vld [vmem:[%s0 + $0x10] sm:$0xf]
  %v32 = vld [vmem:[%s0 + $0x14] sm:$0xf]
  %v33 = vld [vmem:[%s0 + $0x18] sm:$0xf]
  %v34 = vld [vmem:[%s0 + $0x1c] sm:$0xf]
  %v35 = vld [vmem:[%s1] sm:$0xf]
  %v36 = vld [vmem:[%s1 + $0x4] sm:$0xf]
  %v37 = vld [vmem:[%s1 + $0x8] sm:$0xf]
  %v38 = vld [vmem:[%s1 + $0xc] sm:$0xf]
  %v39 = vld [vmem:[%s1 + $0x10] sm:$0xf]
  %v40 = vld [vmem:[%s1 + $0x14] sm:$0xf]
  %v41 = vld [vmem:[%s1 + $0x18] sm:$0xf]
  %v42 = vld [vmem:[%s1 + $0x1c] sm:$0xf]
  %v43 = vld [vmem:[%s1 + $0x20] sm:$0xf]
  %v44 = vld [vmem:[%s1 + $0x24] sm:$0xf]
  %v45 = vld [vmem:[%s1 + $0x28] sm:$0xf]
  %v46 = vld [vmem:[%s1 + $0x2c] sm:$0xf]
  %v47 = vld [vmem:[%s1 + $0x30] sm:$0xf]
  %v48 = vld [vmem:[%s1 + $0x34] sm:$0xf]
  %v49 = vld [vmem:[%s1 + $0x38] sm:$0xf]
  %v50 = vld [vmem:[%s1 + $0x3c] sm:$0xf]
  %v51 = vld [vmem:[%s2] sm:$0x1]
  %v53 = vlaneseq
  %v54 = vshrl.u32 %v53, 7
  %v55 = vsub.s32 0, %v54
  %v56 = vrot.slane %v51, %v55
  %v66 = vunpack.c.l.b16 %v27
  %v67 = vunpack.c.l.b16 %v28
  %v68 = vunpack.c.l.b16 %v29
  %v69 = vunpack.c.l.b16 %v30
  %v70 = vunpack.c.l.b16 %v31
  %v71 = vunpack.c.l.b16 %v32
  %v72 = vunpack.c.l.b16 %v33
  %v73 = vunpack.c.l.b16 %v34
  %v74 = vpack.c.b16 %v67, %v66
  %v75 = vpack.c.b16 %v69, %v68
  %v76 = vpack.c.b16 %v71, %v70
  %v77 = vpack.c.b16 %v73, %v72
  %v98 = vunpack.c.l.b16 %v35
  %v99 = vunpack.c.l.b16 %v36
  %v100 = vunpack.c.l.b16 %v37
  %v101 = vunpack.c.l.b16 %v38
  %v102 = vunpack.c.l.b16 %v39
  %v103 = vunpack.c.l.b16 %v40
  %v104 = vunpack.c.l.b16 %v41
  %v105 = vunpack.c.l.b16 %v42
  %v106 = vunpack.c.l.b16 %v43
  %v107 = vunpack.c.l.b16 %v44
  %v108 = vunpack.c.l.b16 %v45
  %v109 = vunpack.c.l.b16 %v46
  %v110 = vunpack.c.l.b16 %v47
  %v111 = vunpack.c.l.b16 %v48
  %v112 = vunpack.c.l.b16 %v49
  %v113 = vunpack.c.l.b16 %v50
  %v114 = vpack.c.b16 %v99, %v98
  %v115 = vpack.c.b16 %v101, %v100
  %v116 = vpack.c.b16 %v103, %v102
  %v117 = vpack.c.b16 %v105, %v104
  %v118 = vpack.c.b16 %v107, %v106
  %v119 = vpack.c.b16 %v109, %v108
  %v120 = vpack.c.b16 %v111, %v110
  %v121 = vpack.c.b16 %v113, %v112
  %130 = vmatprep.subr.bf16.mxu0 0
  %131 = vmatpush1.bf16.msra.mxu0 %v114
  %132 = vmatprep.subr.bf16.mxu0 0
  %133 = vmatpush1.bf16.msra.mxu0 %v115
  %134 = vmatprep.subr.bf16.mxu0 0
  %135 = vmatpush1.bf16.msra.mxu0 %v116
  %136 = vmatprep.subr.bf16.mxu0 0
  %137 = vmatpush1.bf16.msra.mxu0 %v117
  %138 = vmatprep.subr.bf16.mxu0 0
  %139 = vmatpush1.bf16.msra.mxu0 %v118
  %140 = vmatprep.subr.bf16.mxu0 0
  %141 = vmatpush1.bf16.msra.mxu0 %v119
  %142 = vmatprep.subr.bf16.mxu0 0
  %143 = vmatpush1.bf16.msra.mxu0 %v120
  %144 = vmatprep.subr.bf16.mxu0 0
  %145 = vmatpush1.bf16.msra.mxu0 %v121
  %146 = vmatprep.subr.bf16.mxu0 0
  %147 = vmatpush1.bf16.msra.mxu0 0
  %148 = vmatprep.subr.bf16.mxu0 0
  %149 = vmatpush1.bf16.msra.mxu0 0
  %150 = vmatprep.subr.bf16.mxu0 0
  %151 = vmatpush1.bf16.msra.mxu0 0
  %152 = vmatprep.subr.bf16.mxu0 0
  %153 = vmatpush1.bf16.msra.mxu0 0
  %154 = vmatprep.subr.bf16.mxu0 0
  %155 = vmatpush1.bf16.msra.mxu0 0
  %156 = vmatprep.subr.bf16.mxu0 0
  %157 = vmatpush1.bf16.msra.mxu0 0
  %158 = vmatprep.subr.bf16.mxu0 0
  %159 = vmatpush1.bf16.msra.mxu0 0
  %160 = vmatprep.subr.bf16.mxu0 0
  %161 = vmatpush1.bf16.msra.mxu0 0
  %162 = vmatprep.mubr.bf16.mxu0 0
  %163 = vmatmul.mubr.bf16.gmra.mrb[0].mxu0 %v74
  %v164 = vpop.f32.mrb[0].mxu0
  %v165 = vadd.f32 %v56, %v164
  %v166 = vpop.f32.mrb[0].mxu0
  %v167 = vpop.f32.mrb[0].mxu0
  %v168 = vadd.f32 %v56, %v167
  %v169 = vpop.f32.mrb[0].mxu0
  %170 = vmatprep.mubr.bf16.mxu0 0
  %171 = vmatmul.mubr.bf16.gmra.mrb[0].mxu0 %v75
  %v172 = vpop.f32.mrb[0].mxu0
  %v173 = vadd.f32 %v56, %v172
  %v174 = vpop.f32.mrb[0].mxu0
  %v175 = vpop.f32.mrb[0].mxu0
  %v176 = vadd.f32 %v56, %v175
  %v177 = vpop.f32.mrb[0].mxu0
  %178 = vmatprep.mubr.bf16.mxu0 0
  %179 = vmatmul.mubr.bf16.gmra.mrb[0].mxu0 %v76
  %v180 = vpop.f32.mrb[0].mxu0
  %v181 = vadd.f32 %v56, %v180
  %v182 = vpop.f32.mrb[0].mxu0
  %v183 = vpop.f32.mrb[0].mxu0
  %v184 = vadd.f32 %v56, %v183
  %v185 = vpop.f32.mrb[0].mxu0
  %186 = vmatprep.mubr.bf16.mxu0 0
  %187 = vmatmul.mubr.bf16.gmra.mrb[0].mxu0 %v77
  %v188 = vpop.f32.mrb[0].mxu0
  %v189 = vadd.f32 %v56, %v188
  %v190 = vpop.f32.mrb[0].mxu0
  %v191 = vpop.f32.mrb[0].mxu0
  %v192 = vadd.f32 %v56, %v191
  %v193 = vpop.f32.mrb[0].mxu0
  %194 = vdwg.mxu0
  %v195 = vmax.f32 %v165, 0.0
  %v196 = vmax.f32 %v168, 0.0
  %v197 = vmax.f32 %v173, 0.0
  %v198 = vmax.f32 %v176, 0.0
  %v199 = vmax.f32 %v181, 0.0
  %v200 = vmax.f32 %v184, 0.0
  %v201 = vmax.f32 %v189, 0.0
  %v202 = vmax.f32 %v192, 0.0
  %v203 = vpack.c.bf16 %v196, %v195
  %v204 = vpack.c.bf16 %v198, %v197
  %v205 = vpack.c.bf16 %v200, %v199
  %v206 = vpack.c.bf16 %v202, %v201
  %v207 = vld [vmem:[%s3] sm:$0xf]
  %v208 = vld [vmem:[%s3 + $0x4] sm:$0xf]
  %v209 = vld [vmem:[%s3 + $0x8] sm:$0xf]
  %v210 = vld [vmem:[%s3 + $0xc] sm:$0xf]
  %v211 = vld [vmem:[%s3 + $0x10] sm:$0xf]
  %v212 = vld [vmem:[%s3 + $0x14] sm:$0xf]
  %v213 = vld [vmem:[%s3 + $0x18] sm:$0xf]
  %v214 = vld [vmem:[%s3 + $0x1c] sm:$0xf]
  %v215 = vld [vmem:[%s3 + $0x20] sm:$0xf]
  %v216 = vld [vmem:[%s3 + $0x24] sm:$0xf]
  %v217 = vld [vmem:[%s3 + $0x28] sm:$0xf]
  %v218 = vld [vmem:[%s3 + $0x2c] sm:$0xf]
  %v219 = vld [vmem:[%s3 + $0x30] sm:$0xf]
  %v220 = vld [vmem:[%s3 + $0x34] sm:$0xf]
  %v221 = vld [vmem:[%s3 + $0x38] sm:$0xf]
  %v222 = vld [vmem:[%s3 + $0x3c] sm:$0xf]
  %v223 = vld [vmem:[%s4] sm:$0x1]
  %v225 = vlaneseq
  %v226 = vshrl.u32 %v225, 7
  %v227 = vsub.s32 0, %v226
  %v228 = vrot.slane %v223, %v227
  %v246 = vunpack.c.l.b16 %v207
  %v247 = vunpack.c.l.b16 %v208
  %v248 = vunpack.c.l.b16 %v209
  %v249 = vunpack.c.l.b16 %v210
  %v250 = vunpack.c.l.b16 %v211
  %v251 = vunpack.c.l.b16 %v212
  %v252 = vunpack.c.l.b16 %v213
  %v253 = vunpack.c.l.b16 %v214
  %v254 = vunpack.c.l.b16 %v215
  %v255 = vunpack.c.l.b16 %v216
  %v256 = vunpack.c.l.b16 %v217
  %v257 = vunpack.c.l.b16 %v218
  %v258 = vunpack.c.l.b16 %v219
  %v259 = vunpack.c.l.b16 %v220
  %v260 = vunpack.c.l.b16 %v221
  %v261 = vunpack.c.l.b16 %v222
  %v262 = vpack.c.b16 %v247, %v246
  %v263 = vpack.c.b16 %v249, %v248
  %v264 = vpack.c.b16 %v251, %v250
  %v265 = vpack.c.b16 %v253, %v252
  %v266 = vpack.c.b16 %v255, %v254
  %v267 = vpack.c.b16 %v257, %v256
  %v268 = vpack.c.b16 %v259, %v258
  %v269 = vpack.c.b16 %v261, %v260
  %278 = vmatprep.subr.bf16.mxu0 0
  %279 = vmatpush1.bf16.msra.mxu0 %v262
  %280 = vmatprep.subr.bf16.mxu0 0
  %281 = vmatpush1.bf16.msra.mxu0 %v263
  %282 = vmatprep.subr.bf16.mxu0 0
  %283 = vmatpush1.bf16.msra.mxu0 %v264
  %284 = vmatprep.subr.bf16.mxu0 0
  %285 = vmatpush1.bf16.msra.mxu0 %v265
  %286 = vmatprep.subr.bf16.mxu0 0
  %287 = vmatpush1.bf16.msra.mxu0 %v266
  %288 = vmatprep.subr.bf16.mxu0 0
  %289 = vmatpush1.bf16.msra.mxu0 %v267
  %290 = vmatprep.subr.bf16.mxu0 0
  %291 = vmatpush1.bf16.msra.mxu0 %v268
  %292 = vmatprep.subr.bf16.mxu0 0
  %293 = vmatpush1.bf16.msra.mxu0 %v269
  %294 = vmatprep.subr.bf16.mxu0 0
  %295 = vmatpush1.bf16.msra.mxu0 0
  %296 = vmatprep.subr.bf16.mxu0 0
  %297 = vmatpush1.bf16.msra.mxu0 0
  %298 = vmatprep.subr.bf16.mxu0 0
  %299 = vmatpush1.bf16.msra.mxu0 0
  %300 = vmatprep.subr.bf16.mxu0 0
  %301 = vmatpush1.bf16.msra.mxu0 0
  %302 = vmatprep.subr.bf16.mxu0 0
  %303 = vmatpush1.bf16.msra.mxu0 0
  %304 = vmatprep.subr.bf16.mxu0 0
  %305 = vmatpush1.bf16.msra.mxu0 0
  %306 = vmatprep.subr.bf16.mxu0 0
  %307 = vmatpush1.bf16.msra.mxu0 0
  %308 = vmatprep.subr.bf16.mxu0 0
  %309 = vmatpush1.bf16.msra.mxu0 0
  %310 = vmatprep.mubr.bf16.mxu0 0
  %311 = vmatmul.mubr.bf16.gmra.mrb[0].mxu0 %v203
  %v312 = vpop.f32.mrb[0].mxu0
  %v313 = vadd.f32 %v228, %v312
  %v314 = vpop.f32.mrb[0].mxu0
  %v315 = vpop.f32.mrb[0].mxu0
  %v316 = vadd.f32 %v228, %v315
  %v317 = vpop.f32.mrb[0].mxu0
  %318 = vmatprep.mubr.bf16.mxu0 0
  %319 = vmatmul.mubr.bf16.gmra.mrb[0].mxu0 %v204
  %v320 = vpop.f32.mrb[0].mxu0
  %v321 = vadd.f32 %v228, %v320
  %v322 = vpop.f32.mrb[0].mxu0
  %v323 = vpop.f32.mrb[0].mxu0
  %v324 = vadd.f32 %v228, %v323
  %v325 = vpop.f32.mrb[0].mxu0
  %326 = vmatprep.mubr.bf16.mxu0 0
  %327 = vmatmul.mubr.bf16.gmra.mrb[0].mxu0 %v205
  %v328 = vpop.f32.mrb[0].mxu0
  %v329 = vadd.f32 %v228, %v328
  %v330 = vpop.f32.mrb[0].mxu0
  %v331 = vpop.f32.mrb[0].mxu0
  %v332 = vadd.f32 %v228, %v331
  %v333 = vpop.f32.mrb[0].mxu0
  %334 = vmatprep.mubr.bf16.mxu0 0
  %335 = vmatmul.mubr.bf16.gmra.mrb[0].mxu0 %v206
  %v336 = vpop.f32.mrb[0].mxu0
  %v337 = vadd.f32 %v228, %v336
  %v338 = vpop.f32.mrb[0].mxu0
  %v339 = vpop.f32.mrb[0].mxu0
  %v340 = vadd.f32 %v228, %v339
  %v341 = vpop.f32.mrb[0].mxu0
  %342 = vdwg.mxu0
  %v343 = vmax.f32 %v313, 0.0
  %v344 = vmax.f32 %v316, 0.0
  %v345 = vmax.f32 %v321, 0.0
  %v346 = vmax.f32 %v324, 0.0
  %v347 = vmax.f32 %v329, 0.0
  %v348 = vmax.f32 %v332, 0.0
  %v349 = vmax.f32 %v337, 0.0
  %v350 = vmax.f32 %v340, 0.0
  %v351 = vpack.c.bf16 %v344, %v343
  %v352 = vpack.c.bf16 %v346, %v345
  %v353 = vpack.c.bf16 %v348, %v347
  %v354 = vpack.c.bf16 %v350, %v349
  %v355 = vld [vmem:[%s5] sm:$0xf]
  %v356 = vld [vmem:[%s5 + $0x4] sm:$0xf]
  %v357 = vld [vmem:[%s5 + $0x8] sm:$0xf]
  %v358 = vld [vmem:[%s5 + $0xc] sm:$0xf]
  %v359 = vld [vmem:[%s5 + $0x10] sm:$0xf]
  %v360 = vld [vmem:[%s5 + $0x14] sm:$0xf]
  %v361 = vld [vmem:[%s5 + $0x18] sm:$0xf]
  %v362 = vld [vmem:[%s5 + $0x1c] sm:$0xf]
  %v363 = vld [vmem:[%s5 + $0x20] sm:$0xf]
  %v364 = vld [vmem:[%s5 + $0x24] sm:$0xf]
  %v365 = vld [vmem:[%s5 + $0x28] sm:$0xf]
  %v366 = vld [vmem:[%s5 + $0x2c] sm:$0xf]
  %v367 = vld [vmem:[%s5 + $0x30] sm:$0xf]
  %v368 = vld [vmem:[%s5 + $0x34] sm:$0xf]
  %v369 = vld [vmem:[%s5 + $0x38] sm:$0xf]
  %v370 = vld [vmem:[%s5 + $0x3c] sm:$0xf]
  %v371 = vld [vmem:[%s6] sm:$0x1]
  %v373 = vlaneseq
  %v374 = vshrl.u32 %v373, 7
  %v375 = vsub.s32 0, %v374
  %v376 = vrot.slane %v371, %v375
  %v394 = vunpack.c.l.b16 %v355
  %v395 = vunpack.c.l.b16 %v356
  %v396 = vunpack.c.l.b16 %v357
  %v397 = vunpack.c.l.b16 %v358
  %v398 = vunpack.c.l.b16 %v359
  %v399 = vunpack.c.l.b16 %v360
  %v400 = vunpack.c.l.b16 %v361
  %v401 = vunpack.c.l.b16 %v362
  %v402 = vunpack.c.l.b16 %v363
  %v403 = vunpack.c.l.b16 %v364
  %v404 = vunpack.c.l.b16 %v365
  %v405 = vunpack.c.l.b16 %v366
  %v406 = vunpack.c.l.b16 %v367
  %v407 = vunpack.c.l.b16 %v368
  %v408 = vunpack.c.l.b16 %v369
  %v409 = vunpack.c.l.b16 %v370
  %v410 = vpack.c.b16 %v395, %v394
  %v411 = vpack.c.b16 %v397, %v396
  %v412 = vpack.c.b16 %v399, %v398
  %v413 = vpack.c.b16 %v401, %v400
  %v414 = vpack.c.b16 %v403, %v402
  %v415 = vpack.c.b16 %v405, %v404
  %v416 = vpack.c.b16 %v407, %v406
  %v417 = vpack.c.b16 %v409, %v408
  %426 = vmatprep.subr.bf16.mxu0 0
  %427 = vmatpush1.bf16.msra.mxu0 %v410
  %428 = vmatprep.subr.bf16.mxu0 0
  %429 = vmatpush1.bf16.msra.mxu0 %v411
  %430 = vmatprep.subr.bf16.mxu0 0
  %431 = vmatpush1.bf16.msra.mxu0 %v412
  %432 = vmatprep.subr.bf16.mxu0 0
  %433 = vmatpush1.bf16.msra.mxu0 %v413
  %434 = vmatprep.subr.bf16.mxu0 0
  %435 = vmatpush1.bf16.msra.mxu0 %v414
  %436 = vmatprep.subr.bf16.mxu0 0
  %437 = vmatpush1.bf16.msra.mxu0 %v415
  %438 = vmatprep.subr.bf16.mxu0 0
  %439 = vmatpush1.bf16.msra.mxu0 %v416
  %440 = vmatprep.subr.bf16.mxu0 0
  %441 = vmatpush1.bf16.msra.mxu0 %v417
  %442 = vmatprep.subr.bf16.mxu0 0
  %443 = vmatpush1.bf16.msra.mxu0 0
  %444 = vmatprep.subr.bf16.mxu0 0
  %445 = vmatpush1.bf16.msra.mxu0 0
  %446 = vmatprep.subr.bf16.mxu0 0
  %447 = vmatpush1.bf16.msra.mxu0 0
  %448 = vmatprep.subr.bf16.mxu0 0
  %449 = vmatpush1.bf16.msra.mxu0 0
  %450 = vmatprep.subr.bf16.mxu0 0
  %451 = vmatpush1.bf16.msra.mxu0 0
  %452 = vmatprep.subr.bf16.mxu0 0
  %453 = vmatpush1.bf16.msra.mxu0 0
  %454 = vmatprep.subr.bf16.mxu0 0
  %455 = vmatpush1.bf16.msra.mxu0 0
  %456 = vmatprep.subr.bf16.mxu0 0
  %457 = vmatpush1.bf16.msra.mxu0 0
  %458 = vmatprep.mubr.bf16.mxu0 0
  %459 = vmatmul.mubr.bf16.gmra.mrb[0].mxu0 %v351
  %v460 = vpop.f32.mrb[0].mxu0
  %v461 = vadd.f32 %v376, %v460
  %v462 = vpop.f32.mrb[0].mxu0
  %v463 = vpop.f32.mrb[0].mxu0
  %v464 = vadd.f32 %v376, %v463
  %v465 = vpop.f32.mrb[0].mxu0
  %466 = vmatprep.mubr.bf16.mxu0 0
  %467 = vmatmul.mubr.bf16.gmra.mrb[0].mxu0 %v352
  %v468 = vpop.f32.mrb[0].mxu0
  %v469 = vadd.f32 %v376, %v468
  %v470 = vpop.f32.mrb[0].mxu0
  %v471 = vpop.f32.mrb[0].mxu0
  %v472 = vadd.f32 %v376, %v471
  %v473 = vpop.f32.mrb[0].mxu0
  %474 = vmatprep.mubr.bf16.mxu0 0
  %475 = vmatmul.mubr.bf16.gmra.mrb[0].mxu0 %v353
  %v476 = vpop.f32.mrb[0].mxu0
  %v477 = vadd.f32 %v376, %v476
  %v478 = vpop.f32.mrb[0].mxu0
  %v479 = vpop.f32.mrb[0].mxu0
  %v480 = vadd.f32 %v376, %v479
  %v481 = vpop.f32.mrb[0].mxu0
  %482 = vmatprep.mubr.bf16.mxu0 0
  %483 = vmatmul.mubr.bf16.gmra.mrb[0].mxu0 %v354
  %v484 = vpop.f32.mrb[0].mxu0
  %v485 = vadd.f32 %v376, %v484
  %v486 = vpop.f32.mrb[0].mxu0
  %v487 = vpop.f32.mrb[0].mxu0
  %v488 = vadd.f32 %v376, %v487
  %v489 = vpop.f32.mrb[0].mxu0
  %490 = vdwg.mxu0
  %491 = vst [vmem:[%s7] sm:$0xff] %v461
  %492 = vst [vmem:[%s7 + $0x8] sm:$0xff] %v464
  %493 = vst [vmem:[%s7 + $0x10] sm:$0xff] %v469
  %494 = vst [vmem:[%s7 + $0x18] sm:$0xff] %v472
  %495 = vst [vmem:[%s7 + $0x20] sm:$0xff] %v477
  %496 = vst [vmem:[%s7 + $0x28] sm:$0xff] %v480
  %497 = vst [vmem:[%s7 + $0x30] sm:$0xff] %v485
  %498 = vst [vmem:[%s7 + $0x38] sm:$0xff] %v488
  // Predicated region
  $region30: #{flag_model_forward.17} parent=0 // pred_check
    _
  $region31: #{flag_model_forward.17} parent=0 // pred_check_branch
    %500 = sbr.rel (0) target = $region33
  $region32: #{flag_model_forward.17} parent=0 // pred_region
    _
  $region33: #{flag_model_forward.17} parent=0 // pred_fallthru
    _
  // Predicated region
  $region34: #{flag_model_forward.17} parent=0 // pred_check
    _
  $region35: #{flag_model_forward.17} parent=0 // pred_check_branch
    %502 = sbr.rel (0) target = $region37
  $region36: #{flag_model_forward.17} parent=0 // pred_region
    _
  $region37: #{flag_model_forward.17} parent=0 // pred_fallthru
    _

</llo_original>
